<compile_context>
chip_gen: v7x
topology: tpu7x:2x2x1
jax: 0.10.0
libtpu: 0.0.40
codegen_flags: <defaults>
</compile_context>

<pallas_src>
import functools

import numpy as np
import jax
import jax.numpy as jnp
from jax.experimental import pallas as pl
from jax.experimental.pallas import tpu as pltpu

DF_DIM = 8        # cfg.GAN_DF_DIM  (synthetic, small)
COND_DIM = 16     # cfg.GAN_CONDITION_DIM
BN_EPS = 1e-5

IMG_HW = 8        # input spatial size (conv1 s=2 -> 4x4, matching the 4x4 condition map)
FEAT_HW = 4       # spatial size of intermediate feature maps


# ---------------------------------------------------------------------------
# Single fused forward kernel
# ---------------------------------------------------------------------------
def fused_forward_kernel(img_ref, cond_ref,
                         a1_ref, w1_ref, a3_ref,
                         w2_ref, s2_ref, b2_ref,
                         w3_ref, s3_ref, b3_ref,
                         w4_ref, s4_ref, b4_ref,
                         wc_ref, bc_ref,
                         wfx_ref, wfc_ref, g_ref,
                         o_ref, *, batch):
    f32, bf16 = jnp.float32, jnp.bfloat16
    rows = batch * FEAT_HW * FEAT_HW                      # one row per output pixel

    def leaky(v):
        return jnp.where(v > 0, v, 0.2 * v)

    # ---- conv1: Conv2d(3, df, k=4, s=2, p=1, bias=False) + LeakyReLU(0.2) ----
    x_img = img_ref[...]                                  # (B*64, 3) bf16
    cout1 = w1_ref.shape[1]
    acc = jnp.zeros((rows, cout1), f32)
    for t in range(16):                                   # 4x4 taps (unrolled)
        a_t = a1_ref[t * rows:(t + 1) * rows, :]          # (rows, B*64) 0/1 shift matrix
        w_t = w1_ref[t * 3:(t + 1) * 3, :]                # (3, df)
        sh = jnp.dot(a_t, x_img, preferred_element_type=f32)          # tap window gather
        acc = acc + jnp.dot(sh.astype(bf16), w_t, preferred_element_type=f32)
    h = leaky(acc)                                        # (rows, df) f32

    # ---- conv2..4: conv3x3(s=1,p=1, no bias) + folded eval-BatchNorm + LeakyReLU ----
    def conv3x3_bn_lrelu(h_prev, w_ref, s_ref, b_ref):
        cin = w_ref.shape[0] // 9
        cout = w_ref.shape[1]
        hb = h_prev.astype(bf16)
        acc = jnp.zeros((rows, cout), f32)
        for t in range(9):                                # 3x3 taps (unrolled)
            a_t = a3_ref[t * rows:(t + 1) * rows, :]      # (rows, rows)
            w_t = w_ref[t * cin:(t + 1) * cin, :]         # (cin, cout)
            sh = jnp.dot(a_t, hb, preferred_element_type=f32)
            acc = acc + jnp.dot(sh.astype(bf16), w_t, preferred_element_type=f32)
        return leaky(acc * s_ref[...] + b_ref[...])       # folded BN then LeakyReLU

    h = conv3x3_bn_lrelu(h, w2_ref, s2_ref, b2_ref)       # (rows, 2*df)
    h = conv3x3_bn_lrelu(h, w3_ref, s3_ref, b3_ref)       # (rows, 4*df)
    h = conv3x3_bn_lrelu(h, w4_ref, s4_ref, b4_ref)       # (rows, 8*df)

    # ---- condition_fc: Linear(cond_dim, df*8*4*4) + ReLU ----
    c = jnp.dot(cond_ref[...], wc_ref[...], preferred_element_type=f32) + bc_ref[...]
    c = jnp.maximum(c, 0.0)                               # (B, df*8*16) f32

    # ---- final_conv: 4x4 valid conv over concat([x, cond_map], C) + Sigmoid ----
    # One output channel -> VPU multiply + XLU lane reduction instead of an MXU
    # matmul with a single useful lane.  The channel concat and the condition's
    # view/transpose are folded into the pre-permuted weights wfx / wfc.
    tx = h * wfx_ref[...]                                 # (rows, 8*df)
    gx = jnp.dot(g_ref[...], tx, preferred_element_type=f32)   # (B, 8*df) per-sample sum
    xs = jnp.sum(gx, axis=-1, keepdims=True)              # (B, 1)  x-part contribution
    cs = jnp.sum(c * wfc_ref[...], axis=-1, keepdims=True)  # (B, 1) condition contribution
    o_ref[...] = jax.nn.sigmoid(xs + cs)


# ---------------------------------------------------------------------------
# Static structure (shift / group-sum matrices) and parameter packing
# (done ONCE at init, not in the per-forward hot path)
# ---------------------------------------------------------------------------
def build_shift_matrices(batch):
    fp = FEAT_HW * FEAT_HW
    rows = batch * fp
    in_px = IMG_HW * IMG_HW
    a1 = np.zeros((16, rows, batch * in_px), np.float32)   # conv1: k=4, s=2, p=1
    a3 = np.zeros((9, rows, rows), np.float32)              # conv3x3: k=3, s=1, p=1
    g = np.zeros((batch, rows), np.float32)                  # per-sample row group sum
    for b in range(batch):
        g[b, b * fp:(b + 1) * fp] = 1.0
        for oh in range(FEAT_HW):
            for ow in range(FEAT_HW):
                ro = b * fp + oh * FEAT_HW + ow
                for i in range(4):
                    for j in range(4):
                        hh, ww = 2 * oh + i - 1, 2 * ow + j - 1
                        if 0 <= hh < IMG_HW and 0 <= ww < IMG_HW:
                            a1[i * 4 + j, ro, b * in_px + hh * IMG_HW + ww] = 1.0
                for i in range(3):
                    for j in range(3):
                        ih, iw = oh + i - 1, ow + j - 1
                        if 0 <= ih < FEAT_HW and 0 <= iw < FEAT_HW:
                            a3[i * 3 + j, ro, b * fp + ih * FEAT_HW + iw] = 1.0
    return (a1.reshape(16 * rows, batch * in_px),
            a3.reshape(9 * rows, rows), g)


def init_params(key):
    df = DF_DIM
    keys = jax.random.split(key, 16)
    p = {}
    # conv1: Conv2d(3, df, k=4, s=2, p=1, bias=False)  (HWIO weights)
    p["w1"] = 0.05 * jax.random.normal(keys[0], (4, 4, 3, df), jnp.float32)

    def bn_fold(kg, kb, km, kv, c):     # eval-mode BatchNorm (running stats) folding
        gamma = 1.0 + 0.1 * jax.random.normal(kg, (c,), jnp.float32)
        beta = 0.1 * jax.random.normal(kb, (c,), jnp.float32)
        mean = 0.1 * jax.random.normal(km, (c,), jnp.float32)
        var = 1.0 + 0.1 * jnp.abs(jax.random.normal(kv, (c,), jnp.float32))
        scale = gamma / jnp.sqrt(var + BN_EPS)
        bias = beta - mean * scale
        return scale, bias

    p["w2"] = 0.05 * jax.random.normal(keys[1], (3, 3, df, df * 2), jnp.float32)
    p["s2"], p["b2"] = bn_fold(keys[2], keys[3], keys[4], keys[5], df * 2)
    p["w3"] = 0.05 * jax.random.normal(keys[6], (3, 3, df * 2, df * 4), jnp.float32)
    p["s3"], p["b3"] = bn_fold(keys[7], keys[8], keys[9], keys[10], df * 4)
    p["w4"] = 0.05 * jax.random.normal(keys[11], (3, 3, df * 4, df * 8), jnp.float32)
    p["s4"], p["b4"] = bn_fold(keys[12], keys[13], keys[14], keys[15], df * 8)

    keys2 = jax.random.split(jax.random.fold_in(key, 1), 3)
    # condition_fc: Linear(COND_DIM, df*8*4*4) + ReLU   (stored as (in, out))
    p["wc"] = 0.05 * jax.random.normal(keys2[0], (COND_DIM, df * 8 * 4 * 4), jnp.float32)
    p["bc"] = 0.05 * jax.random.normal(keys2[1], (df * 8 * 4 * 4,), jnp.float32)
    # final_conv: Conv2d(df*16, 1, k=4, s=1, p=0, bias=False)  (HWIO)
    p["wf"] = 0.05 * jax.random.normal(keys2[2], (4, 4, df * 16, 1), jnp.float32)
    return p


def pack_params(params, batch):
    """Static, one-time conversion into the kernel-ready layouts / dtypes."""
    df = DF_DIM
    bf16, f32 = jnp.bfloat16, jnp.float32
    a1_np, a3_np, g_np = build_shift_matrices(batch)

    def taps(w):   # HWIO (k,k,cin,cout) -> (k*k*cin, cout), rows grouped per tap
        return jnp.asarray(w.reshape(-1, w.shape[-1]), bf16)

    def vec(v):
        return jnp.asarray(v, f32).reshape(1, -1)

    wf = params["wf"]                                   # (4, 4, 16*df, 1) HWIO
    # x-part of the final conv weight, one row per output pixel (tiled over batch)
    wfx = jnp.tile(wf[:, :, :8 * df, 0].reshape(16, 8 * df), (batch, 1)).astype(f32)
    # condition-part, permuted to match the FC output's (ch, i, j) flattening
    wfc = jnp.transpose(wf[:, :, 8 * df:, 0], (2, 0, 1)).reshape(1, 8 * df * 16).astype(f32)

    return (
        jnp.asarray(a1_np, bf16),
        taps(params["w1"]),
        jnp.asarray(a3_np, bf16),
        taps(params["w2"]), vec(params["s2"]), vec(params["b2"]),
        taps(params["w3"]), vec(params["s3"]), vec(params["b3"]),
        taps(params["w4"]), vec(params["s4"]), vec(params["b4"]),
        jnp.asarray(params["wc"], bf16), vec(params["bc"]),
        wfx, wfc, jnp.asarray(g_np, f32),
    )


# ---------------------------------------------------------------------------
# Forward pass (single pallas_call)
# ---------------------------------------------------------------------------
@jax.jit
def stage1_discriminator(image_nchw, condition, packed):
    batch = image_nchw.shape[0]
    # Only per-forward prep: NCHW -> (B*H*W, 3) rows (one cheap fused transpose+reshape).
    x2d = jnp.transpose(image_nchw, (0, 2, 3, 1)).reshape(batch * IMG_HW * IMG_HW, 3)
    x2d = x2d.astype(jnp.bfloat16)
    cond = condition.astype(jnp.bfloat16)
    n_in = 2 + len(packed)
    return pl.pallas_call(
        functools.partial(fused_forward_kernel, batch=batch),
        out_shape=jax.ShapeDtypeStruct((batch, 1), jnp.float32),
        in_specs=[pl.BlockSpec(memory_space=pltpu.MemorySpace.VMEM)] * n_in,
        out_specs=pl.BlockSpec(memory_space=pltpu.MemorySpace.VMEM),
    )(x2d, cond, *packed)


# ---------------------------------------------------------------------------
# Pure-JAX reference (for a loose bf16-tolerance correctness check)
# ---------------------------------------------------------------------------
def reference_forward(image_nchw, condition, params):
    df = DF_DIM
    x = jnp.transpose(image_nchw, (0, 2, 3, 1)).astype(jnp.float32)

    def conv(x, w, stride, pad):
        return jax.lax.conv_general_dilated(
            x, w, (stride, stride), [(pad, pad), (pad, pad)],
            dimension_numbers=("NHWC", "HWIO", "NHWC"))

    def leaky(v):
        return jnp.where(v > 0, v, 0.2 * v)

    x = leaky(conv(x, params["w1"], 2, 1))
    x = leaky(conv(x, params["w2"], 1, 1) * params["s2"] + params["b2"])
    x = leaky(conv(x, params["w3"], 1, 1) * params["s3"] + params["b3"])
    x = leaky(conv(x, params["w4"], 1, 1) * params["s4"] + params["b4"])
    c = jnp.maximum(condition @ params["wc"] + params["bc"], 0.0)
    c = c.reshape(-1, df * 8, 4, 4).transpose(0, 2, 3, 1)     # NCHW -> NHWC
    x = jnp.concatenate([x, c], axis=-1)
    y = conv(x, params["wf"], 1, 0)                           # (B, 1, 1, 1)
    return jax.nn.sigmoid(y).reshape(-1, 1)


if __name__ == "__main__":
    key = jax.random.PRNGKey(0)
    k_img, k_cond, k_par = jax.random.split(key, 3)

    batch = 2
    # 8x8 input images -> conv1 (s=2) gives 4x4, matching the 4x4 condition map.
    image = jax.random.normal(k_img, (batch, 3, IMG_HW, IMG_HW), jnp.float32)   # NCHW
    condition = jax.random.normal(k_cond, (batch, COND_DIM), jnp.float32)

    params = init_params(k_par)
    packed = pack_params(params, batch)      # static prep: done once, not per forward

    out = stage1_discriminator(image, condition, packed)
    out = jax.block_until_ready(out)

    assert out.shape == (batch, 1)
    assert bool(jnp.all((out >= 0.0) & (out <= 1.0)))

    ref = reference_forward(image, condition, params)
    assert bool(jnp.max(jnp.abs(out - ref)) < 2e-2), (out, ref)

    print("KERNEL_OK")
</pallas_src>

<mosaic_0001>
module attributes {stable_mosaic.version = 11 : i64} {
  func.func @fused_forward_kernel(%arg0: memref<128x3xbf16, #tpu.memory_space<vmem>>, %arg1: memref<2x16xbf16, #tpu.memory_space<vmem>>, %arg2: memref<512x128xbf16, #tpu.memory_space<vmem>>, %arg3: memref<48x8xbf16, #tpu.memory_space<vmem>>, %arg4: memref<288x32xbf16, #tpu.memory_space<vmem>>, %arg5: memref<72x16xbf16, #tpu.memory_space<vmem>>, %arg6: memref<1x16xf32, #tpu.memory_space<vmem>>, %arg7: memref<1x16xf32, #tpu.memory_space<vmem>>, %arg8: memref<144x32xbf16, #tpu.memory_space<vmem>>, %arg9: memref<1x32xf32, #tpu.memory_space<vmem>>, %arg10: memref<1x32xf32, #tpu.memory_space<vmem>>, %arg11: memref<288x64xbf16, #tpu.memory_space<vmem>>, %arg12: memref<1x64xf32, #tpu.memory_space<vmem>>, %arg13: memref<1x64xf32, #tpu.memory_space<vmem>>, %arg14: memref<16x1024xbf16, #tpu.memory_space<vmem>>, %arg15: memref<1x1024xf32, #tpu.memory_space<vmem>>, %arg16: memref<32x64xf32, #tpu.memory_space<vmem>>, %arg17: memref<1x1024xf32, #tpu.memory_space<vmem>>, %arg18: memref<2x32xf32, #tpu.memory_space<vmem>>, %arg19: memref<2x1xf32, #tpu.memory_space<vmem>>) attributes {dimension_semantics = [], scalar_prefetch = 0 : i64, scratch_operands = 0 : i64, tpu.core_type = #tpu.core_type<tc>} {
    %c0 = arith.constant 0 : index
    %c0_0 = arith.constant 0 : index
    %0 = vector.load %arg0[%c0, %c0_0] : memref<128x3xbf16, #tpu.memory_space<vmem>>, vector<128x3xbf16>
    %cst = arith.constant 0.000000e+00 : f32
    %1 = vector.broadcast %cst : f32 to vector<32x8xf32>
    %c0_1 = arith.constant 0 : index
    %c0_2 = arith.constant 0 : index
    %2 = vector.load %arg2[%c0_1, %c0_2] : memref<512x128xbf16, #tpu.memory_space<vmem>>, vector<32x128xbf16>
    %c0_3 = arith.constant 0 : index
    %c0_4 = arith.constant 0 : index
    %3 = vector.load %arg3[%c0_3, %c0_4] : memref<48x8xbf16, #tpu.memory_space<vmem>>, vector<3x8xbf16>
    %cst_5 = arith.constant dense<0.000000e+00> : vector<32x3xf32>
    %4 = tpu.matmul %2, %0, %cst_5 {dimension_numbers = #tpu.dot_dimension_numbers<[1], [0], [0], [1], [0, 0, 1, 1], [], []>} : vector<32x128xbf16>, vector<128x3xbf16>, vector<32x3xf32> -> vector<32x3xf32>
    %5 = arith.truncf %4 : vector<32x3xf32> to vector<32x3xbf16>
    %cst_6 = arith.constant dense<0.000000e+00> : vector<32x8xf32>
    %6 = tpu.matmul %5, %3, %cst_6 {dimension_numbers = #tpu.dot_dimension_numbers<[1], [0], [0], [1], [0, 0, 1, 1], [], []>} : vector<32x3xbf16>, vector<3x8xbf16>, vector<32x8xf32> -> vector<32x8xf32>
    %7 = arith.addf %1, %6 : vector<32x8xf32>
    %c32 = arith.constant 32 : index
    %c0_7 = arith.constant 0 : index
    %8 = vector.load %arg2[%c32, %c0_7] : memref<512x128xbf16, #tpu.memory_space<vmem>>, vector<32x128xbf16>
    %c3 = arith.constant 3 : index
    %c0_8 = arith.constant 0 : index
    %9 = vector.load %arg3[%c3, %c0_8] : memref<48x8xbf16, #tpu.memory_space<vmem>>, vector<3x8xbf16>
    %cst_9 = arith.constant dense<0.000000e+00> : vector<32x3xf32>
    %10 = tpu.matmul %8, %0, %cst_9 {dimension_numbers = #tpu.dot_dimension_numbers<[1], [0], [0], [1], [0, 0, 1, 1], [], []>} : vector<32x128xbf16>, vector<128x3xbf16>, vector<32x3xf32> -> vector<32x3xf32>
    %11 = arith.truncf %10 : vector<32x3xf32> to vector<32x3xbf16>
    %cst_10 = arith.constant dense<0.000000e+00> : vector<32x8xf32>
    %12 = tpu.matmul %11, %9, %cst_10 {dimension_numbers = #tpu.dot_dimension_numbers<[1], [0], [0], [1], [0, 0, 1, 1], [], []>} : vector<32x3xbf16>, vector<3x8xbf16>, vector<32x8xf32> -> vector<32x8xf32>
    %13 = arith.addf %7, %12 : vector<32x8xf32>
    %c64 = arith.constant 64 : index
    %c0_11 = arith.constant 0 : index
    %14 = vector.load %arg2[%c64, %c0_11] : memref<512x128xbf16, #tpu.memory_space<vmem>>, vector<32x128xbf16>
    %c6 = arith.constant 6 : index
    %c0_12 = arith.constant 0 : index
    %15 = vector.load %arg3[%c6, %c0_12] : memref<48x8xbf16, #tpu.memory_space<vmem>>, vector<3x8xbf16>
    %cst_13 = arith.constant dense<0.000000e+00> : vector<32x3xf32>
    %16 = tpu.matmul %14, %0, %cst_13 {dimension_numbers = #tpu.dot_dimension_numbers<[1], [0], [0], [1], [0, 0, 1, 1], [], []>} : vector<32x128xbf16>, vector<128x3xbf16>, vector<32x3xf32> -> vector<32x3xf32>
    %17 = arith.truncf %16 : vector<32x3xf32> to vector<32x3xbf16>
    %cst_14 = arith.constant dense<0.000000e+00> : vector<32x8xf32>
    %18 = tpu.matmul %17, %15, %cst_14 {dimension_numbers = #tpu.dot_dimension_numbers<[1], [0], [0], [1], [0, 0, 1, 1], [], []>} : vector<32x3xbf16>, vector<3x8xbf16>, vector<32x8xf32> -> vector<32x8xf32>
    %19 = arith.addf %13, %18 : vector<32x8xf32>
    %c96 = arith.constant 96 : index
    %c0_15 = arith.constant 0 : index
    %20 = vector.load %arg2[%c96, %c0_15] : memref<512x128xbf16, #tpu.memory_space<vmem>>, vector<32x128xbf16>
    %c9 = arith.constant 9 : index
    %c0_16 = arith.constant 0 : index
    %21 = vector.load %arg3[%c9, %c0_16] : memref<48x8xbf16, #tpu.memory_space<vmem>>, vector<3x8xbf16>
    %cst_17 = arith.constant dense<0.000000e+00> : vector<32x3xf32>
    %22 = tpu.matmul %20, %0, %cst_17 {dimension_numbers = #tpu.dot_dimension_numbers<[1], [0], [0], [1], [0, 0, 1, 1], [], []>} : vector<32x128xbf16>, vector<128x3xbf16>, vector<32x3xf32> -> vector<32x3xf32>
    %23 = arith.truncf %22 : vector<32x3xf32> to vector<32x3xbf16>
    %cst_18 = arith.constant dense<0.000000e+00> : vector<32x8xf32>
    %24 = tpu.matmul %23, %21, %cst_18 {dimension_numbers = #tpu.dot_dimension_numbers<[1], [0], [0], [1], [0, 0, 1, 1], [], []>} : vector<32x3xbf16>, vector<3x8xbf16>, vector<32x8xf32> -> vector<32x8xf32>
    %25 = arith.addf %19, %24 : vector<32x8xf32>
    %c128 = arith.constant 128 : index
    %c0_19 = arith.constant 0 : index
    %26 = vector.load %arg2[%c128, %c0_19] : memref<512x128xbf16, #tpu.memory_space<vmem>>, vector<32x128xbf16>
    %c12 = arith.constant 12 : index
    %c0_20 = arith.constant 0 : index
    %27 = vector.load %arg3[%c12, %c0_20] : memref<48x8xbf16, #tpu.memory_space<vmem>>, vector<3x8xbf16>
    %cst_21 = arith.constant dense<0.000000e+00> : vector<32x3xf32>
    %28 = tpu.matmul %26, %0, %cst_21 {dimension_numbers = #tpu.dot_dimension_numbers<[1], [0], [0], [1], [0, 0, 1, 1], [], []>} : vector<32x128xbf16>, vector<128x3xbf16>, vector<32x3xf32> -> vector<32x3xf32>
    %29 = arith.truncf %28 : vector<32x3xf32> to vector<32x3xbf16>
    %cst_22 = arith.constant dense<0.000000e+00> : vector<32x8xf32>
    %30 = tpu.matmul %29, %27, %cst_22 {dimension_numbers = #tpu.dot_dimension_numbers<[1], [0], [0], [1], [0, 0, 1, 1], [], []>} : vector<32x3xbf16>, vector<3x8xbf16>, vector<32x8xf32> -> vector<32x8xf32>
    %31 = arith.addf %25, %30 : vector<32x8xf32>
    %c160 = arith.constant 160 : index
    %c0_23 = arith.constant 0 : index
    %32 = vector.load %arg2[%c160, %c0_23] : memref<512x128xbf16, #tpu.memory_space<vmem>>, vector<32x128xbf16>
    %c15 = arith.constant 15 : index
    %c0_24 = arith.constant 0 : index
    %33 = vector.load %arg3[%c15, %c0_24] : memref<48x8xbf16, #tpu.memory_space<vmem>>, vector<3x8xbf16>
    %cst_25 = arith.constant dense<0.000000e+00> : vector<32x3xf32>
    %34 = tpu.matmul %32, %0, %cst_25 {dimension_numbers = #tpu.dot_dimension_numbers<[1], [0], [0], [1], [0, 0, 1, 1], [], []>} : vector<32x128xbf16>, vector<128x3xbf16>, vector<32x3xf32> -> vector<32x3xf32>
    %35 = arith.truncf %34 : vector<32x3xf32> to vector<32x3xbf16>
    %cst_26 = arith.constant dense<0.000000e+00> : vector<32x8xf32>
    %36 = tpu.matmul %35, %33, %cst_26 {dimension_numbers = #tpu.dot_dimension_numbers<[1], [0], [0], [1], [0, 0, 1, 1], [], []>} : vector<32x3xbf16>, vector<3x8xbf16>, vector<32x8xf32> -> vector<32x8xf32>
    %37 = arith.addf %31, %36 : vector<32x8xf32>
    %c192 = arith.constant 192 : index
    %c0_27 = arith.constant 0 : index
    %38 = vector.load %arg2[%c192, %c0_27] : memref<512x128xbf16, #tpu.memory_space<vmem>>, vector<32x128xbf16>
    %c18 = arith.constant 18 : index
    %c0_28 = arith.constant 0 : index
    %39 = vector.load %arg3[%c18, %c0_28] : memref<48x8xbf16, #tpu.memory_space<vmem>>, vector<3x8xbf16>
    %cst_29 = arith.constant dense<0.000000e+00> : vector<32x3xf32>
    %40 = tpu.matmul %38, %0, %cst_29 {dimension_numbers = #tpu.dot_dimension_numbers<[1], [0], [0], [1], [0, 0, 1, 1], [], []>} : vector<32x128xbf16>, vector<128x3xbf16>, vector<32x3xf32> -> vector<32x3xf32>
    %41 = arith.truncf %40 : vector<32x3xf32> to vector<32x3xbf16>
    %cst_30 = arith.constant dense<0.000000e+00> : vector<32x8xf32>
    %42 = tpu.matmul %41, %39, %cst_30 {dimension_numbers = #tpu.dot_dimension_numbers<[1], [0], [0], [1], [0, 0, 1, 1], [], []>} : vector<32x3xbf16>, vector<3x8xbf16>, vector<32x8xf32> -> vector<32x8xf32>
    %43 = arith.addf %37, %42 : vector<32x8xf32>
    %c224 = arith.constant 224 : index
    %c0_31 = arith.constant 0 : index
    %44 = vector.load %arg2[%c224, %c0_31] : memref<512x128xbf16, #tpu.memory_space<vmem>>, vector<32x128xbf16>
    %c21 = arith.constant 21 : index
    %c0_32 = arith.constant 0 : index
    %45 = vector.load %arg3[%c21, %c0_32] : memref<48x8xbf16, #tpu.memory_space<vmem>>, vector<3x8xbf16>
    %cst_33 = arith.constant dense<0.000000e+00> : vector<32x3xf32>
    %46 = tpu.matmul %44, %0, %cst_33 {dimension_numbers = #tpu.dot_dimension_numbers<[1], [0], [0], [1], [0, 0, 1, 1], [], []>} : vector<32x128xbf16>, vector<128x3xbf16>, vector<32x3xf32> -> vector<32x3xf32>
    %47 = arith.truncf %46 : vector<32x3xf32> to vector<32x3xbf16>
    %cst_34 = arith.constant dense<0.000000e+00> : vector<32x8xf32>
    %48 = tpu.matmul %47, %45, %cst_34 {dimension_numbers = #tpu.dot_dimension_numbers<[1], [0], [0], [1], [0, 0, 1, 1], [], []>} : vector<32x3xbf16>, vector<3x8xbf16>, vector<32x8xf32> -> vector<32x8xf32>
    %49 = arith.addf %43, %48 : vector<32x8xf32>
    %c256 = arith.constant 256 : index
    %c0_35 = arith.constant 0 : index
    %50 = vector.load %arg2[%c256, %c0_35] : memref<512x128xbf16, #tpu.memory_space<vmem>>, vector<32x128xbf16>
    %c24 = arith.constant 24 : index
    %c0_36 = arith.constant 0 : index
    %51 = vector.load %arg3[%c24, %c0_36] : memref<48x8xbf16, #tpu.memory_space<vmem>>, vector<3x8xbf16>
    %cst_37 = arith.constant dense<0.000000e+00> : vector<32x3xf32>
    %52 = tpu.matmul %50, %0, %cst_37 {dimension_numbers = #tpu.dot_dimension_numbers<[1], [0], [0], [1], [0, 0, 1, 1], [], []>} : vector<32x128xbf16>, vector<128x3xbf16>, vector<32x3xf32> -> vector<32x3xf32>
    %53 = arith.truncf %52 : vector<32x3xf32> to vector<32x3xbf16>
    %cst_38 = arith.constant dense<0.000000e+00> : vector<32x8xf32>
    %54 = tpu.matmul %53, %51, %cst_38 {dimension_numbers = #tpu.dot_dimension_numbers<[1], [0], [0], [1], [0, 0, 1, 1], [], []>} : vector<32x3xbf16>, vector<3x8xbf16>, vector<32x8xf32> -> vector<32x8xf32>
    %55 = arith.addf %49, %54 : vector<32x8xf32>
    %c288 = arith.constant 288 : index
    %c0_39 = arith.constant 0 : index
    %56 = vector.load %arg2[%c288, %c0_39] : memref<512x128xbf16, #tpu.memory_space<vmem>>, vector<32x128xbf16>
    %c27 = arith.constant 27 : index
    %c0_40 = arith.constant 0 : index
    %57 = vector.load %arg3[%c27, %c0_40] : memref<48x8xbf16, #tpu.memory_space<vmem>>, vector<3x8xbf16>
    %cst_41 = arith.constant dense<0.000000e+00> : vector<32x3xf32>
    %58 = tpu.matmul %56, %0, %cst_41 {dimension_numbers = #tpu.dot_dimension_numbers<[1], [0], [0], [1], [0, 0, 1, 1], [], []>} : vector<32x128xbf16>, vector<128x3xbf16>, vector<32x3xf32> -> vector<32x3xf32>
    %59 = arith.truncf %58 : vector<32x3xf32> to vector<32x3xbf16>
    %cst_42 = arith.constant dense<0.000000e+00> : vector<32x8xf32>
    %60 = tpu.matmul %59, %57, %cst_42 {dimension_numbers = #tpu.dot_dimension_numbers<[1], [0], [0], [1], [0, 0, 1, 1], [], []>} : vector<32x3xbf16>, vector<3x8xbf16>, vector<32x8xf32> -> vector<32x8xf32>
    %61 = arith.addf %55, %60 : vector<32x8xf32>
    %c320 = arith.constant 320 : index
    %c0_43 = arith.constant 0 : index
    %62 = vector.load %arg2[%c320, %c0_43] : memref<512x128xbf16, #tpu.memory_space<vmem>>, vector<32x128xbf16>
    %c30 = arith.constant 30 : index
    %c0_44 = arith.constant 0 : index
    %63 = vector.load %arg3[%c30, %c0_44] : memref<48x8xbf16, #tpu.memory_space<vmem>>, vector<3x8xbf16>
    %cst_45 = arith.constant dense<0.000000e+00> : vector<32x3xf32>
    %64 = tpu.matmul %62, %0, %cst_45 {dimension_numbers = #tpu.dot_dimension_numbers<[1], [0], [0], [1], [0, 0, 1, 1], [], []>} : vector<32x128xbf16>, vector<128x3xbf16>, vector<32x3xf32> -> vector<32x3xf32>
    %65 = arith.truncf %64 : vector<32x3xf32> to vector<32x3xbf16>
    %cst_46 = arith.constant dense<0.000000e+00> : vector<32x8xf32>
    %66 = tpu.matmul %65, %63, %cst_46 {dimension_numbers = #tpu.dot_dimension_numbers<[1], [0], [0], [1], [0, 0, 1, 1], [], []>} : vector<32x3xbf16>, vector<3x8xbf16>, vector<32x8xf32> -> vector<32x8xf32>
    %67 = arith.addf %61, %66 : vector<32x8xf32>
    %c352 = arith.constant 352 : index
    %c0_47 = arith.constant 0 : index
    %68 = vector.load %arg2[%c352, %c0_47] : memref<512x128xbf16, #tpu.memory_space<vmem>>, vector<32x128xbf16>
    %c33 = arith.constant 33 : index
    %c0_48 = arith.constant 0 : index
    %69 = vector.load %arg3[%c33, %c0_48] : memref<48x8xbf16, #tpu.memory_space<vmem>>, vector<3x8xbf16>
    %cst_49 = arith.constant dense<0.000000e+00> : vector<32x3xf32>
    %70 = tpu.matmul %68, %0, %cst_49 {dimension_numbers = #tpu.dot_dimension_numbers<[1], [0], [0], [1], [0, 0, 1, 1], [], []>} : vector<32x128xbf16>, vector<128x3xbf16>, vector<32x3xf32> -> vector<32x3xf32>
    %71 = arith.truncf %70 : vector<32x3xf32> to vector<32x3xbf16>
    %cst_50 = arith.constant dense<0.000000e+00> : vector<32x8xf32>
    %72 = tpu.matmul %71, %69, %cst_50 {dimension_numbers = #tpu.dot_dimension_numbers<[1], [0], [0], [1], [0, 0, 1, 1], [], []>} : vector<32x3xbf16>, vector<3x8xbf16>, vector<32x8xf32> -> vector<32x8xf32>
    %73 = arith.addf %67, %72 : vector<32x8xf32>
    %c384 = arith.constant 384 : index
    %c0_51 = arith.constant 0 : index
    %74 = vector.load %arg2[%c384, %c0_51] : memref<512x128xbf16, #tpu.memory_space<vmem>>, vector<32x128xbf16>
    %c36 = arith.constant 36 : index
    %c0_52 = arith.constant 0 : index
    %75 = vector.load %arg3[%c36, %c0_52] : memref<48x8xbf16, #tpu.memory_space<vmem>>, vector<3x8xbf16>
    %cst_53 = arith.constant dense<0.000000e+00> : vector<32x3xf32>
    %76 = tpu.matmul %74, %0, %cst_53 {dimension_numbers = #tpu.dot_dimension_numbers<[1], [0], [0], [1], [0, 0, 1, 1], [], []>} : vector<32x128xbf16>, vector<128x3xbf16>, vector<32x3xf32> -> vector<32x3xf32>
    %77 = arith.truncf %76 : vector<32x3xf32> to vector<32x3xbf16>
    %cst_54 = arith.constant dense<0.000000e+00> : vector<32x8xf32>
    %78 = tpu.matmul %77, %75, %cst_54 {dimension_numbers = #tpu.dot_dimension_numbers<[1], [0], [0], [1], [0, 0, 1, 1], [], []>} : vector<32x3xbf16>, vector<3x8xbf16>, vector<32x8xf32> -> vector<32x8xf32>
    %79 = arith.addf %73, %78 : vector<32x8xf32>
    %c416 = arith.constant 416 : index
    %c0_55 = arith.constant 0 : index
    %80 = vector.load %arg2[%c416, %c0_55] : memref<512x128xbf16, #tpu.memory_space<vmem>>, vector<32x128xbf16>
    %c39 = arith.constant 39 : index
    %c0_56 = arith.constant 0 : index
    %81 = vector.load %arg3[%c39, %c0_56] : memref<48x8xbf16, #tpu.memory_space<vmem>>, vector<3x8xbf16>
    %cst_57 = arith.constant dense<0.000000e+00> : vector<32x3xf32>
    %82 = tpu.matmul %80, %0, %cst_57 {dimension_numbers = #tpu.dot_dimension_numbers<[1], [0], [0], [1], [0, 0, 1, 1], [], []>} : vector<32x128xbf16>, vector<128x3xbf16>, vector<32x3xf32> -> vector<32x3xf32>
    %83 = arith.truncf %82 : vector<32x3xf32> to vector<32x3xbf16>
    %cst_58 = arith.constant dense<0.000000e+00> : vector<32x8xf32>
    %84 = tpu.matmul %83, %81, %cst_58 {dimension_numbers = #tpu.dot_dimension_numbers<[1], [0], [0], [1], [0, 0, 1, 1], [], []>} : vector<32x3xbf16>, vector<3x8xbf16>, vector<32x8xf32> -> vector<32x8xf32>
    %85 = arith.addf %79, %84 : vector<32x8xf32>
    %c448 = arith.constant 448 : index
    %c0_59 = arith.constant 0 : index
    %86 = vector.load %arg2[%c448, %c0_59] : memref<512x128xbf16, #tpu.memory_space<vmem>>, vector<32x128xbf16>
    %c42 = arith.constant 42 : index
    %c0_60 = arith.constant 0 : index
    %87 = vector.load %arg3[%c42, %c0_60] : memref<48x8xbf16, #tpu.memory_space<vmem>>, vector<3x8xbf16>
    %cst_61 = arith.constant dense<0.000000e+00> : vector<32x3xf32>
    %88 = tpu.matmul %86, %0, %cst_61 {dimension_numbers = #tpu.dot_dimension_numbers<[1], [0], [0], [1], [0, 0, 1, 1], [], []>} : vector<32x128xbf16>, vector<128x3xbf16>, vector<32x3xf32> -> vector<32x3xf32>
    %89 = arith.truncf %88 : vector<32x3xf32> to vector<32x3xbf16>
    %cst_62 = arith.constant dense<0.000000e+00> : vector<32x8xf32>
    %90 = tpu.matmul %89, %87, %cst_62 {dimension_numbers = #tpu.dot_dimension_numbers<[1], [0], [0], [1], [0, 0, 1, 1], [], []>} : vector<32x3xbf16>, vector<3x8xbf16>, vector<32x8xf32> -> vector<32x8xf32>
    %91 = arith.addf %85, %90 : vector<32x8xf32>
    %c480 = arith.constant 480 : index
    %c0_63 = arith.constant 0 : index
    %92 = vector.load %arg2[%c480, %c0_63] : memref<512x128xbf16, #tpu.memory_space<vmem>>, vector<32x128xbf16>
    %c45 = arith.constant 45 : index
    %c0_64 = arith.constant 0 : index
    %93 = vector.load %arg3[%c45, %c0_64] : memref<48x8xbf16, #tpu.memory_space<vmem>>, vector<3x8xbf16>
    %cst_65 = arith.constant dense<0.000000e+00> : vector<32x3xf32>
    %94 = tpu.matmul %92, %0, %cst_65 {dimension_numbers = #tpu.dot_dimension_numbers<[1], [0], [0], [1], [0, 0, 1, 1], [], []>} : vector<32x128xbf16>, vector<128x3xbf16>, vector<32x3xf32> -> vector<32x3xf32>
    %95 = arith.truncf %94 : vector<32x3xf32> to vector<32x3xbf16>
    %cst_66 = arith.constant dense<0.000000e+00> : vector<32x8xf32>
    %96 = tpu.matmul %95, %93, %cst_66 {dimension_numbers = #tpu.dot_dimension_numbers<[1], [0], [0], [1], [0, 0, 1, 1], [], []>} : vector<32x3xbf16>, vector<3x8xbf16>, vector<32x8xf32> -> vector<32x8xf32>
    %97 = arith.addf %91, %96 : vector<32x8xf32>
    %cst_67 = arith.constant 0.000000e+00 : f32
    %98 = vector.broadcast %cst_67 : f32 to vector<32x8xf32>
    %99 = arith.cmpf ogt, %97, %98 : vector<32x8xf32>
    %cst_68 = arith.constant 2.000000e-01 : f32
    %100 = vector.broadcast %cst_68 : f32 to vector<32x8xf32>
    %101 = arith.mulf %100, %97 : vector<32x8xf32>
    %102 = arith.select %99, %97, %101 : vector<32x8xi1>, vector<32x8xf32>
    %103 = arith.truncf %102 : vector<32x8xf32> to vector<32x8xbf16>
    %cst_69 = arith.constant 0.000000e+00 : f32
    %104 = vector.broadcast %cst_69 : f32 to vector<32x16xf32>
    %c0_70 = arith.constant 0 : index
    %c0_71 = arith.constant 0 : index
    %105 = vector.load %arg4[%c0_70, %c0_71] : memref<288x32xbf16, #tpu.memory_space<vmem>>, vector<32x32xbf16>
    %c0_72 = arith.constant 0 : index
    %c0_73 = arith.constant 0 : index
    %106 = vector.load %arg5[%c0_72, %c0_73] : memref<72x16xbf16, #tpu.memory_space<vmem>>, vector<8x16xbf16>
    %cst_74 = arith.constant dense<0.000000e+00> : vector<32x8xf32>
    %107 = tpu.matmul %105, %103, %cst_74 {dimension_numbers = #tpu.dot_dimension_numbers<[1], [0], [0], [1], [0, 0, 1, 1], [], []>} : vector<32x32xbf16>, vector<32x8xbf16>, vector<32x8xf32> -> vector<32x8xf32>
    %108 = arith.truncf %107 : vector<32x8xf32> to vector<32x8xbf16>
    %cst_75 = arith.constant dense<0.000000e+00> : vector<32x16xf32>
    %109 = tpu.matmul %108, %106, %cst_75 {dimension_numbers = #tpu.dot_dimension_numbers<[1], [0], [0], [1], [0, 0, 1, 1], [], []>} : vector<32x8xbf16>, vector<8x16xbf16>, vector<32x16xf32> -> vector<32x16xf32>
    %110 = arith.addf %104, %109 : vector<32x16xf32>
    %c32_76 = arith.constant 32 : index
    %c0_77 = arith.constant 0 : index
    %111 = vector.load %arg4[%c32_76, %c0_77] : memref<288x32xbf16, #tpu.memory_space<vmem>>, vector<32x32xbf16>
    %c8 = arith.constant 8 : index
    %c0_78 = arith.constant 0 : index
    %112 = vector.load %arg5[%c8, %c0_78] : memref<72x16xbf16, #tpu.memory_space<vmem>>, vector<8x16xbf16>
    %cst_79 = arith.constant dense<0.000000e+00> : vector<32x8xf32>
    %113 = tpu.matmul %111, %103, %cst_79 {dimension_numbers = #tpu.dot_dimension_numbers<[1], [0], [0], [1], [0, 0, 1, 1], [], []>} : vector<32x32xbf16>, vector<32x8xbf16>, vector<32x8xf32> -> vector<32x8xf32>
    %114 = arith.truncf %113 : vector<32x8xf32> to vector<32x8xbf16>
    %cst_80 = arith.constant dense<0.000000e+00> : vector<32x16xf32>
    %115 = tpu.matmul %114, %112, %cst_80 {dimension_numbers = #tpu.dot_dimension_numbers<[1], [0], [0], [1], [0, 0, 1, 1], [], []>} : vector<32x8xbf16>, vector<8x16xbf16>, vector<32x16xf32> -> vector<32x16xf32>
    %116 = arith.addf %110, %115 : vector<32x16xf32>
    %c64_81 = arith.constant 64 : index
    %c0_82 = arith.constant 0 : index
    %117 = vector.load %arg4[%c64_81, %c0_82] : memref<288x32xbf16, #tpu.memory_space<vmem>>, vector<32x32xbf16>
    %c16 = arith.constant 16 : index
    %c0_83 = arith.constant 0 : index
    %118 = vector.load %arg5[%c16, %c0_83] : memref<72x16xbf16, #tpu.memory_space<vmem>>, vector<8x16xbf16>
    %cst_84 = arith.constant dense<0.000000e+00> : vector<32x8xf32>
    %119 = tpu.matmul %117, %103, %cst_84 {dimension_numbers = #tpu.dot_dimension_numbers<[1], [0], [0], [1], [0, 0, 1, 1], [], []>} : vector<32x32xbf16>, vector<32x8xbf16>, vector<32x8xf32> -> vector<32x8xf32>
    %120 = arith.truncf %119 : vector<32x8xf32> to vector<32x8xbf16>
    %cst_85 = arith.constant dense<0.000000e+00> : vector<32x16xf32>
    %121 = tpu.matmul %120, %118, %cst_85 {dimension_numbers = #tpu.dot_dimension_numbers<[1], [0], [0], [1], [0, 0, 1, 1], [], []>} : vector<32x8xbf16>, vector<8x16xbf16>, vector<32x16xf32> -> vector<32x16xf32>
    %122 = arith.addf %116, %121 : vector<32x16xf32>
    %c96_86 = arith.constant 96 : index
    %c0_87 = arith.constant 0 : index
    %123 = vector.load %arg4[%c96_86, %c0_87] : memref<288x32xbf16, #tpu.memory_space<vmem>>, vector<32x32xbf16>
    %c24_88 = arith.constant 24 : index
    %c0_89 = arith.constant 0 : index
    %124 = vector.load %arg5[%c24_88, %c0_89] : memref<72x16xbf16, #tpu.memory_space<vmem>>, vector<8x16xbf16>
    %cst_90 = arith.constant dense<0.000000e+00> : vector<32x8xf32>
    %125 = tpu.matmul %123, %103, %cst_90 {dimension_numbers = #tpu.dot_dimension_numbers<[1], [0], [0], [1], [0, 0, 1, 1], [], []>} : vector<32x32xbf16>, vector<32x8xbf16>, vector<32x8xf32> -> vector<32x8xf32>
    %126 = arith.truncf %125 : vector<32x8xf32> to vector<32x8xbf16>
    %cst_91 = arith.constant dense<0.000000e+00> : vector<32x16xf32>
    %127 = tpu.matmul %126, %124, %cst_91 {dimension_numbers = #tpu.dot_dimension_numbers<[1], [0], [0], [1], [0, 0, 1, 1], [], []>} : vector<32x8xbf16>, vector<8x16xbf16>, vector<32x16xf32> -> vector<32x16xf32>
    %128 = arith.addf %122, %127 : vector<32x16xf32>
    %c128_92 = arith.constant 128 : index
    %c0_93 = arith.constant 0 : index
    %129 = vector.load %arg4[%c128_92, %c0_93] : memref<288x32xbf16, #tpu.memory_space<vmem>>, vector<32x32xbf16>
    %c32_94 = arith.constant 32 : index
    %c0_95 = arith.constant 0 : index
    %130 = vector.load %arg5[%c32_94, %c0_95] : memref<72x16xbf16, #tpu.memory_space<vmem>>, vector<8x16xbf16>
    %cst_96 = arith.constant dense<0.000000e+00> : vector<32x8xf32>
    %131 = tpu.matmul %129, %103, %cst_96 {dimension_numbers = #tpu.dot_dimension_numbers<[1], [0], [0], [1], [0, 0, 1, 1], [], []>} : vector<32x32xbf16>, vector<32x8xbf16>, vector<32x8xf32> -> vector<32x8xf32>
    %132 = arith.truncf %131 : vector<32x8xf32> to vector<32x8xbf16>
    %cst_97 = arith.constant dense<0.000000e+00> : vector<32x16xf32>
    %133 = tpu.matmul %132, %130, %cst_97 {dimension_numbers = #tpu.dot_dimension_numbers<[1], [0], [0], [1], [0, 0, 1, 1], [], []>} : vector<32x8xbf16>, vector<8x16xbf16>, vector<32x16xf32> -> vector<32x16xf32>
    %134 = arith.addf %128, %133 : vector<32x16xf32>
    %c160_98 = arith.constant 160 : index
    %c0_99 = arith.constant 0 : index
    %135 = vector.load %arg4[%c160_98, %c0_99] : memref<288x32xbf16, #tpu.memory_space<vmem>>, vector<32x32xbf16>
    %c40 = arith.constant 40 : index
    %c0_100 = arith.constant 0 : index
    %136 = vector.load %arg5[%c40, %c0_100] : memref<72x16xbf16, #tpu.memory_space<vmem>>, vector<8x16xbf16>
    %cst_101 = arith.constant dense<0.000000e+00> : vector<32x8xf32>
    %137 = tpu.matmul %135, %103, %cst_101 {dimension_numbers = #tpu.dot_dimension_numbers<[1], [0], [0], [1], [0, 0, 1, 1], [], []>} : vector<32x32xbf16>, vector<32x8xbf16>, vector<32x8xf32> -> vector<32x8xf32>
    %138 = arith.truncf %137 : vector<32x8xf32> to vector<32x8xbf16>
    %cst_102 = arith.constant dense<0.000000e+00> : vector<32x16xf32>
    %139 = tpu.matmul %138, %136, %cst_102 {dimension_numbers = #tpu.dot_dimension_numbers<[1], [0], [0], [1], [0, 0, 1, 1], [], []>} : vector<32x8xbf16>, vector<8x16xbf16>, vector<32x16xf32> -> vector<32x16xf32>
    %140 = arith.addf %134, %139 : vector<32x16xf32>
    %c192_103 = arith.constant 192 : index
    %c0_104 = arith.constant 0 : index
    %141 = vector.load %arg4[%c192_103, %c0_104] : memref<288x32xbf16, #tpu.memory_space<vmem>>, vector<32x32xbf16>
    %c48 = arith.constant 48 : index
    %c0_105 = arith.constant 0 : index
    %142 = vector.load %arg5[%c48, %c0_105] : memref<72x16xbf16, #tpu.memory_space<vmem>>, vector<8x16xbf16>
    %cst_106 = arith.constant dense<0.000000e+00> : vector<32x8xf32>
    %143 = tpu.matmul %141, %103, %cst_106 {dimension_numbers = #tpu.dot_dimension_numbers<[1], [0], [0], [1], [0, 0, 1, 1], [], []>} : vector<32x32xbf16>, vector<32x8xbf16>, vector<32x8xf32> -> vector<32x8xf32>
    %144 = arith.truncf %143 : vector<32x8xf32> to vector<32x8xbf16>
    %cst_107 = arith.constant dense<0.000000e+00> : vector<32x16xf32>
    %145 = tpu.matmul %144, %142, %cst_107 {dimension_numbers = #tpu.dot_dimension_numbers<[1], [0], [0], [1], [0, 0, 1, 1], [], []>} : vector<32x8xbf16>, vector<8x16xbf16>, vector<32x16xf32> -> vector<32x16xf32>
    %146 = arith.addf %140, %145 : vector<32x16xf32>
    %c224_108 = arith.constant 224 : index
    %c0_109 = arith.constant 0 : index
    %147 = vector.load %arg4[%c224_108, %c0_109] : memref<288x32xbf16, #tpu.memory_space<vmem>>, vector<32x32xbf16>
    %c56 = arith.constant 56 : index
    %c0_110 = arith.constant 0 : index
    %148 = vector.load %arg5[%c56, %c0_110] : memref<72x16xbf16, #tpu.memory_space<vmem>>, vector<8x16xbf16>
    %cst_111 = arith.constant dense<0.000000e+00> : vector<32x8xf32>
    %149 = tpu.matmul %147, %103, %cst_111 {dimension_numbers = #tpu.dot_dimension_numbers<[1], [0], [0], [1], [0, 0, 1, 1], [], []>} : vector<32x32xbf16>, vector<32x8xbf16>, vector<32x8xf32> -> vector<32x8xf32>
    %150 = arith.truncf %149 : vector<32x8xf32> to vector<32x8xbf16>
    %cst_112 = arith.constant dense<0.000000e+00> : vector<32x16xf32>
    %151 = tpu.matmul %150, %148, %cst_112 {dimension_numbers = #tpu.dot_dimension_numbers<[1], [0], [0], [1], [0, 0, 1, 1], [], []>} : vector<32x8xbf16>, vector<8x16xbf16>, vector<32x16xf32> -> vector<32x16xf32>
    %152 = arith.addf %146, %151 : vector<32x16xf32>
    %c256_113 = arith.constant 256 : index
    %c0_114 = arith.constant 0 : index
    %153 = vector.load %arg4[%c256_113, %c0_114] : memref<288x32xbf16, #tpu.memory_space<vmem>>, vector<32x32xbf16>
    %c64_115 = arith.constant 64 : index
    %c0_116 = arith.constant 0 : index
    %154 = vector.load %arg5[%c64_115, %c0_116] : memref<72x16xbf16, #tpu.memory_space<vmem>>, vector<8x16xbf16>
    %cst_117 = arith.constant dense<0.000000e+00> : vector<32x8xf32>
    %155 = tpu.matmul %153, %103, %cst_117 {dimension_numbers = #tpu.dot_dimension_numbers<[1], [0], [0], [1], [0, 0, 1, 1], [], []>} : vector<32x32xbf16>, vector<32x8xbf16>, vector<32x8xf32> -> vector<32x8xf32>
    %156 = arith.truncf %155 : vector<32x8xf32> to vector<32x8xbf16>
    %cst_118 = arith.constant dense<0.000000e+00> : vector<32x16xf32>
    %157 = tpu.matmul %156, %154, %cst_118 {dimension_numbers = #tpu.dot_dimension_numbers<[1], [0], [0], [1], [0, 0, 1, 1], [], []>} : vector<32x8xbf16>, vector<8x16xbf16>, vector<32x16xf32> -> vector<32x16xf32>
    %158 = arith.addf %152, %157 : vector<32x16xf32>
    %c0_119 = arith.constant 0 : index
    %c0_120 = arith.constant 0 : index
    %159 = vector.load %arg6[%c0_119, %c0_120] : memref<1x16xf32, #tpu.memory_space<vmem>>, vector<1x16xf32>
    %160 = vector.broadcast %159 : vector<1x16xf32> to vector<32x16xf32>
    %161 = arith.mulf %158, %160 : vector<32x16xf32>
    %c0_121 = arith.constant 0 : index
    %c0_122 = arith.constant 0 : index
    %162 = vector.load %arg7[%c0_121, %c0_122] : memref<1x16xf32, #tpu.memory_space<vmem>>, vector<1x16xf32>
    %163 = vector.broadcast %162 : vector<1x16xf32> to vector<32x16xf32>
    %164 = arith.addf %161, %163 : vector<32x16xf32>
    %cst_123 = arith.constant 0.000000e+00 : f32
    %165 = vector.broadcast %cst_123 : f32 to vector<32x16xf32>
    %166 = arith.cmpf ogt, %164, %165 : vector<32x16xf32>
    %cst_124 = arith.constant 2.000000e-01 : f32
    %167 = vector.broadcast %cst_124 : f32 to vector<32x16xf32>
    %168 = arith.mulf %167, %164 : vector<32x16xf32>
    %169 = arith.select %166, %164, %168 : vector<32x16xi1>, vector<32x16xf32>
    %170 = arith.truncf %169 : vector<32x16xf32> to vector<32x16xbf16>
    %cst_125 = arith.constant 0.000000e+00 : f32
    %171 = vector.broadcast %cst_125 : f32 to vector<32x32xf32>
    %c0_126 = arith.constant 0 : index
    %c0_127 = arith.constant 0 : index
    %172 = vector.load %arg4[%c0_126, %c0_127] : memref<288x32xbf16, #tpu.memory_space<vmem>>, vector<32x32xbf16>
    %c0_128 = arith.constant 0 : index
    %c0_129 = arith.constant 0 : index
    %173 = vector.load %arg8[%c0_128, %c0_129] : memref<144x32xbf16, #tpu.memory_space<vmem>>, vector<16x32xbf16>
    %cst_130 = arith.constant dense<0.000000e+00> : vector<32x16xf32>
    %174 = tpu.matmul %172, %170, %cst_130 {dimension_numbers = #tpu.dot_dimension_numbers<[1], [0], [0], [1], [0, 0, 1, 1], [], []>} : vector<32x32xbf16>, vector<32x16xbf16>, vector<32x16xf32> -> vector<32x16xf32>
    %175 = arith.truncf %174 : vector<32x16xf32> to vector<32x16xbf16>
    %cst_131 = arith.constant dense<0.000000e+00> : vector<32x32xf32>
    %176 = tpu.matmul %175, %173, %cst_131 {dimension_numbers = #tpu.dot_dimension_numbers<[1], [0], [0], [1], [0, 0, 1, 1], [], []>} : vector<32x16xbf16>, vector<16x32xbf16>, vector<32x32xf32> -> vector<32x32xf32>
    %177 = arith.addf %171, %176 : vector<32x32xf32>
    %c32_132 = arith.constant 32 : index
    %c0_133 = arith.constant 0 : index
    %178 = vector.load %arg4[%c32_132, %c0_133] : memref<288x32xbf16, #tpu.memory_space<vmem>>, vector<32x32xbf16>
    %c16_134 = arith.constant 16 : index
    %c0_135 = arith.constant 0 : index
    %179 = vector.load %arg8[%c16_134, %c0_135] : memref<144x32xbf16, #tpu.memory_space<vmem>>, vector<16x32xbf16>
    %cst_136 = arith.constant dense<0.000000e+00> : vector<32x16xf32>
    %180 = tpu.matmul %178, %170, %cst_136 {dimension_numbers = #tpu.dot_dimension_numbers<[1], [0], [0], [1], [0, 0, 1, 1], [], []>} : vector<32x32xbf16>, vector<32x16xbf16>, vector<32x16xf32> -> vector<32x16xf32>
    %181 = arith.truncf %180 : vector<32x16xf32> to vector<32x16xbf16>
    %cst_137 = arith.constant dense<0.000000e+00> : vector<32x32xf32>
    %182 = tpu.matmul %181, %179, %cst_137 {dimension_numbers = #tpu.dot_dimension_numbers<[1], [0], [0], [1], [0, 0, 1, 1], [], []>} : vector<32x16xbf16>, vector<16x32xbf16>, vector<32x32xf32> -> vector<32x32xf32>
    %183 = arith.addf %177, %182 : vector<32x32xf32>
    %c64_138 = arith.constant 64 : index
    %c0_139 = arith.constant 0 : index
    %184 = vector.load %arg4[%c64_138, %c0_139] : memref<288x32xbf16, #tpu.memory_space<vmem>>, vector<32x32xbf16>
    %c32_140 = arith.constant 32 : index
    %c0_141 = arith.constant 0 : index
    %185 = vector.load %arg8[%c32_140, %c0_141] : memref<144x32xbf16, #tpu.memory_space<vmem>>, vector<16x32xbf16>
    %cst_142 = arith.constant dense<0.000000e+00> : vector<32x16xf32>
    %186 = tpu.matmul %184, %170, %cst_142 {dimension_numbers = #tpu.dot_dimension_numbers<[1], [0], [0], [1], [0, 0, 1, 1], [], []>} : vector<32x32xbf16>, vector<32x16xbf16>, vector<32x16xf32> -> vector<32x16xf32>
    %187 = arith.truncf %186 : vector<32x16xf32> to vector<32x16xbf16>
    %cst_143 = arith.constant dense<0.000000e+00> : vector<32x32xf32>
    %188 = tpu.matmul %187, %185, %cst_143 {dimension_numbers = #tpu.dot_dimension_numbers<[1], [0], [0], [1], [0, 0, 1, 1], [], []>} : vector<32x16xbf16>, vector<16x32xbf16>, vector<32x32xf32> -> vector<32x32xf32>
    %189 = arith.addf %183, %188 : vector<32x32xf32>
    %c96_144 = arith.constant 96 : index
    %c0_145 = arith.constant 0 : index
    %190 = vector.load %arg4[%c96_144, %c0_145] : memref<288x32xbf16, #tpu.memory_space<vmem>>, vector<32x32xbf16>
    %c48_146 = arith.constant 48 : index
    %c0_147 = arith.constant 0 : index
    %191 = vector.load %arg8[%c48_146, %c0_147] : memref<144x32xbf16, #tpu.memory_space<vmem>>, vector<16x32xbf16>
    %cst_148 = arith.constant dense<0.000000e+00> : vector<32x16xf32>
    %192 = tpu.matmul %190, %170, %cst_148 {dimension_numbers = #tpu.dot_dimension_numbers<[1], [0], [0], [1], [0, 0, 1, 1], [], []>} : vector<32x32xbf16>, vector<32x16xbf16>, vector<32x16xf32> -> vector<32x16xf32>
    %193 = arith.truncf %192 : vector<32x16xf32> to vector<32x16xbf16>
    %cst_149 = arith.constant dense<0.000000e+00> : vector<32x32xf32>
    %194 = tpu.matmul %193, %191, %cst_149 {dimension_numbers = #tpu.dot_dimension_numbers<[1], [0], [0], [1], [0, 0, 1, 1], [], []>} : vector<32x16xbf16>, vector<16x32xbf16>, vector<32x32xf32> -> vector<32x32xf32>
    %195 = arith.addf %189, %194 : vector<32x32xf32>
    %c128_150 = arith.constant 128 : index
    %c0_151 = arith.constant 0 : index
    %196 = vector.load %arg4[%c128_150, %c0_151] : memref<288x32xbf16, #tpu.memory_space<vmem>>, vector<32x32xbf16>
    %c64_152 = arith.constant 64 : index
    %c0_153 = arith.constant 0 : index
    %197 = vector.load %arg8[%c64_152, %c0_153] : memref<144x32xbf16, #tpu.memory_space<vmem>>, vector<16x32xbf16>
    %cst_154 = arith.constant dense<0.000000e+00> : vector<32x16xf32>
    %198 = tpu.matmul %196, %170, %cst_154 {dimension_numbers = #tpu.dot_dimension_numbers<[1], [0], [0], [1], [0, 0, 1, 1], [], []>} : vector<32x32xbf16>, vector<32x16xbf16>, vector<32x16xf32> -> vector<32x16xf32>
    %199 = arith.truncf %198 : vector<32x16xf32> to vector<32x16xbf16>
    %cst_155 = arith.constant dense<0.000000e+00> : vector<32x32xf32>
    %200 = tpu.matmul %199, %197, %cst_155 {dimension_numbers = #tpu.dot_dimension_numbers<[1], [0], [0], [1], [0, 0, 1, 1], [], []>} : vector<32x16xbf16>, vector<16x32xbf16>, vector<32x32xf32> -> vector<32x32xf32>
    %201 = arith.addf %195, %200 : vector<32x32xf32>
    %c160_156 = arith.constant 160 : index
    %c0_157 = arith.constant 0 : index
    %202 = vector.load %arg4[%c160_156, %c0_157] : memref<288x32xbf16, #tpu.memory_space<vmem>>, vector<32x32xbf16>
    %c80 = arith.constant 80 : index
    %c0_158 = arith.constant 0 : index
    %203 = vector.load %arg8[%c80, %c0_158] : memref<144x32xbf16, #tpu.memory_space<vmem>>, vector<16x32xbf16>
    %cst_159 = arith.constant dense<0.000000e+00> : vector<32x16xf32>
    %204 = tpu.matmul %202, %170, %cst_159 {dimension_numbers = #tpu.dot_dimension_numbers<[1], [0], [0], [1], [0, 0, 1, 1], [], []>} : vector<32x32xbf16>, vector<32x16xbf16>, vector<32x16xf32> -> vector<32x16xf32>
    %205 = arith.truncf %204 : vector<32x16xf32> to vector<32x16xbf16>
    %cst_160 = arith.constant dense<0.000000e+00> : vector<32x32xf32>
    %206 = tpu.matmul %205, %203, %cst_160 {dimension_numbers = #tpu.dot_dimension_numbers<[1], [0], [0], [1], [0, 0, 1, 1], [], []>} : vector<32x16xbf16>, vector<16x32xbf16>, vector<32x32xf32> -> vector<32x32xf32>
    %207 = arith.addf %201, %206 : vector<32x32xf32>
    %c192_161 = arith.constant 192 : index
    %c0_162 = arith.constant 0 : index
    %208 = vector.load %arg4[%c192_161, %c0_162] : memref<288x32xbf16, #tpu.memory_space<vmem>>, vector<32x32xbf16>
    %c96_163 = arith.constant 96 : index
    %c0_164 = arith.constant 0 : index
    %209 = vector.load %arg8[%c96_163, %c0_164] : memref<144x32xbf16, #tpu.memory_space<vmem>>, vector<16x32xbf16>
    %cst_165 = arith.constant dense<0.000000e+00> : vector<32x16xf32>
    %210 = tpu.matmul %208, %170, %cst_165 {dimension_numbers = #tpu.dot_dimension_numbers<[1], [0], [0], [1], [0, 0, 1, 1], [], []>} : vector<32x32xbf16>, vector<32x16xbf16>, vector<32x16xf32> -> vector<32x16xf32>
    %211 = arith.truncf %210 : vector<32x16xf32> to vector<32x16xbf16>
    %cst_166 = arith.constant dense<0.000000e+00> : vector<32x32xf32>
    %212 = tpu.matmul %211, %209, %cst_166 {dimension_numbers = #tpu.dot_dimension_numbers<[1], [0], [0], [1], [0, 0, 1, 1], [], []>} : vector<32x16xbf16>, vector<16x32xbf16>, vector<32x32xf32> -> vector<32x32xf32>
    %213 = arith.addf %207, %212 : vector<32x32xf32>
    %c224_167 = arith.constant 224 : index
    %c0_168 = arith.constant 0 : index
    %214 = vector.load %arg4[%c224_167, %c0_168] : memref<288x32xbf16, #tpu.memory_space<vmem>>, vector<32x32xbf16>
    %c112 = arith.constant 112 : index
    %c0_169 = arith.constant 0 : index
    %215 = vector.load %arg8[%c112, %c0_169] : memref<144x32xbf16, #tpu.memory_space<vmem>>, vector<16x32xbf16>
    %cst_170 = arith.constant dense<0.000000e+00> : vector<32x16xf32>
    %216 = tpu.matmul %214, %170, %cst_170 {dimension_numbers = #tpu.dot_dimension_numbers<[1], [0], [0], [1], [0, 0, 1, 1], [], []>} : vector<32x32xbf16>, vector<32x16xbf16>, vector<32x16xf32> -> vector<32x16xf32>
    %217 = arith.truncf %216 : vector<32x16xf32> to vector<32x16xbf16>
    %cst_171 = arith.constant dense<0.000000e+00> : vector<32x32xf32>
    %218 = tpu.matmul %217, %215, %cst_171 {dimension_numbers = #tpu.dot_dimension_numbers<[1], [0], [0], [1], [0, 0, 1, 1], [], []>} : vector<32x16xbf16>, vector<16x32xbf16>, vector<32x32xf32> -> vector<32x32xf32>
    %219 = arith.addf %213, %218 : vector<32x32xf32>
    %c256_172 = arith.constant 256 : index
    %c0_173 = arith.constant 0 : index
    %220 = vector.load %arg4[%c256_172, %c0_173] : memref<288x32xbf16, #tpu.memory_space<vmem>>, vector<32x32xbf16>
    %c128_174 = arith.constant 128 : index
    %c0_175 = arith.constant 0 : index
    %221 = vector.load %arg8[%c128_174, %c0_175] : memref<144x32xbf16, #tpu.memory_space<vmem>>, vector<16x32xbf16>
    %cst_176 = arith.constant dense<0.000000e+00> : vector<32x16xf32>
    %222 = tpu.matmul %220, %170, %cst_176 {dimension_numbers = #tpu.dot_dimension_numbers<[1], [0], [0], [1], [0, 0, 1, 1], [], []>} : vector<32x32xbf16>, vector<32x16xbf16>, vector<32x16xf32> -> vector<32x16xf32>
    %223 = arith.truncf %222 : vector<32x16xf32> to vector<32x16xbf16>
    %cst_177 = arith.constant dense<0.000000e+00> : vector<32x32xf32>
    %224 = tpu.matmul %223, %221, %cst_177 {dimension_numbers = #tpu.dot_dimension_numbers<[1], [0], [0], [1], [0, 0, 1, 1], [], []>} : vector<32x16xbf16>, vector<16x32xbf16>, vector<32x32xf32> -> vector<32x32xf32>
    %225 = arith.addf %219, %224 : vector<32x32xf32>
    %c0_178 = arith.constant 0 : index
    %c0_179 = arith.constant 0 : index
    %226 = vector.load %arg9[%c0_178, %c0_179] : memref<1x32xf32, #tpu.memory_space<vmem>>, vector<1x32xf32>
    %227 = vector.broadcast %226 : vector<1x32xf32> to vector<32x32xf32>
    %228 = arith.mulf %225, %227 : vector<32x32xf32>
    %c0_180 = arith.constant 0 : index
    %c0_181 = arith.constant 0 : index
    %229 = vector.load %arg10[%c0_180, %c0_181] : memref<1x32xf32, #tpu.memory_space<vmem>>, vector<1x32xf32>
    %230 = vector.broadcast %229 : vector<1x32xf32> to vector<32x32xf32>
    %231 = arith.addf %228, %230 : vector<32x32xf32>
    %cst_182 = arith.constant 0.000000e+00 : f32
    %232 = vector.broadcast %cst_182 : f32 to vector<32x32xf32>
    %233 = arith.cmpf ogt, %231, %232 : vector<32x32xf32>
    %cst_183 = arith.constant 2.000000e-01 : f32
    %234 = vector.broadcast %cst_183 : f32 to vector<32x32xf32>
    %235 = arith.mulf %234, %231 : vector<32x32xf32>
    %236 = arith.select %233, %231, %235 : vector<32x32xi1>, vector<32x32xf32>
    %237 = arith.truncf %236 : vector<32x32xf32> to vector<32x32xbf16>
    %cst_184 = arith.constant 0.000000e+00 : f32
    %238 = vector.broadcast %cst_184 : f32 to vector<32x64xf32>
    %c0_185 = arith.constant 0 : index
    %c0_186 = arith.constant 0 : index
    %239 = vector.load %arg4[%c0_185, %c0_186] : memref<288x32xbf16, #tpu.memory_space<vmem>>, vector<32x32xbf16>
    %c0_187 = arith.constant 0 : index
    %c0_188 = arith.constant 0 : index
    %240 = vector.load %arg11[%c0_187, %c0_188] : memref<288x64xbf16, #tpu.memory_space<vmem>>, vector<32x64xbf16>
    %cst_189 = arith.constant dense<0.000000e+00> : vector<32x32xf32>
    %241 = tpu.matmul %239, %237, %cst_189 {dimension_numbers = #tpu.dot_dimension_numbers<[1], [0], [0], [1], [0, 0, 1, 1], [], []>} : vector<32x32xbf16>, vector<32x32xbf16>, vector<32x32xf32> -> vector<32x32xf32>
    %242 = arith.truncf %241 : vector<32x32xf32> to vector<32x32xbf16>
    %cst_190 = arith.constant dense<0.000000e+00> : vector<32x64xf32>
    %243 = tpu.matmul %242, %240, %cst_190 {dimension_numbers = #tpu.dot_dimension_numbers<[1], [0], [0], [1], [0, 0, 1, 1], [], []>} : vector<32x32xbf16>, vector<32x64xbf16>, vector<32x64xf32> -> vector<32x64xf32>
    %244 = arith.addf %238, %243 : vector<32x64xf32>
    %c32_191 = arith.constant 32 : index
    %c0_192 = arith.constant 0 : index
    %245 = vector.load %arg4[%c32_191, %c0_192] : memref<288x32xbf16, #tpu.memory_space<vmem>>, vector<32x32xbf16>
    %c32_193 = arith.constant 32 : index
    %c0_194 = arith.constant 0 : index
    %246 = vector.load %arg11[%c32_193, %c0_194] : memref<288x64xbf16, #tpu.memory_space<vmem>>, vector<32x64xbf16>
    %cst_195 = arith.constant dense<0.000000e+00> : vector<32x32xf32>
    %247 = tpu.matmul %245, %237, %cst_195 {dimension_numbers = #tpu.dot_dimension_numbers<[1], [0], [0], [1], [0, 0, 1, 1], [], []>} : vector<32x32xbf16>, vector<32x32xbf16>, vector<32x32xf32> -> vector<32x32xf32>
    %248 = arith.truncf %247 : vector<32x32xf32> to vector<32x32xbf16>
    %cst_196 = arith.constant dense<0.000000e+00> : vector<32x64xf32>
    %249 = tpu.matmul %248, %246, %cst_196 {dimension_numbers = #tpu.dot_dimension_numbers<[1], [0], [0], [1], [0, 0, 1, 1], [], []>} : vector<32x32xbf16>, vector<32x64xbf16>, vector<32x64xf32> -> vector<32x64xf32>
    %250 = arith.addf %244, %249 : vector<32x64xf32>
    %c64_197 = arith.constant 64 : index
    %c0_198 = arith.constant 0 : index
    %251 = vector.load %arg4[%c64_197, %c0_198] : memref<288x32xbf16, #tpu.memory_space<vmem>>, vector<32x32xbf16>
    %c64_199 = arith.constant 64 : index
    %c0_200 = arith.constant 0 : index
    %252 = vector.load %arg11[%c64_199, %c0_200] : memref<288x64xbf16, #tpu.memory_space<vmem>>, vector<32x64xbf16>
    %cst_201 = arith.constant dense<0.000000e+00> : vector<32x32xf32>
    %253 = tpu.matmul %251, %237, %cst_201 {dimension_numbers = #tpu.dot_dimension_numbers<[1], [0], [0], [1], [0, 0, 1, 1], [], []>} : vector<32x32xbf16>, vector<32x32xbf16>, vector<32x32xf32> -> vector<32x32xf32>
    %254 = arith.truncf %253 : vector<32x32xf32> to vector<32x32xbf16>
    %cst_202 = arith.constant dense<0.000000e+00> : vector<32x64xf32>
    %255 = tpu.matmul %254, %252, %cst_202 {dimension_numbers = #tpu.dot_dimension_numbers<[1], [0], [0], [1], [0, 0, 1, 1], [], []>} : vector<32x32xbf16>, vector<32x64xbf16>, vector<32x64xf32> -> vector<32x64xf32>
    %256 = arith.addf %250, %255 : vector<32x64xf32>
    %c96_203 = arith.constant 96 : index
    %c0_204 = arith.constant 0 : index
    %257 = vector.load %arg4[%c96_203, %c0_204] : memref<288x32xbf16, #tpu.memory_space<vmem>>, vector<32x32xbf16>
    %c96_205 = arith.constant 96 : index
    %c0_206 = arith.constant 0 : index
    %258 = vector.load %arg11[%c96_205, %c0_206] : memref<288x64xbf16, #tpu.memory_space<vmem>>, vector<32x64xbf16>
    %cst_207 = arith.constant dense<0.000000e+00> : vector<32x32xf32>
    %259 = tpu.matmul %257, %237, %cst_207 {dimension_numbers = #tpu.dot_dimension_numbers<[1], [0], [0], [1], [0, 0, 1, 1], [], []>} : vector<32x32xbf16>, vector<32x32xbf16>, vector<32x32xf32> -> vector<32x32xf32>
    %260 = arith.truncf %259 : vector<32x32xf32> to vector<32x32xbf16>
    %cst_208 = arith.constant dense<0.000000e+00> : vector<32x64xf32>
    %261 = tpu.matmul %260, %258, %cst_208 {dimension_numbers = #tpu.dot_dimension_numbers<[1], [0], [0], [1], [0, 0, 1, 1], [], []>} : vector<32x32xbf16>, vector<32x64xbf16>, vector<32x64xf32> -> vector<32x64xf32>
    %262 = arith.addf %256, %261 : vector<32x64xf32>
    %c128_209 = arith.constant 128 : index
    %c0_210 = arith.constant 0 : index
    %263 = vector.load %arg4[%c128_209, %c0_210] : memref<288x32xbf16, #tpu.memory_space<vmem>>, vector<32x32xbf16>
    %c128_211 = arith.constant 128 : index
    %c0_212 = arith.constant 0 : index
    %264 = vector.load %arg11[%c128_211, %c0_212] : memref<288x64xbf16, #tpu.memory_space<vmem>>, vector<32x64xbf16>
    %cst_213 = arith.constant dense<0.000000e+00> : vector<32x32xf32>
    %265 = tpu.matmul %263, %237, %cst_213 {dimension_numbers = #tpu.dot_dimension_numbers<[1], [0], [0], [1], [0, 0, 1, 1], [], []>} : vector<32x32xbf16>, vector<32x32xbf16>, vector<32x32xf32> -> vector<32x32xf32>
    %266 = arith.truncf %265 : vector<32x32xf32> to vector<32x32xbf16>
    %cst_214 = arith.constant dense<0.000000e+00> : vector<32x64xf32>
    %267 = tpu.matmul %266, %264, %cst_214 {dimension_numbers = #tpu.dot_dimension_numbers<[1], [0], [0], [1], [0, 0, 1, 1], [], []>} : vector<32x32xbf16>, vector<32x64xbf16>, vector<32x64xf32> -> vector<32x64xf32>
    %268 = arith.addf %262, %267 : vector<32x64xf32>
    %c160_215 = arith.constant 160 : index
    %c0_216 = arith.constant 0 : index
    %269 = vector.load %arg4[%c160_215, %c0_216] : memref<288x32xbf16, #tpu.memory_space<vmem>>, vector<32x32xbf16>
    %c160_217 = arith.constant 160 : index
    %c0_218 = arith.constant 0 : index
    %270 = vector.load %arg11[%c160_217, %c0_218] : memref<288x64xbf16, #tpu.memory_space<vmem>>, vector<32x64xbf16>
    %cst_219 = arith.constant dense<0.000000e+00> : vector<32x32xf32>
    %271 = tpu.matmul %269, %237, %cst_219 {dimension_numbers = #tpu.dot_dimension_numbers<[1], [0], [0], [1], [0, 0, 1, 1], [], []>} : vector<32x32xbf16>, vector<32x32xbf16>, vector<32x32xf32> -> vector<32x32xf32>
    %272 = arith.truncf %271 : vector<32x32xf32> to vector<32x32xbf16>
    %cst_220 = arith.constant dense<0.000000e+00> : vector<32x64xf32>
    %273 = tpu.matmul %272, %270, %cst_220 {dimension_numbers = #tpu.dot_dimension_numbers<[1], [0], [0], [1], [0, 0, 1, 1], [], []>} : vector<32x32xbf16>, vector<32x64xbf16>, vector<32x64xf32> -> vector<32x64xf32>
    %274 = arith.addf %268, %273 : vector<32x64xf32>
    %c192_221 = arith.constant 192 : index
    %c0_222 = arith.constant 0 : index
    %275 = vector.load %arg4[%c192_221, %c0_222] : memref<288x32xbf16, #tpu.memory_space<vmem>>, vector<32x32xbf16>
    %c192_223 = arith.constant 192 : index
    %c0_224 = arith.constant 0 : index
    %276 = vector.load %arg11[%c192_223, %c0_224] : memref<288x64xbf16, #tpu.memory_space<vmem>>, vector<32x64xbf16>
    %cst_225 = arith.constant dense<0.000000e+00> : vector<32x32xf32>
    %277 = tpu.matmul %275, %237, %cst_225 {dimension_numbers = #tpu.dot_dimension_numbers<[1], [0], [0], [1], [0, 0, 1, 1], [], []>} : vector<32x32xbf16>, vector<32x32xbf16>, vector<32x32xf32> -> vector<32x32xf32>
    %278 = arith.truncf %277 : vector<32x32xf32> to vector<32x32xbf16>
    %cst_226 = arith.constant dense<0.000000e+00> : vector<32x64xf32>
    %279 = tpu.matmul %278, %276, %cst_226 {dimension_numbers = #tpu.dot_dimension_numbers<[1], [0], [0], [1], [0, 0, 1, 1], [], []>} : vector<32x32xbf16>, vector<32x64xbf16>, vector<32x64xf32> -> vector<32x64xf32>
    %280 = arith.addf %274, %279 : vector<32x64xf32>
    %c224_227 = arith.constant 224 : index
    %c0_228 = arith.constant 0 : index
    %281 = vector.load %arg4[%c224_227, %c0_228] : memref<288x32xbf16, #tpu.memory_space<vmem>>, vector<32x32xbf16>
    %c224_229 = arith.constant 224 : index
    %c0_230 = arith.constant 0 : index
    %282 = vector.load %arg11[%c224_229, %c0_230] : memref<288x64xbf16, #tpu.memory_space<vmem>>, vector<32x64xbf16>
    %cst_231 = arith.constant dense<0.000000e+00> : vector<32x32xf32>
    %283 = tpu.matmul %281, %237, %cst_231 {dimension_numbers = #tpu.dot_dimension_numbers<[1], [0], [0], [1], [0, 0, 1, 1], [], []>} : vector<32x32xbf16>, vector<32x32xbf16>, vector<32x32xf32> -> vector<32x32xf32>
    %284 = arith.truncf %283 : vector<32x32xf32> to vector<32x32xbf16>
    %cst_232 = arith.constant dense<0.000000e+00> : vector<32x64xf32>
    %285 = tpu.matmul %284, %282, %cst_232 {dimension_numbers = #tpu.dot_dimension_numbers<[1], [0], [0], [1], [0, 0, 1, 1], [], []>} : vector<32x32xbf16>, vector<32x64xbf16>, vector<32x64xf32> -> vector<32x64xf32>
    %286 = arith.addf %280, %285 : vector<32x64xf32>
    %c256_233 = arith.constant 256 : index
    %c0_234 = arith.constant 0 : index
    %287 = vector.load %arg4[%c256_233, %c0_234] : memref<288x32xbf16, #tpu.memory_space<vmem>>, vector<32x32xbf16>
    %c256_235 = arith.constant 256 : index
    %c0_236 = arith.constant 0 : index
    %288 = vector.load %arg11[%c256_235, %c0_236] : memref<288x64xbf16, #tpu.memory_space<vmem>>, vector<32x64xbf16>
    %cst_237 = arith.constant dense<0.000000e+00> : vector<32x32xf32>
    %289 = tpu.matmul %287, %237, %cst_237 {dimension_numbers = #tpu.dot_dimension_numbers<[1], [0], [0], [1], [0, 0, 1, 1], [], []>} : vector<32x32xbf16>, vector<32x32xbf16>, vector<32x32xf32> -> vector<32x32xf32>
    %290 = arith.truncf %289 : vector<32x32xf32> to vector<32x32xbf16>
    %cst_238 = arith.constant dense<0.000000e+00> : vector<32x64xf32>
    %291 = tpu.matmul %290, %288, %cst_238 {dimension_numbers = #tpu.dot_dimension_numbers<[1], [0], [0], [1], [0, 0, 1, 1], [], []>} : vector<32x32xbf16>, vector<32x64xbf16>, vector<32x64xf32> -> vector<32x64xf32>
    %292 = arith.addf %286, %291 : vector<32x64xf32>
    %c0_239 = arith.constant 0 : index
    %c0_240 = arith.constant 0 : index
    %293 = vector.load %arg12[%c0_239, %c0_240] : memref<1x64xf32, #tpu.memory_space<vmem>>, vector<1x64xf32>
    %294 = vector.broadcast %293 : vector<1x64xf32> to vector<32x64xf32>
    %295 = arith.mulf %292, %294 : vector<32x64xf32>
    %c0_241 = arith.constant 0 : index
    %c0_242 = arith.constant 0 : index
    %296 = vector.load %arg13[%c0_241, %c0_242] : memref<1x64xf32, #tpu.memory_space<vmem>>, vector<1x64xf32>
    %297 = vector.broadcast %296 : vector<1x64xf32> to vector<32x64xf32>
    %298 = arith.addf %295, %297 : vector<32x64xf32>
    %cst_243 = arith.constant 0.000000e+00 : f32
    %299 = vector.broadcast %cst_243 : f32 to vector<32x64xf32>
    %300 = arith.cmpf ogt, %298, %299 : vector<32x64xf32>
    %cst_244 = arith.constant 2.000000e-01 : f32
    %301 = vector.broadcast %cst_244 : f32 to vector<32x64xf32>
    %302 = arith.mulf %301, %298 : vector<32x64xf32>
    %303 = arith.select %300, %298, %302 : vector<32x64xi1>, vector<32x64xf32>
    %c0_245 = arith.constant 0 : index
    %c0_246 = arith.constant 0 : index
    %304 = vector.load %arg1[%c0_245, %c0_246] : memref<2x16xbf16, #tpu.memory_space<vmem>>, vector<2x16xbf16>
    %c0_247 = arith.constant 0 : index
    %c0_248 = arith.constant 0 : index
    %305 = vector.load %arg14[%c0_247, %c0_248] : memref<16x1024xbf16, #tpu.memory_space<vmem>>, vector<16x1024xbf16>
    %cst_249 = arith.constant dense<0.000000e+00> : vector<2x1024xf32>
    %306 = tpu.matmul %304, %305, %cst_249 {dimension_numbers = #tpu.dot_dimension_numbers<[1], [0], [0], [1], [0, 0, 1, 1], [], []>} : vector<2x16xbf16>, vector<16x1024xbf16>, vector<2x1024xf32> -> vector<2x1024xf32>
    %c0_250 = arith.constant 0 : index
    %c0_251 = arith.constant 0 : index
    %307 = vector.load %arg15[%c0_250, %c0_251] : memref<1x1024xf32, #tpu.memory_space<vmem>>, vector<1x1024xf32>
    %308 = vector.broadcast %307 : vector<1x1024xf32> to vector<2x1024xf32>
    %309 = arith.addf %306, %308 : vector<2x1024xf32>
    %cst_252 = arith.constant 0.000000e+00 : f32
    %310 = vector.broadcast %cst_252 : f32 to vector<2x1024xf32>
    %311 = arith.maximumf %309, %310 : vector<2x1024xf32>
    %c0_253 = arith.constant 0 : index
    %c0_254 = arith.constant 0 : index
    %312 = vector.load %arg16[%c0_253, %c0_254] : memref<32x64xf32, #tpu.memory_space<vmem>>, vector<32x64xf32>
    %313 = arith.mulf %303, %312 : vector<32x64xf32>
    %c0_255 = arith.constant 0 : index
    %c0_256 = arith.constant 0 : index
    %314 = vector.load %arg18[%c0_255, %c0_256] : memref<2x32xf32, #tpu.memory_space<vmem>>, vector<2x32xf32>
    %cst_257 = arith.constant dense<0.000000e+00> : vector<2x64xf32>
    %315 = tpu.matmul %314, %313, %cst_257 {dimension_numbers = #tpu.dot_dimension_numbers<[1], [0], [0], [1], [0, 0, 1, 1], [], []>} : vector<2x32xf32>, vector<32x64xf32>, vector<2x64xf32> -> vector<2x64xf32>
    %cst_258 = arith.constant dense<0.000000e+00> : vector<2xf32>
    %316 = vector.multi_reduction <add>, %315, %cst_258 [1] : vector<2x64xf32> to vector<2xf32>
    %317 = vector.shape_cast %316 : vector<2xf32> to vector<2x1xf32>
    %c0_259 = arith.constant 0 : index
    %c0_260 = arith.constant 0 : index
    %318 = vector.load %arg17[%c0_259, %c0_260] : memref<1x1024xf32, #tpu.memory_space<vmem>>, vector<1x1024xf32>
    %319 = vector.broadcast %318 : vector<1x1024xf32> to vector<2x1024xf32>
    %320 = arith.mulf %311, %319 : vector<2x1024xf32>
    %cst_261 = arith.constant dense<0.000000e+00> : vector<2xf32>
    %321 = vector.multi_reduction <add>, %320, %cst_261 [1] : vector<2x1024xf32> to vector<2xf32>
    %322 = vector.shape_cast %321 : vector<2xf32> to vector<2x1xf32>
    %323 = arith.addf %317, %322 : vector<2x1xf32>
    %324 = arith.negf %323 : vector<2x1xf32>
    %325 = math.exp %324 : vector<2x1xf32>
    %cst_262 = arith.constant 1.000000e+00 : f32
    %326 = vector.broadcast %cst_262 : f32 to vector<2x1xf32>
    %327 = arith.addf %326, %325 : vector<2x1xf32>
    %328 = arith.divf %326, %327 : vector<2x1xf32>
    %c0_263 = arith.constant 0 : index
    %c0_264 = arith.constant 0 : index
    %329 = vector.load %arg19[%c0_263, %c0_264] : memref<2x1xf32, #tpu.memory_space<vmem>>, vector<2x1xf32>
    tpu.vector_store %arg19[%c0_263, %c0_264], %328 {strides = array<i32>} : memref<2x1xf32, #tpu.memory_space<vmem>>, vector<2x1xf32>,
    return
  }
}

</mosaic_0001>

<llo_original>
// kernel: stage1_discriminator.1
$region0: #{stage1_discriminator.1}
  #allocation0 [shape = 'u32[]', space=smem, size = 0x4, offset = 0x4, fixed_abs, tag = 'smem constant byte address 0x4 - core index']
  #allocation1 [shape = 'u32[144,128]{1,0:T(1,128)}', space=vmem, size = 0x12000, scoped, tag = 'internal scratch']
  %s0 = inlined_call_operand.vmem [shape: bf16[128,3], index: 0, kind: input, shape index: {}]
  %s1 = inlined_call_operand.vmem [shape: bf16[2,16], index: 1, kind: input, shape index: {}]
  %s2 = inlined_call_operand.vmem [shape: bf16[512,128], index: 2, kind: input, shape index: {}]
  %s3 = inlined_call_operand.vmem [shape: bf16[48,8], index: 3, kind: input, shape index: {}]
  %s4 = inlined_call_operand.vmem [shape: bf16[288,32], index: 4, kind: input, shape index: {}]
  %s5 = inlined_call_operand.vmem [shape: bf16[72,16], index: 5, kind: input, shape index: {}]
  %s6 = inlined_call_operand.vmem [shape: f32[1,16], index: 6, kind: input, shape index: {}]
  %s7 = inlined_call_operand.vmem [shape: f32[1,16], index: 7, kind: input, shape index: {}]
  %s8 = inlined_call_operand.vmem [shape: bf16[144,32], index: 8, kind: input, shape index: {}]
  %s9 = inlined_call_operand.vmem [shape: f32[1,32], index: 9, kind: input, shape index: {}]
  %s10 = inlined_call_operand.vmem [shape: f32[1,32], index: 10, kind: input, shape index: {}]
  %s11 = inlined_call_operand.vmem [shape: bf16[288,64], index: 11, kind: input, shape index: {}]
  %s12 = inlined_call_operand.vmem [shape: f32[1,64], index: 12, kind: input, shape index: {}]
  %s13 = inlined_call_operand.vmem [shape: f32[1,64], index: 13, kind: input, shape index: {}]
  %s14 = inlined_call_operand.vmem [shape: bf16[16,1024], index: 14, kind: input, shape index: {}]
  %s15 = inlined_call_operand.vmem [shape: f32[1,1024], index: 15, kind: input, shape index: {}]
  %s16 = inlined_call_operand.vmem [shape: f32[32,64], index: 16, kind: input, shape index: {}]
  %s17 = inlined_call_operand.vmem [shape: f32[1,1024], index: 17, kind: input, shape index: {}]
  %s18 = inlined_call_operand.vmem [shape: f32[2,32], index: 18, kind: input, shape index: {}]
  %s19 = inlined_call_operand.vmem [shape: f32[2,1], index: 19, kind: output, shape index: {}]
  %s20 = sld [smem:[#allocation0]]
  $region86: #{stage1_discriminator.1} parent=0
    _
  %s22 = ssub.s32 1, %s20
  %s23 = scalar_select 0, %s22, %s20
  // Predicated region
  $region2: #{stage1_discriminator.1} parent=0 // pred_check
    _
  $region3: #{stage1_discriminator.1} parent=0 // pred_check_branch
    %25 = sbr.rel (0) target = $region5
  $region4: #{stage1_discriminator.1} parent=0 // pred_region
    _
  $region5: #{stage1_discriminator.1} parent=0 // pred_fallthru
    _
  // Predicated region
  $region6: #{stage1_discriminator.1} parent=0 // pred_check
    _
  $region7: #{stage1_discriminator.1} parent=0 // pred_check_branch
    %27 = sbr.rel (0) target = $region9
  $region8: #{stage1_discriminator.1} parent=0 // pred_region
    _
  $region9: #{stage1_discriminator.1} parent=0 // pred_fallthru
    _
  // Predicated region
  $region10: #{stage1_discriminator.1} parent=0 // pred_check
    _
  $region11: #{stage1_discriminator.1} parent=0 // pred_check_branch
    %29 = sbr.rel (0) target = $region13
  $region12: #{stage1_discriminator.1} parent=0 // pred_region
    _
  $region13: #{stage1_discriminator.1} parent=0 // pred_fallthru
    _
  // Predicated region
  $region14: #{stage1_discriminator.1} parent=0 // pred_check
    _
  $region15: #{stage1_discriminator.1} parent=0 // pred_check_branch
    %31 = sbr.rel (0) target = $region17
  $region16: #{stage1_discriminator.1} parent=0 // pred_region
    _
  $region17: #{stage1_discriminator.1} parent=0 // pred_fallthru
    _
  // Predicated region
  $region18: #{stage1_discriminator.1} parent=0 // pred_check
    _
  $region19: #{stage1_discriminator.1} parent=0 // pred_check_branch
    %33 = sbr.rel (0) target = $region21
  $region20: #{stage1_discriminator.1} parent=0 // pred_region
    _
  $region21: #{stage1_discriminator.1} parent=0 // pred_fallthru
    _
  // Predicated region
  $region22: #{stage1_discriminator.1} parent=0 // pred_check
    _
  $region23: #{stage1_discriminator.1} parent=0 // pred_check_branch
    %35 = sbr.rel (0) target = $region25
  $region24: #{stage1_discriminator.1} parent=0 // pred_region
    _
  $region25: #{stage1_discriminator.1} parent=0 // pred_fallthru
    _
  // Predicated region
  $region26: #{stage1_discriminator.1} parent=0 // pred_check
    _
  $region27: #{stage1_discriminator.1} parent=0 // pred_check_branch
    %37 = sbr.rel (0) target = $region29
  $region28: #{stage1_discriminator.1} parent=0 // pred_region
    _
  $region29: #{stage1_discriminator.1} parent=0 // pred_fallthru
    _
  // Predicated region
  $region30: #{stage1_discriminator.1} parent=0 // pred_check
    _
  $region31: #{stage1_discriminator.1} parent=0 // pred_check_branch
    %39 = sbr.rel (0) target = $region33
  $region32: #{stage1_discriminator.1} parent=0 // pred_region
    _
  $region33: #{stage1_discriminator.1} parent=0 // pred_fallthru
    _
  // Predicated region
  $region34: #{stage1_discriminator.1} parent=0 // pred_check
    _
  $region35: #{stage1_discriminator.1} parent=0 // pred_check_branch
    %41 = sbr.rel (0) target = $region37
  $region36: #{stage1_discriminator.1} parent=0 // pred_region
    _
  $region37: #{stage1_discriminator.1} parent=0 // pred_fallthru
    _
  // Predicated region
  $region38: #{stage1_discriminator.1} parent=0 // pred_check
    _
  $region39: #{stage1_discriminator.1} parent=0 // pred_check_branch
    %43 = sbr.rel (0) target = $region41
  $region40: #{stage1_discriminator.1} parent=0 // pred_region
    _
  $region41: #{stage1_discriminator.1} parent=0 // pred_fallthru
    _
  // Predicated region
  $region42: #{stage1_discriminator.1} parent=0 // pred_check
    _
  $region43: #{stage1_discriminator.1} parent=0 // pred_check_branch
    %45 = sbr.rel (0) target = $region45
  $region44: #{stage1_discriminator.1} parent=0 // pred_region
    _
  $region45: #{stage1_discriminator.1} parent=0 // pred_fallthru
    _
  // Predicated region
  $region46: #{stage1_discriminator.1} parent=0 // pred_check
    _
  $region47: #{stage1_discriminator.1} parent=0 // pred_check_branch
    %47 = sbr.rel (0) target = $region49
  $region48: #{stage1_discriminator.1} parent=0 // pred_region
    _
  $region49: #{stage1_discriminator.1} parent=0 // pred_fallthru
    _
  // Predicated region
  $region50: #{stage1_discriminator.1} parent=0 // pred_check
    _
  $region51: #{stage1_discriminator.1} parent=0 // pred_check_branch
    %49 = sbr.rel (0) target = $region53
  $region52: #{stage1_discriminator.1} parent=0 // pred_region
    _
  $region53: #{stage1_discriminator.1} parent=0 // pred_fallthru
    _
  // Predicated region
  $region54: #{stage1_discriminator.1} parent=0 // pred_check
    _
  $region55: #{stage1_discriminator.1} parent=0 // pred_check_branch
    %51 = sbr.rel (0) target = $region57
  $region56: #{stage1_discriminator.1} parent=0 // pred_region
    _
  $region57: #{stage1_discriminator.1} parent=0 // pred_fallthru
    _
  // Predicated region
  $region58: #{stage1_discriminator.1} parent=0 // pred_check
    _
  $region59: #{stage1_discriminator.1} parent=0 // pred_check_branch
    %53 = sbr.rel (0) target = $region61
  $region60: #{stage1_discriminator.1} parent=0 // pred_region
    _
  $region61: #{stage1_discriminator.1} parent=0 // pred_fallthru
    _
  // Predicated region
  $region62: #{stage1_discriminator.1} parent=0 // pred_check
    _
  $region63: #{stage1_discriminator.1} parent=0 // pred_check_branch
    %55 = sbr.rel (0) target = $region65
  $region64: #{stage1_discriminator.1} parent=0 // pred_region
    _
  $region65: #{stage1_discriminator.1} parent=0 // pred_fallthru
    _
  // Predicated region
  $region66: #{stage1_discriminator.1} parent=0 // pred_check
    _
  $region67: #{stage1_discriminator.1} parent=0 // pred_check_branch
    %57 = sbr.rel (0) target = $region69
  $region68: #{stage1_discriminator.1} parent=0 // pred_region
    _
  $region69: #{stage1_discriminator.1} parent=0 // pred_fallthru
    _
  // Predicated region
  $region70: #{stage1_discriminator.1} parent=0 // pred_check
    _
  $region71: #{stage1_discriminator.1} parent=0 // pred_check_branch
    %59 = sbr.rel (0) target = $region73
  $region72: #{stage1_discriminator.1} parent=0 // pred_region
    _
  $region73: #{stage1_discriminator.1} parent=0 // pred_fallthru
    _
  // Predicated region
  $region74: #{stage1_discriminator.1} parent=0 // pred_check
    _
  $region75: #{stage1_discriminator.1} parent=0 // pred_check_branch
    %61 = sbr.rel (0) target = $region77
  $region76: #{stage1_discriminator.1} parent=0 // pred_region
    _
  $region77: #{stage1_discriminator.1} parent=0 // pred_fallthru
    _
  %v63 = vld [vmem:[%s0] sm:$0xf]
  %v64 = vld [vmem:[%s0 + $0x4] sm:$0xf]
  %v65 = vld [vmem:[%s0 + $0x8] sm:$0xf]
  %v66 = vld [vmem:[%s0 + $0xc] sm:$0xf]
  %v67 = vld [vmem:[%s0 + $0x10] sm:$0xf]
  %v68 = vld [vmem:[%s0 + $0x14] sm:$0xf]
  %v69 = vld [vmem:[%s0 + $0x18] sm:$0xf]
  %v70 = vld [vmem:[%s0 + $0x1c] sm:$0xf]
  %v71 = vld [vmem:[%s0 + $0x20] sm:$0xf]
  %v72 = vld [vmem:[%s0 + $0x24] sm:$0xf]
  %v73 = vld [vmem:[%s0 + $0x28] sm:$0xf]
  %v74 = vld [vmem:[%s0 + $0x2c] sm:$0xf]
  %v75 = vld [vmem:[%s0 + $0x30] sm:$0xf]
  %v76 = vld [vmem:[%s0 + $0x34] sm:$0xf]
  %v77 = vld [vmem:[%s0 + $0x38] sm:$0xf]
  %v78 = vld [vmem:[%s0 + $0x3c] sm:$0xf]
  %v79 = vld [vmem:[%s2] sm:$0xf]
  %v80 = vld [vmem:[%s2 + $0x4] sm:$0xf]
  %v81 = vld [vmem:[%s2 + $0x8] sm:$0xf]
  %v82 = vld [vmem:[%s2 + $0xc] sm:$0xf]
  %v83 = vld [vmem:[%s3] sm:$0x3]
  %v88 = vunpack.c.l.b16 %v79
  %v89 = vunpack.c.l.b16 %v80
  %v90 = vunpack.c.l.b16 %v81
  %v91 = vunpack.c.l.b16 %v82
  %v92 = vpack.c.b16 %v89, %v88
  %v93 = vpack.c.b16 %v91, %v90
  %v112 = vunpack.c.l.b16 %v63
  %v113 = vunpack.c.l.b16 %v64
  %v114 = vunpack.c.l.b16 %v65
  %v115 = vunpack.c.l.b16 %v66
  %v116 = vunpack.c.l.b16 %v67
  %v117 = vunpack.c.l.b16 %v68
  %v118 = vunpack.c.l.b16 %v69
  %v119 = vunpack.c.l.b16 %v70
  %v120 = vunpack.c.l.b16 %v71
  %v121 = vunpack.c.l.b16 %v72
  %v122 = vunpack.c.l.b16 %v73
  %v123 = vunpack.c.l.b16 %v74
  %v124 = vunpack.c.l.b16 %v75
  %v125 = vunpack.c.l.b16 %v76
  %v126 = vunpack.c.l.b16 %v77
  %v127 = vunpack.c.l.b16 %v78
  %v128 = vpack.c.b16 %v113, %v112
  %v129 = vpack.c.b16 %v115, %v114
  %v130 = vpack.c.b16 %v117, %v116
  %v131 = vpack.c.b16 %v119, %v118
  %v132 = vpack.c.b16 %v121, %v120
  %v133 = vpack.c.b16 %v123, %v122
  %v134 = vpack.c.b16 %v125, %v124
  %v135 = vpack.c.b16 %v127, %v126
  %144 = vmatprep.subr.bf16.mxu0 0
  %145 = vmatpush1.bf16.msra.mxu0 %v128
  %146 = vmatprep.subr.bf16.mxu0 0
  %147 = vmatpush1.bf16.msra.mxu0 %v129
  %148 = vmatprep.subr.bf16.mxu0 0
  %149 = vmatpush1.bf16.msra.mxu0 %v130
  %150 = vmatprep.subr.bf16.mxu0 0
  %151 = vmatpush1.bf16.msra.mxu0 %v131
  %152 = vmatprep.subr.bf16.mxu0 0
  %153 = vmatpush1.bf16.msra.mxu0 %v132
  %154 = vmatprep.subr.bf16.mxu0 0
  %155 = vmatpush1.bf16.msra.mxu0 %v133
  %156 = vmatprep.subr.bf16.mxu0 0
  %157 = vmatpush1.bf16.msra.mxu0 %v134
  %158 = vmatprep.subr.bf16.mxu0 0
  %159 = vmatpush1.bf16.msra.mxu0 %v135
  %160 = vmatprep.subr.bf16.mxu0 0
  %161 = vmatpush1.bf16.msra.mxu0 0
  %162 = vmatprep.subr.bf16.mxu0 0
  %163 = vmatpush1.bf16.msra.mxu0 0
  %164 = vmatprep.subr.bf16.mxu0 0
  %165 = vmatpush1.bf16.msra.mxu0 0
  %166 = vmatprep.subr.bf16.mxu0 0
  %167 = vmatpush1.bf16.msra.mxu0 0
  %168 = vmatprep.subr.bf16.mxu0 0
  %169 = vmatpush1.bf16.msra.mxu0 0
  %170 = vmatprep.subr.bf16.mxu0 0
  %171 = vmatpush1.bf16.msra.mxu0 0
  %172 = vmatprep.subr.bf16.mxu0 0
  %173 = vmatpush1.bf16.msra.mxu0 0
  %174 = vmatprep.subr.bf16.mxu0 0
  %175 = vmatpush1.bf16.msra.mxu0 0
  %176 = vmatprep.mubr.bf16.mxu0 0
  %177 = vmatmul.mubr.bf16.gmra.mrb[0].mxu0 %v92
  %v178 = vpop.f32.mrb[0].mxu0
  %v179 = vadd.f32 0.0, %v178
  %v180 = vpop.f32.mrb[0].mxu0
  %v181 = vpop.f32.mrb[0].mxu0
  %v182 = vadd.f32 0.0, %v181
  %v183 = vpop.f32.mrb[0].mxu0
  %184 = vmatprep.mubr.bf16.mxu0 0
  %185 = vmatmul.mubr.bf16.gmra.mrb[0].mxu0 %v93
  %v186 = vpop.f32.mrb[0].mxu0
  %v187 = vadd.f32 0.0, %v186
  %v188 = vpop.f32.mrb[0].mxu0
  %v189 = vpop.f32.mrb[0].mxu0
  %v190 = vadd.f32 0.0, %v189
  %v191 = vpop.f32.mrb[0].mxu0
  %192 = vdwg.mxu0
  %v193 = vpack.c.bf16 %v182, %v179
  %v194 = vpack.c.bf16 %v190, %v187
  %v195 = vld [vmem:[%s2 + $0x10] sm:$0xf]
  %v196 = vld [vmem:[%s2 + $0x14] sm:$0xf]
  %v197 = vld [vmem:[%s2 + $0x18] sm:$0xf]
  %v198 = vld [vmem:[%s2 + $0x1c] sm:$0xf]
  %v199 = vld [vmem:[%s3] sm:$0x6]
  %v204 = vunpack.c.l.b16 %v195
  %v205 = vunpack.c.l.b16 %v196
  %v206 = vunpack.c.l.b16 %v197
  %v207 = vunpack.c.l.b16 %v198
  %v208 = vpack.c.b16 %v205, %v204
  %v209 = vpack.c.b16 %v207, %v206
  %212 = vmatprep.subr.bf16.mxu0 0
  %213 = vmatpush1.bf16.msra.mxu0 %v128
  %214 = vmatprep.subr.bf16.mxu0 0
  %215 = vmatpush1.bf16.msra.mxu0 %v129
  %216 = vmatprep.subr.bf16.mxu0 0
  %217 = vmatpush1.bf16.msra.mxu0 %v130
  %218 = vmatprep.subr.bf16.mxu0 0
  %219 = vmatpush1.bf16.msra.mxu0 %v131
  %220 = vmatprep.subr.bf16.mxu0 0
  %221 = vmatpush1.bf16.msra.mxu0 %v132
  %222 = vmatprep.subr.bf16.mxu0 0
  %223 = vmatpush1.bf16.msra.mxu0 %v133
  %224 = vmatprep.subr.bf16.mxu0 0
  %225 = vmatpush1.bf16.msra.mxu0 %v134
  %226 = vmatprep.subr.bf16.mxu0 0
  %227 = vmatpush1.bf16.msra.mxu0 %v135
  %228 = vmatprep.subr.bf16.mxu0 0
  %229 = vmatpush1.bf16.msra.mxu0 0
  %230 = vmatprep.subr.bf16.mxu0 0
  %231 = vmatpush1.bf16.msra.mxu0 0
  %232 = vmatprep.subr.bf16.mxu0 0
  %233 = vmatpush1.bf16.msra.mxu0 0
  %234 = vmatprep.subr.bf16.mxu0 0
  %235 = vmatpush1.bf16.msra.mxu0 0
  %236 = vmatprep.subr.bf16.mxu0 0
  %237 = vmatpush1.bf16.msra.mxu0 0
  %238 = vmatprep.subr.bf16.mxu0 0
  %239 = vmatpush1.bf16.msra.mxu0 0
  %240 = vmatprep.subr.bf16.mxu0 0
  %241 = vmatpush1.bf16.msra.mxu0 0
  %242 = vmatprep.subr.bf16.mxu0 0
  %243 = vmatpush1.bf16.msra.mxu0 0
  %244 = vmatprep.mubr.bf16.mxu0 0
  %245 = vmatmul.mubr.bf16.gmra.mrb[0].mxu0 %v208
  %v246 = vpop.f32.mrb[0].mxu0
  %v247 = vadd.f32 0.0, %v246
  %v248 = vpop.f32.mrb[0].mxu0
  %v249 = vpop.f32.mrb[0].mxu0
  %v250 = vadd.f32 0.0, %v249
  %v251 = vpop.f32.mrb[0].mxu0
  %252 = vmatprep.mubr.bf16.mxu0 0
  %253 = vmatmul.mubr.bf16.gmra.mrb[0].mxu0 %v209
  %v254 = vpop.f32.mrb[0].mxu0
  %v255 = vadd.f32 0.0, %v254
  %v256 = vpop.f32.mrb[0].mxu0
  %v257 = vpop.f32.mrb[0].mxu0
  %v258 = vadd.f32 0.0, %v257
  %v259 = vpop.f32.mrb[0].mxu0
  %260 = vdwg.mxu0
  %v261 = vpack.c.bf16 %v250, %v247
  %v262 = vpack.c.bf16 %v258, %v255
  %v264 = vunpack.c.l.b16 %v199
  %v265 = vpack.c.b16 %v264, %v264
  %v267 = vshrl.u32 %v265, 16
  %v269 = vrot.slane %v267, 1
  %v270 = vshll.u32 %v265, 16
  %v272 = vrot.slane %v270, 2
  %v273 = vor.u32 %v269, %v272
  %vm274 = vcmask 23552
  %v276 = vsel %vm274, %v261, 0
  %v279 = vsel %vm274, %v262, 0
  %vm281 = vcmask 1040384
  %vm282 = vcmask 1041408
  %v283 = vsel %vm281, 4294967295, 65535
  %v284 = vsel %vm282, %v283, 0
  %v286 = vand.u32 %v273, %v284
  %288 = vmatprep.subr.bf16.mxu0 0
  %289 = vmatpush1.bf16.msra.mxu0 %v286
  %290 = vmatprep.subr.bf16.mxu0 0
  %291 = vmatpush1.bf16.msra.mxu0 0
  %292 = vmatprep.subr.bf16.mxu0 0
  %293 = vmatpush1.bf16.msra.mxu0 0
  %294 = vmatprep.subr.bf16.mxu0 0
  %295 = vmatpush1.bf16.msra.mxu0 0
  %296 = vmatprep.subr.bf16.mxu0 0
  %297 = vmatpush1.bf16.msra.mxu0 0
  %298 = vmatprep.subr.bf16.mxu0 0
  %299 = vmatpush1.bf16.msra.mxu0 0
  %300 = vmatprep.subr.bf16.mxu0 0
  %301 = vmatpush1.bf16.msra.mxu0 0
  %302 = vmatprep.subr.bf16.mxu0 0
  %303 = vmatpush1.bf16.msra.mxu0 0
  %304 = vmatprep.subr.bf16.mxu0 0
  %305 = vmatpush1.bf16.msra.mxu0 0
  %306 = vmatprep.subr.bf16.mxu0 0
  %307 = vmatpush1.bf16.msra.mxu0 0
  %308 = vmatprep.subr.bf16.mxu0 0
  %309 = vmatpush1.bf16.msra.mxu0 0
  %310 = vmatprep.subr.bf16.mxu0 0
  %311 = vmatpush1.bf16.msra.mxu0 0
  %312 = vmatprep.subr.bf16.mxu0 0
  %313 = vmatpush1.bf16.msra.mxu0 0
  %314 = vmatprep.subr.bf16.mxu0 0
  %315 = vmatpush1.bf16.msra.mxu0 0
  %316 = vmatprep.subr.bf16.mxu0 0
  %317 = vmatpush1.bf16.msra.mxu0 0
  %318 = vmatprep.subr.bf16.mxu0 0
  %319 = vmatpush1.bf16.msra.mxu0 0
  %320 = vmatprep.mubr.bf16.mxu0 0
  %321 = vmatmul.mubr.bf16.gmra.mrb[0].mxu0 %v276
  %v322 = vpop.f32.mrb[0].mxu0
  %v323 = vadd.f32 0.0, %v322
  %v324 = vpop.f32.mrb[0].mxu0
  %v325 = vpop.f32.mrb[0].mxu0
  %v326 = vadd.f32 0.0, %v325
  %v327 = vpop.f32.mrb[0].mxu0
  %328 = vmatprep.mubr.bf16.mxu0 0
  %329 = vmatmul.mubr.bf16.gmra.mrb[0].mxu0 %v279
  %v330 = vpop.f32.mrb[0].mxu0
  %v331 = vadd.f32 0.0, %v330
  %v332 = vpop.f32.mrb[0].mxu0
  %v333 = vpop.f32.mrb[0].mxu0
  %v334 = vadd.f32 0.0, %v333
  %v335 = vpop.f32.mrb[0].mxu0
  %336 = vdwg.mxu0
  %v338 = vsel %vm274, %v193, 0
  %v341 = vsel %vm274, %v194, 0
  %v344 = vand.u32 %v83, %v284
  %346 = vmatprep.subr.bf16.mxu0 0
  %347 = vmatpush1.bf16.msra.mxu0 %v344
  %348 = vmatprep.subr.bf16.mxu0 0
  %349 = vmatpush1.bf16.msra.mxu0 0
  %350 = vmatprep.subr.bf16.mxu0 0
  %351 = vmatpush1.bf16.msra.mxu0 0
  %352 = vmatprep.subr.bf16.mxu0 0
  %353 = vmatpush1.bf16.msra.mxu0 0
  %354 = vmatprep.subr.bf16.mxu0 0
  %355 = vmatpush1.bf16.msra.mxu0 0
  %356 = vmatprep.subr.bf16.mxu0 0
  %357 = vmatpush1.bf16.msra.mxu0 0
  %358 = vmatprep.subr.bf16.mxu0 0
  %359 = vmatpush1.bf16.msra.mxu0 0
  %360 = vmatprep.subr.bf16.mxu0 0
  %361 = vmatpush1.bf16.msra.mxu0 0
  %362 = vmatprep.subr.bf16.mxu0 0
  %363 = vmatpush1.bf16.msra.mxu0 0
  %364 = vmatprep.subr.bf16.mxu0 0
  %365 = vmatpush1.bf16.msra.mxu0 0
  %366 = vmatprep.subr.bf16.mxu0 0
  %367 = vmatpush1.bf16.msra.mxu0 0
  %368 = vmatprep.subr.bf16.mxu0 0
  %369 = vmatpush1.bf16.msra.mxu0 0
  %370 = vmatprep.subr.bf16.mxu0 0
  %371 = vmatpush1.bf16.msra.mxu0 0
  %372 = vmatprep.subr.bf16.mxu0 0
  %373 = vmatpush1.bf16.msra.mxu0 0
  %374 = vmatprep.subr.bf16.mxu0 0
  %375 = vmatpush1.bf16.msra.mxu0 0
  %376 = vmatprep.subr.bf16.mxu0 0
  %377 = vmatpush1.bf16.msra.mxu0 0
  %378 = vmatprep.mubr.bf16.mxu0 0
  %379 = vmatmul.mubr.bf16.gmra.mrb[0].mxu0 %v338
  %v380 = vpop.f32.mrb[0].mxu0
  %v381 = vadd.f32 %v323, %v380
  %v382 = vpop.f32.mrb[0].mxu0
  %v383 = vpop.f32.mrb[0].mxu0
  %v384 = vadd.f32 %v326, %v383
  %v385 = vpop.f32.mrb[0].mxu0
  %386 = vmatprep.mubr.bf16.mxu0 0
  %387 = vmatmul.mubr.bf16.gmra.mrb[0].mxu0 %v341
  %v388 = vpop.f32.mrb[0].mxu0
  %v389 = vadd.f32 %v331, %v388
  %v390 = vpop.f32.mrb[0].mxu0
  %v391 = vpop.f32.mrb[0].mxu0
  %v392 = vadd.f32 %v334, %v391
  %v393 = vpop.f32.mrb[0].mxu0
  %394 = vdwg.mxu0
  %v395 = vld [vmem:[%s2 + $0x20] sm:$0xf]
  %v396 = vld [vmem:[%s2 + $0x24] sm:$0xf]
  %v397 = vld [vmem:[%s2 + $0x28] sm:$0xf]
  %v398 = vld [vmem:[%s2 + $0x2c] sm:$0xf]
  %v399 = vld [vmem:[%s3] sm:$0x8]
  %v400 = vld [vmem:[%s3 + $0x4] sm:$0x1]
  %v405 = vunpack.c.l.b16 %v395
  %v406 = vunpack.c.l.b16 %v396
  %v407 = vunpack.c.l.b16 %v397
  %v408 = vunpack.c.l.b16 %v398
  %v409 = vpack.c.b16 %v406, %v405
  %v410 = vpack.c.b16 %v408, %v407
  %413 = vmatprep.subr.bf16.mxu0 0
  %414 = vmatpush1.bf16.msra.mxu0 %v128
  %415 = vmatprep.subr.bf16.mxu0 0
  %416 = vmatpush1.bf16.msra.mxu0 %v129
  %417 = vmatprep.subr.bf16.mxu0 0
  %418 = vmatpush1.bf16.msra.mxu0 %v130
  %419 = vmatprep.subr.bf16.mxu0 0
  %420 = vmatpush1.bf16.msra.mxu0 %v131
  %421 = vmatprep.subr.bf16.mxu0 0
  %422 = vmatpush1.bf16.msra.mxu0 %v132
  %423 = vmatprep.subr.bf16.mxu0 0
  %424 = vmatpush1.bf16.msra.mxu0 %v133
  %425 = vmatprep.subr.bf16.mxu0 0
  %426 = vmatpush1.bf16.msra.mxu0 %v134
  %427 = vmatprep.subr.bf16.mxu0 0
  %428 = vmatpush1.bf16.msra.mxu0 %v135
  %429 = vmatprep.subr.bf16.mxu0 0
  %430 = vmatpush1.bf16.msra.mxu0 0
  %431 = vmatprep.subr.bf16.mxu0 0
  %432 = vmatpush1.bf16.msra.mxu0 0
  %433 = vmatprep.subr.bf16.mxu0 0
  %434 = vmatpush1.bf16.msra.mxu0 0
  %435 = vmatprep.subr.bf16.mxu0 0
  %436 = vmatpush1.bf16.msra.mxu0 0
  %437 = vmatprep.subr.bf16.mxu0 0
  %438 = vmatpush1.bf16.msra.mxu0 0
  %439 = vmatprep.subr.bf16.mxu0 0
  %440 = vmatpush1.bf16.msra.mxu0 0
  %441 = vmatprep.subr.bf16.mxu0 0
  %442 = vmatpush1.bf16.msra.mxu0 0
  %443 = vmatprep.subr.bf16.mxu0 0
  %444 = vmatpush1.bf16.msra.mxu0 0
  %445 = vmatprep.mubr.bf16.mxu0 0
  %446 = vmatmul.mubr.bf16.gmra.mrb[0].mxu0 %v409
  %v447 = vpop.f32.mrb[0].mxu0
  %v448 = vadd.f32 0.0, %v447
  %v449 = vpop.f32.mrb[0].mxu0
  %v450 = vpop.f32.mrb[0].mxu0
  %v451 = vadd.f32 0.0, %v450
  %v452 = vpop.f32.mrb[0].mxu0
  %453 = vmatprep.mubr.bf16.mxu0 0
  %454 = vmatmul.mubr.bf16.gmra.mrb[0].mxu0 %v410
  %v455 = vpop.f32.mrb[0].mxu0
  %v456 = vadd.f32 0.0, %v455
  %v457 = vpop.f32.mrb[0].mxu0
  %v458 = vpop.f32.mrb[0].mxu0
  %v459 = vadd.f32 0.0, %v458
  %v460 = vpop.f32.mrb[0].mxu0
  %461 = vdwg.mxu0
  %v462 = vpack.c.bf16 %v451, %v448
  %v463 = vpack.c.bf16 %v459, %v456
  %v466 = vunpack.c.l.b16 %v399
  %v467 = vunpack.c.l.b16 %v400
  %v468 = vpack.c.b16 %v467, %v466
  %v469 = vrot.slane %v468, 3
  %v471 = vsel %vm274, %v462, 0
  %v474 = vsel %vm274, %v463, 0
  %v477 = vand.u32 %v469, %v284
  %479 = vmatprep.subr.bf16.mxu0 0
  %480 = vmatpush1.bf16.msra.mxu0 %v477
  %481 = vmatprep.subr.bf16.mxu0 0
  %482 = vmatpush1.bf16.msra.mxu0 0
  %483 = vmatprep.subr.bf16.mxu0 0
  %484 = vmatpush1.bf16.msra.mxu0 0
  %485 = vmatprep.subr.bf16.mxu0 0
  %486 = vmatpush1.bf16.msra.mxu0 0
  %487 = vmatprep.subr.bf16.mxu0 0
  %488 = vmatpush1.bf16.msra.mxu0 0
  %489 = vmatprep.subr.bf16.mxu0 0
  %490 = vmatpush1.bf16.msra.mxu0 0
  %491 = vmatprep.subr.bf16.mxu0 0
  %492 = vmatpush1.bf16.msra.mxu0 0
  %493 = vmatprep.subr.bf16.mxu0 0
  %494 = vmatpush1.bf16.msra.mxu0 0
  %495 = vmatprep.subr.bf16.mxu0 0
  %496 = vmatpush1.bf16.msra.mxu0 0
  %497 = vmatprep.subr.bf16.mxu0 0
  %498 = vmatpush1.bf16.msra.mxu0 0
  %499 = vmatprep.subr.bf16.mxu0 0
  %500 = vmatpush1.bf16.msra.mxu0 0
  %501 = vmatprep.subr.bf16.mxu0 0
  %502 = vmatpush1.bf16.msra.mxu0 0
  %503 = vmatprep.subr.bf16.mxu0 0
  %504 = vmatpush1.bf16.msra.mxu0 0
  %505 = vmatprep.subr.bf16.mxu0 0
  %506 = vmatpush1.bf16.msra.mxu0 0
  %507 = vmatprep.subr.bf16.mxu0 0
  %508 = vmatpush1.bf16.msra.mxu0 0
  %509 = vmatprep.subr.bf16.mxu0 0
  %510 = vmatpush1.bf16.msra.mxu0 0
  %511 = vmatprep.mubr.bf16.mxu0 0
  %512 = vmatmul.mubr.bf16.gmra.mrb[0].mxu0 %v471
  %v513 = vpop.f32.mrb[0].mxu0
  %v514 = vadd.f32 0.0, %v513
  %v515 = vpop.f32.mrb[0].mxu0
  %v516 = vpop.f32.mrb[0].mxu0
  %v517 = vadd.f32 0.0, %v516
  %v518 = vpop.f32.mrb[0].mxu0
  %519 = vmatprep.mubr.bf16.mxu0 0
  %520 = vmatmul.mubr.bf16.gmra.mrb[0].mxu0 %v474
  %v521 = vpop.f32.mrb[0].mxu0
  %v522 = vadd.f32 0.0, %v521
  %v523 = vpop.f32.mrb[0].mxu0
  %v524 = vpop.f32.mrb[0].mxu0
  %v525 = vadd.f32 0.0, %v524
  %v526 = vpop.f32.mrb[0].mxu0
  %527 = vdwg.mxu0
  %v528 = vadd.f32 %v381, %v514
  %v529 = vadd.f32 %v384, %v517
  %v530 = vadd.f32 %v389, %v522
  %v531 = vadd.f32 %v392, %v525
  %v532 = vld [vmem:[%s2 + $0x30] sm:$0xf]
  %v533 = vld [vmem:[%s2 + $0x34] sm:$0xf]
  %v534 = vld [vmem:[%s2 + $0x38] sm:$0xf]
  %v535 = vld [vmem:[%s2 + $0x3c] sm:$0xf]
  %v536 = vld [vmem:[%s3 + $0x4] sm:$0x3]
  %v541 = vunpack.c.l.b16 %v532
  %v542 = vunpack.c.l.b16 %v533
  %v543 = vunpack.c.l.b16 %v534
  %v544 = vunpack.c.l.b16 %v535
  %v545 = vpack.c.b16 %v542, %v541
  %v546 = vpack.c.b16 %v544, %v543
  %549 = vmatprep.subr.bf16.mxu0 0
  %550 = vmatpush1.bf16.msra.mxu0 %v128
  %551 = vmatprep.subr.bf16.mxu0 0
  %552 = vmatpush1.bf16.msra.mxu0 %v129
  %553 = vmatprep.subr.bf16.mxu0 0
  %554 = vmatpush1.bf16.msra.mxu0 %v130
  %555 = vmatprep.subr.bf16.mxu0 0
  %556 = vmatpush1.bf16.msra.mxu0 %v131
  %557 = vmatprep.subr.bf16.mxu0 0
  %558 = vmatpush1.bf16.msra.mxu0 %v132
  %559 = vmatprep.subr.bf16.mxu0 0
  %560 = vmatpush1.bf16.msra.mxu0 %v133
  %561 = vmatprep.subr.bf16.mxu0 0
  %562 = vmatpush1.bf16.msra.mxu0 %v134
  %563 = vmatprep.subr.bf16.mxu0 0
  %564 = vmatpush1.bf16.msra.mxu0 %v135
  %565 = vmatprep.subr.bf16.mxu0 0
  %566 = vmatpush1.bf16.msra.mxu0 0
  %567 = vmatprep.subr.bf16.mxu0 0
  %568 = vmatpush1.bf16.msra.mxu0 0
  %569 = vmatprep.subr.bf16.mxu0 0
  %570 = vmatpush1.bf16.msra.mxu0 0
  %571 = vmatprep.subr.bf16.mxu0 0
  %572 = vmatpush1.bf16.msra.mxu0 0
  %573 = vmatprep.subr.bf16.mxu0 0
  %574 = vmatpush1.bf16.msra.mxu0 0
  %575 = vmatprep.subr.bf16.mxu0 0
  %576 = vmatpush1.bf16.msra.mxu0 0
  %577 = vmatprep.subr.bf16.mxu0 0
  %578 = vmatpush1.bf16.msra.mxu0 0
  %579 = vmatprep.subr.bf16.mxu0 0
  %580 = vmatpush1.bf16.msra.mxu0 0
  %581 = vmatprep.mubr.bf16.mxu0 0
  %582 = vmatmul.mubr.bf16.gmra.mrb[0].mxu0 %v545
  %v583 = vpop.f32.mrb[0].mxu0
  %v584 = vadd.f32 0.0, %v583
  %v585 = vpop.f32.mrb[0].mxu0
  %v586 = vpop.f32.mrb[0].mxu0
  %v587 = vadd.f32 0.0, %v586
  %v588 = vpop.f32.mrb[0].mxu0
  %589 = vmatprep.mubr.bf16.mxu0 0
  %590 = vmatmul.mubr.bf16.gmra.mrb[0].mxu0 %v546
  %v591 = vpop.f32.mrb[0].mxu0
  %v592 = vadd.f32 0.0, %v591
  %v593 = vpop.f32.mrb[0].mxu0
  %v594 = vpop.f32.mrb[0].mxu0
  %v595 = vadd.f32 0.0, %v594
  %v596 = vpop.f32.mrb[0].mxu0
  %597 = vdwg.mxu0
  %v598 = vpack.c.bf16 %v587, %v584
  %v599 = vpack.c.bf16 %v595, %v592
  %v601 = vunpack.c.l.b16 %v536
  %v602 = vpack.c.b16 %v601, %v601
  %v604 = vshrl.u32 %v602, 16
  %v606 = vshll.u32 %v602, 16
  %v608 = vrot.slane %v606, 1
  %v609 = vor.u32 %v604, %v608
  %v611 = vsel %vm274, %v598, 0
  %v614 = vsel %vm274, %v599, 0
  %v617 = vand.u32 %v609, %v284
  %619 = vmatprep.subr.bf16.mxu0 0
  %620 = vmatpush1.bf16.msra.mxu0 %v617
  %621 = vmatprep.subr.bf16.mxu0 0
  %622 = vmatpush1.bf16.msra.mxu0 0
  %623 = vmatprep.subr.bf16.mxu0 0
  %624 = vmatpush1.bf16.msra.mxu0 0
  %625 = vmatprep.subr.bf16.mxu0 0
  %626 = vmatpush1.bf16.msra.mxu0 0
  %627 = vmatprep.subr.bf16.mxu0 0
  %628 = vmatpush1.bf16.msra.mxu0 0
  %629 = vmatprep.subr.bf16.mxu0 0
  %630 = vmatpush1.bf16.msra.mxu0 0
  %631 = vmatprep.subr.bf16.mxu0 0
  %632 = vmatpush1.bf16.msra.mxu0 0
  %633 = vmatprep.subr.bf16.mxu0 0
  %634 = vmatpush1.bf16.msra.mxu0 0
  %635 = vmatprep.subr.bf16.mxu0 0
  %636 = vmatpush1.bf16.msra.mxu0 0
  %637 = vmatprep.subr.bf16.mxu0 0
  %638 = vmatpush1.bf16.msra.mxu0 0
  %639 = vmatprep.subr.bf16.mxu0 0
  %640 = vmatpush1.bf16.msra.mxu0 0
  %641 = vmatprep.subr.bf16.mxu0 0
  %642 = vmatpush1.bf16.msra.mxu0 0
  %643 = vmatprep.subr.bf16.mxu0 0
  %644 = vmatpush1.bf16.msra.mxu0 0
  %645 = vmatprep.subr.bf16.mxu0 0
  %646 = vmatpush1.bf16.msra.mxu0 0
  %647 = vmatprep.subr.bf16.mxu0 0
  %648 = vmatpush1.bf16.msra.mxu0 0
  %649 = vmatprep.subr.bf16.mxu0 0
  %650 = vmatpush1.bf16.msra.mxu0 0
  %651 = vmatprep.mubr.bf16.mxu0 0
  %652 = vmatmul.mubr.bf16.gmra.mrb[0].mxu0 %v611
  %v653 = vpop.f32.mrb[0].mxu0
  %v654 = vadd.f32 0.0, %v653
  %v655 = vpop.f32.mrb[0].mxu0
  %v656 = vpop.f32.mrb[0].mxu0
  %v657 = vadd.f32 0.0, %v656
  %v658 = vpop.f32.mrb[0].mxu0
  %659 = vmatprep.mubr.bf16.mxu0 0
  %660 = vmatmul.mubr.bf16.gmra.mrb[0].mxu0 %v614
  %v661 = vpop.f32.mrb[0].mxu0
  %v662 = vadd.f32 0.0, %v661
  %v663 = vpop.f32.mrb[0].mxu0
  %v664 = vpop.f32.mrb[0].mxu0
  %v665 = vadd.f32 0.0, %v664
  %v666 = vpop.f32.mrb[0].mxu0
  %667 = vdwg.mxu0
  %v668 = vadd.f32 %v528, %v654
  %v669 = vadd.f32 %v529, %v657
  %v670 = vadd.f32 %v530, %v662
  %v671 = vadd.f32 %v531, %v665
  %v672 = vld [vmem:[%s2 + $0x40] sm:$0xf]
  %v673 = vld [vmem:[%s2 + $0x44] sm:$0xf]
  %v674 = vld [vmem:[%s2 + $0x48] sm:$0xf]
  %v675 = vld [vmem:[%s2 + $0x4c] sm:$0xf]
  %v676 = vld [vmem:[%s3 + $0x4] sm:$0xc]
  %v681 = vunpack.c.l.b16 %v672
  %v682 = vunpack.c.l.b16 %v673
  %v683 = vunpack.c.l.b16 %v674
  %v684 = vunpack.c.l.b16 %v675
  %v685 = vpack.c.b16 %v682, %v681
  %v686 = vpack.c.b16 %v684, %v683
  %689 = vmatprep.subr.bf16.mxu0 0
  %690 = vmatpush1.bf16.msra.mxu0 %v128
  %691 = vmatprep.subr.bf16.mxu0 0
  %692 = vmatpush1.bf16.msra.mxu0 %v129
  %693 = vmatprep.subr.bf16.mxu0 0
  %694 = vmatpush1.bf16.msra.mxu0 %v130
  %695 = vmatprep.subr.bf16.mxu0 0
  %696 = vmatpush1.bf16.msra.mxu0 %v131
  %697 = vmatprep.subr.bf16.mxu0 0
  %698 = vmatpush1.bf16.msra.mxu0 %v132
  %699 = vmatprep.subr.bf16.mxu0 0
  %700 = vmatpush1.bf16.msra.mxu0 %v133
  %701 = vmatprep.subr.bf16.mxu0 0
  %702 = vmatpush1.bf16.msra.mxu0 %v134
  %703 = vmatprep.subr.bf16.mxu0 0
  %704 = vmatpush1.bf16.msra.mxu0 %v135
  %705 = vmatprep.subr.bf16.mxu0 0
  %706 = vmatpush1.bf16.msra.mxu0 0
  %707 = vmatprep.subr.bf16.mxu0 0
  %708 = vmatpush1.bf16.msra.mxu0 0
  %709 = vmatprep.subr.bf16.mxu0 0
  %710 = vmatpush1.bf16.msra.mxu0 0
  %711 = vmatprep.subr.bf16.mxu0 0
  %712 = vmatpush1.bf16.msra.mxu0 0
  %713 = vmatprep.subr.bf16.mxu0 0
  %714 = vmatpush1.bf16.msra.mxu0 0
  %715 = vmatprep.subr.bf16.mxu0 0
  %716 = vmatpush1.bf16.msra.mxu0 0
  %717 = vmatprep.subr.bf16.mxu0 0
  %718 = vmatpush1.bf16.msra.mxu0 0
  %719 = vmatprep.subr.bf16.mxu0 0
  %720 = vmatpush1.bf16.msra.mxu0 0
  %721 = vmatprep.mubr.bf16.mxu0 0
  %722 = vmatmul.mubr.bf16.gmra.mrb[0].mxu0 %v685
  %v723 = vpop.f32.mrb[0].mxu0
  %v724 = vadd.f32 0.0, %v723
  %v725 = vpop.f32.mrb[0].mxu0
  %v726 = vpop.f32.mrb[0].mxu0
  %v727 = vadd.f32 0.0, %v726
  %v728 = vpop.f32.mrb[0].mxu0
  %729 = vmatprep.mubr.bf16.mxu0 0
  %730 = vmatmul.mubr.bf16.gmra.mrb[0].mxu0 %v686
  %v731 = vpop.f32.mrb[0].mxu0
  %v732 = vadd.f32 0.0, %v731
  %v733 = vpop.f32.mrb[0].mxu0
  %v734 = vpop.f32.mrb[0].mxu0
  %v735 = vadd.f32 0.0, %v734
  %v736 = vpop.f32.mrb[0].mxu0
  %737 = vdwg.mxu0
  %v738 = vpack.c.bf16 %v727, %v724
  %v739 = vpack.c.bf16 %v735, %v732
  %v741 = vunpack.c.l.b16 %v676
  %v742 = vpack.c.b16 %v741, %v741
  %v743 = vrot.slane %v742, 2
  %v745 = vsel %vm274, %v738, 0
  %v748 = vsel %vm274, %v739, 0
  %v751 = vand.u32 %v743, %v284
  %753 = vmatprep.subr.bf16.mxu0 0
  %754 = vmatpush1.bf16.msra.mxu0 %v751
  %755 = vmatprep.subr.bf16.mxu0 0
  %756 = vmatpush1.bf16.msra.mxu0 0
  %757 = vmatprep.subr.bf16.mxu0 0
  %758 = vmatpush1.bf16.msra.mxu0 0
  %759 = vmatprep.subr.bf16.mxu0 0
  %760 = vmatpush1.bf16.msra.mxu0 0
  %761 = vmatprep.subr.bf16.mxu0 0
  %762 = vmatpush1.bf16.msra.mxu0 0
  %763 = vmatprep.subr.bf16.mxu0 0
  %764 = vmatpush1.bf16.msra.mxu0 0
  %765 = vmatprep.subr.bf16.mxu0 0
  %766 = vmatpush1.bf16.msra.mxu0 0
  %767 = vmatprep.subr.bf16.mxu0 0
  %768 = vmatpush1.bf16.msra.mxu0 0
  %769 = vmatprep.subr.bf16.mxu0 0
  %770 = vmatpush1.bf16.msra.mxu0 0
  %771 = vmatprep.subr.bf16.mxu0 0
  %772 = vmatpush1.bf16.msra.mxu0 0
  %773 = vmatprep.subr.bf16.mxu0 0
  %774 = vmatpush1.bf16.msra.mxu0 0
  %775 = vmatprep.subr.bf16.mxu0 0
  %776 = vmatpush1.bf16.msra.mxu0 0
  %777 = vmatprep.subr.bf16.mxu0 0
  %778 = vmatpush1.bf16.msra.mxu0 0
  %779 = vmatprep.subr.bf16.mxu0 0
  %780 = vmatpush1.bf16.msra.mxu0 0
  %781 = vmatprep.subr.bf16.mxu0 0
  %782 = vmatpush1.bf16.msra.mxu0 0
  %783 = vmatprep.subr.bf16.mxu0 0
  %784 = vmatpush1.bf16.msra.mxu0 0
  %785 = vmatprep.mubr.bf16.mxu0 0
  %786 = vmatmul.mubr.bf16.gmra.mrb[0].mxu0 %v745
  %v787 = vpop.f32.mrb[0].mxu0
  %v788 = vadd.f32 0.0, %v787
  %v789 = vpop.f32.mrb[0].mxu0
  %v790 = vpop.f32.mrb[0].mxu0
  %v791 = vadd.f32 0.0, %v790
  %v792 = vpop.f32.mrb[0].mxu0
  %793 = vmatprep.mubr.bf16.mxu0 0
  %794 = vmatmul.mubr.bf16.gmra.mrb[0].mxu0 %v748
  %v795 = vpop.f32.mrb[0].mxu0
  %v796 = vadd.f32 0.0, %v795
  %v797 = vpop.f32.mrb[0].mxu0
  %v798 = vpop.f32.mrb[0].mxu0
  %v799 = vadd.f32 0.0, %v798
  %v800 = vpop.f32.mrb[0].mxu0
  %801 = vdwg.mxu0
  %v802 = vadd.f32 %v668, %v788
  %v803 = vadd.f32 %v669, %v791
  %v804 = vadd.f32 %v670, %v796
  %v805 = vadd.f32 %v671, %v799
  %v806 = vld [vmem:[%s2 + $0x50] sm:$0xf]
  %v807 = vld [vmem:[%s2 + $0x54] sm:$0xf]
  %v808 = vld [vmem:[%s2 + $0x58] sm:$0xf]
  %v809 = vld [vmem:[%s2 + $0x5c] sm:$0xf]
  %v810 = vld [vmem:[%s3 + $0x4] sm:$0x8]
  %v811 = vld [vmem:[%s3 + $0x8] sm:$0x1]
  %v816 = vunpack.c.l.b16 %v806
  %v817 = vunpack.c.l.b16 %v807
  %v818 = vunpack.c.l.b16 %v808
  %v819 = vunpack.c.l.b16 %v809
  %v820 = vpack.c.b16 %v817, %v816
  %v821 = vpack.c.b16 %v819, %v818
  %824 = vmatprep.subr.bf16.mxu0 0
  %825 = vmatpush1.bf16.msra.mxu0 %v128
  %826 = vmatprep.subr.bf16.mxu0 0
  %827 = vmatpush1.bf16.msra.mxu0 %v129
  %828 = vmatprep.subr.bf16.mxu0 0
  %829 = vmatpush1.bf16.msra.mxu0 %v130
  %830 = vmatprep.subr.bf16.mxu0 0
  %831 = vmatpush1.bf16.msra.mxu0 %v131
  %832 = vmatprep.subr.bf16.mxu0 0
  %833 = vmatpush1.bf16.msra.mxu0 %v132
  %834 = vmatprep.subr.bf16.mxu0 0
  %835 = vmatpush1.bf16.msra.mxu0 %v133
  %836 = vmatprep.subr.bf16.mxu0 0
  %837 = vmatpush1.bf16.msra.mxu0 %v134
  %838 = vmatprep.subr.bf16.mxu0 0
  %839 = vmatpush1.bf16.msra.mxu0 %v135
  %840 = vmatprep.subr.bf16.mxu0 0
  %841 = vmatpush1.bf16.msra.mxu0 0
  %842 = vmatprep.subr.bf16.mxu0 0
  %843 = vmatpush1.bf16.msra.mxu0 0
  %844 = vmatprep.subr.bf16.mxu0 0
  %845 = vmatpush1.bf16.msra.mxu0 0
  %846 = vmatprep.subr.bf16.mxu0 0
  %847 = vmatpush1.bf16.msra.mxu0 0
  %848 = vmatprep.subr.bf16.mxu0 0
  %849 = vmatpush1.bf16.msra.mxu0 0
  %850 = vmatprep.subr.bf16.mxu0 0
  %851 = vmatpush1.bf16.msra.mxu0 0
  %852 = vmatprep.subr.bf16.mxu0 0
  %853 = vmatpush1.bf16.msra.mxu0 0
  %854 = vmatprep.subr.bf16.mxu0 0
  %855 = vmatpush1.bf16.msra.mxu0 0
  %856 = vmatprep.mubr.bf16.mxu0 0
  %857 = vmatmul.mubr.bf16.gmra.mrb[0].mxu0 %v820
  %v858 = vpop.f32.mrb[0].mxu0
  %v859 = vadd.f32 0.0, %v858
  %v860 = vpop.f32.mrb[0].mxu0
  %v861 = vpop.f32.mrb[0].mxu0
  %v862 = vadd.f32 0.0, %v861
  %v863 = vpop.f32.mrb[0].mxu0
  %864 = vmatprep.mubr.bf16.mxu0 0
  %865 = vmatmul.mubr.bf16.gmra.mrb[0].mxu0 %v821
  %v866 = vpop.f32.mrb[0].mxu0
  %v867 = vadd.f32 0.0, %v866
  %v868 = vpop.f32.mrb[0].mxu0
  %v869 = vpop.f32.mrb[0].mxu0
  %v870 = vadd.f32 0.0, %v869
  %v871 = vpop.f32.mrb[0].mxu0
  %872 = vdwg.mxu0
  %v873 = vpack.c.bf16 %v862, %v859
  %v874 = vpack.c.bf16 %v870, %v867
  %v877 = vunpack.c.l.b16 %v810
  %v878 = vunpack.c.l.b16 %v811
  %v879 = vpack.c.b16 %v878, %v877
  %v881 = vshrl.u32 %v879, 16
  %v883 = vrot.slane %v881, 3
  %v884 = vshll.u32 %v879, 16
  %v886 = vrot.slane %v884, 4
  %v887 = vor.u32 %v883, %v886
  %v889 = vsel %vm274, %v873, 0
  %v892 = vsel %vm274, %v874, 0
  %v895 = vand.u32 %v887, %v284
  %897 = vmatprep.subr.bf16.mxu0 0
  %898 = vmatpush1.bf16.msra.mxu0 %v895
  %899 = vmatprep.subr.bf16.mxu0 0
  %900 = vmatpush1.bf16.msra.mxu0 0
  %901 = vmatprep.subr.bf16.mxu0 0
  %902 = vmatpush1.bf16.msra.mxu0 0
  %903 = vmatprep.subr.bf16.mxu0 0
  %904 = vmatpush1.bf16.msra.mxu0 0
  %905 = vmatprep.subr.bf16.mxu0 0
  %906 = vmatpush1.bf16.msra.mxu0 0
  %907 = vmatprep.subr.bf16.mxu0 0
  %908 = vmatpush1.bf16.msra.mxu0 0
  %909 = vmatprep.subr.bf16.mxu0 0
  %910 = vmatpush1.bf16.msra.mxu0 0
  %911 = vmatprep.subr.bf16.mxu0 0
  %912 = vmatpush1.bf16.msra.mxu0 0
  %913 = vmatprep.subr.bf16.mxu0 0
  %914 = vmatpush1.bf16.msra.mxu0 0
  %915 = vmatprep.subr.bf16.mxu0 0
  %916 = vmatpush1.bf16.msra.mxu0 0
  %917 = vmatprep.subr.bf16.mxu0 0
  %918 = vmatpush1.bf16.msra.mxu0 0
  %919 = vmatprep.subr.bf16.mxu0 0
  %920 = vmatpush1.bf16.msra.mxu0 0
  %921 = vmatprep.subr.bf16.mxu0 0
  %922 = vmatpush1.bf16.msra.mxu0 0
  %923 = vmatprep.subr.bf16.mxu0 0
  %924 = vmatpush1.bf16.msra.mxu0 0
  %925 = vmatprep.subr.bf16.mxu0 0
  %926 = vmatpush1.bf16.msra.mxu0 0
  %927 = vmatprep.subr.bf16.mxu0 0
  %928 = vmatpush1.bf16.msra.mxu0 0
  %929 = vmatprep.mubr.bf16.mxu0 0
  %930 = vmatmul.mubr.bf16.gmra.mrb[0].mxu0 %v889
  %v931 = vpop.f32.mrb[0].mxu0
  %v932 = vadd.f32 0.0, %v931
  %v933 = vpop.f32.mrb[0].mxu0
  %v934 = vpop.f32.mrb[0].mxu0
  %v935 = vadd.f32 0.0, %v934
  %v936 = vpop.f32.mrb[0].mxu0
  %937 = vmatprep.mubr.bf16.mxu0 0
  %938 = vmatmul.mubr.bf16.gmra.mrb[0].mxu0 %v892
  %v939 = vpop.f32.mrb[0].mxu0
  %v940 = vadd.f32 0.0, %v939
  %v941 = vpop.f32.mrb[0].mxu0
  %v942 = vpop.f32.mrb[0].mxu0
  %v943 = vadd.f32 0.0, %v942
  %v944 = vpop.f32.mrb[0].mxu0
  %945 = vdwg.mxu0
  %v946 = vadd.f32 %v802, %v932
  %v947 = vadd.f32 %v803, %v935
  %v948 = vadd.f32 %v804, %v940
  %v949 = vadd.f32 %v805, %v943
  %v950 = vld [vmem:[%s2 + $0x60] sm:$0xf]
  %v951 = vld [vmem:[%s2 + $0x64] sm:$0xf]
  %v952 = vld [vmem:[%s2 + $0x68] sm:$0xf]
  %v953 = vld [vmem:[%s2 + $0x6c] sm:$0xf]
  %v954 = vld [vmem:[%s3 + $0x8] sm:$0x6]
  %v959 = vunpack.c.l.b16 %v950
  %v960 = vunpack.c.l.b16 %v951
  %v961 = vunpack.c.l.b16 %v952
  %v962 = vunpack.c.l.b16 %v953
  %v963 = vpack.c.b16 %v960, %v959
  %v964 = vpack.c.b16 %v962, %v961
  %967 = vmatprep.subr.bf16.mxu0 0
  %968 = vmatpush1.bf16.msra.mxu0 %v128
  %969 = vmatprep.subr.bf16.mxu0 0
  %970 = vmatpush1.bf16.msra.mxu0 %v129
  %971 = vmatprep.subr.bf16.mxu0 0
  %972 = vmatpush1.bf16.msra.mxu0 %v130
  %973 = vmatprep.subr.bf16.mxu0 0
  %974 = vmatpush1.bf16.msra.mxu0 %v131
  %975 = vmatprep.subr.bf16.mxu0 0
  %976 = vmatpush1.bf16.msra.mxu0 %v132
  %977 = vmatprep.subr.bf16.mxu0 0
  %978 = vmatpush1.bf16.msra.mxu0 %v133
  %979 = vmatprep.subr.bf16.mxu0 0
  %980 = vmatpush1.bf16.msra.mxu0 %v134
  %981 = vmatprep.subr.bf16.mxu0 0
  %982 = vmatpush1.bf16.msra.mxu0 %v135
  %983 = vmatprep.subr.bf16.mxu0 0
  %984 = vmatpush1.bf16.msra.mxu0 0
  %985 = vmatprep.subr.bf16.mxu0 0
  %986 = vmatpush1.bf16.msra.mxu0 0
  %987 = vmatprep.subr.bf16.mxu0 0
  %988 = vmatpush1.bf16.msra.mxu0 0
  %989 = vmatprep.subr.bf16.mxu0 0
  %990 = vmatpush1.bf16.msra.mxu0 0
  %991 = vmatprep.subr.bf16.mxu0 0
  %992 = vmatpush1.bf16.msra.mxu0 0
  %993 = vmatprep.subr.bf16.mxu0 0
  %994 = vmatpush1.bf16.msra.mxu0 0
  %995 = vmatprep.subr.bf16.mxu0 0
  %996 = vmatpush1.bf16.msra.mxu0 0
  %997 = vmatprep.subr.bf16.mxu0 0
  %998 = vmatpush1.bf16.msra.mxu0 0
  %999 = vmatprep.mubr.bf16.mxu0 0
  %1000 = vmatmul.mubr.bf16.gmra.mrb[0].mxu0 %v963
  %v1001 = vpop.f32.mrb[0].mxu0
  %v1002 = vadd.f32 0.0, %v1001
  %v1003 = vpop.f32.mrb[0].mxu0
  %v1004 = vpop.f32.mrb[0].mxu0
  %v1005 = vadd.f32 0.0, %v1004
  %v1006 = vpop.f32.mrb[0].mxu0
  %1007 = vmatprep.mubr.bf16.mxu0 0
  %1008 = vmatmul.mubr.bf16.gmra.mrb[0].mxu0 %v964
  %v1009 = vpop.f32.mrb[0].mxu0
  %v1010 = vadd.f32 0.0, %v1009
  %v1011 = vpop.f32.mrb[0].mxu0
  %v1012 = vpop.f32.mrb[0].mxu0
  %v1013 = vadd.f32 0.0, %v1012
  %v1014 = vpop.f32.mrb[0].mxu0
  %1015 = vdwg.mxu0
  %v1016 = vpack.c.bf16 %v1005, %v1002
  %v1017 = vpack.c.bf16 %v1013, %v1010
  %v1019 = vunpack.c.l.b16 %v954
  %v1020 = vpack.c.b16 %v1019, %v1019
  %v1021 = vrot.slane %v1020, 1
  %v1023 = vsel %vm274, %v1016, 0
  %v1026 = vsel %vm274, %v1017, 0
  %v1029 = vand.u32 %v1021, %v284
  %1031 = vmatprep.subr.bf16.mxu0 0
  %1032 = vmatpush1.bf16.msra.mxu0 %v1029
  %1033 = vmatprep.subr.bf16.mxu0 0
  %1034 = vmatpush1.bf16.msra.mxu0 0
  %1035 = vmatprep.subr.bf16.mxu0 0
  %1036 = vmatpush1.bf16.msra.mxu0 0
  %1037 = vmatprep.subr.bf16.mxu0 0
  %1038 = vmatpush1.bf16.msra.mxu0 0
  %1039 = vmatprep.subr.bf16.mxu0 0
  %1040 = vmatpush1.bf16.msra.mxu0 0
  %1041 = vmatprep.subr.bf16.mxu0 0
  %1042 = vmatpush1.bf16.msra.mxu0 0
  %1043 = vmatprep.subr.bf16.mxu0 0
  %1044 = vmatpush1.bf16.msra.mxu0 0
  %1045 = vmatprep.subr.bf16.mxu0 0
  %1046 = vmatpush1.bf16.msra.mxu0 0
  %1047 = vmatprep.subr.bf16.mxu0 0
  %1048 = vmatpush1.bf16.msra.mxu0 0
  %1049 = vmatprep.subr.bf16.mxu0 0
  %1050 = vmatpush1.bf16.msra.mxu0 0
  %1051 = vmatprep.subr.bf16.mxu0 0
  %1052 = vmatpush1.bf16.msra.mxu0 0
  %1053 = vmatprep.subr.bf16.mxu0 0
  %1054 = vmatpush1.bf16.msra.mxu0 0
  %1055 = vmatprep.subr.bf16.mxu0 0
  %1056 = vmatpush1.bf16.msra.mxu0 0
  %1057 = vmatprep.subr.bf16.mxu0 0
  %1058 = vmatpush1.bf16.msra.mxu0 0
  %1059 = vmatprep.subr.bf16.mxu0 0
  %1060 = vmatpush1.bf16.msra.mxu0 0
  %1061 = vmatprep.subr.bf16.mxu0 0
  %1062 = vmatpush1.bf16.msra.mxu0 0
  %1063 = vmatprep.mubr.bf16.mxu0 0
  %1064 = vmatmul.mubr.bf16.gmra.mrb[0].mxu0 %v1023
  %v1065 = vpop.f32.mrb[0].mxu0
  %v1066 = vadd.f32 0.0, %v1065
  %v1067 = vpop.f32.mrb[0].mxu0
  %v1068 = vpop.f32.mrb[0].mxu0
  %v1069 = vadd.f32 0.0, %v1068
  %v1070 = vpop.f32.mrb[0].mxu0
  %1071 = vmatprep.mubr.bf16.mxu0 0
  %1072 = vmatmul.mubr.bf16.gmra.mrb[0].mxu0 %v1026
  %v1073 = vpop.f32.mrb[0].mxu0
  %v1074 = vadd.f32 0.0, %v1073
  %v1075 = vpop.f32.mrb[0].mxu0
  %v1076 = vpop.f32.mrb[0].mxu0
  %v1077 = vadd.f32 0.0, %v1076
  %v1078 = vpop.f32.mrb[0].mxu0
  %1079 = vdwg.mxu0
  %v1080 = vadd.f32 %v946, %v1066
  %v1081 = vadd.f32 %v947, %v1069
  %v1082 = vadd.f32 %v948, %v1074
  %v1083 = vadd.f32 %v949, %v1077
  %v1084 = vld [vmem:[%s2 + $0x70] sm:$0xf]
  %v1085 = vld [vmem:[%s2 + $0x74] sm:$0xf]
  %v1086 = vld [vmem:[%s2 + $0x78] sm:$0xf]
  %v1087 = vld [vmem:[%s2 + $0x7c] sm:$0xf]
  %v1088 = vld [vmem:[%s3 + $0x8] sm:$0xc]
  %v1093 = vunpack.c.l.b16 %v1084
  %v1094 = vunpack.c.l.b16 %v1085
  %v1095 = vunpack.c.l.b16 %v1086
  %v1096 = vunpack.c.l.b16 %v1087
  %v1097 = vpack.c.b16 %v1094, %v1093
  %v1098 = vpack.c.b16 %v1096, %v1095
  %1101 = vmatprep.subr.bf16.mxu0 0
  %1102 = vmatpush1.bf16.msra.mxu0 %v128
  %1103 = vmatprep.subr.bf16.mxu0 0
  %1104 = vmatpush1.bf16.msra.mxu0 %v129
  %1105 = vmatprep.subr.bf16.mxu0 0
  %1106 = vmatpush1.bf16.msra.mxu0 %v130
  %1107 = vmatprep.subr.bf16.mxu0 0
  %1108 = vmatpush1.bf16.msra.mxu0 %v131
  %1109 = vmatprep.subr.bf16.mxu0 0
  %1110 = vmatpush1.bf16.msra.mxu0 %v132
  %1111 = vmatprep.subr.bf16.mxu0 0
  %1112 = vmatpush1.bf16.msra.mxu0 %v133
  %1113 = vmatprep.subr.bf16.mxu0 0
  %1114 = vmatpush1.bf16.msra.mxu0 %v134
  %1115 = vmatprep.subr.bf16.mxu0 0
  %1116 = vmatpush1.bf16.msra.mxu0 %v135
  %1117 = vmatprep.subr.bf16.mxu0 0
  %1118 = vmatpush1.bf16.msra.mxu0 0
  %1119 = vmatprep.subr.bf16.mxu0 0
  %1120 = vmatpush1.bf16.msra.mxu0 0
  %1121 = vmatprep.subr.bf16.mxu0 0
  %1122 = vmatpush1.bf16.msra.mxu0 0
  %1123 = vmatprep.subr.bf16.mxu0 0
  %1124 = vmatpush1.bf16.msra.mxu0 0
  %1125 = vmatprep.subr.bf16.mxu0 0
  %1126 = vmatpush1.bf16.msra.mxu0 0
  %1127 = vmatprep.subr.bf16.mxu0 0
  %1128 = vmatpush1.bf16.msra.mxu0 0
  %1129 = vmatprep.subr.bf16.mxu0 0
  %1130 = vmatpush1.bf16.msra.mxu0 0
  %1131 = vmatprep.subr.bf16.mxu0 0
  %1132 = vmatpush1.bf16.msra.mxu0 0
  %1133 = vmatprep.mubr.bf16.mxu0 0
  %1134 = vmatmul.mubr.bf16.gmra.mrb[0].mxu0 %v1097
  %v1135 = vpop.f32.mrb[0].mxu0
  %v1136 = vadd.f32 0.0, %v1135
  %v1137 = vpop.f32.mrb[0].mxu0
  %v1138 = vpop.f32.mrb[0].mxu0
  %v1139 = vadd.f32 0.0, %v1138
  %v1140 = vpop.f32.mrb[0].mxu0
  %1141 = vmatprep.mubr.bf16.mxu0 0
  %1142 = vmatmul.mubr.bf16.gmra.mrb[0].mxu0 %v1098
  %v1143 = vpop.f32.mrb[0].mxu0
  %v1144 = vadd.f32 0.0, %v1143
  %v1145 = vpop.f32.mrb[0].mxu0
  %v1146 = vpop.f32.mrb[0].mxu0
  %v1147 = vadd.f32 0.0, %v1146
  %v1148 = vpop.f32.mrb[0].mxu0
  %1149 = vdwg.mxu0
  %v1150 = vpack.c.bf16 %v1139, %v1136
  %v1151 = vpack.c.bf16 %v1147, %v1144
  %v1153 = vunpack.c.l.b16 %v1088
  %v1154 = vpack.c.b16 %v1153, %v1153
  %v1156 = vshrl.u32 %v1154, 16
  %v1158 = vrot.slane %v1156, 2
  %v1159 = vshll.u32 %v1154, 16
  %v1161 = vrot.slane %v1159, 3
  %v1162 = vor.u32 %v1158, %v1161
  %v1164 = vsel %vm274, %v1150, 0
  %v1167 = vsel %vm274, %v1151, 0
  %v1170 = vand.u32 %v1162, %v284
  %1172 = vmatprep.subr.bf16.mxu0 0
  %1173 = vmatpush1.bf16.msra.mxu0 %v1170
  %1174 = vmatprep.subr.bf16.mxu0 0
  %1175 = vmatpush1.bf16.msra.mxu0 0
  %1176 = vmatprep.subr.bf16.mxu0 0
  %1177 = vmatpush1.bf16.msra.mxu0 0
  %1178 = vmatprep.subr.bf16.mxu0 0
  %1179 = vmatpush1.bf16.msra.mxu0 0
  %1180 = vmatprep.subr.bf16.mxu0 0
  %1181 = vmatpush1.bf16.msra.mxu0 0
  %1182 = vmatprep.subr.bf16.mxu0 0
  %1183 = vmatpush1.bf16.msra.mxu0 0
  %1184 = vmatprep.subr.bf16.mxu0 0
  %1185 = vmatpush1.bf16.msra.mxu0 0
  %1186 = vmatprep.subr.bf16.mxu0 0
  %1187 = vmatpush1.bf16.msra.mxu0 0
  %1188 = vmatprep.subr.bf16.mxu0 0
  %1189 = vmatpush1.bf16.msra.mxu0 0
  %1190 = vmatprep.subr.bf16.mxu0 0
  %1191 = vmatpush1.bf16.msra.mxu0 0
  %1192 = vmatprep.subr.bf16.mxu0 0
  %1193 = vmatpush1.bf16.msra.mxu0 0
  %1194 = vmatprep.subr.bf16.mxu0 0
  %1195 = vmatpush1.bf16.msra.mxu0 0
  %1196 = vmatprep.subr.bf16.mxu0 0
  %1197 = vmatpush1.bf16.msra.mxu0 0
  %1198 = vmatprep.subr.bf16.mxu0 0
  %1199 = vmatpush1.bf16.msra.mxu0 0
  %1200 = vmatprep.subr.bf16.mxu0 0
  %1201 = vmatpush1.bf16.msra.mxu0 0
  %1202 = vmatprep.subr.bf16.mxu0 0
  %1203 = vmatpush1.bf16.msra.mxu0 0
  %1204 = vmatprep.mubr.bf16.mxu0 0
  %1205 = vmatmul.mubr.bf16.gmra.mrb[0].mxu0 %v1164
  %v1206 = vpop.f32.mrb[0].mxu0
  %v1207 = vadd.f32 0.0, %v1206
  %v1208 = vpop.f32.mrb[0].mxu0
  %v1209 = vpop.f32.mrb[0].mxu0
  %v1210 = vadd.f32 0.0, %v1209
  %v1211 = vpop.f32.mrb[0].mxu0
  %1212 = vmatprep.mubr.bf16.mxu0 0
  %1213 = vmatmul.mubr.bf16.gmra.mrb[0].mxu0 %v1167
  %v1214 = vpop.f32.mrb[0].mxu0
  %v1215 = vadd.f32 0.0, %v1214
  %v1216 = vpop.f32.mrb[0].mxu0
  %v1217 = vpop.f32.mrb[0].mxu0
  %v1218 = vadd.f32 0.0, %v1217
  %v1219 = vpop.f32.mrb[0].mxu0
  %1220 = vdwg.mxu0
  %v1221 = vadd.f32 %v1080, %v1207
  %v1222 = vadd.f32 %v1081, %v1210
  %v1223 = vadd.f32 %v1082, %v1215
  %v1224 = vadd.f32 %v1083, %v1218
  %v1225 = vld [vmem:[%s2 + $0x80] sm:$0xf]
  %v1226 = vld [vmem:[%s2 + $0x84] sm:$0xf]
  %v1227 = vld [vmem:[%s2 + $0x88] sm:$0xf]
  %v1228 = vld [vmem:[%s2 + $0x8c] sm:$0xf]
  %v1229 = vld [vmem:[%s3 + $0xc] sm:$0x3]
  %v1234 = vunpack.c.l.b16 %v1225
  %v1235 = vunpack.c.l.b16 %v1226
  %v1236 = vunpack.c.l.b16 %v1227
  %v1237 = vunpack.c.l.b16 %v1228
  %v1238 = vpack.c.b16 %v1235, %v1234
  %v1239 = vpack.c.b16 %v1237, %v1236
  %1242 = vmatprep.subr.bf16.mxu0 0
  %1243 = vmatpush1.bf16.msra.mxu0 %v128
  %1244 = vmatprep.subr.bf16.mxu0 0
  %1245 = vmatpush1.bf16.msra.mxu0 %v129
  %1246 = vmatprep.subr.bf16.mxu0 0
  %1247 = vmatpush1.bf16.msra.mxu0 %v130
  %1248 = vmatprep.subr.bf16.mxu0 0
  %1249 = vmatpush1.bf16.msra.mxu0 %v131
  %1250 = vmatprep.subr.bf16.mxu0 0
  %1251 = vmatpush1.bf16.msra.mxu0 %v132
  %1252 = vmatprep.subr.bf16.mxu0 0
  %1253 = vmatpush1.bf16.msra.mxu0 %v133
  %1254 = vmatprep.subr.bf16.mxu0 0
  %1255 = vmatpush1.bf16.msra.mxu0 %v134
  %1256 = vmatprep.subr.bf16.mxu0 0
  %1257 = vmatpush1.bf16.msra.mxu0 %v135
  %1258 = vmatprep.subr.bf16.mxu0 0
  %1259 = vmatpush1.bf16.msra.mxu0 0
  %1260 = vmatprep.subr.bf16.mxu0 0
  %1261 = vmatpush1.bf16.msra.mxu0 0
  %1262 = vmatprep.subr.bf16.mxu0 0
  %1263 = vmatpush1.bf16.msra.mxu0 0
  %1264 = vmatprep.subr.bf16.mxu0 0
  %1265 = vmatpush1.bf16.msra.mxu0 0
  %1266 = vmatprep.subr.bf16.mxu0 0
  %1267 = vmatpush1.bf16.msra.mxu0 0
  %1268 = vmatprep.subr.bf16.mxu0 0
  %1269 = vmatpush1.bf16.msra.mxu0 0
  %1270 = vmatprep.subr.bf16.mxu0 0
  %1271 = vmatpush1.bf16.msra.mxu0 0
  %1272 = vmatprep.subr.bf16.mxu0 0
  %1273 = vmatpush1.bf16.msra.mxu0 0
  %1274 = vmatprep.mubr.bf16.mxu0 0
  %1275 = vmatmul.mubr.bf16.gmra.mrb[0].mxu0 %v1238
  %v1276 = vpop.f32.mrb[0].mxu0
  %v1277 = vadd.f32 0.0, %v1276
  %v1278 = vpop.f32.mrb[0].mxu0
  %v1279 = vpop.f32.mrb[0].mxu0
  %v1280 = vadd.f32 0.0, %v1279
  %v1281 = vpop.f32.mrb[0].mxu0
  %1282 = vmatprep.mubr.bf16.mxu0 0
  %1283 = vmatmul.mubr.bf16.gmra.mrb[0].mxu0 %v1239
  %v1284 = vpop.f32.mrb[0].mxu0
  %v1285 = vadd.f32 0.0, %v1284
  %v1286 = vpop.f32.mrb[0].mxu0
  %v1287 = vpop.f32.mrb[0].mxu0
  %v1288 = vadd.f32 0.0, %v1287
  %v1289 = vpop.f32.mrb[0].mxu0
  %1290 = vdwg.mxu0
  %v1291 = vpack.c.bf16 %v1280, %v1277
  %v1292 = vpack.c.bf16 %v1288, %v1285
  %v1294 = vsel %vm274, %v1291, 0
  %v1297 = vsel %vm274, %v1292, 0
  %v1300 = vand.u32 %v1229, %v284
  %1302 = vmatprep.subr.bf16.mxu0 0
  %1303 = vmatpush1.bf16.msra.mxu0 %v1300
  %1304 = vmatprep.subr.bf16.mxu0 0
  %1305 = vmatpush1.bf16.msra.mxu0 0
  %1306 = vmatprep.subr.bf16.mxu0 0
  %1307 = vmatpush1.bf16.msra.mxu0 0
  %1308 = vmatprep.subr.bf16.mxu0 0
  %1309 = vmatpush1.bf16.msra.mxu0 0
  %1310 = vmatprep.subr.bf16.mxu0 0
  %1311 = vmatpush1.bf16.msra.mxu0 0
  %1312 = vmatprep.subr.bf16.mxu0 0
  %1313 = vmatpush1.bf16.msra.mxu0 0
  %1314 = vmatprep.subr.bf16.mxu0 0
  %1315 = vmatpush1.bf16.msra.mxu0 0
  %1316 = vmatprep.subr.bf16.mxu0 0
  %1317 = vmatpush1.bf16.msra.mxu0 0
  %1318 = vmatprep.subr.bf16.mxu0 0
  %1319 = vmatpush1.bf16.msra.mxu0 0
  %1320 = vmatprep.subr.bf16.mxu0 0
  %1321 = vmatpush1.bf16.msra.mxu0 0
  %1322 = vmatprep.subr.bf16.mxu0 0
  %1323 = vmatpush1.bf16.msra.mxu0 0
  %1324 = vmatprep.subr.bf16.mxu0 0
  %1325 = vmatpush1.bf16.msra.mxu0 0
  %1326 = vmatprep.subr.bf16.mxu0 0
  %1327 = vmatpush1.bf16.msra.mxu0 0
  %1328 = vmatprep.subr.bf16.mxu0 0
  %1329 = vmatpush1.bf16.msra.mxu0 0
  %1330 = vmatprep.subr.bf16.mxu0 0
  %1331 = vmatpush1.bf16.msra.mxu0 0
  %1332 = vmatprep.subr.bf16.mxu0 0
  %1333 = vmatpush1.bf16.msra.mxu0 0
  %1334 = vmatprep.mubr.bf16.mxu0 0
  %1335 = vmatmul.mubr.bf16.gmra.mrb[0].mxu0 %v1294
  %v1336 = vpop.f32.mrb[0].mxu0
  %v1337 = vadd.f32 0.0, %v1336
  %v1338 = vpop.f32.mrb[0].mxu0
  %v1339 = vpop.f32.mrb[0].mxu0
  %v1340 = vadd.f32 0.0, %v1339
  %v1341 = vpop.f32.mrb[0].mxu0
  %1342 = vmatprep.mubr.bf16.mxu0 0
  %1343 = vmatmul.mubr.bf16.gmra.mrb[0].mxu0 %v1297
  %v1344 = vpop.f32.mrb[0].mxu0
  %v1345 = vadd.f32 0.0, %v1344
  %v1346 = vpop.f32.mrb[0].mxu0
  %v1347 = vpop.f32.mrb[0].mxu0
  %v1348 = vadd.f32 0.0, %v1347
  %v1349 = vpop.f32.mrb[0].mxu0
  %1350 = vdwg.mxu0
  %v1351 = vadd.f32 %v1221, %v1337
  %v1352 = vadd.f32 %v1222, %v1340
  %v1353 = vadd.f32 %v1223, %v1345
  %v1354 = vadd.f32 %v1224, %v1348
  %v1355 = vld [vmem:[%s2 + $0x90] sm:$0xf]
  %v1356 = vld [vmem:[%s2 + $0x94] sm:$0xf]
  %v1357 = vld [vmem:[%s2 + $0x98] sm:$0xf]
  %v1358 = vld [vmem:[%s2 + $0x9c] sm:$0xf]
  %v1359 = vld [vmem:[%s3 + $0xc] sm:$0x6]
  %v1364 = vunpack.c.l.b16 %v1355
  %v1365 = vunpack.c.l.b16 %v1356
  %v1366 = vunpack.c.l.b16 %v1357
  %v1367 = vunpack.c.l.b16 %v1358
  %v1368 = vpack.c.b16 %v1365, %v1364
  %v1369 = vpack.c.b16 %v1367, %v1366
  %1372 = vmatprep.subr.bf16.mxu0 0
  %1373 = vmatpush1.bf16.msra.mxu0 %v128
  %1374 = vmatprep.subr.bf16.mxu0 0
  %1375 = vmatpush1.bf16.msra.mxu0 %v129
  %1376 = vmatprep.subr.bf16.mxu0 0
  %1377 = vmatpush1.bf16.msra.mxu0 %v130
  %1378 = vmatprep.subr.bf16.mxu0 0
  %1379 = vmatpush1.bf16.msra.mxu0 %v131
  %1380 = vmatprep.subr.bf16.mxu0 0
  %1381 = vmatpush1.bf16.msra.mxu0 %v132
  %1382 = vmatprep.subr.bf16.mxu0 0
  %1383 = vmatpush1.bf16.msra.mxu0 %v133
  %1384 = vmatprep.subr.bf16.mxu0 0
  %1385 = vmatpush1.bf16.msra.mxu0 %v134
  %1386 = vmatprep.subr.bf16.mxu0 0
  %1387 = vmatpush1.bf16.msra.mxu0 %v135
  %1388 = vmatprep.subr.bf16.mxu0 0
  %1389 = vmatpush1.bf16.msra.mxu0 0
  %1390 = vmatprep.subr.bf16.mxu0 0
  %1391 = vmatpush1.bf16.msra.mxu0 0
  %1392 = vmatprep.subr.bf16.mxu0 0
  %1393 = vmatpush1.bf16.msra.mxu0 0
  %1394 = vmatprep.subr.bf16.mxu0 0
  %1395 = vmatpush1.bf16.msra.mxu0 0
  %1396 = vmatprep.subr.bf16.mxu0 0
  %1397 = vmatpush1.bf16.msra.mxu0 0
  %1398 = vmatprep.subr.bf16.mxu0 0
  %1399 = vmatpush1.bf16.msra.mxu0 0
  %1400 = vmatprep.subr.bf16.mxu0 0
  %1401 = vmatpush1.bf16.msra.mxu0 0
  %1402 = vmatprep.subr.bf16.mxu0 0
  %1403 = vmatpush1.bf16.msra.mxu0 0
  %1404 = vmatprep.mubr.bf16.mxu0 0
  %1405 = vmatmul.mubr.bf16.gmra.mrb[0].mxu0 %v1368
  %v1406 = vpop.f32.mrb[0].mxu0
  %v1407 = vadd.f32 0.0, %v1406
  %v1408 = vpop.f32.mrb[0].mxu0
  %v1409 = vpop.f32.mrb[0].mxu0
  %v1410 = vadd.f32 0.0, %v1409
  %v1411 = vpop.f32.mrb[0].mxu0
  %1412 = vmatprep.mubr.bf16.mxu0 0
  %1413 = vmatmul.mubr.bf16.gmra.mrb[0].mxu0 %v1369
  %v1414 = vpop.f32.mrb[0].mxu0
  %v1415 = vadd.f32 0.0, %v1414
  %v1416 = vpop.f32.mrb[0].mxu0
  %v1417 = vpop.f32.mrb[0].mxu0
  %v1418 = vadd.f32 0.0, %v1417
  %v1419 = vpop.f32.mrb[0].mxu0
  %1420 = vdwg.mxu0
  %v1421 = vpack.c.bf16 %v1410, %v1407
  %v1422 = vpack.c.bf16 %v1418, %v1415
  %v1424 = vunpack.c.l.b16 %v1359
  %v1425 = vpack.c.b16 %v1424, %v1424
  %v1427 = vshrl.u32 %v1425, 16
  %v1429 = vrot.slane %v1427, 1
  %v1430 = vshll.u32 %v1425, 16
  %v1432 = vrot.slane %v1430, 2
  %v1433 = vor.u32 %v1429, %v1432
  %v1435 = vsel %vm274, %v1421, 0
  %v1438 = vsel %vm274, %v1422, 0
  %v1441 = vand.u32 %v1433, %v284
  %1443 = vmatprep.subr.bf16.mxu0 0
  %1444 = vmatpush1.bf16.msra.mxu0 %v1441
  %1445 = vmatprep.subr.bf16.mxu0 0
  %1446 = vmatpush1.bf16.msra.mxu0 0
  %1447 = vmatprep.subr.bf16.mxu0 0
  %1448 = vmatpush1.bf16.msra.mxu0 0
  %1449 = vmatprep.subr.bf16.mxu0 0
  %1450 = vmatpush1.bf16.msra.mxu0 0
  %1451 = vmatprep.subr.bf16.mxu0 0
  %1452 = vmatpush1.bf16.msra.mxu0 0
  %1453 = vmatprep.subr.bf16.mxu0 0
  %1454 = vmatpush1.bf16.msra.mxu0 0
  %1455 = vmatprep.subr.bf16.mxu0 0
  %1456 = vmatpush1.bf16.msra.mxu0 0
  %1457 = vmatprep.subr.bf16.mxu0 0
  %1458 = vmatpush1.bf16.msra.mxu0 0
  %1459 = vmatprep.subr.bf16.mxu0 0
  %1460 = vmatpush1.bf16.msra.mxu0 0
  %1461 = vmatprep.subr.bf16.mxu0 0
  %1462 = vmatpush1.bf16.msra.mxu0 0
  %1463 = vmatprep.subr.bf16.mxu0 0
  %1464 = vmatpush1.bf16.msra.mxu0 0
  %1465 = vmatprep.subr.bf16.mxu0 0
  %1466 = vmatpush1.bf16.msra.mxu0 0
  %1467 = vmatprep.subr.bf16.mxu0 0
  %1468 = vmatpush1.bf16.msra.mxu0 0
  %1469 = vmatprep.subr.bf16.mxu0 0
  %1470 = vmatpush1.bf16.msra.mxu0 0
  %1471 = vmatprep.subr.bf16.mxu0 0
  %1472 = vmatpush1.bf16.msra.mxu0 0
  %1473 = vmatprep.subr.bf16.mxu0 0
  %1474 = vmatpush1.bf16.msra.mxu0 0
  %1475 = vmatprep.mubr.bf16.mxu0 0
  %1476 = vmatmul.mubr.bf16.gmra.mrb[0].mxu0 %v1435
  %v1477 = vpop.f32.mrb[0].mxu0
  %v1478 = vadd.f32 0.0, %v1477
  %v1479 = vpop.f32.mrb[0].mxu0
  %v1480 = vpop.f32.mrb[0].mxu0
  %v1481 = vadd.f32 0.0, %v1480
  %v1482 = vpop.f32.mrb[0].mxu0
  %1483 = vmatprep.mubr.bf16.mxu0 0
  %1484 = vmatmul.mubr.bf16.gmra.mrb[0].mxu0 %v1438
  %v1485 = vpop.f32.mrb[0].mxu0
  %v1486 = vadd.f32 0.0, %v1485
  %v1487 = vpop.f32.mrb[0].mxu0
  %v1488 = vpop.f32.mrb[0].mxu0
  %v1489 = vadd.f32 0.0, %v1488
  %v1490 = vpop.f32.mrb[0].mxu0
  %1491 = vdwg.mxu0
  %v1492 = vadd.f32 %v1351, %v1478
  %v1493 = vadd.f32 %v1352, %v1481
  %v1494 = vadd.f32 %v1353, %v1486
  %v1495 = vadd.f32 %v1354, %v1489
  %v1496 = vld [vmem:[%s2 + $0xa0] sm:$0xf]
  %v1497 = vld [vmem:[%s2 + $0xa4] sm:$0xf]
  %v1498 = vld [vmem:[%s2 + $0xa8] sm:$0xf]
  %v1499 = vld [vmem:[%s2 + $0xac] sm:$0xf]
  %v1500 = vld [vmem:[%s3 + $0xc] sm:$0x8]
  %v1501 = vld [vmem:[%s3 + $0x10] sm:$0x1]
  %v1506 = vunpack.c.l.b16 %v1496
  %v1507 = vunpack.c.l.b16 %v1497
  %v1508 = vunpack.c.l.b16 %v1498
  %v1509 = vunpack.c.l.b16 %v1499
  %v1510 = vpack.c.b16 %v1507, %v1506
  %v1511 = vpack.c.b16 %v1509, %v1508
  %1514 = vmatprep.subr.bf16.mxu0 0
  %1515 = vmatpush1.bf16.msra.mxu0 %v128
  %1516 = vmatprep.subr.bf16.mxu0 0
  %1517 = vmatpush1.bf16.msra.mxu0 %v129
  %1518 = vmatprep.subr.bf16.mxu0 0
  %1519 = vmatpush1.bf16.msra.mxu0 %v130
  %1520 = vmatprep.subr.bf16.mxu0 0
  %1521 = vmatpush1.bf16.msra.mxu0 %v131
  %1522 = vmatprep.subr.bf16.mxu0 0
  %1523 = vmatpush1.bf16.msra.mxu0 %v132
  %1524 = vmatprep.subr.bf16.mxu0 0
  %1525 = vmatpush1.bf16.msra.mxu0 %v133
  %1526 = vmatprep.subr.bf16.mxu0 0
  %1527 = vmatpush1.bf16.msra.mxu0 %v134
  %1528 = vmatprep.subr.bf16.mxu0 0
  %1529 = vmatpush1.bf16.msra.mxu0 %v135
  %1530 = vmatprep.subr.bf16.mxu0 0
  %1531 = vmatpush1.bf16.msra.mxu0 0
  %1532 = vmatprep.subr.bf16.mxu0 0
  %1533 = vmatpush1.bf16.msra.mxu0 0
  %1534 = vmatprep.subr.bf16.mxu0 0
  %1535 = vmatpush1.bf16.msra.mxu0 0
  %1536 = vmatprep.subr.bf16.mxu0 0
  %1537 = vmatpush1.bf16.msra.mxu0 0
  %1538 = vmatprep.subr.bf16.mxu0 0
  %1539 = vmatpush1.bf16.msra.mxu0 0
  %1540 = vmatprep.subr.bf16.mxu0 0
  %1541 = vmatpush1.bf16.msra.mxu0 0
  %1542 = vmatprep.subr.bf16.mxu0 0
  %1543 = vmatpush1.bf16.msra.mxu0 0
  %1544 = vmatprep.subr.bf16.mxu0 0
  %1545 = vmatpush1.bf16.msra.mxu0 0
  %1546 = vmatprep.mubr.bf16.mxu0 0
  %1547 = vmatmul.mubr.bf16.gmra.mrb[0].mxu0 %v1510
  %v1548 = vpop.f32.mrb[0].mxu0
  %v1549 = vadd.f32 0.0, %v1548
  %v1550 = vpop.f32.mrb[0].mxu0
  %v1551 = vpop.f32.mrb[0].mxu0
  %v1552 = vadd.f32 0.0, %v1551
  %v1553 = vpop.f32.mrb[0].mxu0
  %1554 = vmatprep.mubr.bf16.mxu0 0
  %1555 = vmatmul.mubr.bf16.gmra.mrb[0].mxu0 %v1511
  %v1556 = vpop.f32.mrb[0].mxu0
  %v1557 = vadd.f32 0.0, %v1556
  %v1558 = vpop.f32.mrb[0].mxu0
  %v1559 = vpop.f32.mrb[0].mxu0
  %v1560 = vadd.f32 0.0, %v1559
  %v1561 = vpop.f32.mrb[0].mxu0
  %1562 = vdwg.mxu0
  %v1563 = vpack.c.bf16 %v1552, %v1549
  %v1564 = vpack.c.bf16 %v1560, %v1557
  %v1567 = vunpack.c.l.b16 %v1500
  %v1568 = vunpack.c.l.b16 %v1501
  %v1569 = vpack.c.b16 %v1568, %v1567
  %v1570 = vrot.slane %v1569, 3
  %v1572 = vsel %vm274, %v1563, 0
  %v1575 = vsel %vm274, %v1564, 0
  %v1578 = vand.u32 %v1570, %v284
  %1580 = vmatprep.subr.bf16.mxu0 0
  %1581 = vmatpush1.bf16.msra.mxu0 %v1578
  %1582 = vmatprep.subr.bf16.mxu0 0
  %1583 = vmatpush1.bf16.msra.mxu0 0
  %1584 = vmatprep.subr.bf16.mxu0 0
  %1585 = vmatpush1.bf16.msra.mxu0 0
  %1586 = vmatprep.subr.bf16.mxu0 0
  %1587 = vmatpush1.bf16.msra.mxu0 0
  %1588 = vmatprep.subr.bf16.mxu0 0
  %1589 = vmatpush1.bf16.msra.mxu0 0
  %1590 = vmatprep.subr.bf16.mxu0 0
  %1591 = vmatpush1.bf16.msra.mxu0 0
  %1592 = vmatprep.subr.bf16.mxu0 0
  %1593 = vmatpush1.bf16.msra.mxu0 0
  %1594 = vmatprep.subr.bf16.mxu0 0
  %1595 = vmatpush1.bf16.msra.mxu0 0
  %1596 = vmatprep.subr.bf16.mxu0 0
  %1597 = vmatpush1.bf16.msra.mxu0 0
  %1598 = vmatprep.subr.bf16.mxu0 0
  %1599 = vmatpush1.bf16.msra.mxu0 0
  %1600 = vmatprep.subr.bf16.mxu0 0
  %1601 = vmatpush1.bf16.msra.mxu0 0
  %1602 = vmatprep.subr.bf16.mxu0 0
  %1603 = vmatpush1.bf16.msra.mxu0 0
  %1604 = vmatprep.subr.bf16.mxu0 0
  %1605 = vmatpush1.bf16.msra.mxu0 0
  %1606 = vmatprep.subr.bf16.mxu0 0
  %1607 = vmatpush1.bf16.msra.mxu0 0
  %1608 = vmatprep.subr.bf16.mxu0 0
  %1609 = vmatpush1.bf16.msra.mxu0 0
  %1610 = vmatprep.subr.bf16.mxu0 0
  %1611 = vmatpush1.bf16.msra.mxu0 0
  %1612 = vmatprep.mubr.bf16.mxu0 0
  %1613 = vmatmul.mubr.bf16.gmra.mrb[0].mxu0 %v1572
  %v1614 = vpop.f32.mrb[0].mxu0
  %v1615 = vadd.f32 0.0, %v1614
  %v1616 = vpop.f32.mrb[0].mxu0
  %v1617 = vpop.f32.mrb[0].mxu0
  %v1618 = vadd.f32 0.0, %v1617
  %v1619 = vpop.f32.mrb[0].mxu0
  %1620 = vmatprep.mubr.bf16.mxu0 0
  %1621 = vmatmul.mubr.bf16.gmra.mrb[0].mxu0 %v1575
  %v1622 = vpop.f32.mrb[0].mxu0
  %v1623 = vadd.f32 0.0, %v1622
  %v1624 = vpop.f32.mrb[0].mxu0
  %v1625 = vpop.f32.mrb[0].mxu0
  %v1626 = vadd.f32 0.0, %v1625
  %v1627 = vpop.f32.mrb[0].mxu0
  %1628 = vdwg.mxu0
  %v1629 = vadd.f32 %v1492, %v1615
  %v1630 = vadd.f32 %v1493, %v1618
  %v1631 = vadd.f32 %v1494, %v1623
  %v1632 = vadd.f32 %v1495, %v1626
  %v1633 = vld [vmem:[%s2 + $0xb0] sm:$0xf]
  %v1634 = vld [vmem:[%s2 + $0xb4] sm:$0xf]
  %v1635 = vld [vmem:[%s2 + $0xb8] sm:$0xf]
  %v1636 = vld [vmem:[%s2 + $0xbc] sm:$0xf]
  %v1637 = vld [vmem:[%s3 + $0x10] sm:$0x3]
  %v1642 = vunpack.c.l.b16 %v1633
  %v1643 = vunpack.c.l.b16 %v1634
  %v1644 = vunpack.c.l.b16 %v1635
  %v1645 = vunpack.c.l.b16 %v1636
  %v1646 = vpack.c.b16 %v1643, %v1642
  %v1647 = vpack.c.b16 %v1645, %v1644
  %1650 = vmatprep.subr.bf16.mxu0 0
  %1651 = vmatpush1.bf16.msra.mxu0 %v128
  %1652 = vmatprep.subr.bf16.mxu0 0
  %1653 = vmatpush1.bf16.msra.mxu0 %v129
  %1654 = vmatprep.subr.bf16.mxu0 0
  %1655 = vmatpush1.bf16.msra.mxu0 %v130
  %1656 = vmatprep.subr.bf16.mxu0 0
  %1657 = vmatpush1.bf16.msra.mxu0 %v131
  %1658 = vmatprep.subr.bf16.mxu0 0
  %1659 = vmatpush1.bf16.msra.mxu0 %v132
  %1660 = vmatprep.subr.bf16.mxu0 0
  %1661 = vmatpush1.bf16.msra.mxu0 %v133
  %1662 = vmatprep.subr.bf16.mxu0 0
  %1663 = vmatpush1.bf16.msra.mxu0 %v134
  %1664 = vmatprep.subr.bf16.mxu0 0
  %1665 = vmatpush1.bf16.msra.mxu0 %v135
  %1666 = vmatprep.subr.bf16.mxu0 0
  %1667 = vmatpush1.bf16.msra.mxu0 0
  %1668 = vmatprep.subr.bf16.mxu0 0
  %1669 = vmatpush1.bf16.msra.mxu0 0
  %1670 = vmatprep.subr.bf16.mxu0 0
  %1671 = vmatpush1.bf16.msra.mxu0 0
  %1672 = vmatprep.subr.bf16.mxu0 0
  %1673 = vmatpush1.bf16.msra.mxu0 0
  %1674 = vmatprep.subr.bf16.mxu0 0
  %1675 = vmatpush1.bf16.msra.mxu0 0
  %1676 = vmatprep.subr.bf16.mxu0 0
  %1677 = vmatpush1.bf16.msra.mxu0 0
  %1678 = vmatprep.subr.bf16.mxu0 0
  %1679 = vmatpush1.bf16.msra.mxu0 0
  %1680 = vmatprep.subr.bf16.mxu0 0
  %1681 = vmatpush1.bf16.msra.mxu0 0
  %1682 = vmatprep.mubr.bf16.mxu0 0
  %1683 = vmatmul.mubr.bf16.gmra.mrb[0].mxu0 %v1646
  %v1684 = vpop.f32.mrb[0].mxu0
  %v1685 = vadd.f32 0.0, %v1684
  %v1686 = vpop.f32.mrb[0].mxu0
  %v1687 = vpop.f32.mrb[0].mxu0
  %v1688 = vadd.f32 0.0, %v1687
  %v1689 = vpop.f32.mrb[0].mxu0
  %1690 = vmatprep.mubr.bf16.mxu0 0
  %1691 = vmatmul.mubr.bf16.gmra.mrb[0].mxu0 %v1647
  %v1692 = vpop.f32.mrb[0].mxu0
  %v1693 = vadd.f32 0.0, %v1692
  %v1694 = vpop.f32.mrb[0].mxu0
  %v1695 = vpop.f32.mrb[0].mxu0
  %v1696 = vadd.f32 0.0, %v1695
  %v1697 = vpop.f32.mrb[0].mxu0
  %1698 = vdwg.mxu0
  %v1699 = vpack.c.bf16 %v1688, %v1685
  %v1700 = vpack.c.bf16 %v1696, %v1693
  %v1702 = vunpack.c.l.b16 %v1637
  %v1703 = vpack.c.b16 %v1702, %v1702
  %v1705 = vshrl.u32 %v1703, 16
  %v1707 = vshll.u32 %v1703, 16
  %v1709 = vrot.slane %v1707, 1
  %v1710 = vor.u32 %v1705, %v1709
  %v1712 = vsel %vm274, %v1699, 0
  %v1715 = vsel %vm274, %v1700, 0
  %v1718 = vand.u32 %v1710, %v284
  %1720 = vmatprep.subr.bf16.mxu0 0
  %1721 = vmatpush1.bf16.msra.mxu0 %v1718
  %1722 = vmatprep.subr.bf16.mxu0 0
  %1723 = vmatpush1.bf16.msra.mxu0 0
  %1724 = vmatprep.subr.bf16.mxu0 0
  %1725 = vmatpush1.bf16.msra.mxu0 0
  %1726 = vmatprep.subr.bf16.mxu0 0
  %1727 = vmatpush1.bf16.msra.mxu0 0
  %1728 = vmatprep.subr.bf16.mxu0 0
  %1729 = vmatpush1.bf16.msra.mxu0 0
  %1730 = vmatprep.subr.bf16.mxu0 0
  %1731 = vmatpush1.bf16.msra.mxu0 0
  %1732 = vmatprep.subr.bf16.mxu0 0
  %1733 = vmatpush1.bf16.msra.mxu0 0
  %1734 = vmatprep.subr.bf16.mxu0 0
  %1735 = vmatpush1.bf16.msra.mxu0 0
  %1736 = vmatprep.subr.bf16.mxu0 0
  %1737 = vmatpush1.bf16.msra.mxu0 0
  %1738 = vmatprep.subr.bf16.mxu0 0
  %1739 = vmatpush1.bf16.msra.mxu0 0
  %1740 = vmatprep.subr.bf16.mxu0 0
  %1741 = vmatpush1.bf16.msra.mxu0 0
  %1742 = vmatprep.subr.bf16.mxu0 0
  %1743 = vmatpush1.bf16.msra.mxu0 0
  %1744 = vmatprep.subr.bf16.mxu0 0
  %1745 = vmatpush1.bf16.msra.mxu0 0
  %1746 = vmatprep.subr.bf16.mxu0 0
  %1747 = vmatpush1.bf16.msra.mxu0 0
  %1748 = vmatprep.subr.bf16.mxu0 0
  %1749 = vmatpush1.bf16.msra.mxu0 0
  %1750 = vmatprep.subr.bf16.mxu0 0
  %1751 = vmatpush1.bf16.msra.mxu0 0
  %1752 = vmatprep.mubr.bf16.mxu0 0
  %1753 = vmatmul.mubr.bf16.gmra.mrb[0].mxu0 %v1712
  %v1754 = vpop.f32.mrb[0].mxu0
  %v1755 = vadd.f32 0.0, %v1754
  %v1756 = vpop.f32.mrb[0].mxu0
  %v1757 = vpop.f32.mrb[0].mxu0
  %v1758 = vadd.f32 0.0, %v1757
  %v1759 = vpop.f32.mrb[0].mxu0
  %1760 = vmatprep.mubr.bf16.mxu0 0
  %1761 = vmatmul.mubr.bf16.gmra.mrb[0].mxu0 %v1715
  %v1762 = vpop.f32.mrb[0].mxu0
  %v1763 = vadd.f32 0.0, %v1762
  %v1764 = vpop.f32.mrb[0].mxu0
  %v1765 = vpop.f32.mrb[0].mxu0
  %v1766 = vadd.f32 0.0, %v1765
  %v1767 = vpop.f32.mrb[0].mxu0
  %1768 = vdwg.mxu0
  %v1769 = vadd.f32 %v1629, %v1755
  %v1770 = vadd.f32 %v1630, %v1758
  %v1771 = vadd.f32 %v1631, %v1763
  %v1772 = vadd.f32 %v1632, %v1766
  %v1773 = vld [vmem:[%s2 + $0xc0] sm:$0xf]
  %v1774 = vld [vmem:[%s2 + $0xc4] sm:$0xf]
  %v1775 = vld [vmem:[%s2 + $0xc8] sm:$0xf]
  %v1776 = vld [vmem:[%s2 + $0xcc] sm:$0xf]
  %v1777 = vld [vmem:[%s3 + $0x10] sm:$0xc]
  %v1782 = vunpack.c.l.b16 %v1773
  %v1783 = vunpack.c.l.b16 %v1774
  %v1784 = vunpack.c.l.b16 %v1775
  %v1785 = vunpack.c.l.b16 %v1776
  %v1786 = vpack.c.b16 %v1783, %v1782
  %v1787 = vpack.c.b16 %v1785, %v1784
  %1790 = vmatprep.subr.bf16.mxu0 0
  %1791 = vmatpush1.bf16.msra.mxu0 %v128
  %1792 = vmatprep.subr.bf16.mxu0 0
  %1793 = vmatpush1.bf16.msra.mxu0 %v129
  %1794 = vmatprep.subr.bf16.mxu0 0
  %1795 = vmatpush1.bf16.msra.mxu0 %v130
  %1796 = vmatprep.subr.bf16.mxu0 0
  %1797 = vmatpush1.bf16.msra.mxu0 %v131
  %1798 = vmatprep.subr.bf16.mxu0 0
  %1799 = vmatpush1.bf16.msra.mxu0 %v132
  %1800 = vmatprep.subr.bf16.mxu0 0
  %1801 = vmatpush1.bf16.msra.mxu0 %v133
  %1802 = vmatprep.subr.bf16.mxu0 0
  %1803 = vmatpush1.bf16.msra.mxu0 %v134
  %1804 = vmatprep.subr.bf16.mxu0 0
  %1805 = vmatpush1.bf16.msra.mxu0 %v135
  %1806 = vmatprep.subr.bf16.mxu0 0
  %1807 = vmatpush1.bf16.msra.mxu0 0
  %1808 = vmatprep.subr.bf16.mxu0 0
  %1809 = vmatpush1.bf16.msra.mxu0 0
  %1810 = vmatprep.subr.bf16.mxu0 0
  %1811 = vmatpush1.bf16.msra.mxu0 0
  %1812 = vmatprep.subr.bf16.mxu0 0
  %1813 = vmatpush1.bf16.msra.mxu0 0
  %1814 = vmatprep.subr.bf16.mxu0 0
  %1815 = vmatpush1.bf16.msra.mxu0 0
  %1816 = vmatprep.subr.bf16.mxu0 0
  %1817 = vmatpush1.bf16.msra.mxu0 0
  %1818 = vmatprep.subr.bf16.mxu0 0
  %1819 = vmatpush1.bf16.msra.mxu0 0
  %1820 = vmatprep.subr.bf16.mxu0 0
  %1821 = vmatpush1.bf16.msra.mxu0 0
  %1822 = vmatprep.mubr.bf16.mxu0 0
  %1823 = vmatmul.mubr.bf16.gmra.mrb[0].mxu0 %v1786
  %v1824 = vpop.f32.mrb[0].mxu0
  %v1825 = vadd.f32 0.0, %v1824
  %v1826 = vpop.f32.mrb[0].mxu0
  %v1827 = vpop.f32.mrb[0].mxu0
  %v1828 = vadd.f32 0.0, %v1827
  %v1829 = vpop.f32.mrb[0].mxu0
  %1830 = vmatprep.mubr.bf16.mxu0 0
  %1831 = vmatmul.mubr.bf16.gmra.mrb[0].mxu0 %v1787
  %v1832 = vpop.f32.mrb[0].mxu0
  %v1833 = vadd.f32 0.0, %v1832
  %v1834 = vpop.f32.mrb[0].mxu0
  %v1835 = vpop.f32.mrb[0].mxu0
  %v1836 = vadd.f32 0.0, %v1835
  %v1837 = vpop.f32.mrb[0].mxu0
  %1838 = vdwg.mxu0
  %v1839 = vpack.c.bf16 %v1828, %v1825
  %v1840 = vpack.c.bf16 %v1836, %v1833
  %v1842 = vunpack.c.l.b16 %v1777
  %v1843 = vpack.c.b16 %v1842, %v1842
  %v1844 = vrot.slane %v1843, 2
  %v1846 = vsel %vm274, %v1839, 0
  %v1849 = vsel %vm274, %v1840, 0
  %v1852 = vand.u32 %v1844, %v284
  %1854 = vmatprep.subr.bf16.mxu0 0
  %1855 = vmatpush1.bf16.msra.mxu0 %v1852
  %1856 = vmatprep.subr.bf16.mxu0 0
  %1857 = vmatpush1.bf16.msra.mxu0 0
  %1858 = vmatprep.subr.bf16.mxu0 0
  %1859 = vmatpush1.bf16.msra.mxu0 0
  %1860 = vmatprep.subr.bf16.mxu0 0
  %1861 = vmatpush1.bf16.msra.mxu0 0
  %1862 = vmatprep.subr.bf16.mxu0 0
  %1863 = vmatpush1.bf16.msra.mxu0 0
  %1864 = vmatprep.subr.bf16.mxu0 0
  %1865 = vmatpush1.bf16.msra.mxu0 0
  %1866 = vmatprep.subr.bf16.mxu0 0
  %1867 = vmatpush1.bf16.msra.mxu0 0
  %1868 = vmatprep.subr.bf16.mxu0 0
  %1869 = vmatpush1.bf16.msra.mxu0 0
  %1870 = vmatprep.subr.bf16.mxu0 0
  %1871 = vmatpush1.bf16.msra.mxu0 0
  %1872 = vmatprep.subr.bf16.mxu0 0
  %1873 = vmatpush1.bf16.msra.mxu0 0
  %1874 = vmatprep.subr.bf16.mxu0 0
  %1875 = vmatpush1.bf16.msra.mxu0 0
  %1876 = vmatprep.subr.bf16.mxu0 0
  %1877 = vmatpush1.bf16.msra.mxu0 0
  %1878 = vmatprep.subr.bf16.mxu0 0
  %1879 = vmatpush1.bf16.msra.mxu0 0
  %1880 = vmatprep.subr.bf16.mxu0 0
  %1881 = vmatpush1.bf16.msra.mxu0 0
  %1882 = vmatprep.subr.bf16.mxu0 0
  %1883 = vmatpush1.bf16.msra.mxu0 0
  %1884 = vmatprep.subr.bf16.mxu0 0
  %1885 = vmatpush1.bf16.msra.mxu0 0
  %1886 = vmatprep.mubr.bf16.mxu0 0
  %1887 = vmatmul.mubr.bf16.gmra.mrb[0].mxu0 %v1846
  %v1888 = vpop.f32.mrb[0].mxu0
  %v1889 = vadd.f32 0.0, %v1888
  %v1890 = vpop.f32.mrb[0].mxu0
  %v1891 = vpop.f32.mrb[0].mxu0
  %v1892 = vadd.f32 0.0, %v1891
  %v1893 = vpop.f32.mrb[0].mxu0
  %1894 = vmatprep.mubr.bf16.mxu0 0
  %1895 = vmatmul.mubr.bf16.gmra.mrb[0].mxu0 %v1849
  %v1896 = vpop.f32.mrb[0].mxu0
  %v1897 = vadd.f32 0.0, %v1896
  %v1898 = vpop.f32.mrb[0].mxu0
  %v1899 = vpop.f32.mrb[0].mxu0
  %v1900 = vadd.f32 0.0, %v1899
  %v1901 = vpop.f32.mrb[0].mxu0
  %1902 = vdwg.mxu0
  %v1903 = vadd.f32 %v1769, %v1889
  %v1904 = vadd.f32 %v1770, %v1892
  %v1905 = vadd.f32 %v1771, %v1897
  %v1906 = vadd.f32 %v1772, %v1900
  %v1907 = vld [vmem:[%s2 + $0xd0] sm:$0xf]
  %v1908 = vld [vmem:[%s2 + $0xd4] sm:$0xf]
  %v1909 = vld [vmem:[%s2 + $0xd8] sm:$0xf]
  %v1910 = vld [vmem:[%s2 + $0xdc] sm:$0xf]
  %v1911 = vld [vmem:[%s3 + $0x10] sm:$0x8]
  %v1912 = vld [vmem:[%s3 + $0x14] sm:$0x1]
  %v1917 = vunpack.c.l.b16 %v1907
  %v1918 = vunpack.c.l.b16 %v1908
  %v1919 = vunpack.c.l.b16 %v1909
  %v1920 = vunpack.c.l.b16 %v1910
  %v1921 = vpack.c.b16 %v1918, %v1917
  %v1922 = vpack.c.b16 %v1920, %v1919
  %1925 = vmatprep.subr.bf16.mxu0 0
  %1926 = vmatpush1.bf16.msra.mxu0 %v128
  %1927 = vmatprep.subr.bf16.mxu0 0
  %1928 = vmatpush1.bf16.msra.mxu0 %v129
  %1929 = vmatprep.subr.bf16.mxu0 0
  %1930 = vmatpush1.bf16.msra.mxu0 %v130
  %1931 = vmatprep.subr.bf16.mxu0 0
  %1932 = vmatpush1.bf16.msra.mxu0 %v131
  %1933 = vmatprep.subr.bf16.mxu0 0
  %1934 = vmatpush1.bf16.msra.mxu0 %v132
  %1935 = vmatprep.subr.bf16.mxu0 0
  %1936 = vmatpush1.bf16.msra.mxu0 %v133
  %1937 = vmatprep.subr.bf16.mxu0 0
  %1938 = vmatpush1.bf16.msra.mxu0 %v134
  %1939 = vmatprep.subr.bf16.mxu0 0
  %1940 = vmatpush1.bf16.msra.mxu0 %v135
  %1941 = vmatprep.subr.bf16.mxu0 0
  %1942 = vmatpush1.bf16.msra.mxu0 0
  %1943 = vmatprep.subr.bf16.mxu0 0
  %1944 = vmatpush1.bf16.msra.mxu0 0
  %1945 = vmatprep.subr.bf16.mxu0 0
  %1946 = vmatpush1.bf16.msra.mxu0 0
  %1947 = vmatprep.subr.bf16.mxu0 0
  %1948 = vmatpush1.bf16.msra.mxu0 0
  %1949 = vmatprep.subr.bf16.mxu0 0
  %1950 = vmatpush1.bf16.msra.mxu0 0
  %1951 = vmatprep.subr.bf16.mxu0 0
  %1952 = vmatpush1.bf16.msra.mxu0 0
  %1953 = vmatprep.subr.bf16.mxu0 0
  %1954 = vmatpush1.bf16.msra.mxu0 0
  %1955 = vmatprep.subr.bf16.mxu0 0
  %1956 = vmatpush1.bf16.msra.mxu0 0
  %1957 = vmatprep.mubr.bf16.mxu0 0
  %1958 = vmatmul.mubr.bf16.gmra.mrb[0].mxu0 %v1921
  %v1959 = vpop.f32.mrb[0].mxu0
  %v1960 = vadd.f32 0.0, %v1959
  %v1961 = vpop.f32.mrb[0].mxu0
  %v1962 = vpop.f32.mrb[0].mxu0
  %v1963 = vadd.f32 0.0, %v1962
  %v1964 = vpop.f32.mrb[0].mxu0
  %1965 = vmatprep.mubr.bf16.mxu0 0
  %1966 = vmatmul.mubr.bf16.gmra.mrb[0].mxu0 %v1922
  %v1967 = vpop.f32.mrb[0].mxu0
  %v1968 = vadd.f32 0.0, %v1967
  %v1969 = vpop.f32.mrb[0].mxu0
  %v1970 = vpop.f32.mrb[0].mxu0
  %v1971 = vadd.f32 0.0, %v1970
  %v1972 = vpop.f32.mrb[0].mxu0
  %1973 = vdwg.mxu0
  %v1974 = vpack.c.bf16 %v1963, %v1960
  %v1975 = vpack.c.bf16 %v1971, %v1968
  %v1978 = vunpack.c.l.b16 %v1911
  %v1979 = vunpack.c.l.b16 %v1912
  %v1980 = vpack.c.b16 %v1979, %v1978
  %v1982 = vshrl.u32 %v1980, 16
  %v1984 = vrot.slane %v1982, 3
  %v1985 = vshll.u32 %v1980, 16
  %v1987 = vrot.slane %v1985, 4
  %v1988 = vor.u32 %v1984, %v1987
  %v1990 = vsel %vm274, %v1974, 0
  %v1993 = vsel %vm274, %v1975, 0
  %v1996 = vand.u32 %v1988, %v284
  %1998 = vmatprep.subr.bf16.mxu0 0
  %1999 = vmatpush1.bf16.msra.mxu0 %v1996
  %2000 = vmatprep.subr.bf16.mxu0 0
  %2001 = vmatpush1.bf16.msra.mxu0 0
  %2002 = vmatprep.subr.bf16.mxu0 0
  %2003 = vmatpush1.bf16.msra.mxu0 0
  %2004 = vmatprep.subr.bf16.mxu0 0
  %2005 = vmatpush1.bf16.msra.mxu0 0
  %2006 = vmatprep.subr.bf16.mxu0 0
  %2007 = vmatpush1.bf16.msra.mxu0 0
  %2008 = vmatprep.subr.bf16.mxu0 0
  %2009 = vmatpush1.bf16.msra.mxu0 0
  %2010 = vmatprep.subr.bf16.mxu0 0
  %2011 = vmatpush1.bf16.msra.mxu0 0
  %2012 = vmatprep.subr.bf16.mxu0 0
  %2013 = vmatpush1.bf16.msra.mxu0 0
  %2014 = vmatprep.subr.bf16.mxu0 0
  %2015 = vmatpush1.bf16.msra.mxu0 0
  %2016 = vmatprep.subr.bf16.mxu0 0
  %2017 = vmatpush1.bf16.msra.mxu0 0
  %2018 = vmatprep.subr.bf16.mxu0 0
  %2019 = vmatpush1.bf16.msra.mxu0 0
  %2020 = vmatprep.subr.bf16.mxu0 0
  %2021 = vmatpush1.bf16.msra.mxu0 0
  %2022 = vmatprep.subr.bf16.mxu0 0
  %2023 = vmatpush1.bf16.msra.mxu0 0
  %2024 = vmatprep.subr.bf16.mxu0 0
  %2025 = vmatpush1.bf16.msra.mxu0 0
  %2026 = vmatprep.subr.bf16.mxu0 0
  %2027 = vmatpush1.bf16.msra.mxu0 0
  %2028 = vmatprep.subr.bf16.mxu0 0
  %2029 = vmatpush1.bf16.msra.mxu0 0
  %2030 = vmatprep.mubr.bf16.mxu0 0
  %2031 = vmatmul.mubr.bf16.gmra.mrb[0].mxu0 %v1990
  %v2032 = vpop.f32.mrb[0].mxu0
  %v2033 = vadd.f32 0.0, %v2032
  %v2034 = vpop.f32.mrb[0].mxu0
  %v2035 = vpop.f32.mrb[0].mxu0
  %v2036 = vadd.f32 0.0, %v2035
  %v2037 = vpop.f32.mrb[0].mxu0
  %2038 = vmatprep.mubr.bf16.mxu0 0
  %2039 = vmatmul.mubr.bf16.gmra.mrb[0].mxu0 %v1993
  %v2040 = vpop.f32.mrb[0].mxu0
  %v2041 = vadd.f32 0.0, %v2040
  %v2042 = vpop.f32.mrb[0].mxu0
  %v2043 = vpop.f32.mrb[0].mxu0
  %v2044 = vadd.f32 0.0, %v2043
  %v2045 = vpop.f32.mrb[0].mxu0
  %2046 = vdwg.mxu0
  %v2047 = vadd.f32 %v1903, %v2033
  %v2048 = vadd.f32 %v1904, %v2036
  %v2049 = vadd.f32 %v1905, %v2041
  %v2050 = vadd.f32 %v1906, %v2044
  %v2051 = vld [vmem:[%s2 + $0xe0] sm:$0xf]
  %v2052 = vld [vmem:[%s2 + $0xe4] sm:$0xf]
  %v2053 = vld [vmem:[%s2 + $0xe8] sm:$0xf]
  %v2054 = vld [vmem:[%s2 + $0xec] sm:$0xf]
  %v2055 = vld [vmem:[%s3 + $0x14] sm:$0x6]
  %v2060 = vunpack.c.l.b16 %v2051
  %v2061 = vunpack.c.l.b16 %v2052
  %v2062 = vunpack.c.l.b16 %v2053
  %v2063 = vunpack.c.l.b16 %v2054
  %v2064 = vpack.c.b16 %v2061, %v2060
  %v2065 = vpack.c.b16 %v2063, %v2062
  %2068 = vmatprep.subr.bf16.mxu0 0
  %2069 = vmatpush1.bf16.msra.mxu0 %v128
  %2070 = vmatprep.subr.bf16.mxu0 0
  %2071 = vmatpush1.bf16.msra.mxu0 %v129
  %2072 = vmatprep.subr.bf16.mxu0 0
  %2073 = vmatpush1.bf16.msra.mxu0 %v130
  %2074 = vmatprep.subr.bf16.mxu0 0
  %2075 = vmatpush1.bf16.msra.mxu0 %v131
  %2076 = vmatprep.subr.bf16.mxu0 0
  %2077 = vmatpush1.bf16.msra.mxu0 %v132
  %2078 = vmatprep.subr.bf16.mxu0 0
  %2079 = vmatpush1.bf16.msra.mxu0 %v133
  %2080 = vmatprep.subr.bf16.mxu0 0
  %2081 = vmatpush1.bf16.msra.mxu0 %v134
  %2082 = vmatprep.subr.bf16.mxu0 0
  %2083 = vmatpush1.bf16.msra.mxu0 %v135
  %2084 = vmatprep.subr.bf16.mxu0 0
  %2085 = vmatpush1.bf16.msra.mxu0 0
  %2086 = vmatprep.subr.bf16.mxu0 0
  %2087 = vmatpush1.bf16.msra.mxu0 0
  %2088 = vmatprep.subr.bf16.mxu0 0
  %2089 = vmatpush1.bf16.msra.mxu0 0
  %2090 = vmatprep.subr.bf16.mxu0 0
  %2091 = vmatpush1.bf16.msra.mxu0 0
  %2092 = vmatprep.subr.bf16.mxu0 0
  %2093 = vmatpush1.bf16.msra.mxu0 0
  %2094 = vmatprep.subr.bf16.mxu0 0
  %2095 = vmatpush1.bf16.msra.mxu0 0
  %2096 = vmatprep.subr.bf16.mxu0 0
  %2097 = vmatpush1.bf16.msra.mxu0 0
  %2098 = vmatprep.subr.bf16.mxu0 0
  %2099 = vmatpush1.bf16.msra.mxu0 0
  %2100 = vmatprep.mubr.bf16.mxu0 0
  %2101 = vmatmul.mubr.bf16.gmra.mrb[0].mxu0 %v2064
  %v2102 = vpop.f32.mrb[0].mxu0
  %v2103 = vadd.f32 0.0, %v2102
  %v2104 = vpop.f32.mrb[0].mxu0
  %v2105 = vpop.f32.mrb[0].mxu0
  %v2106 = vadd.f32 0.0, %v2105
  %v2107 = vpop.f32.mrb[0].mxu0
  %2108 = vmatprep.mubr.bf16.mxu0 0
  %2109 = vmatmul.mubr.bf16.gmra.mrb[0].mxu0 %v2065
  %v2110 = vpop.f32.mrb[0].mxu0
  %v2111 = vadd.f32 0.0, %v2110
  %v2112 = vpop.f32.mrb[0].mxu0
  %v2113 = vpop.f32.mrb[0].mxu0
  %v2114 = vadd.f32 0.0, %v2113
  %v2115 = vpop.f32.mrb[0].mxu0
  %2116 = vdwg.mxu0
  %v2117 = vpack.c.bf16 %v2106, %v2103
  %v2118 = vpack.c.bf16 %v2114, %v2111
  %v2120 = vunpack.c.l.b16 %v2055
  %v2121 = vpack.c.b16 %v2120, %v2120
  %v2122 = vrot.slane %v2121, 1
  %v2124 = vsel %vm274, %v2117, 0
  %v2127 = vsel %vm274, %v2118, 0
  %v2130 = vand.u32 %v2122, %v284
  %2132 = vmatprep.subr.bf16.mxu0 0
  %2133 = vmatpush1.bf16.msra.mxu0 %v2130
  %2134 = vmatprep.subr.bf16.mxu0 0
  %2135 = vmatpush1.bf16.msra.mxu0 0
  %2136 = vmatprep.subr.bf16.mxu0 0
  %2137 = vmatpush1.bf16.msra.mxu0 0
  %2138 = vmatprep.subr.bf16.mxu0 0
  %2139 = vmatpush1.bf16.msra.mxu0 0
  %2140 = vmatprep.subr.bf16.mxu0 0
  %2141 = vmatpush1.bf16.msra.mxu0 0
  %2142 = vmatprep.subr.bf16.mxu0 0
  %2143 = vmatpush1.bf16.msra.mxu0 0
  %2144 = vmatprep.subr.bf16.mxu0 0
  %2145 = vmatpush1.bf16.msra.mxu0 0
  %2146 = vmatprep.subr.bf16.mxu0 0
  %2147 = vmatpush1.bf16.msra.mxu0 0
  %2148 = vmatprep.subr.bf16.mxu0 0
  %2149 = vmatpush1.bf16.msra.mxu0 0
  %2150 = vmatprep.subr.bf16.mxu0 0
  %2151 = vmatpush1.bf16.msra.mxu0 0
  %2152 = vmatprep.subr.bf16.mxu0 0
  %2153 = vmatpush1.bf16.msra.mxu0 0
  %2154 = vmatprep.subr.bf16.mxu0 0
  %2155 = vmatpush1.bf16.msra.mxu0 0
  %2156 = vmatprep.subr.bf16.mxu0 0
  %2157 = vmatpush1.bf16.msra.mxu0 0
  %2158 = vmatprep.subr.bf16.mxu0 0
  %2159 = vmatpush1.bf16.msra.mxu0 0
  %2160 = vmatprep.subr.bf16.mxu0 0
  %2161 = vmatpush1.bf16.msra.mxu0 0
  %2162 = vmatprep.subr.bf16.mxu0 0
  %2163 = vmatpush1.bf16.msra.mxu0 0
  %2164 = vmatprep.mubr.bf16.mxu0 0
  %2165 = vmatmul.mubr.bf16.gmra.mrb[0].mxu0 %v2124
  %v2166 = vpop.f32.mrb[0].mxu0
  %v2167 = vadd.f32 0.0, %v2166
  %v2168 = vpop.f32.mrb[0].mxu0
  %v2169 = vpop.f32.mrb[0].mxu0
  %v2170 = vadd.f32 0.0, %v2169
  %v2171 = vpop.f32.mrb[0].mxu0
  %2172 = vmatprep.mubr.bf16.mxu0 0
  %2173 = vmatmul.mubr.bf16.gmra.mrb[0].mxu0 %v2127
  %v2174 = vpop.f32.mrb[0].mxu0
  %v2175 = vadd.f32 0.0, %v2174
  %v2176 = vpop.f32.mrb[0].mxu0
  %v2177 = vpop.f32.mrb[0].mxu0
  %v2178 = vadd.f32 0.0, %v2177
  %v2179 = vpop.f32.mrb[0].mxu0
  %2180 = vdwg.mxu0
  %v2181 = vadd.f32 %v2047, %v2167
  %v2182 = vadd.f32 %v2048, %v2170
  %v2183 = vadd.f32 %v2049, %v2175
  %v2184 = vadd.f32 %v2050, %v2178
  %v2185 = vld [vmem:[%s2 + $0xf0] sm:$0xf]
  %v2186 = vld [vmem:[%s2 + $0xf4] sm:$0xf]
  %v2187 = vld [vmem:[%s2 + $0xf8] sm:$0xf]
  %v2188 = vld [vmem:[%s2 + $0xfc] sm:$0xf]
  %v2189 = vld [vmem:[%s3 + $0x14] sm:$0xc]
  %v2194 = vunpack.c.l.b16 %v2185
  %v2195 = vunpack.c.l.b16 %v2186
  %v2196 = vunpack.c.l.b16 %v2187
  %v2197 = vunpack.c.l.b16 %v2188
  %v2198 = vpack.c.b16 %v2195, %v2194
  %v2199 = vpack.c.b16 %v2197, %v2196
  %2202 = vmatprep.subr.bf16.mxu0 0
  %2203 = vmatpush1.bf16.msra.mxu0 %v128
  %2204 = vmatprep.subr.bf16.mxu0 0
  %2205 = vmatpush1.bf16.msra.mxu0 %v129
  %2206 = vmatprep.subr.bf16.mxu0 0
  %2207 = vmatpush1.bf16.msra.mxu0 %v130
  %2208 = vmatprep.subr.bf16.mxu0 0
  %2209 = vmatpush1.bf16.msra.mxu0 %v131
  %2210 = vmatprep.subr.bf16.mxu0 0
  %2211 = vmatpush1.bf16.msra.mxu0 %v132
  %2212 = vmatprep.subr.bf16.mxu0 0
  %2213 = vmatpush1.bf16.msra.mxu0 %v133
  %2214 = vmatprep.subr.bf16.mxu0 0
  %2215 = vmatpush1.bf16.msra.mxu0 %v134
  %2216 = vmatprep.subr.bf16.mxu0 0
  %2217 = vmatpush1.bf16.msra.mxu0 %v135
  %2218 = vmatprep.subr.bf16.mxu0 0
  %2219 = vmatpush1.bf16.msra.mxu0 0
  %2220 = vmatprep.subr.bf16.mxu0 0
  %2221 = vmatpush1.bf16.msra.mxu0 0
  %2222 = vmatprep.subr.bf16.mxu0 0
  %2223 = vmatpush1.bf16.msra.mxu0 0
  %2224 = vmatprep.subr.bf16.mxu0 0
  %2225 = vmatpush1.bf16.msra.mxu0 0
  %2226 = vmatprep.subr.bf16.mxu0 0
  %2227 = vmatpush1.bf16.msra.mxu0 0
  %2228 = vmatprep.subr.bf16.mxu0 0
  %2229 = vmatpush1.bf16.msra.mxu0 0
  %2230 = vmatprep.subr.bf16.mxu0 0
  %2231 = vmatpush1.bf16.msra.mxu0 0
  %2232 = vmatprep.subr.bf16.mxu0 0
  %2233 = vmatpush1.bf16.msra.mxu0 0
  %2234 = vmatprep.mubr.bf16.mxu0 0
  %2235 = vmatmul.mubr.bf16.gmra.mrb[0].mxu0 %v2198
  %v2236 = vpop.f32.mrb[0].mxu0
  %v2237 = vadd.f32 0.0, %v2236
  %v2238 = vpop.f32.mrb[0].mxu0
  %v2239 = vpop.f32.mrb[0].mxu0
  %v2240 = vadd.f32 0.0, %v2239
  %v2241 = vpop.f32.mrb[0].mxu0
  %2242 = vmatprep.mubr.bf16.mxu0 0
  %2243 = vmatmul.mubr.bf16.gmra.mrb[0].mxu0 %v2199
  %v2244 = vpop.f32.mrb[0].mxu0
  %v2245 = vadd.f32 0.0, %v2244
  %v2246 = vpop.f32.mrb[0].mxu0
  %v2247 = vpop.f32.mrb[0].mxu0
  %v2248 = vadd.f32 0.0, %v2247
  %v2249 = vpop.f32.mrb[0].mxu0
  %2250 = vdwg.mxu0
  %v2251 = vpack.c.bf16 %v2240, %v2237
  %v2252 = vpack.c.bf16 %v2248, %v2245
  %v2254 = vunpack.c.l.b16 %v2189
  %v2255 = vpack.c.b16 %v2254, %v2254
  %v2257 = vshrl.u32 %v2255, 16
  %v2259 = vrot.slane %v2257, 2
  %v2260 = vshll.u32 %v2255, 16
  %v2262 = vrot.slane %v2260, 3
  %v2263 = vor.u32 %v2259, %v2262
  %v2265 = vsel %vm274, %v2251, 0
  %v2268 = vsel %vm274, %v2252, 0
  %v2271 = vand.u32 %v2263, %v284
  %2273 = vmatprep.subr.bf16.mxu0 0
  %2274 = vmatpush1.bf16.msra.mxu0 %v2271
  %2275 = vmatprep.subr.bf16.mxu0 0
  %2276 = vmatpush1.bf16.msra.mxu0 0
  %2277 = vmatprep.subr.bf16.mxu0 0
  %2278 = vmatpush1.bf16.msra.mxu0 0
  %2279 = vmatprep.subr.bf16.mxu0 0
  %2280 = vmatpush1.bf16.msra.mxu0 0
  %2281 = vmatprep.subr.bf16.mxu0 0
  %2282 = vmatpush1.bf16.msra.mxu0 0
  %2283 = vmatprep.subr.bf16.mxu0 0
  %2284 = vmatpush1.bf16.msra.mxu0 0
  %2285 = vmatprep.subr.bf16.mxu0 0
  %2286 = vmatpush1.bf16.msra.mxu0 0
  %2287 = vmatprep.subr.bf16.mxu0 0
  %2288 = vmatpush1.bf16.msra.mxu0 0
  %2289 = vmatprep.subr.bf16.mxu0 0
  %2290 = vmatpush1.bf16.msra.mxu0 0
  %2291 = vmatprep.subr.bf16.mxu0 0
  %2292 = vmatpush1.bf16.msra.mxu0 0
  %2293 = vmatprep.subr.bf16.mxu0 0
  %2294 = vmatpush1.bf16.msra.mxu0 0
  %2295 = vmatprep.subr.bf16.mxu0 0
  %2296 = vmatpush1.bf16.msra.mxu0 0
  %2297 = vmatprep.subr.bf16.mxu0 0
  %2298 = vmatpush1.bf16.msra.mxu0 0
  %2299 = vmatprep.subr.bf16.mxu0 0
  %2300 = vmatpush1.bf16.msra.mxu0 0
  %2301 = vmatprep.subr.bf16.mxu0 0
  %2302 = vmatpush1.bf16.msra.mxu0 0
  %2303 = vmatprep.subr.bf16.mxu0 0
  %2304 = vmatpush1.bf16.msra.mxu0 0
  %2305 = vmatprep.mubr.bf16.mxu0 0
  %2306 = vmatmul.mubr.bf16.gmra.mrb[0].mxu0 %v2265
  %v2307 = vpop.f32.mrb[0].mxu0
  %v2308 = vadd.f32 0.0, %v2307
  %v2309 = vpop.f32.mrb[0].mxu0
  %v2310 = vpop.f32.mrb[0].mxu0
  %v2311 = vadd.f32 0.0, %v2310
  %v2312 = vpop.f32.mrb[0].mxu0
  %2313 = vmatprep.mubr.bf16.mxu0 0
  %2314 = vmatmul.mubr.bf16.gmra.mrb[0].mxu0 %v2268
  %v2315 = vpop.f32.mrb[0].mxu0
  %v2316 = vadd.f32 0.0, %v2315
  %v2317 = vpop.f32.mrb[0].mxu0
  %v2318 = vpop.f32.mrb[0].mxu0
  %v2319 = vadd.f32 0.0, %v2318
  %v2320 = vpop.f32.mrb[0].mxu0
  %2321 = vdwg.mxu0
  %v2322 = vadd.f32 %v2181, %v2308
  %v2323 = vadd.f32 %v2182, %v2311
  %v2324 = vadd.f32 %v2183, %v2316
  %v2325 = vadd.f32 %v2184, %v2319
  %vm2326 = vcmp.gt.f32.partialorder %v2322, 0.0
  %vm2327 = vcmp.gt.f32.partialorder %v2323, 0.0
  %vm2328 = vcmp.gt.f32.partialorder %v2324, 0.0
  %vm2329 = vcmp.gt.f32.partialorder %v2325, 0.0
  %v2330 = vmul.f32 %v2322, 0.2
  %v2331 = vmul.f32 %v2323, 0.2
  %v2332 = vmul.f32 %v2324, 0.2
  %v2333 = vmul.f32 %v2325, 0.2
  %v2334 = vsel %vm2326, %v2322, %v2330
  %v2335 = vsel %vm2327, %v2323, %v2331
  %v2336 = vsel %vm2328, %v2324, %v2332
  %v2337 = vsel %vm2329, %v2325, %v2333
  %v2338 = vpack.c.bf16 %v2335, %v2334
  %v2339 = vpack.c.bf16 %v2337, %v2336
  %v2340 = vld [vmem:[%s4] sm:$0xf]
  %v2341 = vld [vmem:[%s4 + $0x4] sm:$0xf]
  %v2342 = vld [vmem:[%s4 + $0x8] sm:$0xf]
  %v2343 = vld [vmem:[%s4 + $0xc] sm:$0xf]
  %v2344 = vld [vmem:[%s5] sm:$0xf]
  %v2349 = vunpack.c.l.b16 %v2340
  %v2350 = vunpack.c.l.b16 %v2341
  %v2351 = vunpack.c.l.b16 %v2342
  %v2352 = vunpack.c.l.b16 %v2343
  %v2353 = vpack.c.b16 %v2350, %v2349
  %v2354 = vpack.c.b16 %v2352, %v2351
  %vm2355 = vcmask 261120
  %v2357 = vsel %vm2355, %v2353, 0
  %v2360 = vsel %vm2355, %v2354, 0
  %2362 = vmatprep.subr.bf16.mxu0 0
  %2363 = vmatpush1.bf16.msra.mxu0 %v2338
  %2364 = vmatprep.subr.bf16.mxu0 0
  %2365 = vmatpush1.bf16.msra.mxu0 %v2339
  %2366 = vmatprep.subr.bf16.mxu0 0
  %2367 = vmatpush1.bf16.msra.mxu0 0
  %2368 = vmatprep.subr.bf16.mxu0 0
  %2369 = vmatpush1.bf16.msra.mxu0 0
  %2370 = vmatprep.subr.bf16.mxu0 0
  %2371 = vmatpush1.bf16.msra.mxu0 0
  %2372 = vmatprep.subr.bf16.mxu0 0
  %2373 = vmatpush1.bf16.msra.mxu0 0
  %2374 = vmatprep.subr.bf16.mxu0 0
  %2375 = vmatpush1.bf16.msra.mxu0 0
  %2376 = vmatprep.subr.bf16.mxu0 0
  %2377 = vmatpush1.bf16.msra.mxu0 0
  %2378 = vmatprep.subr.bf16.mxu0 0
  %2379 = vmatpush1.bf16.msra.mxu0 0
  %2380 = vmatprep.subr.bf16.mxu0 0
  %2381 = vmatpush1.bf16.msra.mxu0 0
  %2382 = vmatprep.subr.bf16.mxu0 0
  %2383 = vmatpush1.bf16.msra.mxu0 0
  %2384 = vmatprep.subr.bf16.mxu0 0
  %2385 = vmatpush1.bf16.msra.mxu0 0
  %2386 = vmatprep.subr.bf16.mxu0 0
  %2387 = vmatpush1.bf16.msra.mxu0 0
  %2388 = vmatprep.subr.bf16.mxu0 0
  %2389 = vmatpush1.bf16.msra.mxu0 0
  %2390 = vmatprep.subr.bf16.mxu0 0
  %2391 = vmatpush1.bf16.msra.mxu0 0
  %2392 = vmatprep.subr.bf16.mxu0 0
  %2393 = vmatpush1.bf16.msra.mxu0 0
  %2394 = vmatprep.mubr.bf16.mxu0 0
  %2395 = vmatmul.mubr.bf16.gmra.mrb[0].mxu0 %v2357
  %v2396 = vpop.f32.mrb[0].mxu0
  %v2397 = vadd.f32 0.0, %v2396
  %v2398 = vpop.f32.mrb[0].mxu0
  %v2399 = vpop.f32.mrb[0].mxu0
  %v2400 = vadd.f32 0.0, %v2399
  %v2401 = vpop.f32.mrb[0].mxu0
  %2402 = vmatprep.mubr.bf16.mxu0 0
  %2403 = vmatmul.mubr.bf16.gmra.mrb[0].mxu0 %v2360
  %v2404 = vpop.f32.mrb[0].mxu0
  %v2405 = vadd.f32 0.0, %v2404
  %v2406 = vpop.f32.mrb[0].mxu0
  %v2407 = vpop.f32.mrb[0].mxu0
  %v2408 = vadd.f32 0.0, %v2407
  %v2409 = vpop.f32.mrb[0].mxu0
  %2410 = vdwg.mxu0
  %v2411 = vpack.c.bf16 %v2400, %v2397
  %v2412 = vpack.c.bf16 %v2408, %v2405
  %v2413 = vld [vmem:[%s4 + $0x10] sm:$0xf]
  %v2414 = vld [vmem:[%s4 + $0x14] sm:$0xf]
  %v2415 = vld [vmem:[%s4 + $0x18] sm:$0xf]
  %v2416 = vld [vmem:[%s4 + $0x1c] sm:$0xf]
  %v2417 = vld [vmem:[%s5 + $0x4] sm:$0xf]
  %v2422 = vunpack.c.l.b16 %v2413
  %v2423 = vunpack.c.l.b16 %v2414
  %v2424 = vunpack.c.l.b16 %v2415
  %v2425 = vunpack.c.l.b16 %v2416
  %v2426 = vpack.c.b16 %v2423, %v2422
  %v2427 = vpack.c.b16 %v2425, %v2424
  %v2429 = vsel %vm2355, %v2426, 0
  %v2432 = vsel %vm2355, %v2427, 0
  %2434 = vmatprep.subr.bf16.mxu0 0
  %2435 = vmatpush1.bf16.msra.mxu0 %v2338
  %2436 = vmatprep.subr.bf16.mxu0 0
  %2437 = vmatpush1.bf16.msra.mxu0 %v2339
  %2438 = vmatprep.subr.bf16.mxu0 0
  %2439 = vmatpush1.bf16.msra.mxu0 0
  %2440 = vmatprep.subr.bf16.mxu0 0
  %2441 = vmatpush1.bf16.msra.mxu0 0
  %2442 = vmatprep.subr.bf16.mxu0 0
  %2443 = vmatpush1.bf16.msra.mxu0 0
  %2444 = vmatprep.subr.bf16.mxu0 0
  %2445 = vmatpush1.bf16.msra.mxu0 0
  %2446 = vmatprep.subr.bf16.mxu0 0
  %2447 = vmatpush1.bf16.msra.mxu0 0
  %2448 = vmatprep.subr.bf16.mxu0 0
  %2449 = vmatpush1.bf16.msra.mxu0 0
  %2450 = vmatprep.subr.bf16.mxu0 0
  %2451 = vmatpush1.bf16.msra.mxu0 0
  %2452 = vmatprep.subr.bf16.mxu0 0
  %2453 = vmatpush1.bf16.msra.mxu0 0
  %2454 = vmatprep.subr.bf16.mxu0 0
  %2455 = vmatpush1.bf16.msra.mxu0 0
  %2456 = vmatprep.subr.bf16.mxu0 0
  %2457 = vmatpush1.bf16.msra.mxu0 0
  %2458 = vmatprep.subr.bf16.mxu0 0
  %2459 = vmatpush1.bf16.msra.mxu0 0
  %2460 = vmatprep.subr.bf16.mxu0 0
  %2461 = vmatpush1.bf16.msra.mxu0 0
  %2462 = vmatprep.subr.bf16.mxu0 0
  %2463 = vmatpush1.bf16.msra.mxu0 0
  %2464 = vmatprep.subr.bf16.mxu0 0
  %2465 = vmatpush1.bf16.msra.mxu0 0
  %2466 = vmatprep.mubr.bf16.mxu0 0
  %2467 = vmatmul.mubr.bf16.gmra.mrb[0].mxu0 %v2429
  %v2468 = vpop.f32.mrb[0].mxu0
  %v2469 = vadd.f32 0.0, %v2468
  %v2470 = vpop.f32.mrb[0].mxu0
  %v2471 = vpop.f32.mrb[0].mxu0
  %v2472 = vadd.f32 0.0, %v2471
  %v2473 = vpop.f32.mrb[0].mxu0
  %2474 = vmatprep.mubr.bf16.mxu0 0
  %2475 = vmatmul.mubr.bf16.gmra.mrb[0].mxu0 %v2432
  %v2476 = vpop.f32.mrb[0].mxu0
  %v2477 = vadd.f32 0.0, %v2476
  %v2478 = vpop.f32.mrb[0].mxu0
  %v2479 = vpop.f32.mrb[0].mxu0
  %v2480 = vadd.f32 0.0, %v2479
  %v2481 = vpop.f32.mrb[0].mxu0
  %2482 = vdwg.mxu0
  %v2483 = vpack.c.bf16 %v2472, %v2469
  %v2484 = vpack.c.bf16 %v2480, %v2477
  %vm2485 = vcmask 64512
  %v2487 = vsel %vm2485, %v2483, 0
  %v2490 = vsel %vm2485, %v2484, 0
  %vm2492 = vcmask 1043456
  %v2494 = vsel %vm2492, %v2417, 0
  %2496 = vmatprep.subr.bf16.mxu0 0
  %2497 = vmatpush1.bf16.msra.mxu0 %v2494
  %2498 = vmatprep.subr.bf16.mxu0 0
  %2499 = vmatpush1.bf16.msra.mxu0 0
  %2500 = vmatprep.subr.bf16.mxu0 0
  %2501 = vmatpush1.bf16.msra.mxu0 0
  %2502 = vmatprep.subr.bf16.mxu0 0
  %2503 = vmatpush1.bf16.msra.mxu0 0
  %2504 = vmatprep.subr.bf16.mxu0 0
  %2505 = vmatpush1.bf16.msra.mxu0 0
  %2506 = vmatprep.subr.bf16.mxu0 0
  %2507 = vmatpush1.bf16.msra.mxu0 0
  %2508 = vmatprep.subr.bf16.mxu0 0
  %2509 = vmatpush1.bf16.msra.mxu0 0
  %2510 = vmatprep.subr.bf16.mxu0 0
  %2511 = vmatpush1.bf16.msra.mxu0 0
  %2512 = vmatprep.subr.bf16.mxu0 0
  %2513 = vmatpush1.bf16.msra.mxu0 0
  %2514 = vmatprep.subr.bf16.mxu0 0
  %2515 = vmatpush1.bf16.msra.mxu0 0
  %2516 = vmatprep.subr.bf16.mxu0 0
  %2517 = vmatpush1.bf16.msra.mxu0 0
  %2518 = vmatprep.subr.bf16.mxu0 0
  %2519 = vmatpush1.bf16.msra.mxu0 0
  %2520 = vmatprep.subr.bf16.mxu0 0
  %2521 = vmatpush1.bf16.msra.mxu0 0
  %2522 = vmatprep.subr.bf16.mxu0 0
  %2523 = vmatpush1.bf16.msra.mxu0 0
  %2524 = vmatprep.subr.bf16.mxu0 0
  %2525 = vmatpush1.bf16.msra.mxu0 0
  %2526 = vmatprep.subr.bf16.mxu0 0
  %2527 = vmatpush1.bf16.msra.mxu0 0
  %2528 = vmatprep.mubr.bf16.mxu0 0
  %2529 = vmatmul.mubr.bf16.gmra.mrb[0].mxu0 %v2487
  %v2530 = vpop.f32.mrb[0].mxu0
  %v2531 = vadd.f32 0.0, %v2530
  %v2532 = vpop.f32.mrb[0].mxu0
  %v2533 = vpop.f32.mrb[0].mxu0
  %v2534 = vadd.f32 0.0, %v2533
  %v2535 = vpop.f32.mrb[0].mxu0
  %2536 = vmatprep.mubr.bf16.mxu0 0
  %2537 = vmatmul.mubr.bf16.gmra.mrb[0].mxu0 %v2490
  %v2538 = vpop.f32.mrb[0].mxu0
  %v2539 = vadd.f32 0.0, %v2538
  %v2540 = vpop.f32.mrb[0].mxu0
  %v2541 = vpop.f32.mrb[0].mxu0
  %v2542 = vadd.f32 0.0, %v2541
  %v2543 = vpop.f32.mrb[0].mxu0
  %2544 = vdwg.mxu0
  %v2546 = vsel %vm2485, %v2411, 0
  %v2549 = vsel %vm2485, %v2412, 0
  %v2552 = vsel %vm2492, %v2344, 0
  %2554 = vmatprep.subr.bf16.mxu0 0
  %2555 = vmatpush1.bf16.msra.mxu0 %v2552
  %2556 = vmatprep.subr.bf16.mxu0 0
  %2557 = vmatpush1.bf16.msra.mxu0 0
  %2558 = vmatprep.subr.bf16.mxu0 0
  %2559 = vmatpush1.bf16.msra.mxu0 0
  %2560 = vmatprep.subr.bf16.mxu0 0
  %2561 = vmatpush1.bf16.msra.mxu0 0
  %2562 = vmatprep.subr.bf16.mxu0 0
  %2563 = vmatpush1.bf16.msra.mxu0 0
  %2564 = vmatprep.subr.bf16.mxu0 0
  %2565 = vmatpush1.bf16.msra.mxu0 0
  %2566 = vmatprep.subr.bf16.mxu0 0
  %2567 = vmatpush1.bf16.msra.mxu0 0
  %2568 = vmatprep.subr.bf16.mxu0 0
  %2569 = vmatpush1.bf16.msra.mxu0 0
  %2570 = vmatprep.subr.bf16.mxu0 0
  %2571 = vmatpush1.bf16.msra.mxu0 0
  %2572 = vmatprep.subr.bf16.mxu0 0
  %2573 = vmatpush1.bf16.msra.mxu0 0
  %2574 = vmatprep.subr.bf16.mxu0 0
  %2575 = vmatpush1.bf16.msra.mxu0 0
  %2576 = vmatprep.subr.bf16.mxu0 0
  %2577 = vmatpush1.bf16.msra.mxu0 0
  %2578 = vmatprep.subr.bf16.mxu0 0
  %2579 = vmatpush1.bf16.msra.mxu0 0
  %2580 = vmatprep.subr.bf16.mxu0 0
  %2581 = vmatpush1.bf16.msra.mxu0 0
  %2582 = vmatprep.subr.bf16.mxu0 0
  %2583 = vmatpush1.bf16.msra.mxu0 0
  %2584 = vmatprep.subr.bf16.mxu0 0
  %2585 = vmatpush1.bf16.msra.mxu0 0
  %2586 = vmatprep.mubr.bf16.mxu0 0
  %2587 = vmatmul.mubr.bf16.gmra.mrb[0].mxu0 %v2546
  %v2588 = vpop.f32.mrb[0].mxu0
  %v2589 = vadd.f32 %v2531, %v2588
  %v2590 = vpop.f32.mrb[0].mxu0
  %v2591 = vpop.f32.mrb[0].mxu0
  %v2592 = vadd.f32 %v2534, %v2591
  %v2593 = vpop.f32.mrb[0].mxu0
  %2594 = vmatprep.mubr.bf16.mxu0 0
  %2595 = vmatmul.mubr.bf16.gmra.mrb[0].mxu0 %v2549
  %v2596 = vpop.f32.mrb[0].mxu0
  %v2597 = vadd.f32 %v2539, %v2596
  %v2598 = vpop.f32.mrb[0].mxu0
  %v2599 = vpop.f32.mrb[0].mxu0
  %v2600 = vadd.f32 %v2542, %v2599
  %v2601 = vpop.f32.mrb[0].mxu0
  %2602 = vdwg.mxu0
  %v2603 = vld [vmem:[%s4 + $0x20] sm:$0xf]
  %v2604 = vld [vmem:[%s4 + $0x24] sm:$0xf]
  %v2605 = vld [vmem:[%s4 + $0x28] sm:$0xf]
  %v2606 = vld [vmem:[%s4 + $0x2c] sm:$0xf]
  %v2607 = vld [vmem:[%s5 + $0x8] sm:$0xf]
  %v2612 = vunpack.c.l.b16 %v2603
  %v2613 = vunpack.c.l.b16 %v2604
  %v2614 = vunpack.c.l.b16 %v2605
  %v2615 = vunpack.c.l.b16 %v2606
  %v2616 = vpack.c.b16 %v2613, %v2612
  %v2617 = vpack.c.b16 %v2615, %v2614
  %v2619 = vsel %vm2355, %v2616, 0
  %v2622 = vsel %vm2355, %v2617, 0
  %2624 = vmatprep.subr.bf16.mxu0 0
  %2625 = vmatpush1.bf16.msra.mxu0 %v2338
  %2626 = vmatprep.subr.bf16.mxu0 0
  %2627 = vmatpush1.bf16.msra.mxu0 %v2339
  %2628 = vmatprep.subr.bf16.mxu0 0
  %2629 = vmatpush1.bf16.msra.mxu0 0
  %2630 = vmatprep.subr.bf16.mxu0 0
  %2631 = vmatpush1.bf16.msra.mxu0 0
  %2632 = vmatprep.subr.bf16.mxu0 0
  %2633 = vmatpush1.bf16.msra.mxu0 0
  %2634 = vmatprep.subr.bf16.mxu0 0
  %2635 = vmatpush1.bf16.msra.mxu0 0
  %2636 = vmatprep.subr.bf16.mxu0 0
  %2637 = vmatpush1.bf16.msra.mxu0 0
  %2638 = vmatprep.subr.bf16.mxu0 0
  %2639 = vmatpush1.bf16.msra.mxu0 0
  %2640 = vmatprep.subr.bf16.mxu0 0
  %2641 = vmatpush1.bf16.msra.mxu0 0
  %2642 = vmatprep.subr.bf16.mxu0 0
  %2643 = vmatpush1.bf16.msra.mxu0 0
  %2644 = vmatprep.subr.bf16.mxu0 0
  %2645 = vmatpush1.bf16.msra.mxu0 0
  %2646 = vmatprep.subr.bf16.mxu0 0
  %2647 = vmatpush1.bf16.msra.mxu0 0
  %2648 = vmatprep.subr.bf16.mxu0 0
  %2649 = vmatpush1.bf16.msra.mxu0 0
  %2650 = vmatprep.subr.bf16.mxu0 0
  %2651 = vmatpush1.bf16.msra.mxu0 0
  %2652 = vmatprep.subr.bf16.mxu0 0
  %2653 = vmatpush1.bf16.msra.mxu0 0
  %2654 = vmatprep.subr.bf16.mxu0 0
  %2655 = vmatpush1.bf16.msra.mxu0 0
  %2656 = vmatprep.mubr.bf16.mxu0 0
  %2657 = vmatmul.mubr.bf16.gmra.mrb[0].mxu0 %v2619
  %v2658 = vpop.f32.mrb[0].mxu0
  %v2659 = vadd.f32 0.0, %v2658
  %v2660 = vpop.f32.mrb[0].mxu0
  %v2661 = vpop.f32.mrb[0].mxu0
  %v2662 = vadd.f32 0.0, %v2661
  %v2663 = vpop.f32.mrb[0].mxu0
  %2664 = vmatprep.mubr.bf16.mxu0 0
  %2665 = vmatmul.mubr.bf16.gmra.mrb[0].mxu0 %v2622
  %v2666 = vpop.f32.mrb[0].mxu0
  %v2667 = vadd.f32 0.0, %v2666
  %v2668 = vpop.f32.mrb[0].mxu0
  %v2669 = vpop.f32.mrb[0].mxu0
  %v2670 = vadd.f32 0.0, %v2669
  %v2671 = vpop.f32.mrb[0].mxu0
  %2672 = vdwg.mxu0
  %v2673 = vpack.c.bf16 %v2662, %v2659
  %v2674 = vpack.c.bf16 %v2670, %v2667
  %v2676 = vsel %vm2485, %v2673, 0
  %v2679 = vsel %vm2485, %v2674, 0
  %v2682 = vsel %vm2492, %v2607, 0
  %2684 = vmatprep.subr.bf16.mxu0 0
  %2685 = vmatpush1.bf16.msra.mxu0 %v2682
  %2686 = vmatprep.subr.bf16.mxu0 0
  %2687 = vmatpush1.bf16.msra.mxu0 0
  %2688 = vmatprep.subr.bf16.mxu0 0
  %2689 = vmatpush1.bf16.msra.mxu0 0
  %2690 = vmatprep.subr.bf16.mxu0 0
  %2691 = vmatpush1.bf16.msra.mxu0 0
  %2692 = vmatprep.subr.bf16.mxu0 0
  %2693 = vmatpush1.bf16.msra.mxu0 0
  %2694 = vmatprep.subr.bf16.mxu0 0
  %2695 = vmatpush1.bf16.msra.mxu0 0
  %2696 = vmatprep.subr.bf16.mxu0 0
  %2697 = vmatpush1.bf16.msra.mxu0 0
  %2698 = vmatprep.subr.bf16.mxu0 0
  %2699 = vmatpush1.bf16.msra.mxu0 0
  %2700 = vmatprep.subr.bf16.mxu0 0
  %2701 = vmatpush1.bf16.msra.mxu0 0
  %2702 = vmatprep.subr.bf16.mxu0 0
  %2703 = vmatpush1.bf16.msra.mxu0 0
  %2704 = vmatprep.subr.bf16.mxu0 0
  %2705 = vmatpush1.bf16.msra.mxu0 0
  %2706 = vmatprep.subr.bf16.mxu0 0
  %2707 = vmatpush1.bf16.msra.mxu0 0
  %2708 = vmatprep.subr.bf16.mxu0 0
  %2709 = vmatpush1.bf16.msra.mxu0 0
  %2710 = vmatprep.subr.bf16.mxu0 0
  %2711 = vmatpush1.bf16.msra.mxu0 0
  %2712 = vmatprep.subr.bf16.mxu0 0
  %2713 = vmatpush1.bf16.msra.mxu0 0
  %2714 = vmatprep.subr.bf16.mxu0 0
  %2715 = vmatpush1.bf16.msra.mxu0 0
  %2716 = vmatprep.mubr.bf16.mxu0 0
  %2717 = vmatmul.mubr.bf16.gmra.mrb[0].mxu0 %v2676
  %v2718 = vpop.f32.mrb[0].mxu0
  %v2719 = vadd.f32 0.0, %v2718
  %v2720 = vpop.f32.mrb[0].mxu0
  %v2721 = vpop.f32.mrb[0].mxu0
  %v2722 = vadd.f32 0.0, %v2721
  %v2723 = vpop.f32.mrb[0].mxu0
  %2724 = vmatprep.mubr.bf16.mxu0 0
  %2725 = vmatmul.mubr.bf16.gmra.mrb[0].mxu0 %v2679
  %v2726 = vpop.f32.mrb[0].mxu0
  %v2727 = vadd.f32 0.0, %v2726
  %v2728 = vpop.f32.mrb[0].mxu0
  %v2729 = vpop.f32.mrb[0].mxu0
  %v2730 = vadd.f32 0.0, %v2729
  %v2731 = vpop.f32.mrb[0].mxu0
  %2732 = vdwg.mxu0
  %v2733 = vadd.f32 %v2589, %v2719
  %v2734 = vadd.f32 %v2592, %v2722
  %v2735 = vadd.f32 %v2597, %v2727
  %v2736 = vadd.f32 %v2600, %v2730
  %v2737 = vld [vmem:[%s4 + $0x30] sm:$0xf]
  %v2738 = vld [vmem:[%s4 + $0x34] sm:$0xf]
  %v2739 = vld [vmem:[%s4 + $0x38] sm:$0xf]
  %v2740 = vld [vmem:[%s4 + $0x3c] sm:$0xf]
  %v2741 = vld [vmem:[%s5 + $0xc] sm:$0xf]
  %v2746 = vunpack.c.l.b16 %v2737
  %v2747 = vunpack.c.l.b16 %v2738
  %v2748 = vunpack.c.l.b16 %v2739
  %v2749 = vunpack.c.l.b16 %v2740
  %v2750 = vpack.c.b16 %v2747, %v2746
  %v2751 = vpack.c.b16 %v2749, %v2748
  %v2753 = vsel %vm2355, %v2750, 0
  %v2756 = vsel %vm2355, %v2751, 0
  %2758 = vmatprep.subr.bf16.mxu0 0
  %2759 = vmatpush1.bf16.msra.mxu0 %v2338
  %2760 = vmatprep.subr.bf16.mxu0 0
  %2761 = vmatpush1.bf16.msra.mxu0 %v2339
  %2762 = vmatprep.subr.bf16.mxu0 0
  %2763 = vmatpush1.bf16.msra.mxu0 0
  %2764 = vmatprep.subr.bf16.mxu0 0
  %2765 = vmatpush1.bf16.msra.mxu0 0
  %2766 = vmatprep.subr.bf16.mxu0 0
  %2767 = vmatpush1.bf16.msra.mxu0 0
  %2768 = vmatprep.subr.bf16.mxu0 0
  %2769 = vmatpush1.bf16.msra.mxu0 0
  %2770 = vmatprep.subr.bf16.mxu0 0
  %2771 = vmatpush1.bf16.msra.mxu0 0
  %2772 = vmatprep.subr.bf16.mxu0 0
  %2773 = vmatpush1.bf16.msra.mxu0 0
  %2774 = vmatprep.subr.bf16.mxu0 0
  %2775 = vmatpush1.bf16.msra.mxu0 0
  %2776 = vmatprep.subr.bf16.mxu0 0
  %2777 = vmatpush1.bf16.msra.mxu0 0
  %2778 = vmatprep.subr.bf16.mxu0 0
  %2779 = vmatpush1.bf16.msra.mxu0 0
  %2780 = vmatprep.subr.bf16.mxu0 0
  %2781 = vmatpush1.bf16.msra.mxu0 0
  %2782 = vmatprep.subr.bf16.mxu0 0
  %2783 = vmatpush1.bf16.msra.mxu0 0
  %2784 = vmatprep.subr.bf16.mxu0 0
  %2785 = vmatpush1.bf16.msra.mxu0 0
  %2786 = vmatprep.subr.bf16.mxu0 0
  %2787 = vmatpush1.bf16.msra.mxu0 0
  %2788 = vmatprep.subr.bf16.mxu0 0
  %2789 = vmatpush1.bf16.msra.mxu0 0
  %2790 = vmatprep.mubr.bf16.mxu0 0
  %2791 = vmatmul.mubr.bf16.gmra.mrb[0].mxu0 %v2753
  %v2792 = vpop.f32.mrb[0].mxu0
  %v2793 = vadd.f32 0.0, %v2792
  %v2794 = vpop.f32.mrb[0].mxu0
  %v2795 = vpop.f32.mrb[0].mxu0
  %v2796 = vadd.f32 0.0, %v2795
  %v2797 = vpop.f32.mrb[0].mxu0
  %2798 = vmatprep.mubr.bf16.mxu0 0
  %2799 = vmatmul.mubr.bf16.gmra.mrb[0].mxu0 %v2756
  %v2800 = vpop.f32.mrb[0].mxu0
  %v2801 = vadd.f32 0.0, %v2800
  %v2802 = vpop.f32.mrb[0].mxu0
  %v2803 = vpop.f32.mrb[0].mxu0
  %v2804 = vadd.f32 0.0, %v2803
  %v2805 = vpop.f32.mrb[0].mxu0
  %2806 = vdwg.mxu0
  %v2807 = vpack.c.bf16 %v2796, %v2793
  %v2808 = vpack.c.bf16 %v2804, %v2801
  %v2810 = vsel %vm2485, %v2807, 0
  %v2813 = vsel %vm2485, %v2808, 0
  %v2816 = vsel %vm2492, %v2741, 0
  %2818 = vmatprep.subr.bf16.mxu0 0
  %2819 = vmatpush1.bf16.msra.mxu0 %v2816
  %2820 = vmatprep.subr.bf16.mxu0 0
  %2821 = vmatpush1.bf16.msra.mxu0 0
  %2822 = vmatprep.subr.bf16.mxu0 0
  %2823 = vmatpush1.bf16.msra.mxu0 0
  %2824 = vmatprep.subr.bf16.mxu0 0
  %2825 = vmatpush1.bf16.msra.mxu0 0
  %2826 = vmatprep.subr.bf16.mxu0 0
  %2827 = vmatpush1.bf16.msra.mxu0 0
  %2828 = vmatprep.subr.bf16.mxu0 0
  %2829 = vmatpush1.bf16.msra.mxu0 0
  %2830 = vmatprep.subr.bf16.mxu0 0
  %2831 = vmatpush1.bf16.msra.mxu0 0
  %2832 = vmatprep.subr.bf16.mxu0 0
  %2833 = vmatpush1.bf16.msra.mxu0 0
  %2834 = vmatprep.subr.bf16.mxu0 0
  %2835 = vmatpush1.bf16.msra.mxu0 0
  %2836 = vmatprep.subr.bf16.mxu0 0
  %2837 = vmatpush1.bf16.msra.mxu0 0
  %2838 = vmatprep.subr.bf16.mxu0 0
  %2839 = vmatpush1.bf16.msra.mxu0 0
  %2840 = vmatprep.subr.bf16.mxu0 0
  %2841 = vmatpush1.bf16.msra.mxu0 0
  %2842 = vmatprep.subr.bf16.mxu0 0
  %2843 = vmatpush1.bf16.msra.mxu0 0
  %2844 = vmatprep.subr.bf16.mxu0 0
  %2845 = vmatpush1.bf16.msra.mxu0 0
  %2846 = vmatprep.subr.bf16.mxu0 0
  %2847 = vmatpush1.bf16.msra.mxu0 0
  %2848 = vmatprep.subr.bf16.mxu0 0
  %2849 = vmatpush1.bf16.msra.mxu0 0
  %2850 = vmatprep.mubr.bf16.mxu0 0
  %2851 = vmatmul.mubr.bf16.gmra.mrb[0].mxu0 %v2810
  %v2852 = vpop.f32.mrb[0].mxu0
  %v2853 = vadd.f32 0.0, %v2852
  %v2854 = vpop.f32.mrb[0].mxu0
  %v2855 = vpop.f32.mrb[0].mxu0
  %v2856 = vadd.f32 0.0, %v2855
  %v2857 = vpop.f32.mrb[0].mxu0
  %2858 = vmatprep.mubr.bf16.mxu0 0
  %2859 = vmatmul.mubr.bf16.gmra.mrb[0].mxu0 %v2813
  %v2860 = vpop.f32.mrb[0].mxu0
  %v2861 = vadd.f32 0.0, %v2860
  %v2862 = vpop.f32.mrb[0].mxu0
  %v2863 = vpop.f32.mrb[0].mxu0
  %v2864 = vadd.f32 0.0, %v2863
  %v2865 = vpop.f32.mrb[0].mxu0
  %2866 = vdwg.mxu0
  %v2867 = vadd.f32 %v2733, %v2853
  %v2868 = vadd.f32 %v2734, %v2856
  %v2869 = vadd.f32 %v2735, %v2861
  %v2870 = vadd.f32 %v2736, %v2864
  %v2871 = vld [vmem:[%s4 + $0x40] sm:$0xf]
  %v2872 = vld [vmem:[%s4 + $0x44] sm:$0xf]
  %v2873 = vld [vmem:[%s4 + $0x48] sm:$0xf]
  %v2874 = vld [vmem:[%s4 + $0x4c] sm:$0xf]
  %v2875 = vld [vmem:[%s5 + $0x10] sm:$0xf]
  %v2880 = vunpack.c.l.b16 %v2871
  %v2881 = vunpack.c.l.b16 %v2872
  %v2882 = vunpack.c.l.b16 %v2873
  %v2883 = vunpack.c.l.b16 %v2874
  %v2884 = vpack.c.b16 %v2881, %v2880
  %v2885 = vpack.c.b16 %v2883, %v2882
  %v2887 = vsel %vm2355, %v2884, 0
  %v2890 = vsel %vm2355, %v2885, 0
  %2892 = vmatprep.subr.bf16.mxu0 0
  %2893 = vmatpush1.bf16.msra.mxu0 %v2338
  %2894 = vmatprep.subr.bf16.mxu0 0
  %2895 = vmatpush1.bf16.msra.mxu0 %v2339
  %2896 = vmatprep.subr.bf16.mxu0 0
  %2897 = vmatpush1.bf16.msra.mxu0 0
  %2898 = vmatprep.subr.bf16.mxu0 0
  %2899 = vmatpush1.bf16.msra.mxu0 0
  %2900 = vmatprep.subr.bf16.mxu0 0
  %2901 = vmatpush1.bf16.msra.mxu0 0
  %2902 = vmatprep.subr.bf16.mxu0 0
  %2903 = vmatpush1.bf16.msra.mxu0 0
  %2904 = vmatprep.subr.bf16.mxu0 0
  %2905 = vmatpush1.bf16.msra.mxu0 0
  %2906 = vmatprep.subr.bf16.mxu0 0
  %2907 = vmatpush1.bf16.msra.mxu0 0
  %2908 = vmatprep.subr.bf16.mxu0 0
  %2909 = vmatpush1.bf16.msra.mxu0 0
  %2910 = vmatprep.subr.bf16.mxu0 0
  %2911 = vmatpush1.bf16.msra.mxu0 0
  %2912 = vmatprep.subr.bf16.mxu0 0
  %2913 = vmatpush1.bf16.msra.mxu0 0
  %2914 = vmatprep.subr.bf16.mxu0 0
  %2915 = vmatpush1.bf16.msra.mxu0 0
  %2916 = vmatprep.subr.bf16.mxu0 0
  %2917 = vmatpush1.bf16.msra.mxu0 0
  %2918 = vmatprep.subr.bf16.mxu0 0
  %2919 = vmatpush1.bf16.msra.mxu0 0
  %2920 = vmatprep.subr.bf16.mxu0 0
  %2921 = vmatpush1.bf16.msra.mxu0 0
  %2922 = vmatprep.subr.bf16.mxu0 0
  %2923 = vmatpush1.bf16.msra.mxu0 0
  %2924 = vmatprep.mubr.bf16.mxu0 0
  %2925 = vmatmul.mubr.bf16.gmra.mrb[0].mxu0 %v2887
  %v2926 = vpop.f32.mrb[0].mxu0
  %v2927 = vadd.f32 0.0, %v2926
  %v2928 = vpop.f32.mrb[0].mxu0
  %v2929 = vpop.f32.mrb[0].mxu0
  %v2930 = vadd.f32 0.0, %v2929
  %v2931 = vpop.f32.mrb[0].mxu0
  %2932 = vmatprep.mubr.bf16.mxu0 0
  %2933 = vmatmul.mubr.bf16.gmra.mrb[0].mxu0 %v2890
  %v2934 = vpop.f32.mrb[0].mxu0
  %v2935 = vadd.f32 0.0, %v2934
  %v2936 = vpop.f32.mrb[0].mxu0
  %v2937 = vpop.f32.mrb[0].mxu0
  %v2938 = vadd.f32 0.0, %v2937
  %v2939 = vpop.f32.mrb[0].mxu0
  %2940 = vdwg.mxu0
  %v2941 = vpack.c.bf16 %v2930, %v2927
  %v2942 = vpack.c.bf16 %v2938, %v2935
  %v2944 = vsel %vm2485, %v2941, 0
  %v2947 = vsel %vm2485, %v2942, 0
  %v2950 = vsel %vm2492, %v2875, 0
  %2952 = vmatprep.subr.bf16.mxu0 0
  %2953 = vmatpush1.bf16.msra.mxu0 %v2950
  %2954 = vmatprep.subr.bf16.mxu0 0
  %2955 = vmatpush1.bf16.msra.mxu0 0
  %2956 = vmatprep.subr.bf16.mxu0 0
  %2957 = vmatpush1.bf16.msra.mxu0 0
  %2958 = vmatprep.subr.bf16.mxu0 0
  %2959 = vmatpush1.bf16.msra.mxu0 0
  %2960 = vmatprep.subr.bf16.mxu0 0
  %2961 = vmatpush1.bf16.msra.mxu0 0
  %2962 = vmatprep.subr.bf16.mxu0 0
  %2963 = vmatpush1.bf16.msra.mxu0 0
  %2964 = vmatprep.subr.bf16.mxu0 0
  %2965 = vmatpush1.bf16.msra.mxu0 0
  %2966 = vmatprep.subr.bf16.mxu0 0
  %2967 = vmatpush1.bf16.msra.mxu0 0
  %2968 = vmatprep.subr.bf16.mxu0 0
  %2969 = vmatpush1.bf16.msra.mxu0 0
  %2970 = vmatprep.subr.bf16.mxu0 0
  %2971 = vmatpush1.bf16.msra.mxu0 0
  %2972 = vmatprep.subr.bf16.mxu0 0
  %2973 = vmatpush1.bf16.msra.mxu0 0
  %2974 = vmatprep.subr.bf16.mxu0 0
  %2975 = vmatpush1.bf16.msra.mxu0 0
  %2976 = vmatprep.subr.bf16.mxu0 0
  %2977 = vmatpush1.bf16.msra.mxu0 0
  %2978 = vmatprep.subr.bf16.mxu0 0
  %2979 = vmatpush1.bf16.msra.mxu0 0
  %2980 = vmatprep.subr.bf16.mxu0 0
  %2981 = vmatpush1.bf16.msra.mxu0 0
  %2982 = vmatprep.subr.bf16.mxu0 0
  %2983 = vmatpush1.bf16.msra.mxu0 0
  %2984 = vmatprep.mubr.bf16.mxu0 0
  %2985 = vmatmul.mubr.bf16.gmra.mrb[0].mxu0 %v2944
  %v2986 = vpop.f32.mrb[0].mxu0
  %v2987 = vadd.f32 0.0, %v2986
  %v2988 = vpop.f32.mrb[0].mxu0
  %v2989 = vpop.f32.mrb[0].mxu0
  %v2990 = vadd.f32 0.0, %v2989
  %v2991 = vpop.f32.mrb[0].mxu0
  %2992 = vmatprep.mubr.bf16.mxu0 0
  %2993 = vmatmul.mubr.bf16.gmra.mrb[0].mxu0 %v2947
  %v2994 = vpop.f32.mrb[0].mxu0
  %v2995 = vadd.f32 0.0, %v2994
  %v2996 = vpop.f32.mrb[0].mxu0
  %v2997 = vpop.f32.mrb[0].mxu0
  %v2998 = vadd.f32 0.0, %v2997
  %v2999 = vpop.f32.mrb[0].mxu0
  %3000 = vdwg.mxu0
  %v3001 = vadd.f32 %v2867, %v2987
  %v3002 = vadd.f32 %v2868, %v2990
  %v3003 = vadd.f32 %v2869, %v2995
  %v3004 = vadd.f32 %v2870, %v2998
  %v3005 = vld [vmem:[%s4 + $0x50] sm:$0xf]
  %v3006 = vld [vmem:[%s4 + $0x54] sm:$0xf]
  %v3007 = vld [vmem:[%s4 + $0x58] sm:$0xf]
  %v3008 = vld [vmem:[%s4 + $0x5c] sm:$0xf]
  %v3009 = vld [vmem:[%s5 + $0x14] sm:$0xf]
  %v3014 = vunpack.c.l.b16 %v3005
  %v3015 = vunpack.c.l.b16 %v3006
  %v3016 = vunpack.c.l.b16 %v3007
  %v3017 = vunpack.c.l.b16 %v3008
  %v3018 = vpack.c.b16 %v3015, %v3014
  %v3019 = vpack.c.b16 %v3017, %v3016
  %v3021 = vsel %vm2355, %v3018, 0
  %v3024 = vsel %vm2355, %v3019, 0
  %3026 = vmatprep.subr.bf16.mxu0 0
  %3027 = vmatpush1.bf16.msra.mxu0 %v2338
  %3028 = vmatprep.subr.bf16.mxu0 0
  %3029 = vmatpush1.bf16.msra.mxu0 %v2339
  %3030 = vmatprep.subr.bf16.mxu0 0
  %3031 = vmatpush1.bf16.msra.mxu0 0
  %3032 = vmatprep.subr.bf16.mxu0 0
  %3033 = vmatpush1.bf16.msra.mxu0 0
  %3034 = vmatprep.subr.bf16.mxu0 0
  %3035 = vmatpush1.bf16.msra.mxu0 0
  %3036 = vmatprep.subr.bf16.mxu0 0
  %3037 = vmatpush1.bf16.msra.mxu0 0
  %3038 = vmatprep.subr.bf16.mxu0 0
  %3039 = vmatpush1.bf16.msra.mxu0 0
  %3040 = vmatprep.subr.bf16.mxu0 0
  %3041 = vmatpush1.bf16.msra.mxu0 0
  %3042 = vmatprep.subr.bf16.mxu0 0
  %3043 = vmatpush1.bf16.msra.mxu0 0
  %3044 = vmatprep.subr.bf16.mxu0 0
  %3045 = vmatpush1.bf16.msra.mxu0 0
  %3046 = vmatprep.subr.bf16.mxu0 0
  %3047 = vmatpush1.bf16.msra.mxu0 0
  %3048 = vmatprep.subr.bf16.mxu0 0
  %3049 = vmatpush1.bf16.msra.mxu0 0
  %3050 = vmatprep.subr.bf16.mxu0 0
  %3051 = vmatpush1.bf16.msra.mxu0 0
  %3052 = vmatprep.subr.bf16.mxu0 0
  %3053 = vmatpush1.bf16.msra.mxu0 0
  %3054 = vmatprep.subr.bf16.mxu0 0
  %3055 = vmatpush1.bf16.msra.mxu0 0
  %3056 = vmatprep.subr.bf16.mxu0 0
  %3057 = vmatpush1.bf16.msra.mxu0 0
  %3058 = vmatprep.mubr.bf16.mxu0 0
  %3059 = vmatmul.mubr.bf16.gmra.mrb[0].mxu0 %v3021
  %v3060 = vpop.f32.mrb[0].mxu0
  %v3061 = vadd.f32 0.0, %v3060
  %v3062 = vpop.f32.mrb[0].mxu0
  %v3063 = vpop.f32.mrb[0].mxu0
  %v3064 = vadd.f32 0.0, %v3063
  %v3065 = vpop.f32.mrb[0].mxu0
  %3066 = vmatprep.mubr.bf16.mxu0 0
  %3067 = vmatmul.mubr.bf16.gmra.mrb[0].mxu0 %v3024
  %v3068 = vpop.f32.mrb[0].mxu0
  %v3069 = vadd.f32 0.0, %v3068
  %v3070 = vpop.f32.mrb[0].mxu0
  %v3071 = vpop.f32.mrb[0].mxu0
  %v3072 = vadd.f32 0.0, %v3071
  %v3073 = vpop.f32.mrb[0].mxu0
  %3074 = vdwg.mxu0
  %v3075 = vpack.c.bf16 %v3064, %v3061
  %v3076 = vpack.c.bf16 %v3072, %v3069
  %v3078 = vsel %vm2485, %v3075, 0
  %v3081 = vsel %vm2485, %v3076, 0
  %v3084 = vsel %vm2492, %v3009, 0
  %3086 = vmatprep.subr.bf16.mxu0 0
  %3087 = vmatpush1.bf16.msra.mxu0 %v3084
  %3088 = vmatprep.subr.bf16.mxu0 0
  %3089 = vmatpush1.bf16.msra.mxu0 0
  %3090 = vmatprep.subr.bf16.mxu0 0
  %3091 = vmatpush1.bf16.msra.mxu0 0
  %3092 = vmatprep.subr.bf16.mxu0 0
  %3093 = vmatpush1.bf16.msra.mxu0 0
  %3094 = vmatprep.subr.bf16.mxu0 0
  %3095 = vmatpush1.bf16.msra.mxu0 0
  %3096 = vmatprep.subr.bf16.mxu0 0
  %3097 = vmatpush1.bf16.msra.mxu0 0
  %3098 = vmatprep.subr.bf16.mxu0 0
  %3099 = vmatpush1.bf16.msra.mxu0 0
  %3100 = vmatprep.subr.bf16.mxu0 0
  %3101 = vmatpush1.bf16.msra.mxu0 0
  %3102 = vmatprep.subr.bf16.mxu0 0
  %3103 = vmatpush1.bf16.msra.mxu0 0
  %3104 = vmatprep.subr.bf16.mxu0 0
  %3105 = vmatpush1.bf16.msra.mxu0 0
  %3106 = vmatprep.subr.bf16.mxu0 0
  %3107 = vmatpush1.bf16.msra.mxu0 0
  %3108 = vmatprep.subr.bf16.mxu0 0
  %3109 = vmatpush1.bf16.msra.mxu0 0
  %3110 = vmatprep.subr.bf16.mxu0 0
  %3111 = vmatpush1.bf16.msra.mxu0 0
  %3112 = vmatprep.subr.bf16.mxu0 0
  %3113 = vmatpush1.bf16.msra.mxu0 0
  %3114 = vmatprep.subr.bf16.mxu0 0
  %3115 = vmatpush1.bf16.msra.mxu0 0
  %3116 = vmatprep.subr.bf16.mxu0 0
  %3117 = vmatpush1.bf16.msra.mxu0 0
  %3118 = vmatprep.mubr.bf16.mxu0 0
  %3119 = vmatmul.mubr.bf16.gmra.mrb[0].mxu0 %v3078
  %v3120 = vpop.f32.mrb[0].mxu0
  %v3121 = vadd.f32 0.0, %v3120
  %v3122 = vpop.f32.mrb[0].mxu0
  %v3123 = vpop.f32.mrb[0].mxu0
  %v3124 = vadd.f32 0.0, %v3123
  %v3125 = vpop.f32.mrb[0].mxu0
  %3126 = vmatprep.mubr.bf16.mxu0 0
  %3127 = vmatmul.mubr.bf16.gmra.mrb[0].mxu0 %v3081
  %v3128 = vpop.f32.mrb[0].mxu0
  %v3129 = vadd.f32 0.0, %v3128
  %v3130 = vpop.f32.mrb[0].mxu0
  %v3131 = vpop.f32.mrb[0].mxu0
  %v3132 = vadd.f32 0.0, %v3131
  %v3133 = vpop.f32.mrb[0].mxu0
  %3134 = vdwg.mxu0
  %v3135 = vadd.f32 %v3001, %v3121
  %v3136 = vadd.f32 %v3002, %v3124
  %v3137 = vadd.f32 %v3003, %v3129
  %v3138 = vadd.f32 %v3004, %v3132
  %v3139 = vld [vmem:[%s4 + $0x60] sm:$0xf]
  %v3140 = vld [vmem:[%s4 + $0x64] sm:$0xf]
  %v3141 = vld [vmem:[%s4 + $0x68] sm:$0xf]
  %v3142 = vld [vmem:[%s4 + $0x6c] sm:$0xf]
  %v3143 = vld [vmem:[%s5 + $0x18] sm:$0xf]
  %v3148 = vunpack.c.l.b16 %v3139
  %v3149 = vunpack.c.l.b16 %v3140
  %v3150 = vunpack.c.l.b16 %v3141
  %v3151 = vunpack.c.l.b16 %v3142
  %v3152 = vpack.c.b16 %v3149, %v3148
  %v3153 = vpack.c.b16 %v3151, %v3150
  %v3155 = vsel %vm2355, %v3152, 0
  %v3158 = vsel %vm2355, %v3153, 0
  %3160 = vmatprep.subr.bf16.mxu0 0
  %3161 = vmatpush1.bf16.msra.mxu0 %v2338
  %3162 = vmatprep.subr.bf16.mxu0 0
  %3163 = vmatpush1.bf16.msra.mxu0 %v2339
  %3164 = vmatprep.subr.bf16.mxu0 0
  %3165 = vmatpush1.bf16.msra.mxu0 0
  %3166 = vmatprep.subr.bf16.mxu0 0
  %3167 = vmatpush1.bf16.msra.mxu0 0
  %3168 = vmatprep.subr.bf16.mxu0 0
  %3169 = vmatpush1.bf16.msra.mxu0 0
  %3170 = vmatprep.subr.bf16.mxu0 0
  %3171 = vmatpush1.bf16.msra.mxu0 0
  %3172 = vmatprep.subr.bf16.mxu0 0
  %3173 = vmatpush1.bf16.msra.mxu0 0
  %3174 = vmatprep.subr.bf16.mxu0 0
  %3175 = vmatpush1.bf16.msra.mxu0 0
  %3176 = vmatprep.subr.bf16.mxu0 0
  %3177 = vmatpush1.bf16.msra.mxu0 0
  %3178 = vmatprep.subr.bf16.mxu0 0
  %3179 = vmatpush1.bf16.msra.mxu0 0
  %3180 = vmatprep.subr.bf16.mxu0 0
  %3181 = vmatpush1.bf16.msra.mxu0 0
  %3182 = vmatprep.subr.bf16.mxu0 0
  %3183 = vmatpush1.bf16.msra.mxu0 0
  %3184 = vmatprep.subr.bf16.mxu0 0
  %3185 = vmatpush1.bf16.msra.mxu0 0
  %3186 = vmatprep.subr.bf16.mxu0 0
  %3187 = vmatpush1.bf16.msra.mxu0 0
  %3188 = vmatprep.subr.bf16.mxu0 0
  %3189 = vmatpush1.bf16.msra.mxu0 0
  %3190 = vmatprep.subr.bf16.mxu0 0
  %3191 = vmatpush1.bf16.msra.mxu0 0
  %3192 = vmatprep.mubr.bf16.mxu0 0
  %3193 = vmatmul.mubr.bf16.gmra.mrb[0].mxu0 %v3155
  %v3194 = vpop.f32.mrb[0].mxu0
  %v3195 = vadd.f32 0.0, %v3194
  %v3196 = vpop.f32.mrb[0].mxu0
  %v3197 = vpop.f32.mrb[0].mxu0
  %v3198 = vadd.f32 0.0, %v3197
  %v3199 = vpop.f32.mrb[0].mxu0
  %3200 = vmatprep.mubr.bf16.mxu0 0
  %3201 = vmatmul.mubr.bf16.gmra.mrb[0].mxu0 %v3158
  %v3202 = vpop.f32.mrb[0].mxu0
  %v3203 = vadd.f32 0.0, %v3202
  %v3204 = vpop.f32.mrb[0].mxu0
  %v3205 = vpop.f32.mrb[0].mxu0
  %v3206 = vadd.f32 0.0, %v3205
  %v3207 = vpop.f32.mrb[0].mxu0
  %3208 = vdwg.mxu0
  %v3209 = vpack.c.bf16 %v3198, %v3195
  %v3210 = vpack.c.bf16 %v3206, %v3203
  %v3212 = vsel %vm2485, %v3209, 0
  %v3215 = vsel %vm2485, %v3210, 0
  %v3218 = vsel %vm2492, %v3143, 0
  %3220 = vmatprep.subr.bf16.mxu0 0
  %3221 = vmatpush1.bf16.msra.mxu0 %v3218
  %3222 = vmatprep.subr.bf16.mxu0 0
  %3223 = vmatpush1.bf16.msra.mxu0 0
  %3224 = vmatprep.subr.bf16.mxu0 0
  %3225 = vmatpush1.bf16.msra.mxu0 0
  %3226 = vmatprep.subr.bf16.mxu0 0
  %3227 = vmatpush1.bf16.msra.mxu0 0
  %3228 = vmatprep.subr.bf16.mxu0 0
  %3229 = vmatpush1.bf16.msra.mxu0 0
  %3230 = vmatprep.subr.bf16.mxu0 0
  %3231 = vmatpush1.bf16.msra.mxu0 0
  %3232 = vmatprep.subr.bf16.mxu0 0
  %3233 = vmatpush1.bf16.msra.mxu0 0
  %3234 = vmatprep.subr.bf16.mxu0 0
  %3235 = vmatpush1.bf16.msra.mxu0 0
  %3236 = vmatprep.subr.bf16.mxu0 0
  %3237 = vmatpush1.bf16.msra.mxu0 0
  %3238 = vmatprep.subr.bf16.mxu0 0
  %3239 = vmatpush1.bf16.msra.mxu0 0
  %3240 = vmatprep.subr.bf16.mxu0 0
  %3241 = vmatpush1.bf16.msra.mxu0 0
  %3242 = vmatprep.subr.bf16.mxu0 0
  %3243 = vmatpush1.bf16.msra.mxu0 0
  %3244 = vmatprep.subr.bf16.mxu0 0
  %3245 = vmatpush1.bf16.msra.mxu0 0
  %3246 = vmatprep.subr.bf16.mxu0 0
  %3247 = vmatpush1.bf16.msra.mxu0 0
  %3248 = vmatprep.subr.bf16.mxu0 0
  %3249 = vmatpush1.bf16.msra.mxu0 0
  %3250 = vmatprep.subr.bf16.mxu0 0
  %3251 = vmatpush1.bf16.msra.mxu0 0
  %3252 = vmatprep.mubr.bf16.mxu0 0
  %3253 = vmatmul.mubr.bf16.gmra.mrb[0].mxu0 %v3212
  %v3254 = vpop.f32.mrb[0].mxu0
  %v3255 = vadd.f32 0.0, %v3254
  %v3256 = vpop.f32.mrb[0].mxu0
  %v3257 = vpop.f32.mrb[0].mxu0
  %v3258 = vadd.f32 0.0, %v3257
  %v3259 = vpop.f32.mrb[0].mxu0
  %3260 = vmatprep.mubr.bf16.mxu0 0
  %3261 = vmatmul.mubr.bf16.gmra.mrb[0].mxu0 %v3215
  %v3262 = vpop.f32.mrb[0].mxu0
  %v3263 = vadd.f32 0.0, %v3262
  %v3264 = vpop.f32.mrb[0].mxu0
  %v3265 = vpop.f32.mrb[0].mxu0
  %v3266 = vadd.f32 0.0, %v3265
  %v3267 = vpop.f32.mrb[0].mxu0
  %3268 = vdwg.mxu0
  %v3269 = vadd.f32 %v3135, %v3255
  %v3270 = vadd.f32 %v3136, %v3258
  %v3271 = vadd.f32 %v3137, %v3263
  %v3272 = vadd.f32 %v3138, %v3266
  %v3273 = vld [vmem:[%s4 + $0x70] sm:$0xf]
  %v3274 = vld [vmem:[%s4 + $0x74] sm:$0xf]
  %v3275 = vld [vmem:[%s4 + $0x78] sm:$0xf]
  %v3276 = vld [vmem:[%s4 + $0x7c] sm:$0xf]
  %v3277 = vld [vmem:[%s5 + $0x1c] sm:$0xf]
  %v3282 = vunpack.c.l.b16 %v3273
  %v3283 = vunpack.c.l.b16 %v3274
  %v3284 = vunpack.c.l.b16 %v3275
  %v3285 = vunpack.c.l.b16 %v3276
  %v3286 = vpack.c.b16 %v3283, %v3282
  %v3287 = vpack.c.b16 %v3285, %v3284
  %v3289 = vsel %vm2355, %v3286, 0
  %v3292 = vsel %vm2355, %v3287, 0
  %3294 = vmatprep.subr.bf16.mxu0 0
  %3295 = vmatpush1.bf16.msra.mxu0 %v2338
  %3296 = vmatprep.subr.bf16.mxu0 0
  %3297 = vmatpush1.bf16.msra.mxu0 %v2339
  %3298 = vmatprep.subr.bf16.mxu0 0
  %3299 = vmatpush1.bf16.msra.mxu0 0
  %3300 = vmatprep.subr.bf16.mxu0 0
  %3301 = vmatpush1.bf16.msra.mxu0 0
  %3302 = vmatprep.subr.bf16.mxu0 0
  %3303 = vmatpush1.bf16.msra.mxu0 0
  %3304 = vmatprep.subr.bf16.mxu0 0
  %3305 = vmatpush1.bf16.msra.mxu0 0
  %3306 = vmatprep.subr.bf16.mxu0 0
  %3307 = vmatpush1.bf16.msra.mxu0 0
  %3308 = vmatprep.subr.bf16.mxu0 0
  %3309 = vmatpush1.bf16.msra.mxu0 0
  %3310 = vmatprep.subr.bf16.mxu0 0
  %3311 = vmatpush1.bf16.msra.mxu0 0
  %3312 = vmatprep.subr.bf16.mxu0 0
  %3313 = vmatpush1.bf16.msra.mxu0 0
  %3314 = vmatprep.subr.bf16.mxu0 0
  %3315 = vmatpush1.bf16.msra.mxu0 0
  %3316 = vmatprep.subr.bf16.mxu0 0
  %3317 = vmatpush1.bf16.msra.mxu0 0
  %3318 = vmatprep.subr.bf16.mxu0 0
  %3319 = vmatpush1.bf16.msra.mxu0 0
  %3320 = vmatprep.subr.bf16.mxu0 0
  %3321 = vmatpush1.bf16.msra.mxu0 0
  %3322 = vmatprep.subr.bf16.mxu0 0
  %3323 = vmatpush1.bf16.msra.mxu0 0
  %3324 = vmatprep.subr.bf16.mxu0 0
  %3325 = vmatpush1.bf16.msra.mxu0 0
  %3326 = vmatprep.mubr.bf16.mxu0 0
  %3327 = vmatmul.mubr.bf16.gmra.mrb[0].mxu0 %v3289
  %v3328 = vpop.f32.mrb[0].mxu0
  %v3329 = vadd.f32 0.0, %v3328
  %v3330 = vpop.f32.mrb[0].mxu0
  %v3331 = vpop.f32.mrb[0].mxu0
  %v3332 = vadd.f32 0.0, %v3331
  %v3333 = vpop.f32.mrb[0].mxu0
  %3334 = vmatprep.mubr.bf16.mxu0 0
  %3335 = vmatmul.mubr.bf16.gmra.mrb[0].mxu0 %v3292
  %v3336 = vpop.f32.mrb[0].mxu0
  %v3337 = vadd.f32 0.0, %v3336
  %v3338 = vpop.f32.mrb[0].mxu0
  %v3339 = vpop.f32.mrb[0].mxu0
  %v3340 = vadd.f32 0.0, %v3339
  %v3341 = vpop.f32.mrb[0].mxu0
  %3342 = vdwg.mxu0
  %v3343 = vpack.c.bf16 %v3332, %v3329
  %v3344 = vpack.c.bf16 %v3340, %v3337
  %v3346 = vsel %vm2485, %v3343, 0
  %v3349 = vsel %vm2485, %v3344, 0
  %v3352 = vsel %vm2492, %v3277, 0
  %3354 = vmatprep.subr.bf16.mxu0 0
  %3355 = vmatpush1.bf16.msra.mxu0 %v3352
  %3356 = vmatprep.subr.bf16.mxu0 0
  %3357 = vmatpush1.bf16.msra.mxu0 0
  %3358 = vmatprep.subr.bf16.mxu0 0
  %3359 = vmatpush1.bf16.msra.mxu0 0
  %3360 = vmatprep.subr.bf16.mxu0 0
  %3361 = vmatpush1.bf16.msra.mxu0 0
  %3362 = vmatprep.subr.bf16.mxu0 0
  %3363 = vmatpush1.bf16.msra.mxu0 0
  %3364 = vmatprep.subr.bf16.mxu0 0
  %3365 = vmatpush1.bf16.msra.mxu0 0
  %3366 = vmatprep.subr.bf16.mxu0 0
  %3367 = vmatpush1.bf16.msra.mxu0 0
  %3368 = vmatprep.subr.bf16.mxu0 0
  %3369 = vmatpush1.bf16.msra.mxu0 0
  %3370 = vmatprep.subr.bf16.mxu0 0
  %3371 = vmatpush1.bf16.msra.mxu0 0
  %3372 = vmatprep.subr.bf16.mxu0 0
  %3373 = vmatpush1.bf16.msra.mxu0 0
  %3374 = vmatprep.subr.bf16.mxu0 0
  %3375 = vmatpush1.bf16.msra.mxu0 0
  %3376 = vmatprep.subr.bf16.mxu0 0
  %3377 = vmatpush1.bf16.msra.mxu0 0
  %3378 = vmatprep.subr.bf16.mxu0 0
  %3379 = vmatpush1.bf16.msra.mxu0 0
  %3380 = vmatprep.subr.bf16.mxu0 0
  %3381 = vmatpush1.bf16.msra.mxu0 0
  %3382 = vmatprep.subr.bf16.mxu0 0
  %3383 = vmatpush1.bf16.msra.mxu0 0
  %3384 = vmatprep.subr.bf16.mxu0 0
  %3385 = vmatpush1.bf16.msra.mxu0 0
  %3386 = vmatprep.mubr.bf16.mxu0 0
  %3387 = vmatmul.mubr.bf16.gmra.mrb[0].mxu0 %v3346
  %v3388 = vpop.f32.mrb[0].mxu0
  %v3389 = vadd.f32 0.0, %v3388
  %v3390 = vpop.f32.mrb[0].mxu0
  %v3391 = vpop.f32.mrb[0].mxu0
  %v3392 = vadd.f32 0.0, %v3391
  %v3393 = vpop.f32.mrb[0].mxu0
  %3394 = vmatprep.mubr.bf16.mxu0 0
  %3395 = vmatmul.mubr.bf16.gmra.mrb[0].mxu0 %v3349
  %v3396 = vpop.f32.mrb[0].mxu0
  %v3397 = vadd.f32 0.0, %v3396
  %v3398 = vpop.f32.mrb[0].mxu0
  %v3399 = vpop.f32.mrb[0].mxu0
  %v3400 = vadd.f32 0.0, %v3399
  %v3401 = vpop.f32.mrb[0].mxu0
  %3402 = vdwg.mxu0
  %v3403 = vadd.f32 %v3269, %v3389
  %v3404 = vadd.f32 %v3270, %v3392
  %v3405 = vadd.f32 %v3271, %v3397
  %v3406 = vadd.f32 %v3272, %v3400
  %v3407 = vld [vmem:[%s4 + $0x80] sm:$0xf]
  %v3408 = vld [vmem:[%s4 + $0x84] sm:$0xf]
  %v3409 = vld [vmem:[%s4 + $0x88] sm:$0xf]
  %v3410 = vld [vmem:[%s4 + $0x8c] sm:$0xf]
  %v3411 = vld [vmem:[%s5 + $0x20] sm:$0xf]
  %v3416 = vunpack.c.l.b16 %v3407
  %v3417 = vunpack.c.l.b16 %v3408
  %v3418 = vunpack.c.l.b16 %v3409
  %v3419 = vunpack.c.l.b16 %v3410
  %v3420 = vpack.c.b16 %v3417, %v3416
  %v3421 = vpack.c.b16 %v3419, %v3418
  %v3423 = vsel %vm2355, %v3420, 0
  %v3426 = vsel %vm2355, %v3421, 0
  %3428 = vmatprep.subr.bf16.mxu0 0
  %3429 = vmatpush1.bf16.msra.mxu0 %v2338
  %3430 = vmatprep.subr.bf16.mxu0 0
  %3431 = vmatpush1.bf16.msra.mxu0 %v2339
  %3432 = vmatprep.subr.bf16.mxu0 0
  %3433 = vmatpush1.bf16.msra.mxu0 0
  %3434 = vmatprep.subr.bf16.mxu0 0
  %3435 = vmatpush1.bf16.msra.mxu0 0
  %3436 = vmatprep.subr.bf16.mxu0 0
  %3437 = vmatpush1.bf16.msra.mxu0 0
  %3438 = vmatprep.subr.bf16.mxu0 0
  %3439 = vmatpush1.bf16.msra.mxu0 0
  %3440 = vmatprep.subr.bf16.mxu0 0
  %3441 = vmatpush1.bf16.msra.mxu0 0
  %3442 = vmatprep.subr.bf16.mxu0 0
  %3443 = vmatpush1.bf16.msra.mxu0 0
  %3444 = vmatprep.subr.bf16.mxu0 0
  %3445 = vmatpush1.bf16.msra.mxu0 0
  %3446 = vmatprep.subr.bf16.mxu0 0
  %3447 = vmatpush1.bf16.msra.mxu0 0
  %3448 = vmatprep.subr.bf16.mxu0 0
  %3449 = vmatpush1.bf16.msra.mxu0 0
  %3450 = vmatprep.subr.bf16.mxu0 0
  %3451 = vmatpush1.bf16.msra.mxu0 0
  %3452 = vmatprep.subr.bf16.mxu0 0
  %3453 = vmatpush1.bf16.msra.mxu0 0
  %3454 = vmatprep.subr.bf16.mxu0 0
  %3455 = vmatpush1.bf16.msra.mxu0 0
  %3456 = vmatprep.subr.bf16.mxu0 0
  %3457 = vmatpush1.bf16.msra.mxu0 0
  %3458 = vmatprep.subr.bf16.mxu0 0
  %3459 = vmatpush1.bf16.msra.mxu0 0
  %3460 = vmatprep.mubr.bf16.mxu0 0
  %3461 = vmatmul.mubr.bf16.gmra.mrb[0].mxu0 %v3423
  %v3462 = vpop.f32.mrb[0].mxu0
  %v3463 = vadd.f32 0.0, %v3462
  %v3464 = vpop.f32.mrb[0].mxu0
  %v3465 = vpop.f32.mrb[0].mxu0
  %v3466 = vadd.f32 0.0, %v3465
  %v3467 = vpop.f32.mrb[0].mxu0
  %3468 = vmatprep.mubr.bf16.mxu0 0
  %3469 = vmatmul.mubr.bf16.gmra.mrb[0].mxu0 %v3426
  %v3470 = vpop.f32.mrb[0].mxu0
  %v3471 = vadd.f32 0.0, %v3470
  %v3472 = vpop.f32.mrb[0].mxu0
  %v3473 = vpop.f32.mrb[0].mxu0
  %v3474 = vadd.f32 0.0, %v3473
  %v3475 = vpop.f32.mrb[0].mxu0
  %3476 = vdwg.mxu0
  %v3477 = vpack.c.bf16 %v3466, %v3463
  %v3478 = vpack.c.bf16 %v3474, %v3471
  %v3480 = vsel %vm2485, %v3477, 0
  %v3483 = vsel %vm2485, %v3478, 0
  %v3486 = vsel %vm2492, %v3411, 0
  %3488 = vmatprep.subr.bf16.mxu0 0
  %3489 = vmatpush1.bf16.msra.mxu0 %v3486
  %3490 = vmatprep.subr.bf16.mxu0 0
  %3491 = vmatpush1.bf16.msra.mxu0 0
  %3492 = vmatprep.subr.bf16.mxu0 0
  %3493 = vmatpush1.bf16.msra.mxu0 0
  %3494 = vmatprep.subr.bf16.mxu0 0
  %3495 = vmatpush1.bf16.msra.mxu0 0
  %3496 = vmatprep.subr.bf16.mxu0 0
  %3497 = vmatpush1.bf16.msra.mxu0 0
  %3498 = vmatprep.subr.bf16.mxu0 0
  %3499 = vmatpush1.bf16.msra.mxu0 0
  %3500 = vmatprep.subr.bf16.mxu0 0
  %3501 = vmatpush1.bf16.msra.mxu0 0
  %3502 = vmatprep.subr.bf16.mxu0 0
  %3503 = vmatpush1.bf16.msra.mxu0 0
  %3504 = vmatprep.subr.bf16.mxu0 0
  %3505 = vmatpush1.bf16.msra.mxu0 0
  %3506 = vmatprep.subr.bf16.mxu0 0
  %3507 = vmatpush1.bf16.msra.mxu0 0
  %3508 = vmatprep.subr.bf16.mxu0 0
  %3509 = vmatpush1.bf16.msra.mxu0 0
  %3510 = vmatprep.subr.bf16.mxu0 0
  %3511 = vmatpush1.bf16.msra.mxu0 0
  %3512 = vmatprep.subr.bf16.mxu0 0
  %3513 = vmatpush1.bf16.msra.mxu0 0
  %3514 = vmatprep.subr.bf16.mxu0 0
  %3515 = vmatpush1.bf16.msra.mxu0 0
  %3516 = vmatprep.subr.bf16.mxu0 0
  %3517 = vmatpush1.bf16.msra.mxu0 0
  %3518 = vmatprep.subr.bf16.mxu0 0
  %3519 = vmatpush1.bf16.msra.mxu0 0
  %3520 = vmatprep.mubr.bf16.mxu0 0
  %3521 = vmatmul.mubr.bf16.gmra.mrb[0].mxu0 %v3480
  %v3522 = vpop.f32.mrb[0].mxu0
  %v3523 = vadd.f32 0.0, %v3522
  %v3524 = vpop.f32.mrb[0].mxu0
  %v3525 = vpop.f32.mrb[0].mxu0
  %v3526 = vadd.f32 0.0, %v3525
  %v3527 = vpop.f32.mrb[0].mxu0
  %3528 = vmatprep.mubr.bf16.mxu0 0
  %3529 = vmatmul.mubr.bf16.gmra.mrb[0].mxu0 %v3483
  %v3530 = vpop.f32.mrb[0].mxu0
  %v3531 = vadd.f32 0.0, %v3530
  %v3532 = vpop.f32.mrb[0].mxu0
  %v3533 = vpop.f32.mrb[0].mxu0
  %v3534 = vadd.f32 0.0, %v3533
  %v3535 = vpop.f32.mrb[0].mxu0
  %3536 = vdwg.mxu0
  %v3537 = vadd.f32 %v3403, %v3523
  %v3538 = vadd.f32 %v3404, %v3526
  %v3539 = vadd.f32 %v3405, %v3531
  %v3540 = vadd.f32 %v3406, %v3534
  %v3541 = vld [vmem:[%s6] sm:$0x1]
  %v3543 = vlaneseq
  %v3544 = vshrl.u32 %v3543, 7
  %v3545 = vsub.s32 0, %v3544
  %v3546 = vrot.slane %v3541, %v3545
  %v3548 = vmul.f32 %v3537, %v3546
  %v3549 = vmul.f32 %v3538, %v3546
  %v3550 = vmul.f32 %v3539, %v3546
  %v3551 = vmul.f32 %v3540, %v3546
  %v3552 = vld [vmem:[%s7] sm:$0x1]
  %v3554 = vlaneseq
  %v3555 = vshrl.u32 %v3554, 7
  %v3556 = vsub.s32 0, %v3555
  %v3557 = vrot.slane %v3552, %v3556
  %v3559 = vadd.f32 %v3548, %v3557
  %v3560 = vadd.f32 %v3549, %v3557
  %v3561 = vadd.f32 %v3550, %v3557
  %v3562 = vadd.f32 %v3551, %v3557
  %vm3563 = vcmp.gt.f32.partialorder %v3559, 0.0
  %vm3564 = vcmp.gt.f32.partialorder %v3560, 0.0
  %vm3565 = vcmp.gt.f32.partialorder %v3561, 0.0
  %vm3566 = vcmp.gt.f32.partialorder %v3562, 0.0
  %v3567 = vmul.f32 %v3559, 0.2
  %v3568 = vmul.f32 %v3560, 0.2
  %v3569 = vmul.f32 %v3561, 0.2
  %v3570 = vmul.f32 %v3562, 0.2
  %v3571 = vsel %vm3563, %v3559, %v3567
  %v3572 = vsel %vm3564, %v3560, %v3568
  %v3573 = vsel %vm3565, %v3561, %v3569
  %v3574 = vsel %vm3566, %v3562, %v3570
  %v3575 = vpack.c.bf16 %v3572, %v3571
  %v3576 = vpack.c.bf16 %v3574, %v3573
  %v3577 = vld [vmem:[%s8] sm:$0xf]
  %v3578 = vld [vmem:[%s8 + $0x4] sm:$0xf]
  %3579 = vmatprep.subr.bf16.mxu0 0
  %3580 = vmatpush1.bf16.msra.mxu0 %v3575
  %3581 = vmatprep.subr.bf16.mxu0 0
  %3582 = vmatpush1.bf16.msra.mxu0 %v3576
  %3583 = vmatprep.subr.bf16.mxu0 0
  %3584 = vmatpush1.bf16.msra.mxu0 0
  %3585 = vmatprep.subr.bf16.mxu0 0
  %3586 = vmatpush1.bf16.msra.mxu0 0
  %3587 = vmatprep.subr.bf16.mxu0 0
  %3588 = vmatpush1.bf16.msra.mxu0 0
  %3589 = vmatprep.subr.bf16.mxu0 0
  %3590 = vmatpush1.bf16.msra.mxu0 0
  %3591 = vmatprep.subr.bf16.mxu0 0
  %3592 = vmatpush1.bf16.msra.mxu0 0
  %3593 = vmatprep.subr.bf16.mxu0 0
  %3594 = vmatpush1.bf16.msra.mxu0 0
  %3595 = vmatprep.subr.bf16.mxu0 0
  %3596 = vmatpush1.bf16.msra.mxu0 0
  %3597 = vmatprep.subr.bf16.mxu0 0
  %3598 = vmatpush1.bf16.msra.mxu0 0
  %3599 = vmatprep.subr.bf16.mxu0 0
  %3600 = vmatpush1.bf16.msra.mxu0 0
  %3601 = vmatprep.subr.bf16.mxu0 0
  %3602 = vmatpush1.bf16.msra.mxu0 0
  %3603 = vmatprep.subr.bf16.mxu0 0
  %3604 = vmatpush1.bf16.msra.mxu0 0
  %3605 = vmatprep.subr.bf16.mxu0 0
  %3606 = vmatpush1.bf16.msra.mxu0 0
  %3607 = vmatprep.subr.bf16.mxu0 0
  %3608 = vmatpush1.bf16.msra.mxu0 0
  %3609 = vmatprep.subr.bf16.mxu0 0
  %3610 = vmatpush1.bf16.msra.mxu0 0
  %3611 = vmatprep.mubr.bf16.mxu0 0
  %3612 = vmatmul.mubr.bf16.gmra.mrb[0].mxu0 %v2357
  %v3613 = vpop.f32.mrb[0].mxu0
  %v3614 = vadd.f32 0.0, %v3613
  %v3615 = vpop.f32.mrb[0].mxu0
  %v3616 = vpop.f32.mrb[0].mxu0
  %v3617 = vadd.f32 0.0, %v3616
  %v3618 = vpop.f32.mrb[0].mxu0
  %3619 = vmatprep.mubr.bf16.mxu0 0
  %3620 = vmatmul.mubr.bf16.gmra.mrb[0].mxu0 %v2360
  %v3621 = vpop.f32.mrb[0].mxu0
  %v3622 = vadd.f32 0.0, %v3621
  %v3623 = vpop.f32.mrb[0].mxu0
  %v3624 = vpop.f32.mrb[0].mxu0
  %v3625 = vadd.f32 0.0, %v3624
  %v3626 = vpop.f32.mrb[0].mxu0
  %3627 = vdwg.mxu0
  %v3628 = vpack.c.bf16 %v3617, %v3614
  %v3629 = vpack.c.bf16 %v3625, %v3622
  %v3630 = vld [vmem:[%s8 + $0x8] sm:$0xf]
  %v3631 = vld [vmem:[%s8 + $0xc] sm:$0xf]
  %3632 = vmatprep.subr.bf16.mxu0 0
  %3633 = vmatpush1.bf16.msra.mxu0 %v3575
  %3634 = vmatprep.subr.bf16.mxu0 0
  %3635 = vmatpush1.bf16.msra.mxu0 %v3576
  %3636 = vmatprep.subr.bf16.mxu0 0
  %3637 = vmatpush1.bf16.msra.mxu0 0
  %3638 = vmatprep.subr.bf16.mxu0 0
  %3639 = vmatpush1.bf16.msra.mxu0 0
  %3640 = vmatprep.subr.bf16.mxu0 0
  %3641 = vmatpush1.bf16.msra.mxu0 0
  %3642 = vmatprep.subr.bf16.mxu0 0
  %3643 = vmatpush1.bf16.msra.mxu0 0
  %3644 = vmatprep.subr.bf16.mxu0 0
  %3645 = vmatpush1.bf16.msra.mxu0 0
  %3646 = vmatprep.subr.bf16.mxu0 0
  %3647 = vmatpush1.bf16.msra.mxu0 0
  %3648 = vmatprep.subr.bf16.mxu0 0
  %3649 = vmatpush1.bf16.msra.mxu0 0
  %3650 = vmatprep.subr.bf16.mxu0 0
  %3651 = vmatpush1.bf16.msra.mxu0 0
  %3652 = vmatprep.subr.bf16.mxu0 0
  %3653 = vmatpush1.bf16.msra.mxu0 0
  %3654 = vmatprep.subr.bf16.mxu0 0
  %3655 = vmatpush1.bf16.msra.mxu0 0
  %3656 = vmatprep.subr.bf16.mxu0 0
  %3657 = vmatpush1.bf16.msra.mxu0 0
  %3658 = vmatprep.subr.bf16.mxu0 0
  %3659 = vmatpush1.bf16.msra.mxu0 0
  %3660 = vmatprep.subr.bf16.mxu0 0
  %3661 = vmatpush1.bf16.msra.mxu0 0
  %3662 = vmatprep.subr.bf16.mxu0 0
  %3663 = vmatpush1.bf16.msra.mxu0 0
  %3664 = vmatprep.mubr.bf16.mxu0 0
  %3665 = vmatmul.mubr.bf16.gmra.mrb[0].mxu0 %v2429
  %v3666 = vpop.f32.mrb[0].mxu0
  %v3667 = vadd.f32 0.0, %v3666
  %v3668 = vpop.f32.mrb[0].mxu0
  %v3669 = vpop.f32.mrb[0].mxu0
  %v3670 = vadd.f32 0.0, %v3669
  %v3671 = vpop.f32.mrb[0].mxu0
  %3672 = vmatprep.mubr.bf16.mxu0 0
  %3673 = vmatmul.mubr.bf16.gmra.mrb[0].mxu0 %v2432
  %v3674 = vpop.f32.mrb[0].mxu0
  %v3675 = vadd.f32 0.0, %v3674
  %v3676 = vpop.f32.mrb[0].mxu0
  %v3677 = vpop.f32.mrb[0].mxu0
  %v3678 = vadd.f32 0.0, %v3677
  %v3679 = vpop.f32.mrb[0].mxu0
  %3680 = vdwg.mxu0
  %v3681 = vpack.c.bf16 %v3670, %v3667
  %v3682 = vpack.c.bf16 %v3678, %v3675
  %v3685 = vunpack.c.l.b16 %v3630
  %v3686 = vunpack.c.l.b16 %v3631
  %v3687 = vpack.c.b16 %v3686, %v3685
  %vm3689 = vcmask 130048
  %v3691 = vsel %vm3689, %v3681, 0
  %v3694 = vsel %vm3689, %v3682, 0
  %3696 = vmatprep.subr.bf16.mxu0 0
  %3697 = vmatpush1.bf16.msra.mxu0 %v3687
  %3698 = vmatprep.subr.bf16.mxu0 0
  %3699 = vmatpush1.bf16.msra.mxu0 0
  %3700 = vmatprep.subr.bf16.mxu0 0
  %3701 = vmatpush1.bf16.msra.mxu0 0
  %3702 = vmatprep.subr.bf16.mxu0 0
  %3703 = vmatpush1.bf16.msra.mxu0 0
  %3704 = vmatprep.subr.bf16.mxu0 0
  %3705 = vmatpush1.bf16.msra.mxu0 0
  %3706 = vmatprep.subr.bf16.mxu0 0
  %3707 = vmatpush1.bf16.msra.mxu0 0
  %3708 = vmatprep.subr.bf16.mxu0 0
  %3709 = vmatpush1.bf16.msra.mxu0 0
  %3710 = vmatprep.subr.bf16.mxu0 0
  %3711 = vmatpush1.bf16.msra.mxu0 0
  %3712 = vmatprep.subr.bf16.mxu0 0
  %3713 = vmatpush1.bf16.msra.mxu0 0
  %3714 = vmatprep.subr.bf16.mxu0 0
  %3715 = vmatpush1.bf16.msra.mxu0 0
  %3716 = vmatprep.subr.bf16.mxu0 0
  %3717 = vmatpush1.bf16.msra.mxu0 0
  %3718 = vmatprep.subr.bf16.mxu0 0
  %3719 = vmatpush1.bf16.msra.mxu0 0
  %3720 = vmatprep.subr.bf16.mxu0 0
  %3721 = vmatpush1.bf16.msra.mxu0 0
  %3722 = vmatprep.subr.bf16.mxu0 0
  %3723 = vmatpush1.bf16.msra.mxu0 0
  %3724 = vmatprep.subr.bf16.mxu0 0
  %3725 = vmatpush1.bf16.msra.mxu0 0
  %3726 = vmatprep.subr.bf16.mxu0 0
  %3727 = vmatpush1.bf16.msra.mxu0 0
  %3728 = vmatprep.mubr.bf16.mxu0 0
  %3729 = vmatmul.mubr.bf16.gmra.mrb[0].mxu0 %v3691
  %v3730 = vpop.f32.mrb[0].mxu0
  %v3731 = vadd.f32 0.0, %v3730
  %v3732 = vpop.f32.mrb[0].mxu0
  %v3733 = vpop.f32.mrb[0].mxu0
  %v3734 = vadd.f32 0.0, %v3733
  %v3735 = vpop.f32.mrb[0].mxu0
  %3736 = vmatprep.mubr.bf16.mxu0 0
  %3737 = vmatmul.mubr.bf16.gmra.mrb[0].mxu0 %v3694
  %v3738 = vpop.f32.mrb[0].mxu0
  %v3739 = vadd.f32 0.0, %v3738
  %v3740 = vpop.f32.mrb[0].mxu0
  %v3741 = vpop.f32.mrb[0].mxu0
  %v3742 = vadd.f32 0.0, %v3741
  %v3743 = vpop.f32.mrb[0].mxu0
  %3744 = vdwg.mxu0
  %v3747 = vunpack.c.l.b16 %v3577
  %v3748 = vunpack.c.l.b16 %v3578
  %v3749 = vpack.c.b16 %v3748, %v3747
  %v3752 = vsel %vm3689, %v3628, 0
  %v3755 = vsel %vm3689, %v3629, 0
  %3757 = vmatprep.subr.bf16.mxu0 0
  %3758 = vmatpush1.bf16.msra.mxu0 %v3749
  %3759 = vmatprep.subr.bf16.mxu0 0
  %3760 = vmatpush1.bf16.msra.mxu0 0
  %3761 = vmatprep.subr.bf16.mxu0 0
  %3762 = vmatpush1.bf16.msra.mxu0 0
  %3763 = vmatprep.subr.bf16.mxu0 0
  %3764 = vmatpush1.bf16.msra.mxu0 0
  %3765 = vmatprep.subr.bf16.mxu0 0
  %3766 = vmatpush1.bf16.msra.mxu0 0
  %3767 = vmatprep.subr.bf16.mxu0 0
  %3768 = vmatpush1.bf16.msra.mxu0 0
  %3769 = vmatprep.subr.bf16.mxu0 0
  %3770 = vmatpush1.bf16.msra.mxu0 0
  %3771 = vmatprep.subr.bf16.mxu0 0
  %3772 = vmatpush1.bf16.msra.mxu0 0
  %3773 = vmatprep.subr.bf16.mxu0 0
  %3774 = vmatpush1.bf16.msra.mxu0 0
  %3775 = vmatprep.subr.bf16.mxu0 0
  %3776 = vmatpush1.bf16.msra.mxu0 0
  %3777 = vmatprep.subr.bf16.mxu0 0
  %3778 = vmatpush1.bf16.msra.mxu0 0
  %3779 = vmatprep.subr.bf16.mxu0 0
  %3780 = vmatpush1.bf16.msra.mxu0 0
  %3781 = vmatprep.subr.bf16.mxu0 0
  %3782 = vmatpush1.bf16.msra.mxu0 0
  %3783 = vmatprep.subr.bf16.mxu0 0
  %3784 = vmatpush1.bf16.msra.mxu0 0
  %3785 = vmatprep.subr.bf16.mxu0 0
  %3786 = vmatpush1.bf16.msra.mxu0 0
  %3787 = vmatprep.subr.bf16.mxu0 0
  %3788 = vmatpush1.bf16.msra.mxu0 0
  %3789 = vmatprep.mubr.bf16.mxu0 0
  %3790 = vmatmul.mubr.bf16.gmra.mrb[0].mxu0 %v3752
  %v3791 = vpop.f32.mrb[0].mxu0
  %v3792 = vadd.f32 %v3731, %v3791
  %v3793 = vpop.f32.mrb[0].mxu0
  %v3794 = vpop.f32.mrb[0].mxu0
  %v3795 = vadd.f32 %v3734, %v3794
  %v3796 = vpop.f32.mrb[0].mxu0
  %3797 = vmatprep.mubr.bf16.mxu0 0
  %3798 = vmatmul.mubr.bf16.gmra.mrb[0].mxu0 %v3755
  %v3799 = vpop.f32.mrb[0].mxu0
  %v3800 = vadd.f32 %v3739, %v3799
  %v3801 = vpop.f32.mrb[0].mxu0
  %v3802 = vpop.f32.mrb[0].mxu0
  %v3803 = vadd.f32 %v3742, %v3802
  %v3804 = vpop.f32.mrb[0].mxu0
  %3805 = vdwg.mxu0
  %v3806 = vld [vmem:[%s8 + $0x10] sm:$0xf]
  %v3807 = vld [vmem:[%s8 + $0x14] sm:$0xf]
  %3808 = vmatprep.subr.bf16.mxu0 0
  %3809 = vmatpush1.bf16.msra.mxu0 %v3575
  %3810 = vmatprep.subr.bf16.mxu0 0
  %3811 = vmatpush1.bf16.msra.mxu0 %v3576
  %3812 = vmatprep.subr.bf16.mxu0 0
  %3813 = vmatpush1.bf16.msra.mxu0 0
  %3814 = vmatprep.subr.bf16.mxu0 0
  %3815 = vmatpush1.bf16.msra.mxu0 0
  %3816 = vmatprep.subr.bf16.mxu0 0
  %3817 = vmatpush1.bf16.msra.mxu0 0
  %3818 = vmatprep.subr.bf16.mxu0 0
  %3819 = vmatpush1.bf16.msra.mxu0 0
  %3820 = vmatprep.subr.bf16.mxu0 0
  %3821 = vmatpush1.bf16.msra.mxu0 0
  %3822 = vmatprep.subr.bf16.mxu0 0
  %3823 = vmatpush1.bf16.msra.mxu0 0
  %3824 = vmatprep.subr.bf16.mxu0 0
  %3825 = vmatpush1.bf16.msra.mxu0 0
  %3826 = vmatprep.subr.bf16.mxu0 0
  %3827 = vmatpush1.bf16.msra.mxu0 0
  %3828 = vmatprep.subr.bf16.mxu0 0
  %3829 = vmatpush1.bf16.msra.mxu0 0
  %3830 = vmatprep.subr.bf16.mxu0 0
  %3831 = vmatpush1.bf16.msra.mxu0 0
  %3832 = vmatprep.subr.bf16.mxu0 0
  %3833 = vmatpush1.bf16.msra.mxu0 0
  %3834 = vmatprep.subr.bf16.mxu0 0
  %3835 = vmatpush1.bf16.msra.mxu0 0
  %3836 = vmatprep.subr.bf16.mxu0 0
  %3837 = vmatpush1.bf16.msra.mxu0 0
  %3838 = vmatprep.subr.bf16.mxu0 0
  %3839 = vmatpush1.bf16.msra.mxu0 0
  %3840 = vmatprep.mubr.bf16.mxu0 0
  %3841 = vmatmul.mubr.bf16.gmra.mrb[0].mxu0 %v2619
  %v3842 = vpop.f32.mrb[0].mxu0
  %v3843 = vadd.f32 0.0, %v3842
  %v3844 = vpop.f32.mrb[0].mxu0
  %v3845 = vpop.f32.mrb[0].mxu0
  %v3846 = vadd.f32 0.0, %v3845
  %v3847 = vpop.f32.mrb[0].mxu0
  %3848 = vmatprep.mubr.bf16.mxu0 0
  %3849 = vmatmul.mubr.bf16.gmra.mrb[0].mxu0 %v2622
  %v3850 = vpop.f32.mrb[0].mxu0
  %v3851 = vadd.f32 0.0, %v3850
  %v3852 = vpop.f32.mrb[0].mxu0
  %v3853 = vpop.f32.mrb[0].mxu0
  %v3854 = vadd.f32 0.0, %v3853
  %v3855 = vpop.f32.mrb[0].mxu0
  %3856 = vdwg.mxu0
  %v3857 = vpack.c.bf16 %v3846, %v3843
  %v3858 = vpack.c.bf16 %v3854, %v3851
  %v3861 = vunpack.c.l.b16 %v3806
  %v3862 = vunpack.c.l.b16 %v3807
  %v3863 = vpack.c.b16 %v3862, %v3861
  %v3866 = vsel %vm3689, %v3857, 0
  %v3869 = vsel %vm3689, %v3858, 0
  %3871 = vmatprep.subr.bf16.mxu0 0
  %3872 = vmatpush1.bf16.msra.mxu0 %v3863
  %3873 = vmatprep.subr.bf16.mxu0 0
  %3874 = vmatpush1.bf16.msra.mxu0 0
  %3875 = vmatprep.subr.bf16.mxu0 0
  %3876 = vmatpush1.bf16.msra.mxu0 0
  %3877 = vmatprep.subr.bf16.mxu0 0
  %3878 = vmatpush1.bf16.msra.mxu0 0
  %3879 = vmatprep.subr.bf16.mxu0 0
  %3880 = vmatpush1.bf16.msra.mxu0 0
  %3881 = vmatprep.subr.bf16.mxu0 0
  %3882 = vmatpush1.bf16.msra.mxu0 0
  %3883 = vmatprep.subr.bf16.mxu0 0
  %3884 = vmatpush1.bf16.msra.mxu0 0
  %3885 = vmatprep.subr.bf16.mxu0 0
  %3886 = vmatpush1.bf16.msra.mxu0 0
  %3887 = vmatprep.subr.bf16.mxu0 0
  %3888 = vmatpush1.bf16.msra.mxu0 0
  %3889 = vmatprep.subr.bf16.mxu0 0
  %3890 = vmatpush1.bf16.msra.mxu0 0
  %3891 = vmatprep.subr.bf16.mxu0 0
  %3892 = vmatpush1.bf16.msra.mxu0 0
  %3893 = vmatprep.subr.bf16.mxu0 0
  %3894 = vmatpush1.bf16.msra.mxu0 0
  %3895 = vmatprep.subr.bf16.mxu0 0
  %3896 = vmatpush1.bf16.msra.mxu0 0
  %3897 = vmatprep.subr.bf16.mxu0 0
  %3898 = vmatpush1.bf16.msra.mxu0 0
  %3899 = vmatprep.subr.bf16.mxu0 0
  %3900 = vmatpush1.bf16.msra.mxu0 0
  %3901 = vmatprep.subr.bf16.mxu0 0
  %3902 = vmatpush1.bf16.msra.mxu0 0
  %3903 = vmatprep.mubr.bf16.mxu0 0
  %3904 = vmatmul.mubr.bf16.gmra.mrb[0].mxu0 %v3866
  %v3905 = vpop.f32.mrb[0].mxu0
  %v3906 = vadd.f32 0.0, %v3905
  %v3907 = vpop.f32.mrb[0].mxu0
  %v3908 = vpop.f32.mrb[0].mxu0
  %v3909 = vadd.f32 0.0, %v3908
  %v3910 = vpop.f32.mrb[0].mxu0
  %3911 = vmatprep.mubr.bf16.mxu0 0
  %3912 = vmatmul.mubr.bf16.gmra.mrb[0].mxu0 %v3869
  %v3913 = vpop.f32.mrb[0].mxu0
  %v3914 = vadd.f32 0.0, %v3913
  %v3915 = vpop.f32.mrb[0].mxu0
  %v3916 = vpop.f32.mrb[0].mxu0
  %v3917 = vadd.f32 0.0, %v3916
  %v3918 = vpop.f32.mrb[0].mxu0
  %3919 = vdwg.mxu0
  %v3920 = vadd.f32 %v3792, %v3906
  %v3921 = vadd.f32 %v3795, %v3909
  %v3922 = vadd.f32 %v3800, %v3914
  %v3923 = vadd.f32 %v3803, %v3917
  %v3924 = vld [vmem:[%s8 + $0x18] sm:$0xf]
  %v3925 = vld [vmem:[%s8 + $0x1c] sm:$0xf]
  %3926 = vmatprep.subr.bf16.mxu0 0
  %3927 = vmatpush1.bf16.msra.mxu0 %v3575
  %3928 = vmatprep.subr.bf16.mxu0 0
  %3929 = vmatpush1.bf16.msra.mxu0 %v3576
  %3930 = vmatprep.subr.bf16.mxu0 0
  %3931 = vmatpush1.bf16.msra.mxu0 0
  %3932 = vmatprep.subr.bf16.mxu0 0
  %3933 = vmatpush1.bf16.msra.mxu0 0
  %3934 = vmatprep.subr.bf16.mxu0 0
  %3935 = vmatpush1.bf16.msra.mxu0 0
  %3936 = vmatprep.subr.bf16.mxu0 0
  %3937 = vmatpush1.bf16.msra.mxu0 0
  %3938 = vmatprep.subr.bf16.mxu0 0
  %3939 = vmatpush1.bf16.msra.mxu0 0
  %3940 = vmatprep.subr.bf16.mxu0 0
  %3941 = vmatpush1.bf16.msra.mxu0 0
  %3942 = vmatprep.subr.bf16.mxu0 0
  %3943 = vmatpush1.bf16.msra.mxu0 0
  %3944 = vmatprep.subr.bf16.mxu0 0
  %3945 = vmatpush1.bf16.msra.mxu0 0
  %3946 = vmatprep.subr.bf16.mxu0 0
  %3947 = vmatpush1.bf16.msra.mxu0 0
  %3948 = vmatprep.subr.bf16.mxu0 0
  %3949 = vmatpush1.bf16.msra.mxu0 0
  %3950 = vmatprep.subr.bf16.mxu0 0
  %3951 = vmatpush1.bf16.msra.mxu0 0
  %3952 = vmatprep.subr.bf16.mxu0 0
  %3953 = vmatpush1.bf16.msra.mxu0 0
  %3954 = vmatprep.subr.bf16.mxu0 0
  %3955 = vmatpush1.bf16.msra.mxu0 0
  %3956 = vmatprep.subr.bf16.mxu0 0
  %3957 = vmatpush1.bf16.msra.mxu0 0
  %3958 = vmatprep.mubr.bf16.mxu0 0
  %3959 = vmatmul.mubr.bf16.gmra.mrb[0].mxu0 %v2753
  %v3960 = vpop.f32.mrb[0].mxu0
  %v3961 = vadd.f32 0.0, %v3960
  %v3962 = vpop.f32.mrb[0].mxu0
  %v3963 = vpop.f32.mrb[0].mxu0
  %v3964 = vadd.f32 0.0, %v3963
  %v3965 = vpop.f32.mrb[0].mxu0
  %3966 = vmatprep.mubr.bf16.mxu0 0
  %3967 = vmatmul.mubr.bf16.gmra.mrb[0].mxu0 %v2756
  %v3968 = vpop.f32.mrb[0].mxu0
  %v3969 = vadd.f32 0.0, %v3968
  %v3970 = vpop.f32.mrb[0].mxu0
  %v3971 = vpop.f32.mrb[0].mxu0
  %v3972 = vadd.f32 0.0, %v3971
  %v3973 = vpop.f32.mrb[0].mxu0
  %3974 = vdwg.mxu0
  %v3975 = vpack.c.bf16 %v3964, %v3961
  %v3976 = vpack.c.bf16 %v3972, %v3969
  %v3979 = vunpack.c.l.b16 %v3924
  %v3980 = vunpack.c.l.b16 %v3925
  %v3981 = vpack.c.b16 %v3980, %v3979
  %v3984 = vsel %vm3689, %v3975, 0
  %v3987 = vsel %vm3689, %v3976, 0
  %3989 = vmatprep.subr.bf16.mxu0 0
  %3990 = vmatpush1.bf16.msra.mxu0 %v3981
  %3991 = vmatprep.subr.bf16.mxu0 0
  %3992 = vmatpush1.bf16.msra.mxu0 0
  %3993 = vmatprep.subr.bf16.mxu0 0
  %3994 = vmatpush1.bf16.msra.mxu0 0
  %3995 = vmatprep.subr.bf16.mxu0 0
  %3996 = vmatpush1.bf16.msra.mxu0 0
  %3997 = vmatprep.subr.bf16.mxu0 0
  %3998 = vmatpush1.bf16.msra.mxu0 0
  %3999 = vmatprep.subr.bf16.mxu0 0
  %4000 = vmatpush1.bf16.msra.mxu0 0
  %4001 = vmatprep.subr.bf16.mxu0 0
  %4002 = vmatpush1.bf16.msra.mxu0 0
  %4003 = vmatprep.subr.bf16.mxu0 0
  %4004 = vmatpush1.bf16.msra.mxu0 0
  %4005 = vmatprep.subr.bf16.mxu0 0
  %4006 = vmatpush1.bf16.msra.mxu0 0
  %4007 = vmatprep.subr.bf16.mxu0 0
  %4008 = vmatpush1.bf16.msra.mxu0 0
  %4009 = vmatprep.subr.bf16.mxu0 0
  %4010 = vmatpush1.bf16.msra.mxu0 0
  %4011 = vmatprep.subr.bf16.mxu0 0
  %4012 = vmatpush1.bf16.msra.mxu0 0
  %4013 = vmatprep.subr.bf16.mxu0 0
  %4014 = vmatpush1.bf16.msra.mxu0 0
  %4015 = vmatprep.subr.bf16.mxu0 0
  %4016 = vmatpush1.bf16.msra.mxu0 0
  %4017 = vmatprep.subr.bf16.mxu0 0
  %4018 = vmatpush1.bf16.msra.mxu0 0
  %4019 = vmatprep.subr.bf16.mxu0 0
  %4020 = vmatpush1.bf16.msra.mxu0 0
  %4021 = vmatprep.mubr.bf16.mxu0 0
  %4022 = vmatmul.mubr.bf16.gmra.mrb[0].mxu0 %v3984
  %v4023 = vpop.f32.mrb[0].mxu0
  %v4024 = vadd.f32 0.0, %v4023
  %v4025 = vpop.f32.mrb[0].mxu0
  %v4026 = vpop.f32.mrb[0].mxu0
  %v4027 = vadd.f32 0.0, %v4026
  %v4028 = vpop.f32.mrb[0].mxu0
  %4029 = vmatprep.mubr.bf16.mxu0 0
  %4030 = vmatmul.mubr.bf16.gmra.mrb[0].mxu0 %v3987
  %v4031 = vpop.f32.mrb[0].mxu0
  %v4032 = vadd.f32 0.0, %v4031
  %v4033 = vpop.f32.mrb[0].mxu0
  %v4034 = vpop.f32.mrb[0].mxu0
  %v4035 = vadd.f32 0.0, %v4034
  %v4036 = vpop.f32.mrb[0].mxu0
  %4037 = vdwg.mxu0
  %v4038 = vadd.f32 %v3920, %v4024
  %v4039 = vadd.f32 %v3921, %v4027
  %v4040 = vadd.f32 %v3922, %v4032
  %v4041 = vadd.f32 %v3923, %v4035
  %v4042 = vld [vmem:[%s8 + $0x20] sm:$0xf]
  %v4043 = vld [vmem:[%s8 + $0x24] sm:$0xf]
  %4044 = vmatprep.subr.bf16.mxu0 0
  %4045 = vmatpush1.bf16.msra.mxu0 %v3575
  %4046 = vmatprep.subr.bf16.mxu0 0
  %4047 = vmatpush1.bf16.msra.mxu0 %v3576
  %4048 = vmatprep.subr.bf16.mxu0 0
  %4049 = vmatpush1.bf16.msra.mxu0 0
  %4050 = vmatprep.subr.bf16.mxu0 0
  %4051 = vmatpush1.bf16.msra.mxu0 0
  %4052 = vmatprep.subr.bf16.mxu0 0
  %4053 = vmatpush1.bf16.msra.mxu0 0
  %4054 = vmatprep.subr.bf16.mxu0 0
  %4055 = vmatpush1.bf16.msra.mxu0 0
  %4056 = vmatprep.subr.bf16.mxu0 0
  %4057 = vmatpush1.bf16.msra.mxu0 0
  %4058 = vmatprep.subr.bf16.mxu0 0
  %4059 = vmatpush1.bf16.msra.mxu0 0
  %4060 = vmatprep.subr.bf16.mxu0 0
  %4061 = vmatpush1.bf16.msra.mxu0 0
  %4062 = vmatprep.subr.bf16.mxu0 0
  %4063 = vmatpush1.bf16.msra.mxu0 0
  %4064 = vmatprep.subr.bf16.mxu0 0
  %4065 = vmatpush1.bf16.msra.mxu0 0
  %4066 = vmatprep.subr.bf16.mxu0 0
  %4067 = vmatpush1.bf16.msra.mxu0 0
  %4068 = vmatprep.subr.bf16.mxu0 0
  %4069 = vmatpush1.bf16.msra.mxu0 0
  %4070 = vmatprep.subr.bf16.mxu0 0
  %4071 = vmatpush1.bf16.msra.mxu0 0
  %4072 = vmatprep.subr.bf16.mxu0 0
  %4073 = vmatpush1.bf16.msra.mxu0 0
  %4074 = vmatprep.subr.bf16.mxu0 0
  %4075 = vmatpush1.bf16.msra.mxu0 0
  %4076 = vmatprep.mubr.bf16.mxu0 0
  %4077 = vmatmul.mubr.bf16.gmra.mrb[0].mxu0 %v2887
  %v4078 = vpop.f32.mrb[0].mxu0
  %v4079 = vadd.f32 0.0, %v4078
  %v4080 = vpop.f32.mrb[0].mxu0
  %v4081 = vpop.f32.mrb[0].mxu0
  %v4082 = vadd.f32 0.0, %v4081
  %v4083 = vpop.f32.mrb[0].mxu0
  %4084 = vmatprep.mubr.bf16.mxu0 0
  %4085 = vmatmul.mubr.bf16.gmra.mrb[0].mxu0 %v2890
  %v4086 = vpop.f32.mrb[0].mxu0
  %v4087 = vadd.f32 0.0, %v4086
  %v4088 = vpop.f32.mrb[0].mxu0
  %v4089 = vpop.f32.mrb[0].mxu0
  %v4090 = vadd.f32 0.0, %v4089
  %v4091 = vpop.f32.mrb[0].mxu0
  %4092 = vdwg.mxu0
  %v4093 = vpack.c.bf16 %v4082, %v4079
  %v4094 = vpack.c.bf16 %v4090, %v4087
  %v4097 = vunpack.c.l.b16 %v4042
  %v4098 = vunpack.c.l.b16 %v4043
  %v4099 = vpack.c.b16 %v4098, %v4097
  %v4102 = vsel %vm3689, %v4093, 0
  %v4105 = vsel %vm3689, %v4094, 0
  %4107 = vmatprep.subr.bf16.mxu0 0
  %4108 = vmatpush1.bf16.msra.mxu0 %v4099
  %4109 = vmatprep.subr.bf16.mxu0 0
  %4110 = vmatpush1.bf16.msra.mxu0 0
  %4111 = vmatprep.subr.bf16.mxu0 0
  %4112 = vmatpush1.bf16.msra.mxu0 0
  %4113 = vmatprep.subr.bf16.mxu0 0
  %4114 = vmatpush1.bf16.msra.mxu0 0
  %4115 = vmatprep.subr.bf16.mxu0 0
  %4116 = vmatpush1.bf16.msra.mxu0 0
  %4117 = vmatprep.subr.bf16.mxu0 0
  %4118 = vmatpush1.bf16.msra.mxu0 0
  %4119 = vmatprep.subr.bf16.mxu0 0
  %4120 = vmatpush1.bf16.msra.mxu0 0
  %4121 = vmatprep.subr.bf16.mxu0 0
  %4122 = vmatpush1.bf16.msra.mxu0 0
  %4123 = vmatprep.subr.bf16.mxu0 0
  %4124 = vmatpush1.bf16.msra.mxu0 0
  %4125 = vmatprep.subr.bf16.mxu0 0
  %4126 = vmatpush1.bf16.msra.mxu0 0
  %4127 = vmatprep.subr.bf16.mxu0 0
  %4128 = vmatpush1.bf16.msra.mxu0 0
  %4129 = vmatprep.subr.bf16.mxu0 0
  %4130 = vmatpush1.bf16.msra.mxu0 0
  %4131 = vmatprep.subr.bf16.mxu0 0
  %4132 = vmatpush1.bf16.msra.mxu0 0
  %4133 = vmatprep.subr.bf16.mxu0 0
  %4134 = vmatpush1.bf16.msra.mxu0 0
  %4135 = vmatprep.subr.bf16.mxu0 0
  %4136 = vmatpush1.bf16.msra.mxu0 0
  %4137 = vmatprep.subr.bf16.mxu0 0
  %4138 = vmatpush1.bf16.msra.mxu0 0
  %4139 = vmatprep.mubr.bf16.mxu0 0
  %4140 = vmatmul.mubr.bf16.gmra.mrb[0].mxu0 %v4102
  %v4141 = vpop.f32.mrb[0].mxu0
  %v4142 = vadd.f32 0.0, %v4141
  %v4143 = vpop.f32.mrb[0].mxu0
  %v4144 = vpop.f32.mrb[0].mxu0
  %v4145 = vadd.f32 0.0, %v4144
  %v4146 = vpop.f32.mrb[0].mxu0
  %4147 = vmatprep.mubr.bf16.mxu0 0
  %4148 = vmatmul.mubr.bf16.gmra.mrb[0].mxu0 %v4105
  %v4149 = vpop.f32.mrb[0].mxu0
  %v4150 = vadd.f32 0.0, %v4149
  %v4151 = vpop.f32.mrb[0].mxu0
  %v4152 = vpop.f32.mrb[0].mxu0
  %v4153 = vadd.f32 0.0, %v4152
  %v4154 = vpop.f32.mrb[0].mxu0
  %4155 = vdwg.mxu0
  %v4156 = vadd.f32 %v4038, %v4142
  %v4157 = vadd.f32 %v4039, %v4145
  %v4158 = vadd.f32 %v4040, %v4150
  %v4159 = vadd.f32 %v4041, %v4153
  %v4160 = vld [vmem:[%s8 + $0x28] sm:$0xf]
  %v4161 = vld [vmem:[%s8 + $0x2c] sm:$0xf]
  %4162 = vmatprep.subr.bf16.mxu0 0
  %4163 = vmatpush1.bf16.msra.mxu0 %v3575
  %4164 = vmatprep.subr.bf16.mxu0 0
  %4165 = vmatpush1.bf16.msra.mxu0 %v3576
  %4166 = vmatprep.subr.bf16.mxu0 0
  %4167 = vmatpush1.bf16.msra.mxu0 0
  %4168 = vmatprep.subr.bf16.mxu0 0
  %4169 = vmatpush1.bf16.msra.mxu0 0
  %4170 = vmatprep.subr.bf16.mxu0 0
  %4171 = vmatpush1.bf16.msra.mxu0 0
  %4172 = vmatprep.subr.bf16.mxu0 0
  %4173 = vmatpush1.bf16.msra.mxu0 0
  %4174 = vmatprep.subr.bf16.mxu0 0
  %4175 = vmatpush1.bf16.msra.mxu0 0
  %4176 = vmatprep.subr.bf16.mxu0 0
  %4177 = vmatpush1.bf16.msra.mxu0 0
  %4178 = vmatprep.subr.bf16.mxu0 0
  %4179 = vmatpush1.bf16.msra.mxu0 0
  %4180 = vmatprep.subr.bf16.mxu0 0
  %4181 = vmatpush1.bf16.msra.mxu0 0
  %4182 = vmatprep.subr.bf16.mxu0 0
  %4183 = vmatpush1.bf16.msra.mxu0 0
  %4184 = vmatprep.subr.bf16.mxu0 0
  %4185 = vmatpush1.bf16.msra.mxu0 0
  %4186 = vmatprep.subr.bf16.mxu0 0
  %4187 = vmatpush1.bf16.msra.mxu0 0
  %4188 = vmatprep.subr.bf16.mxu0 0
  %4189 = vmatpush1.bf16.msra.mxu0 0
  %4190 = vmatprep.subr.bf16.mxu0 0
  %4191 = vmatpush1.bf16.msra.mxu0 0
  %4192 = vmatprep.subr.bf16.mxu0 0
  %4193 = vmatpush1.bf16.msra.mxu0 0
  %4194 = vmatprep.mubr.bf16.mxu0 0
  %4195 = vmatmul.mubr.bf16.gmra.mrb[0].mxu0 %v3021
  %v4196 = vpop.f32.mrb[0].mxu0
  %v4197 = vadd.f32 0.0, %v4196
  %v4198 = vpop.f32.mrb[0].mxu0
  %v4199 = vpop.f32.mrb[0].mxu0
  %v4200 = vadd.f32 0.0, %v4199
  %v4201 = vpop.f32.mrb[0].mxu0
  %4202 = vmatprep.mubr.bf16.mxu0 0
  %4203 = vmatmul.mubr.bf16.gmra.mrb[0].mxu0 %v3024
  %v4204 = vpop.f32.mrb[0].mxu0
  %v4205 = vadd.f32 0.0, %v4204
  %v4206 = vpop.f32.mrb[0].mxu0
  %v4207 = vpop.f32.mrb[0].mxu0
  %v4208 = vadd.f32 0.0, %v4207
  %v4209 = vpop.f32.mrb[0].mxu0
  %4210 = vdwg.mxu0
  %v4211 = vpack.c.bf16 %v4200, %v4197
  %v4212 = vpack.c.bf16 %v4208, %v4205
  %v4215 = vunpack.c.l.b16 %v4160
  %v4216 = vunpack.c.l.b16 %v4161
  %v4217 = vpack.c.b16 %v4216, %v4215
  %v4220 = vsel %vm3689, %v4211, 0
  %v4223 = vsel %vm3689, %v4212, 0
  %4225 = vmatprep.subr.bf16.mxu0 0
  %4226 = vmatpush1.bf16.msra.mxu0 %v4217
  %4227 = vmatprep.subr.bf16.mxu0 0
  %4228 = vmatpush1.bf16.msra.mxu0 0
  %4229 = vmatprep.subr.bf16.mxu0 0
  %4230 = vmatpush1.bf16.msra.mxu0 0
  %4231 = vmatprep.subr.bf16.mxu0 0
  %4232 = vmatpush1.bf16.msra.mxu0 0
  %4233 = vmatprep.subr.bf16.mxu0 0
  %4234 = vmatpush1.bf16.msra.mxu0 0
  %4235 = vmatprep.subr.bf16.mxu0 0
  %4236 = vmatpush1.bf16.msra.mxu0 0
  %4237 = vmatprep.subr.bf16.mxu0 0
  %4238 = vmatpush1.bf16.msra.mxu0 0
  %4239 = vmatprep.subr.bf16.mxu0 0
  %4240 = vmatpush1.bf16.msra.mxu0 0
  %4241 = vmatprep.subr.bf16.mxu0 0
  %4242 = vmatpush1.bf16.msra.mxu0 0
  %4243 = vmatprep.subr.bf16.mxu0 0
  %4244 = vmatpush1.bf16.msra.mxu0 0
  %4245 = vmatprep.subr.bf16.mxu0 0
  %4246 = vmatpush1.bf16.msra.mxu0 0
  %4247 = vmatprep.subr.bf16.mxu0 0
  %4248 = vmatpush1.bf16.msra.mxu0 0
  %4249 = vmatprep.subr.bf16.mxu0 0
  %4250 = vmatpush1.bf16.msra.mxu0 0
  %4251 = vmatprep.subr.bf16.mxu0 0
  %4252 = vmatpush1.bf16.msra.mxu0 0
  %4253 = vmatprep.subr.bf16.mxu0 0
  %4254 = vmatpush1.bf16.msra.mxu0 0
  %4255 = vmatprep.subr.bf16.mxu0 0
  %4256 = vmatpush1.bf16.msra.mxu0 0
  %4257 = vmatprep.mubr.bf16.mxu0 0
  %4258 = vmatmul.mubr.bf16.gmra.mrb[0].mxu0 %v4220
  %v4259 = vpop.f32.mrb[0].mxu0
  %v4260 = vadd.f32 0.0, %v4259
  %v4261 = vpop.f32.mrb[0].mxu0
  %v4262 = vpop.f32.mrb[0].mxu0
  %v4263 = vadd.f32 0.0, %v4262
  %v4264 = vpop.f32.mrb[0].mxu0
  %4265 = vmatprep.mubr.bf16.mxu0 0
  %4266 = vmatmul.mubr.bf16.gmra.mrb[0].mxu0 %v4223
  %v4267 = vpop.f32.mrb[0].mxu0
  %v4268 = vadd.f32 0.0, %v4267
  %v4269 = vpop.f32.mrb[0].mxu0
  %v4270 = vpop.f32.mrb[0].mxu0
  %v4271 = vadd.f32 0.0, %v4270
  %v4272 = vpop.f32.mrb[0].mxu0
  %4273 = vdwg.mxu0
  %v4274 = vadd.f32 %v4156, %v4260
  %v4275 = vadd.f32 %v4157, %v4263
  %v4276 = vadd.f32 %v4158, %v4268
  %v4277 = vadd.f32 %v4159, %v4271
  %v4278 = vld [vmem:[%s8 + $0x30] sm:$0xf]
  %v4279 = vld [vmem:[%s8 + $0x34] sm:$0xf]
  %4280 = vmatprep.subr.bf16.mxu0 0
  %4281 = vmatpush1.bf16.msra.mxu0 %v3575
  %4282 = vmatprep.subr.bf16.mxu0 0
  %4283 = vmatpush1.bf16.msra.mxu0 %v3576
  %4284 = vmatprep.subr.bf16.mxu0 0
  %4285 = vmatpush1.bf16.msra.mxu0 0
  %4286 = vmatprep.subr.bf16.mxu0 0
  %4287 = vmatpush1.bf16.msra.mxu0 0
  %4288 = vmatprep.subr.bf16.mxu0 0
  %4289 = vmatpush1.bf16.msra.mxu0 0
  %4290 = vmatprep.subr.bf16.mxu0 0
  %4291 = vmatpush1.bf16.msra.mxu0 0
  %4292 = vmatprep.subr.bf16.mxu0 0
  %4293 = vmatpush1.bf16.msra.mxu0 0
  %4294 = vmatprep.subr.bf16.mxu0 0
  %4295 = vmatpush1.bf16.msra.mxu0 0
  %4296 = vmatprep.subr.bf16.mxu0 0
  %4297 = vmatpush1.bf16.msra.mxu0 0
  %4298 = vmatprep.subr.bf16.mxu0 0
  %4299 = vmatpush1.bf16.msra.mxu0 0
  %4300 = vmatprep.subr.bf16.mxu0 0
  %4301 = vmatpush1.bf16.msra.mxu0 0
  %4302 = vmatprep.subr.bf16.mxu0 0
  %4303 = vmatpush1.bf16.msra.mxu0 0
  %4304 = vmatprep.subr.bf16.mxu0 0
  %4305 = vmatpush1.bf16.msra.mxu0 0
  %4306 = vmatprep.subr.bf16.mxu0 0
  %4307 = vmatpush1.bf16.msra.mxu0 0
  %4308 = vmatprep.subr.bf16.mxu0 0
  %4309 = vmatpush1.bf16.msra.mxu0 0
  %4310 = vmatprep.subr.bf16.mxu0 0
  %4311 = vmatpush1.bf16.msra.mxu0 0
  %4312 = vmatprep.mubr.bf16.mxu0 0
  %4313 = vmatmul.mubr.bf16.gmra.mrb[0].mxu0 %v3155
  %v4314 = vpop.f32.mrb[0].mxu0
  %v4315 = vadd.f32 0.0, %v4314
  %v4316 = vpop.f32.mrb[0].mxu0
  %v4317 = vpop.f32.mrb[0].mxu0
  %v4318 = vadd.f32 0.0, %v4317
  %v4319 = vpop.f32.mrb[0].mxu0
  %4320 = vmatprep.mubr.bf16.mxu0 0
  %4321 = vmatmul.mubr.bf16.gmra.mrb[0].mxu0 %v3158
  %v4322 = vpop.f32.mrb[0].mxu0
  %v4323 = vadd.f32 0.0, %v4322
  %v4324 = vpop.f32.mrb[0].mxu0
  %v4325 = vpop.f32.mrb[0].mxu0
  %v4326 = vadd.f32 0.0, %v4325
  %v4327 = vpop.f32.mrb[0].mxu0
  %4328 = vdwg.mxu0
  %v4329 = vpack.c.bf16 %v4318, %v4315
  %v4330 = vpack.c.bf16 %v4326, %v4323
  %v4333 = vunpack.c.l.b16 %v4278
  %v4334 = vunpack.c.l.b16 %v4279
  %v4335 = vpack.c.b16 %v4334, %v4333
  %v4338 = vsel %vm3689, %v4329, 0
  %v4341 = vsel %vm3689, %v4330, 0
  %4343 = vmatprep.subr.bf16.mxu0 0
  %4344 = vmatpush1.bf16.msra.mxu0 %v4335
  %4345 = vmatprep.subr.bf16.mxu0 0
  %4346 = vmatpush1.bf16.msra.mxu0 0
  %4347 = vmatprep.subr.bf16.mxu0 0
  %4348 = vmatpush1.bf16.msra.mxu0 0
  %4349 = vmatprep.subr.bf16.mxu0 0
  %4350 = vmatpush1.bf16.msra.mxu0 0
  %4351 = vmatprep.subr.bf16.mxu0 0
  %4352 = vmatpush1.bf16.msra.mxu0 0
  %4353 = vmatprep.subr.bf16.mxu0 0
  %4354 = vmatpush1.bf16.msra.mxu0 0
  %4355 = vmatprep.subr.bf16.mxu0 0
  %4356 = vmatpush1.bf16.msra.mxu0 0
  %4357 = vmatprep.subr.bf16.mxu0 0
  %4358 = vmatpush1.bf16.msra.mxu0 0
  %4359 = vmatprep.subr.bf16.mxu0 0
  %4360 = vmatpush1.bf16.msra.mxu0 0
  %4361 = vmatprep.subr.bf16.mxu0 0
  %4362 = vmatpush1.bf16.msra.mxu0 0
  %4363 = vmatprep.subr.bf16.mxu0 0
  %4364 = vmatpush1.bf16.msra.mxu0 0
  %4365 = vmatprep.subr.bf16.mxu0 0
  %4366 = vmatpush1.bf16.msra.mxu0 0
  %4367 = vmatprep.subr.bf16.mxu0 0
  %4368 = vmatpush1.bf16.msra.mxu0 0
  %4369 = vmatprep.subr.bf16.mxu0 0
  %4370 = vmatpush1.bf16.msra.mxu0 0
  %4371 = vmatprep.subr.bf16.mxu0 0
  %4372 = vmatpush1.bf16.msra.mxu0 0
  %4373 = vmatprep.subr.bf16.mxu0 0
  %4374 = vmatpush1.bf16.msra.mxu0 0
  %4375 = vmatprep.mubr.bf16.mxu0 0
  %4376 = vmatmul.mubr.bf16.gmra.mrb[0].mxu0 %v4338
  %v4377 = vpop.f32.mrb[0].mxu0
  %v4378 = vadd.f32 0.0, %v4377
  %v4379 = vpop.f32.mrb[0].mxu0
  %v4380 = vpop.f32.mrb[0].mxu0
  %v4381 = vadd.f32 0.0, %v4380
  %v4382 = vpop.f32.mrb[0].mxu0
  %4383 = vmatprep.mubr.bf16.mxu0 0
  %4384 = vmatmul.mubr.bf16.gmra.mrb[0].mxu0 %v4341
  %v4385 = vpop.f32.mrb[0].mxu0
  %v4386 = vadd.f32 0.0, %v4385
  %v4387 = vpop.f32.mrb[0].mxu0
  %v4388 = vpop.f32.mrb[0].mxu0
  %v4389 = vadd.f32 0.0, %v4388
  %v4390 = vpop.f32.mrb[0].mxu0
  %4391 = vdwg.mxu0
  %v4392 = vadd.f32 %v4274, %v4378
  %v4393 = vadd.f32 %v4275, %v4381
  %v4394 = vadd.f32 %v4276, %v4386
  %v4395 = vadd.f32 %v4277, %v4389
  %v4396 = vld [vmem:[%s8 + $0x38] sm:$0xf]
  %v4397 = vld [vmem:[%s8 + $0x3c] sm:$0xf]
  %4398 = vmatprep.subr.bf16.mxu0 0
  %4399 = vmatpush1.bf16.msra.mxu0 %v3575
  %4400 = vmatprep.subr.bf16.mxu0 0
  %4401 = vmatpush1.bf16.msra.mxu0 %v3576
  %4402 = vmatprep.subr.bf16.mxu0 0
  %4403 = vmatpush1.bf16.msra.mxu0 0
  %4404 = vmatprep.subr.bf16.mxu0 0
  %4405 = vmatpush1.bf16.msra.mxu0 0
  %4406 = vmatprep.subr.bf16.mxu0 0
  %4407 = vmatpush1.bf16.msra.mxu0 0
  %4408 = vmatprep.subr.bf16.mxu0 0
  %4409 = vmatpush1.bf16.msra.mxu0 0
  %4410 = vmatprep.subr.bf16.mxu0 0
  %4411 = vmatpush1.bf16.msra.mxu0 0
  %4412 = vmatprep.subr.bf16.mxu0 0
  %4413 = vmatpush1.bf16.msra.mxu0 0
  %4414 = vmatprep.subr.bf16.mxu0 0
  %4415 = vmatpush1.bf16.msra.mxu0 0
  %4416 = vmatprep.subr.bf16.mxu0 0
  %4417 = vmatpush1.bf16.msra.mxu0 0
  %4418 = vmatprep.subr.bf16.mxu0 0
  %4419 = vmatpush1.bf16.msra.mxu0 0
  %4420 = vmatprep.subr.bf16.mxu0 0
  %4421 = vmatpush1.bf16.msra.mxu0 0
  %4422 = vmatprep.subr.bf16.mxu0 0
  %4423 = vmatpush1.bf16.msra.mxu0 0
  %4424 = vmatprep.subr.bf16.mxu0 0
  %4425 = vmatpush1.bf16.msra.mxu0 0
  %4426 = vmatprep.subr.bf16.mxu0 0
  %4427 = vmatpush1.bf16.msra.mxu0 0
  %4428 = vmatprep.subr.bf16.mxu0 0
  %4429 = vmatpush1.bf16.msra.mxu0 0
  %4430 = vmatprep.mubr.bf16.mxu0 0
  %4431 = vmatmul.mubr.bf16.gmra.mrb[0].mxu0 %v3289
  %v4432 = vpop.f32.mrb[0].mxu0
  %v4433 = vadd.f32 0.0, %v4432
  %v4434 = vpop.f32.mrb[0].mxu0
  %v4435 = vpop.f32.mrb[0].mxu0
  %v4436 = vadd.f32 0.0, %v4435
  %v4437 = vpop.f32.mrb[0].mxu0
  %4438 = vmatprep.mubr.bf16.mxu0 0
  %4439 = vmatmul.mubr.bf16.gmra.mrb[0].mxu0 %v3292
  %v4440 = vpop.f32.mrb[0].mxu0
  %v4441 = vadd.f32 0.0, %v4440
  %v4442 = vpop.f32.mrb[0].mxu0
  %v4443 = vpop.f32.mrb[0].mxu0
  %v4444 = vadd.f32 0.0, %v4443
  %v4445 = vpop.f32.mrb[0].mxu0
  %4446 = vdwg.mxu0
  %v4447 = vpack.c.bf16 %v4436, %v4433
  %v4448 = vpack.c.bf16 %v4444, %v4441
  %v4451 = vunpack.c.l.b16 %v4396
  %v4452 = vunpack.c.l.b16 %v4397
  %v4453 = vpack.c.b16 %v4452, %v4451
  %v4456 = vsel %vm3689, %v4447, 0
  %v4459 = vsel %vm3689, %v4448, 0
  %4461 = vmatprep.subr.bf16.mxu0 0
  %4462 = vmatpush1.bf16.msra.mxu0 %v4453
  %4463 = vmatprep.subr.bf16.mxu0 0
  %4464 = vmatpush1.bf16.msra.mxu0 0
  %4465 = vmatprep.subr.bf16.mxu0 0
  %4466 = vmatpush1.bf16.msra.mxu0 0
  %4467 = vmatprep.subr.bf16.mxu0 0
  %4468 = vmatpush1.bf16.msra.mxu0 0
  %4469 = vmatprep.subr.bf16.mxu0 0
  %4470 = vmatpush1.bf16.msra.mxu0 0
  %4471 = vmatprep.subr.bf16.mxu0 0
  %4472 = vmatpush1.bf16.msra.mxu0 0
  %4473 = vmatprep.subr.bf16.mxu0 0
  %4474 = vmatpush1.bf16.msra.mxu0 0
  %4475 = vmatprep.subr.bf16.mxu0 0
  %4476 = vmatpush1.bf16.msra.mxu0 0
  %4477 = vmatprep.subr.bf16.mxu0 0
  %4478 = vmatpush1.bf16.msra.mxu0 0
  %4479 = vmatprep.subr.bf16.mxu0 0
  %4480 = vmatpush1.bf16.msra.mxu0 0
  %4481 = vmatprep.subr.bf16.mxu0 0
  %4482 = vmatpush1.bf16.msra.mxu0 0
  %4483 = vmatprep.subr.bf16.mxu0 0
  %4484 = vmatpush1.bf16.msra.mxu0 0
  %4485 = vmatprep.subr.bf16.mxu0 0
  %4486 = vmatpush1.bf16.msra.mxu0 0
  %4487 = vmatprep.subr.bf16.mxu0 0
  %4488 = vmatpush1.bf16.msra.mxu0 0
  %4489 = vmatprep.subr.bf16.mxu0 0
  %4490 = vmatpush1.bf16.msra.mxu0 0
  %4491 = vmatprep.subr.bf16.mxu0 0
  %4492 = vmatpush1.bf16.msra.mxu0 0
  %4493 = vmatprep.mubr.bf16.mxu0 0
  %4494 = vmatmul.mubr.bf16.gmra.mrb[0].mxu0 %v4456
  %v4495 = vpop.f32.mrb[0].mxu0
  %v4496 = vadd.f32 0.0, %v4495
  %v4497 = vpop.f32.mrb[0].mxu0
  %v4498 = vpop.f32.mrb[0].mxu0
  %v4499 = vadd.f32 0.0, %v4498
  %v4500 = vpop.f32.mrb[0].mxu0
  %4501 = vmatprep.mubr.bf16.mxu0 0
  %4502 = vmatmul.mubr.bf16.gmra.mrb[0].mxu0 %v4459
  %v4503 = vpop.f32.mrb[0].mxu0
  %v4504 = vadd.f32 0.0, %v4503
  %v4505 = vpop.f32.mrb[0].mxu0
  %v4506 = vpop.f32.mrb[0].mxu0
  %v4507 = vadd.f32 0.0, %v4506
  %v4508 = vpop.f32.mrb[0].mxu0
  %4509 = vdwg.mxu0
  %v4510 = vadd.f32 %v4392, %v4496
  %v4511 = vadd.f32 %v4393, %v4499
  %v4512 = vadd.f32 %v4394, %v4504
  %v4513 = vadd.f32 %v4395, %v4507
  %v4514 = vld [vmem:[%s8 + $0x40] sm:$0xf]
  %v4515 = vld [vmem:[%s8 + $0x44] sm:$0xf]
  %4516 = vmatprep.subr.bf16.mxu0 0
  %4517 = vmatpush1.bf16.msra.mxu0 %v3575
  %4518 = vmatprep.subr.bf16.mxu0 0
  %4519 = vmatpush1.bf16.msra.mxu0 %v3576
  %4520 = vmatprep.subr.bf16.mxu0 0
  %4521 = vmatpush1.bf16.msra.mxu0 0
  %4522 = vmatprep.subr.bf16.mxu0 0
  %4523 = vmatpush1.bf16.msra.mxu0 0
  %4524 = vmatprep.subr.bf16.mxu0 0
  %4525 = vmatpush1.bf16.msra.mxu0 0
  %4526 = vmatprep.subr.bf16.mxu0 0
  %4527 = vmatpush1.bf16.msra.mxu0 0
  %4528 = vmatprep.subr.bf16.mxu0 0
  %4529 = vmatpush1.bf16.msra.mxu0 0
  %4530 = vmatprep.subr.bf16.mxu0 0
  %4531 = vmatpush1.bf16.msra.mxu0 0
  %4532 = vmatprep.subr.bf16.mxu0 0
  %4533 = vmatpush1.bf16.msra.mxu0 0
  %4534 = vmatprep.subr.bf16.mxu0 0
  %4535 = vmatpush1.bf16.msra.mxu0 0
  %4536 = vmatprep.subr.bf16.mxu0 0
  %4537 = vmatpush1.bf16.msra.mxu0 0
  %4538 = vmatprep.subr.bf16.mxu0 0
  %4539 = vmatpush1.bf16.msra.mxu0 0
  %4540 = vmatprep.subr.bf16.mxu0 0
  %4541 = vmatpush1.bf16.msra.mxu0 0
  %4542 = vmatprep.subr.bf16.mxu0 0
  %4543 = vmatpush1.bf16.msra.mxu0 0
  %4544 = vmatprep.subr.bf16.mxu0 0
  %4545 = vmatpush1.bf16.msra.mxu0 0
  %4546 = vmatprep.subr.bf16.mxu0 0
  %4547 = vmatpush1.bf16.msra.mxu0 0
  %4548 = vmatprep.mubr.bf16.mxu0 0
  %4549 = vmatmul.mubr.bf16.gmra.mrb[0].mxu0 %v3423
  %v4550 = vpop.f32.mrb[0].mxu0
  %v4551 = vadd.f32 0.0, %v4550
  %v4552 = vpop.f32.mrb[0].mxu0
  %v4553 = vpop.f32.mrb[0].mxu0
  %v4554 = vadd.f32 0.0, %v4553
  %v4555 = vpop.f32.mrb[0].mxu0
  %4556 = vmatprep.mubr.bf16.mxu0 0
  %4557 = vmatmul.mubr.bf16.gmra.mrb[0].mxu0 %v3426
  %v4558 = vpop.f32.mrb[0].mxu0
  %v4559 = vadd.f32 0.0, %v4558
  %v4560 = vpop.f32.mrb[0].mxu0
  %v4561 = vpop.f32.mrb[0].mxu0
  %v4562 = vadd.f32 0.0, %v4561
  %v4563 = vpop.f32.mrb[0].mxu0
  %4564 = vdwg.mxu0
  %v4565 = vpack.c.bf16 %v4554, %v4551
  %v4566 = vpack.c.bf16 %v4562, %v4559
  %v4569 = vunpack.c.l.b16 %v4514
  %v4570 = vunpack.c.l.b16 %v4515
  %v4571 = vpack.c.b16 %v4570, %v4569
  %v4574 = vsel %vm3689, %v4565, 0
  %v4577 = vsel %vm3689, %v4566, 0
  %4579 = vmatprep.subr.bf16.mxu0 0
  %4580 = vmatpush1.bf16.msra.mxu0 %v4571
  %4581 = vmatprep.subr.bf16.mxu0 0
  %4582 = vmatpush1.bf16.msra.mxu0 0
  %4583 = vmatprep.subr.bf16.mxu0 0
  %4584 = vmatpush1.bf16.msra.mxu0 0
  %4585 = vmatprep.subr.bf16.mxu0 0
  %4586 = vmatpush1.bf16.msra.mxu0 0
  %4587 = vmatprep.subr.bf16.mxu0 0
  %4588 = vmatpush1.bf16.msra.mxu0 0
  %4589 = vmatprep.subr.bf16.mxu0 0
  %4590 = vmatpush1.bf16.msra.mxu0 0
  %4591 = vmatprep.subr.bf16.mxu0 0
  %4592 = vmatpush1.bf16.msra.mxu0 0
  %4593 = vmatprep.subr.bf16.mxu0 0
  %4594 = vmatpush1.bf16.msra.mxu0 0
  %4595 = vmatprep.subr.bf16.mxu0 0
  %4596 = vmatpush1.bf16.msra.mxu0 0
  %4597 = vmatprep.subr.bf16.mxu0 0
  %4598 = vmatpush1.bf16.msra.mxu0 0
  %4599 = vmatprep.subr.bf16.mxu0 0
  %4600 = vmatpush1.bf16.msra.mxu0 0
  %4601 = vmatprep.subr.bf16.mxu0 0
  %4602 = vmatpush1.bf16.msra.mxu0 0
  %4603 = vmatprep.subr.bf16.mxu0 0
  %4604 = vmatpush1.bf16.msra.mxu0 0
  %4605 = vmatprep.subr.bf16.mxu0 0
  %4606 = vmatpush1.bf16.msra.mxu0 0
  %4607 = vmatprep.subr.bf16.mxu0 0
  %4608 = vmatpush1.bf16.msra.mxu0 0
  %4609 = vmatprep.subr.bf16.mxu0 0
  %4610 = vmatpush1.bf16.msra.mxu0 0
  %4611 = vmatprep.mubr.bf16.mxu0 0
  %4612 = vmatmul.mubr.bf16.gmra.mrb[0].mxu0 %v4574
  %v4613 = vpop.f32.mrb[0].mxu0
  %v4614 = vadd.f32 0.0, %v4613
  %v4615 = vpop.f32.mrb[0].mxu0
  %v4616 = vpop.f32.mrb[0].mxu0
  %v4617 = vadd.f32 0.0, %v4616
  %v4618 = vpop.f32.mrb[0].mxu0
  %4619 = vmatprep.mubr.bf16.mxu0 0
  %4620 = vmatmul.mubr.bf16.gmra.mrb[0].mxu0 %v4577
  %v4621 = vpop.f32.mrb[0].mxu0
  %v4622 = vadd.f32 0.0, %v4621
  %v4623 = vpop.f32.mrb[0].mxu0
  %v4624 = vpop.f32.mrb[0].mxu0
  %v4625 = vadd.f32 0.0, %v4624
  %v4626 = vpop.f32.mrb[0].mxu0
  %4627 = vdwg.mxu0
  %v4628 = vadd.f32 %v4510, %v4614
  %v4629 = vadd.f32 %v4511, %v4617
  %v4630 = vadd.f32 %v4512, %v4622
  %v4631 = vadd.f32 %v4513, %v4625
  %v4632 = vld [vmem:[%s9] sm:$0x1]
  %v4634 = vlaneseq
  %v4635 = vshrl.u32 %v4634, 7
  %v4636 = vsub.s32 0, %v4635
  %v4637 = vrot.slane %v4632, %v4636
  %v4639 = vmul.f32 %v4628, %v4637
  %v4640 = vmul.f32 %v4629, %v4637
  %v4641 = vmul.f32 %v4630, %v4637
  %v4642 = vmul.f32 %v4631, %v4637
  %v4643 = vld [vmem:[%s10] sm:$0x1]
  %v4645 = vlaneseq
  %v4646 = vshrl.u32 %v4645, 7
  %v4647 = vsub.s32 0, %v4646
  %v4648 = vrot.slane %v4643, %v4647
  %v4650 = vadd.f32 %v4639, %v4648
  %v4651 = vadd.f32 %v4640, %v4648
  %v4652 = vadd.f32 %v4641, %v4648
  %v4653 = vadd.f32 %v4642, %v4648
  %vm4654 = vcmp.gt.f32.partialorder %v4650, 0.0
  %vm4655 = vcmp.gt.f32.partialorder %v4651, 0.0
  %vm4656 = vcmp.gt.f32.partialorder %v4652, 0.0
  %vm4657 = vcmp.gt.f32.partialorder %v4653, 0.0
  %v4658 = vmul.f32 %v4650, 0.2
  %v4659 = vmul.f32 %v4651, 0.2
  %v4660 = vmul.f32 %v4652, 0.2
  %v4661 = vmul.f32 %v4653, 0.2
  %v4662 = vsel %vm4654, %v4650, %v4658
  %v4663 = vsel %vm4655, %v4651, %v4659
  %v4664 = vsel %vm4656, %v4652, %v4660
  %v4665 = vsel %vm4657, %v4653, %v4661
  %v4666 = vpack.c.bf16 %v4663, %v4662
  %v4667 = vpack.c.bf16 %v4665, %v4664
  %v4668 = vld [vmem:[%s11] sm:$0xf]
  %v4669 = vld [vmem:[%s11 + $0x4] sm:$0xf]
  %v4670 = vld [vmem:[%s11 + $0x8] sm:$0xf]
  %v4671 = vld [vmem:[%s11 + $0xc] sm:$0xf]
  %4672 = vmatprep.subr.bf16.mxu0 0
  %4673 = vmatpush1.bf16.msra.mxu0 %v4666
  %4674 = vmatprep.subr.bf16.mxu0 0
  %4675 = vmatpush1.bf16.msra.mxu0 %v4667
  %4676 = vmatprep.subr.bf16.mxu0 0
  %4677 = vmatpush1.bf16.msra.mxu0 0
  %4678 = vmatprep.subr.bf16.mxu0 0
  %4679 = vmatpush1.bf16.msra.mxu0 0
  %4680 = vmatprep.subr.bf16.mxu0 0
  %4681 = vmatpush1.bf16.msra.mxu0 0
  %4682 = vmatprep.subr.bf16.mxu0 0
  %4683 = vmatpush1.bf16.msra.mxu0 0
  %4684 = vmatprep.subr.bf16.mxu0 0
  %4685 = vmatpush1.bf16.msra.mxu0 0
  %4686 = vmatprep.subr.bf16.mxu0 0
  %4687 = vmatpush1.bf16.msra.mxu0 0
  %4688 = vmatprep.subr.bf16.mxu0 0
  %4689 = vmatpush1.bf16.msra.mxu0 0
  %4690 = vmatprep.subr.bf16.mxu0 0
  %4691 = vmatpush1.bf16.msra.mxu0 0
  %4692 = vmatprep.subr.bf16.mxu0 0
  %4693 = vmatpush1.bf16.msra.mxu0 0
  %4694 = vmatprep.subr.bf16.mxu0 0
  %4695 = vmatpush1.bf16.msra.mxu0 0
  %4696 = vmatprep.subr.bf16.mxu0 0
  %4697 = vmatpush1.bf16.msra.mxu0 0
  %4698 = vmatprep.subr.bf16.mxu0 0
  %4699 = vmatpush1.bf16.msra.mxu0 0
  %4700 = vmatprep.subr.bf16.mxu0 0
  %4701 = vmatpush1.bf16.msra.mxu0 0
  %4702 = vmatprep.subr.bf16.mxu0 0
  %4703 = vmatpush1.bf16.msra.mxu0 0
  %4704 = vmatprep.mubr.bf16.mxu0 0
  %4705 = vmatmul.mubr.bf16.gmra.mrb[0].mxu0 %v2357
  %v4706 = vpop.f32.mrb[0].mxu0
  %v4707 = vadd.f32 0.0, %v4706
  %v4708 = vpop.f32.mrb[0].mxu0
  %v4709 = vpop.f32.mrb[0].mxu0
  %v4710 = vadd.f32 0.0, %v4709
  %v4711 = vpop.f32.mrb[0].mxu0
  %4712 = vmatprep.mubr.bf16.mxu0 0
  %4713 = vmatmul.mubr.bf16.gmra.mrb[0].mxu0 %v2360
  %v4714 = vpop.f32.mrb[0].mxu0
  %v4715 = vadd.f32 0.0, %v4714
  %v4716 = vpop.f32.mrb[0].mxu0
  %v4717 = vpop.f32.mrb[0].mxu0
  %v4718 = vadd.f32 0.0, %v4717
  %v4719 = vpop.f32.mrb[0].mxu0
  %4720 = vdwg.mxu0
  %v4721 = vpack.c.bf16 %v4710, %v4707
  %v4722 = vpack.c.bf16 %v4718, %v4715
  %v4723 = vld [vmem:[%s11 + $0x10] sm:$0xf]
  %v4724 = vld [vmem:[%s11 + $0x14] sm:$0xf]
  %v4725 = vld [vmem:[%s11 + $0x18] sm:$0xf]
  %v4726 = vld [vmem:[%s11 + $0x1c] sm:$0xf]
  %4727 = vmatprep.subr.bf16.mxu0 0
  %4728 = vmatpush1.bf16.msra.mxu0 %v4666
  %4729 = vmatprep.subr.bf16.mxu0 0
  %4730 = vmatpush1.bf16.msra.mxu0 %v4667
  %4731 = vmatprep.subr.bf16.mxu0 0
  %4732 = vmatpush1.bf16.msra.mxu0 0
  %4733 = vmatprep.subr.bf16.mxu0 0
  %4734 = vmatpush1.bf16.msra.mxu0 0
  %4735 = vmatprep.subr.bf16.mxu0 0
  %4736 = vmatpush1.bf16.msra.mxu0 0
  %4737 = vmatprep.subr.bf16.mxu0 0
  %4738 = vmatpush1.bf16.msra.mxu0 0
  %4739 = vmatprep.subr.bf16.mxu0 0
  %4740 = vmatpush1.bf16.msra.mxu0 0
  %4741 = vmatprep.subr.bf16.mxu0 0
  %4742 = vmatpush1.bf16.msra.mxu0 0
  %4743 = vmatprep.subr.bf16.mxu0 0
  %4744 = vmatpush1.bf16.msra.mxu0 0
  %4745 = vmatprep.subr.bf16.mxu0 0
  %4746 = vmatpush1.bf16.msra.mxu0 0
  %4747 = vmatprep.subr.bf16.mxu0 0
  %4748 = vmatpush1.bf16.msra.mxu0 0
  %4749 = vmatprep.subr.bf16.mxu0 0
  %4750 = vmatpush1.bf16.msra.mxu0 0
  %4751 = vmatprep.subr.bf16.mxu0 0
  %4752 = vmatpush1.bf16.msra.mxu0 0
  %4753 = vmatprep.subr.bf16.mxu0 0
  %4754 = vmatpush1.bf16.msra.mxu0 0
  %4755 = vmatprep.subr.bf16.mxu0 0
  %4756 = vmatpush1.bf16.msra.mxu0 0
  %4757 = vmatprep.subr.bf16.mxu0 0
  %4758 = vmatpush1.bf16.msra.mxu0 0
  %4759 = vmatprep.mubr.bf16.mxu0 0
  %4760 = vmatmul.mubr.bf16.gmra.mrb[0].mxu0 %v2429
  %v4761 = vpop.f32.mrb[0].mxu0
  %v4762 = vadd.f32 0.0, %v4761
  %v4763 = vpop.f32.mrb[0].mxu0
  %v4764 = vpop.f32.mrb[0].mxu0
  %v4765 = vadd.f32 0.0, %v4764
  %v4766 = vpop.f32.mrb[0].mxu0
  %4767 = vmatprep.mubr.bf16.mxu0 0
  %4768 = vmatmul.mubr.bf16.gmra.mrb[0].mxu0 %v2432
  %v4769 = vpop.f32.mrb[0].mxu0
  %v4770 = vadd.f32 0.0, %v4769
  %v4771 = vpop.f32.mrb[0].mxu0
  %v4772 = vpop.f32.mrb[0].mxu0
  %v4773 = vadd.f32 0.0, %v4772
  %v4774 = vpop.f32.mrb[0].mxu0
  %4775 = vdwg.mxu0
  %v4776 = vpack.c.bf16 %v4765, %v4762
  %v4777 = vpack.c.bf16 %v4773, %v4770
  %v4782 = vunpack.c.l.b16 %v4723
  %v4783 = vunpack.c.l.b16 %v4724
  %v4784 = vunpack.c.l.b16 %v4725
  %v4785 = vunpack.c.l.b16 %v4726
  %v4786 = vpack.c.b16 %v4783, %v4782
  %v4787 = vpack.c.b16 %v4785, %v4784
  %v4791 = vsel %vm2355, %v4776, 0
  %v4794 = vsel %vm2355, %v4777, 0
  %4796 = vmatprep.subr.bf16.mxu0 0
  %4797 = vmatpush1.bf16.msra.mxu0 %v4786
  %4798 = vmatprep.subr.bf16.mxu0 0
  %4799 = vmatpush1.bf16.msra.mxu0 %v4787
  %4800 = vmatprep.subr.bf16.mxu0 0
  %4801 = vmatpush1.bf16.msra.mxu0 0
  %4802 = vmatprep.subr.bf16.mxu0 0
  %4803 = vmatpush1.bf16.msra.mxu0 0
  %4804 = vmatprep.subr.bf16.mxu0 0
  %4805 = vmatpush1.bf16.msra.mxu0 0
  %4806 = vmatprep.subr.bf16.mxu0 0
  %4807 = vmatpush1.bf16.msra.mxu0 0
  %4808 = vmatprep.subr.bf16.mxu0 0
  %4809 = vmatpush1.bf16.msra.mxu0 0
  %4810 = vmatprep.subr.bf16.mxu0 0
  %4811 = vmatpush1.bf16.msra.mxu0 0
  %4812 = vmatprep.subr.bf16.mxu0 0
  %4813 = vmatpush1.bf16.msra.mxu0 0
  %4814 = vmatprep.subr.bf16.mxu0 0
  %4815 = vmatpush1.bf16.msra.mxu0 0
  %4816 = vmatprep.subr.bf16.mxu0 0
  %4817 = vmatpush1.bf16.msra.mxu0 0
  %4818 = vmatprep.subr.bf16.mxu0 0
  %4819 = vmatpush1.bf16.msra.mxu0 0
  %4820 = vmatprep.subr.bf16.mxu0 0
  %4821 = vmatpush1.bf16.msra.mxu0 0
  %4822 = vmatprep.subr.bf16.mxu0 0
  %4823 = vmatpush1.bf16.msra.mxu0 0
  %4824 = vmatprep.subr.bf16.mxu0 0
  %4825 = vmatpush1.bf16.msra.mxu0 0
  %4826 = vmatprep.subr.bf16.mxu0 0
  %4827 = vmatpush1.bf16.msra.mxu0 0
  %4828 = vmatprep.mubr.bf16.mxu0 0
  %4829 = vmatmul.mubr.bf16.gmra.mrb[0].mxu0 %v4791
  %v4830 = vpop.f32.mrb[0].mxu0
  %v4831 = vadd.f32 0.0, %v4830
  %v4832 = vpop.f32.mrb[0].mxu0
  %v4833 = vpop.f32.mrb[0].mxu0
  %v4834 = vadd.f32 0.0, %v4833
  %v4835 = vpop.f32.mrb[0].mxu0
  %4836 = vmatprep.mubr.bf16.mxu0 0
  %4837 = vmatmul.mubr.bf16.gmra.mrb[0].mxu0 %v4794
  %v4838 = vpop.f32.mrb[0].mxu0
  %v4839 = vadd.f32 0.0, %v4838
  %v4840 = vpop.f32.mrb[0].mxu0
  %v4841 = vpop.f32.mrb[0].mxu0
  %v4842 = vadd.f32 0.0, %v4841
  %v4843 = vpop.f32.mrb[0].mxu0
  %4844 = vdwg.mxu0
  %v4849 = vunpack.c.l.b16 %v4668
  %v4850 = vunpack.c.l.b16 %v4669
  %v4851 = vunpack.c.l.b16 %v4670
  %v4852 = vunpack.c.l.b16 %v4671
  %v4853 = vpack.c.b16 %v4850, %v4849
  %v4854 = vpack.c.b16 %v4852, %v4851
  %v4858 = vsel %vm2355, %v4721, 0
  %v4861 = vsel %vm2355, %v4722, 0
  %4863 = vmatprep.subr.bf16.mxu0 0
  %4864 = vmatpush1.bf16.msra.mxu0 %v4853
  %4865 = vmatprep.subr.bf16.mxu0 0
  %4866 = vmatpush1.bf16.msra.mxu0 %v4854
  %4867 = vmatprep.subr.bf16.mxu0 0
  %4868 = vmatpush1.bf16.msra.mxu0 0
  %4869 = vmatprep.subr.bf16.mxu0 0
  %4870 = vmatpush1.bf16.msra.mxu0 0
  %4871 = vmatprep.subr.bf16.mxu0 0
  %4872 = vmatpush1.bf16.msra.mxu0 0
  %4873 = vmatprep.subr.bf16.mxu0 0
  %4874 = vmatpush1.bf16.msra.mxu0 0
  %4875 = vmatprep.subr.bf16.mxu0 0
  %4876 = vmatpush1.bf16.msra.mxu0 0
  %4877 = vmatprep.subr.bf16.mxu0 0
  %4878 = vmatpush1.bf16.msra.mxu0 0
  %4879 = vmatprep.subr.bf16.mxu0 0
  %4880 = vmatpush1.bf16.msra.mxu0 0
  %4881 = vmatprep.subr.bf16.mxu0 0
  %4882 = vmatpush1.bf16.msra.mxu0 0
  %4883 = vmatprep.subr.bf16.mxu0 0
  %4884 = vmatpush1.bf16.msra.mxu0 0
  %4885 = vmatprep.subr.bf16.mxu0 0
  %4886 = vmatpush1.bf16.msra.mxu0 0
  %4887 = vmatprep.subr.bf16.mxu0 0
  %4888 = vmatpush1.bf16.msra.mxu0 0
  %4889 = vmatprep.subr.bf16.mxu0 0
  %4890 = vmatpush1.bf16.msra.mxu0 0
  %4891 = vmatprep.subr.bf16.mxu0 0
  %4892 = vmatpush1.bf16.msra.mxu0 0
  %4893 = vmatprep.subr.bf16.mxu0 0
  %4894 = vmatpush1.bf16.msra.mxu0 0
  %4895 = vmatprep.mubr.bf16.mxu0 0
  %4896 = vmatmul.mubr.bf16.gmra.mrb[0].mxu0 %v4858
  %v4897 = vpop.f32.mrb[0].mxu0
  %v4898 = vadd.f32 %v4831, %v4897
  %v4899 = vpop.f32.mrb[0].mxu0
  %v4900 = vpop.f32.mrb[0].mxu0
  %v4901 = vadd.f32 %v4834, %v4900
  %v4902 = vpop.f32.mrb[0].mxu0
  %4903 = vmatprep.mubr.bf16.mxu0 0
  %4904 = vmatmul.mubr.bf16.gmra.mrb[0].mxu0 %v4861
  %v4905 = vpop.f32.mrb[0].mxu0
  %v4906 = vadd.f32 %v4839, %v4905
  %v4907 = vpop.f32.mrb[0].mxu0
  %v4908 = vpop.f32.mrb[0].mxu0
  %v4909 = vadd.f32 %v4842, %v4908
  %v4910 = vpop.f32.mrb[0].mxu0
  %4911 = vdwg.mxu0
  %v4912 = vld [vmem:[%s11 + $0x20] sm:$0xf]
  %v4913 = vld [vmem:[%s11 + $0x24] sm:$0xf]
  %v4914 = vld [vmem:[%s11 + $0x28] sm:$0xf]
  %v4915 = vld [vmem:[%s11 + $0x2c] sm:$0xf]
  %4916 = vmatprep.subr.bf16.mxu0 0
  %4917 = vmatpush1.bf16.msra.mxu0 %v4666
  %4918 = vmatprep.subr.bf16.mxu0 0
  %4919 = vmatpush1.bf16.msra.mxu0 %v4667
  %4920 = vmatprep.subr.bf16.mxu0 0
  %4921 = vmatpush1.bf16.msra.mxu0 0
  %4922 = vmatprep.subr.bf16.mxu0 0
  %4923 = vmatpush1.bf16.msra.mxu0 0
  %4924 = vmatprep.subr.bf16.mxu0 0
  %4925 = vmatpush1.bf16.msra.mxu0 0
  %4926 = vmatprep.subr.bf16.mxu0 0
  %4927 = vmatpush1.bf16.msra.mxu0 0
  %4928 = vmatprep.subr.bf16.mxu0 0
  %4929 = vmatpush1.bf16.msra.mxu0 0
  %4930 = vmatprep.subr.bf16.mxu0 0
  %4931 = vmatpush1.bf16.msra.mxu0 0
  %4932 = vmatprep.subr.bf16.mxu0 0
  %4933 = vmatpush1.bf16.msra.mxu0 0
  %4934 = vmatprep.subr.bf16.mxu0 0
  %4935 = vmatpush1.bf16.msra.mxu0 0
  %4936 = vmatprep.subr.bf16.mxu0 0
  %4937 = vmatpush1.bf16.msra.mxu0 0
  %4938 = vmatprep.subr.bf16.mxu0 0
  %4939 = vmatpush1.bf16.msra.mxu0 0
  %4940 = vmatprep.subr.bf16.mxu0 0
  %4941 = vmatpush1.bf16.msra.mxu0 0
  %4942 = vmatprep.subr.bf16.mxu0 0
  %4943 = vmatpush1.bf16.msra.mxu0 0
  %4944 = vmatprep.subr.bf16.mxu0 0
  %4945 = vmatpush1.bf16.msra.mxu0 0
  %4946 = vmatprep.subr.bf16.mxu0 0
  %4947 = vmatpush1.bf16.msra.mxu0 0
  %4948 = vmatprep.mubr.bf16.mxu0 0
  %4949 = vmatmul.mubr.bf16.gmra.mrb[0].mxu0 %v2619
  %v4950 = vpop.f32.mrb[0].mxu0
  %v4951 = vadd.f32 0.0, %v4950
  %v4952 = vpop.f32.mrb[0].mxu0
  %v4953 = vpop.f32.mrb[0].mxu0
  %v4954 = vadd.f32 0.0, %v4953
  %v4955 = vpop.f32.mrb[0].mxu0
  %4956 = vmatprep.mubr.bf16.mxu0 0
  %4957 = vmatmul.mubr.bf16.gmra.mrb[0].mxu0 %v2622
  %v4958 = vpop.f32.mrb[0].mxu0
  %v4959 = vadd.f32 0.0, %v4958
  %v4960 = vpop.f32.mrb[0].mxu0
  %v4961 = vpop.f32.mrb[0].mxu0
  %v4962 = vadd.f32 0.0, %v4961
  %v4963 = vpop.f32.mrb[0].mxu0
  %4964 = vdwg.mxu0
  %v4965 = vpack.c.bf16 %v4954, %v4951
  %v4966 = vpack.c.bf16 %v4962, %v4959
  %v4971 = vunpack.c.l.b16 %v4912
  %v4972 = vunpack.c.l.b16 %v4913
  %v4973 = vunpack.c.l.b16 %v4914
  %v4974 = vunpack.c.l.b16 %v4915
  %v4975 = vpack.c.b16 %v4972, %v4971
  %v4976 = vpack.c.b16 %v4974, %v4973
  %v4980 = vsel %vm2355, %v4965, 0
  %v4983 = vsel %vm2355, %v4966, 0
  %4985 = vmatprep.subr.bf16.mxu0 0
  %4986 = vmatpush1.bf16.msra.mxu0 %v4975
  %4987 = vmatprep.subr.bf16.mxu0 0
  %4988 = vmatpush1.bf16.msra.mxu0 %v4976
  %4989 = vmatprep.subr.bf16.mxu0 0
  %4990 = vmatpush1.bf16.msra.mxu0 0
  %4991 = vmatprep.subr.bf16.mxu0 0
  %4992 = vmatpush1.bf16.msra.mxu0 0
  %4993 = vmatprep.subr.bf16.mxu0 0
  %4994 = vmatpush1.bf16.msra.mxu0 0
  %4995 = vmatprep.subr.bf16.mxu0 0
  %4996 = vmatpush1.bf16.msra.mxu0 0
  %4997 = vmatprep.subr.bf16.mxu0 0
  %4998 = vmatpush1.bf16.msra.mxu0 0
  %4999 = vmatprep.subr.bf16.mxu0 0
  %5000 = vmatpush1.bf16.msra.mxu0 0
  %5001 = vmatprep.subr.bf16.mxu0 0
  %5002 = vmatpush1.bf16.msra.mxu0 0
  %5003 = vmatprep.subr.bf16.mxu0 0
  %5004 = vmatpush1.bf16.msra.mxu0 0
  %5005 = vmatprep.subr.bf16.mxu0 0
  %5006 = vmatpush1.bf16.msra.mxu0 0
  %5007 = vmatprep.subr.bf16.mxu0 0
  %5008 = vmatpush1.bf16.msra.mxu0 0
  %5009 = vmatprep.subr.bf16.mxu0 0
  %5010 = vmatpush1.bf16.msra.mxu0 0
  %5011 = vmatprep.subr.bf16.mxu0 0
  %5012 = vmatpush1.bf16.msra.mxu0 0
  %5013 = vmatprep.subr.bf16.mxu0 0
  %5014 = vmatpush1.bf16.msra.mxu0 0
  %5015 = vmatprep.subr.bf16.mxu0 0
  %5016 = vmatpush1.bf16.msra.mxu0 0
  %5017 = vmatprep.mubr.bf16.mxu0 0
  %5018 = vmatmul.mubr.bf16.gmra.mrb[0].mxu0 %v4980
  %v5019 = vpop.f32.mrb[0].mxu0
  %v5020 = vadd.f32 0.0, %v5019
  %v5021 = vpop.f32.mrb[0].mxu0
  %v5022 = vpop.f32.mrb[0].mxu0
  %v5023 = vadd.f32 0.0, %v5022
  %v5024 = vpop.f32.mrb[0].mxu0
  %5025 = vmatprep.mubr.bf16.mxu0 0
  %5026 = vmatmul.mubr.bf16.gmra.mrb[0].mxu0 %v4983
  %v5027 = vpop.f32.mrb[0].mxu0
  %v5028 = vadd.f32 0.0, %v5027
  %v5029 = vpop.f32.mrb[0].mxu0
  %v5030 = vpop.f32.mrb[0].mxu0
  %v5031 = vadd.f32 0.0, %v5030
  %v5032 = vpop.f32.mrb[0].mxu0
  %5033 = vdwg.mxu0
  %v5034 = vadd.f32 %v4898, %v5020
  %v5035 = vadd.f32 %v4901, %v5023
  %v5036 = vadd.f32 %v4906, %v5028
  %v5037 = vadd.f32 %v4909, %v5031
  %v5038 = vld [vmem:[%s11 + $0x30] sm:$0xf]
  %v5039 = vld [vmem:[%s11 + $0x34] sm:$0xf]
  %v5040 = vld [vmem:[%s11 + $0x38] sm:$0xf]
  %v5041 = vld [vmem:[%s11 + $0x3c] sm:$0xf]
  %5042 = vmatprep.subr.bf16.mxu0 0
  %5043 = vmatpush1.bf16.msra.mxu0 %v4666
  %5044 = vmatprep.subr.bf16.mxu0 0
  %5045 = vmatpush1.bf16.msra.mxu0 %v4667
  %5046 = vmatprep.subr.bf16.mxu0 0
  %5047 = vmatpush1.bf16.msra.mxu0 0
  %5048 = vmatprep.subr.bf16.mxu0 0
  %5049 = vmatpush1.bf16.msra.mxu0 0
  %5050 = vmatprep.subr.bf16.mxu0 0
  %5051 = vmatpush1.bf16.msra.mxu0 0
  %5052 = vmatprep.subr.bf16.mxu0 0
  %5053 = vmatpush1.bf16.msra.mxu0 0
  %5054 = vmatprep.subr.bf16.mxu0 0
  %5055 = vmatpush1.bf16.msra.mxu0 0
  %5056 = vmatprep.subr.bf16.mxu0 0
  %5057 = vmatpush1.bf16.msra.mxu0 0
  %5058 = vmatprep.subr.bf16.mxu0 0
  %5059 = vmatpush1.bf16.msra.mxu0 0
  %5060 = vmatprep.subr.bf16.mxu0 0
  %5061 = vmatpush1.bf16.msra.mxu0 0
  %5062 = vmatprep.subr.bf16.mxu0 0
  %5063 = vmatpush1.bf16.msra.mxu0 0
  %5064 = vmatprep.subr.bf16.mxu0 0
  %5065 = vmatpush1.bf16.msra.mxu0 0
  %5066 = vmatprep.subr.bf16.mxu0 0
  %5067 = vmatpush1.bf16.msra.mxu0 0
  %5068 = vmatprep.subr.bf16.mxu0 0
  %5069 = vmatpush1.bf16.msra.mxu0 0
  %5070 = vmatprep.subr.bf16.mxu0 0
  %5071 = vmatpush1.bf16.msra.mxu0 0
  %5072 = vmatprep.subr.bf16.mxu0 0
  %5073 = vmatpush1.bf16.msra.mxu0 0
  %5074 = vmatprep.mubr.bf16.mxu0 0
  %5075 = vmatmul.mubr.bf16.gmra.mrb[0].mxu0 %v2753
  %v5076 = vpop.f32.mrb[0].mxu0
  %v5077 = vadd.f32 0.0, %v5076
  %v5078 = vpop.f32.mrb[0].mxu0
  %v5079 = vpop.f32.mrb[0].mxu0
  %v5080 = vadd.f32 0.0, %v5079
  %v5081 = vpop.f32.mrb[0].mxu0
  %5082 = vmatprep.mubr.bf16.mxu0 0
  %5083 = vmatmul.mubr.bf16.gmra.mrb[0].mxu0 %v2756
  %v5084 = vpop.f32.mrb[0].mxu0
  %v5085 = vadd.f32 0.0, %v5084
  %v5086 = vpop.f32.mrb[0].mxu0
  %v5087 = vpop.f32.mrb[0].mxu0
  %v5088 = vadd.f32 0.0, %v5087
  %v5089 = vpop.f32.mrb[0].mxu0
  %5090 = vdwg.mxu0
  %v5091 = vpack.c.bf16 %v5080, %v5077
  %v5092 = vpack.c.bf16 %v5088, %v5085
  %v5097 = vunpack.c.l.b16 %v5038
  %v5098 = vunpack.c.l.b16 %v5039
  %v5099 = vunpack.c.l.b16 %v5040
  %v5100 = vunpack.c.l.b16 %v5041
  %v5101 = vpack.c.b16 %v5098, %v5097
  %v5102 = vpack.c.b16 %v5100, %v5099
  %v5106 = vsel %vm2355, %v5091, 0
  %v5109 = vsel %vm2355, %v5092, 0
  %5111 = vmatprep.subr.bf16.mxu0 0
  %5112 = vmatpush1.bf16.msra.mxu0 %v5101
  %5113 = vmatprep.subr.bf16.mxu0 0
  %5114 = vmatpush1.bf16.msra.mxu0 %v5102
  %5115 = vmatprep.subr.bf16.mxu0 0
  %5116 = vmatpush1.bf16.msra.mxu0 0
  %5117 = vmatprep.subr.bf16.mxu0 0
  %5118 = vmatpush1.bf16.msra.mxu0 0
  %5119 = vmatprep.subr.bf16.mxu0 0
  %5120 = vmatpush1.bf16.msra.mxu0 0
  %5121 = vmatprep.subr.bf16.mxu0 0
  %5122 = vmatpush1.bf16.msra.mxu0 0
  %5123 = vmatprep.subr.bf16.mxu0 0
  %5124 = vmatpush1.bf16.msra.mxu0 0
  %5125 = vmatprep.subr.bf16.mxu0 0
  %5126 = vmatpush1.bf16.msra.mxu0 0
  %5127 = vmatprep.subr.bf16.mxu0 0
  %5128 = vmatpush1.bf16.msra.mxu0 0
  %5129 = vmatprep.subr.bf16.mxu0 0
  %5130 = vmatpush1.bf16.msra.mxu0 0
  %5131 = vmatprep.subr.bf16.mxu0 0
  %5132 = vmatpush1.bf16.msra.mxu0 0
  %5133 = vmatprep.subr.bf16.mxu0 0
  %5134 = vmatpush1.bf16.msra.mxu0 0
  %5135 = vmatprep.subr.bf16.mxu0 0
  %5136 = vmatpush1.bf16.msra.mxu0 0
  %5137 = vmatprep.subr.bf16.mxu0 0
  %5138 = vmatpush1.bf16.msra.mxu0 0
  %5139 = vmatprep.subr.bf16.mxu0 0
  %5140 = vmatpush1.bf16.msra.mxu0 0
  %5141 = vmatprep.subr.bf16.mxu0 0
  %5142 = vmatpush1.bf16.msra.mxu0 0
  %5143 = vmatprep.mubr.bf16.mxu0 0
  %5144 = vmatmul.mubr.bf16.gmra.mrb[0].mxu0 %v5106
  %v5145 = vpop.f32.mrb[0].mxu0
  %v5146 = vadd.f32 0.0, %v5145
  %v5147 = vpop.f32.mrb[0].mxu0
  %v5148 = vpop.f32.mrb[0].mxu0
  %v5149 = vadd.f32 0.0, %v5148
  %v5150 = vpop.f32.mrb[0].mxu0
  %5151 = vmatprep.mubr.bf16.mxu0 0
  %5152 = vmatmul.mubr.bf16.gmra.mrb[0].mxu0 %v5109
  %v5153 = vpop.f32.mrb[0].mxu0
  %v5154 = vadd.f32 0.0, %v5153
  %v5155 = vpop.f32.mrb[0].mxu0
  %v5156 = vpop.f32.mrb[0].mxu0
  %v5157 = vadd.f32 0.0, %v5156
  %v5158 = vpop.f32.mrb[0].mxu0
  %5159 = vdwg.mxu0
  %v5160 = vadd.f32 %v5034, %v5146
  %v5161 = vadd.f32 %v5035, %v5149
  %v5162 = vadd.f32 %v5036, %v5154
  %v5163 = vadd.f32 %v5037, %v5157
  %v5164 = vld [vmem:[%s11 + $0x40] sm:$0xf]
  %v5165 = vld [vmem:[%s11 + $0x44] sm:$0xf]
  %v5166 = vld [vmem:[%s11 + $0x48] sm:$0xf]
  %v5167 = vld [vmem:[%s11 + $0x4c] sm:$0xf]
  %5168 = vmatprep.subr.bf16.mxu0 0
  %5169 = vmatpush1.bf16.msra.mxu0 %v4666
  %5170 = vmatprep.subr.bf16.mxu0 0
  %5171 = vmatpush1.bf16.msra.mxu0 %v4667
  %5172 = vmatprep.subr.bf16.mxu0 0
  %5173 = vmatpush1.bf16.msra.mxu0 0
  %5174 = vmatprep.subr.bf16.mxu0 0
  %5175 = vmatpush1.bf16.msra.mxu0 0
  %5176 = vmatprep.subr.bf16.mxu0 0
  %5177 = vmatpush1.bf16.msra.mxu0 0
  %5178 = vmatprep.subr.bf16.mxu0 0
  %5179 = vmatpush1.bf16.msra.mxu0 0
  %5180 = vmatprep.subr.bf16.mxu0 0
  %5181 = vmatpush1.bf16.msra.mxu0 0
  %5182 = vmatprep.subr.bf16.mxu0 0
  %5183 = vmatpush1.bf16.msra.mxu0 0
  %5184 = vmatprep.subr.bf16.mxu0 0
  %5185 = vmatpush1.bf16.msra.mxu0 0
  %5186 = vmatprep.subr.bf16.mxu0 0
  %5187 = vmatpush1.bf16.msra.mxu0 0
  %5188 = vmatprep.subr.bf16.mxu0 0
  %5189 = vmatpush1.bf16.msra.mxu0 0
  %5190 = vmatprep.subr.bf16.mxu0 0
  %5191 = vmatpush1.bf16.msra.mxu0 0
  %5192 = vmatprep.subr.bf16.mxu0 0
  %5193 = vmatpush1.bf16.msra.mxu0 0
  %5194 = vmatprep.subr.bf16.mxu0 0
  %5195 = vmatpush1.bf16.msra.mxu0 0
  %5196 = vmatprep.subr.bf16.mxu0 0
  %5197 = vmatpush1.bf16.msra.mxu0 0
  %5198 = vmatprep.subr.bf16.mxu0 0
  %5199 = vmatpush1.bf16.msra.mxu0 0
  %5200 = vmatprep.mubr.bf16.mxu0 0
  %5201 = vmatmul.mubr.bf16.gmra.mrb[0].mxu0 %v2887
  %v5202 = vpop.f32.mrb[0].mxu0
  %v5203 = vadd.f32 0.0, %v5202
  %v5204 = vpop.f32.mrb[0].mxu0
  %v5205 = vpop.f32.mrb[0].mxu0
  %v5206 = vadd.f32 0.0, %v5205
  %v5207 = vpop.f32.mrb[0].mxu0
  %5208 = vmatprep.mubr.bf16.mxu0 0
  %5209 = vmatmul.mubr.bf16.gmra.mrb[0].mxu0 %v2890
  %v5210 = vpop.f32.mrb[0].mxu0
  %v5211 = vadd.f32 0.0, %v5210
  %v5212 = vpop.f32.mrb[0].mxu0
  %v5213 = vpop.f32.mrb[0].mxu0
  %v5214 = vadd.f32 0.0, %v5213
  %v5215 = vpop.f32.mrb[0].mxu0
  %5216 = vdwg.mxu0
  %v5217 = vpack.c.bf16 %v5206, %v5203
  %v5218 = vpack.c.bf16 %v5214, %v5211
  %v5223 = vunpack.c.l.b16 %v5164
  %v5224 = vunpack.c.l.b16 %v5165
  %v5225 = vunpack.c.l.b16 %v5166
  %v5226 = vunpack.c.l.b16 %v5167
  %v5227 = vpack.c.b16 %v5224, %v5223
  %v5228 = vpack.c.b16 %v5226, %v5225
  %v5232 = vsel %vm2355, %v5217, 0
  %v5235 = vsel %vm2355, %v5218, 0
  %5237 = vmatprep.subr.bf16.mxu0 0
  %5238 = vmatpush1.bf16.msra.mxu0 %v5227
  %5239 = vmatprep.subr.bf16.mxu0 0
  %5240 = vmatpush1.bf16.msra.mxu0 %v5228
  %5241 = vmatprep.subr.bf16.mxu0 0
  %5242 = vmatpush1.bf16.msra.mxu0 0
  %5243 = vmatprep.subr.bf16.mxu0 0
  %5244 = vmatpush1.bf16.msra.mxu0 0
  %5245 = vmatprep.subr.bf16.mxu0 0
  %5246 = vmatpush1.bf16.msra.mxu0 0
  %5247 = vmatprep.subr.bf16.mxu0 0
  %5248 = vmatpush1.bf16.msra.mxu0 0
  %5249 = vmatprep.subr.bf16.mxu0 0
  %5250 = vmatpush1.bf16.msra.mxu0 0
  %5251 = vmatprep.subr.bf16.mxu0 0
  %5252 = vmatpush1.bf16.msra.mxu0 0
  %5253 = vmatprep.subr.bf16.mxu0 0
  %5254 = vmatpush1.bf16.msra.mxu0 0
  %5255 = vmatprep.subr.bf16.mxu0 0
  %5256 = vmatpush1.bf16.msra.mxu0 0
  %5257 = vmatprep.subr.bf16.mxu0 0
  %5258 = vmatpush1.bf16.msra.mxu0 0
  %5259 = vmatprep.subr.bf16.mxu0 0
  %5260 = vmatpush1.bf16.msra.mxu0 0
  %5261 = vmatprep.subr.bf16.mxu0 0
  %5262 = vmatpush1.bf16.msra.mxu0 0
  %5263 = vmatprep.subr.bf16.mxu0 0
  %5264 = vmatpush1.bf16.msra.mxu0 0
  %5265 = vmatprep.subr.bf16.mxu0 0
  %5266 = vmatpush1.bf16.msra.mxu0 0
  %5267 = vmatprep.subr.bf16.mxu0 0
  %5268 = vmatpush1.bf16.msra.mxu0 0
  %5269 = vmatprep.mubr.bf16.mxu0 0
  %5270 = vmatmul.mubr.bf16.gmra.mrb[0].mxu0 %v5232
  %v5271 = vpop.f32.mrb[0].mxu0
  %v5272 = vadd.f32 0.0, %v5271
  %v5273 = vpop.f32.mrb[0].mxu0
  %v5274 = vpop.f32.mrb[0].mxu0
  %v5275 = vadd.f32 0.0, %v5274
  %v5276 = vpop.f32.mrb[0].mxu0
  %5277 = vmatprep.mubr.bf16.mxu0 0
  %5278 = vmatmul.mubr.bf16.gmra.mrb[0].mxu0 %v5235
  %v5279 = vpop.f32.mrb[0].mxu0
  %v5280 = vadd.f32 0.0, %v5279
  %v5281 = vpop.f32.mrb[0].mxu0
  %v5282 = vpop.f32.mrb[0].mxu0
  %v5283 = vadd.f32 0.0, %v5282
  %v5284 = vpop.f32.mrb[0].mxu0
  %5285 = vdwg.mxu0
  %v5286 = vadd.f32 %v5160, %v5272
  %v5287 = vadd.f32 %v5161, %v5275
  %v5288 = vadd.f32 %v5162, %v5280
  %v5289 = vadd.f32 %v5163, %v5283
  %v5290 = vld [vmem:[%s11 + $0x50] sm:$0xf]
  %v5291 = vld [vmem:[%s11 + $0x54] sm:$0xf]
  %v5292 = vld [vmem:[%s11 + $0x58] sm:$0xf]
  %v5293 = vld [vmem:[%s11 + $0x5c] sm:$0xf]
  %5294 = vmatprep.subr.bf16.mxu0 0
  %5295 = vmatpush1.bf16.msra.mxu0 %v4666
  %5296 = vmatprep.subr.bf16.mxu0 0
  %5297 = vmatpush1.bf16.msra.mxu0 %v4667
  %5298 = vmatprep.subr.bf16.mxu0 0
  %5299 = vmatpush1.bf16.msra.mxu0 0
  %5300 = vmatprep.subr.bf16.mxu0 0
  %5301 = vmatpush1.bf16.msra.mxu0 0
  %5302 = vmatprep.subr.bf16.mxu0 0
  %5303 = vmatpush1.bf16.msra.mxu0 0
  %5304 = vmatprep.subr.bf16.mxu0 0
  %5305 = vmatpush1.bf16.msra.mxu0 0
  %5306 = vmatprep.subr.bf16.mxu0 0
  %5307 = vmatpush1.bf16.msra.mxu0 0
  %5308 = vmatprep.subr.bf16.mxu0 0
  %5309 = vmatpush1.bf16.msra.mxu0 0
  %5310 = vmatprep.subr.bf16.mxu0 0
  %5311 = vmatpush1.bf16.msra.mxu0 0
  %5312 = vmatprep.subr.bf16.mxu0 0
  %5313 = vmatpush1.bf16.msra.mxu0 0
  %5314 = vmatprep.subr.bf16.mxu0 0
  %5315 = vmatpush1.bf16.msra.mxu0 0
  %5316 = vmatprep.subr.bf16.mxu0 0
  %5317 = vmatpush1.bf16.msra.mxu0 0
  %5318 = vmatprep.subr.bf16.mxu0 0
  %5319 = vmatpush1.bf16.msra.mxu0 0
  %5320 = vmatprep.subr.bf16.mxu0 0
  %5321 = vmatpush1.bf16.msra.mxu0 0
  %5322 = vmatprep.subr.bf16.mxu0 0
  %5323 = vmatpush1.bf16.msra.mxu0 0
  %5324 = vmatprep.subr.bf16.mxu0 0
  %5325 = vmatpush1.bf16.msra.mxu0 0
  %5326 = vmatprep.mubr.bf16.mxu0 0
  %5327 = vmatmul.mubr.bf16.gmra.mrb[0].mxu0 %v3021
  %v5328 = vpop.f32.mrb[0].mxu0
  %v5329 = vadd.f32 0.0, %v5328
  %v5330 = vpop.f32.mrb[0].mxu0
  %v5331 = vpop.f32.mrb[0].mxu0
  %v5332 = vadd.f32 0.0, %v5331
  %v5333 = vpop.f32.mrb[0].mxu0
  %5334 = vmatprep.mubr.bf16.mxu0 0
  %5335 = vmatmul.mubr.bf16.gmra.mrb[0].mxu0 %v3024
  %v5336 = vpop.f32.mrb[0].mxu0
  %v5337 = vadd.f32 0.0, %v5336
  %v5338 = vpop.f32.mrb[0].mxu0
  %v5339 = vpop.f32.mrb[0].mxu0
  %v5340 = vadd.f32 0.0, %v5339
  %v5341 = vpop.f32.mrb[0].mxu0
  %5342 = vdwg.mxu0
  %v5343 = vpack.c.bf16 %v5332, %v5329
  %v5344 = vpack.c.bf16 %v5340, %v5337
  %v5349 = vunpack.c.l.b16 %v5290
  %v5350 = vunpack.c.l.b16 %v5291
  %v5351 = vunpack.c.l.b16 %v5292
  %v5352 = vunpack.c.l.b16 %v5293
  %v5353 = vpack.c.b16 %v5350, %v5349
  %v5354 = vpack.c.b16 %v5352, %v5351
  %v5358 = vsel %vm2355, %v5343, 0
  %v5361 = vsel %vm2355, %v5344, 0
  %5363 = vmatprep.subr.bf16.mxu0 0
  %5364 = vmatpush1.bf16.msra.mxu0 %v5353
  %5365 = vmatprep.subr.bf16.mxu0 0
  %5366 = vmatpush1.bf16.msra.mxu0 %v5354
  %5367 = vmatprep.subr.bf16.mxu0 0
  %5368 = vmatpush1.bf16.msra.mxu0 0
  %5369 = vmatprep.subr.bf16.mxu0 0
  %5370 = vmatpush1.bf16.msra.mxu0 0
  %5371 = vmatprep.subr.bf16.mxu0 0
  %5372 = vmatpush1.bf16.msra.mxu0 0
  %5373 = vmatprep.subr.bf16.mxu0 0
  %5374 = vmatpush1.bf16.msra.mxu0 0
  %5375 = vmatprep.subr.bf16.mxu0 0
  %5376 = vmatpush1.bf16.msra.mxu0 0
  %5377 = vmatprep.subr.bf16.mxu0 0
  %5378 = vmatpush1.bf16.msra.mxu0 0
  %5379 = vmatprep.subr.bf16.mxu0 0
  %5380 = vmatpush1.bf16.msra.mxu0 0
  %5381 = vmatprep.subr.bf16.mxu0 0
  %5382 = vmatpush1.bf16.msra.mxu0 0
  %5383 = vmatprep.subr.bf16.mxu0 0
  %5384 = vmatpush1.bf16.msra.mxu0 0
  %5385 = vmatprep.subr.bf16.mxu0 0
  %5386 = vmatpush1.bf16.msra.mxu0 0
  %5387 = vmatprep.subr.bf16.mxu0 0
  %5388 = vmatpush1.bf16.msra.mxu0 0
  %5389 = vmatprep.subr.bf16.mxu0 0
  %5390 = vmatpush1.bf16.msra.mxu0 0
  %5391 = vmatprep.subr.bf16.mxu0 0
  %5392 = vmatpush1.bf16.msra.mxu0 0
  %5393 = vmatprep.subr.bf16.mxu0 0
  %5394 = vmatpush1.bf16.msra.mxu0 0
  %5395 = vmatprep.mubr.bf16.mxu0 0
  %5396 = vmatmul.mubr.bf16.gmra.mrb[0].mxu0 %v5358
  %v5397 = vpop.f32.mrb[0].mxu0
  %v5398 = vadd.f32 0.0, %v5397
  %v5399 = vpop.f32.mrb[0].mxu0
  %v5400 = vpop.f32.mrb[0].mxu0
  %v5401 = vadd.f32 0.0, %v5400
  %v5402 = vpop.f32.mrb[0].mxu0
  %5403 = vmatprep.mubr.bf16.mxu0 0
  %5404 = vmatmul.mubr.bf16.gmra.mrb[0].mxu0 %v5361
  %v5405 = vpop.f32.mrb[0].mxu0
  %v5406 = vadd.f32 0.0, %v5405
  %v5407 = vpop.f32.mrb[0].mxu0
  %v5408 = vpop.f32.mrb[0].mxu0
  %v5409 = vadd.f32 0.0, %v5408
  %v5410 = vpop.f32.mrb[0].mxu0
  %5411 = vdwg.mxu0
  %v5412 = vadd.f32 %v5286, %v5398
  %v5413 = vadd.f32 %v5287, %v5401
  %v5414 = vadd.f32 %v5288, %v5406
  %v5415 = vadd.f32 %v5289, %v5409
  %v5416 = vld [vmem:[%s11 + $0x60] sm:$0xf]
  %v5417 = vld [vmem:[%s11 + $0x64] sm:$0xf]
  %v5418 = vld [vmem:[%s11 + $0x68] sm:$0xf]
  %v5419 = vld [vmem:[%s11 + $0x6c] sm:$0xf]
  %5420 = vmatprep.subr.bf16.mxu0 0
  %5421 = vmatpush1.bf16.msra.mxu0 %v4666
  %5422 = vmatprep.subr.bf16.mxu0 0
  %5423 = vmatpush1.bf16.msra.mxu0 %v4667
  %5424 = vmatprep.subr.bf16.mxu0 0
  %5425 = vmatpush1.bf16.msra.mxu0 0
  %5426 = vmatprep.subr.bf16.mxu0 0
  %5427 = vmatpush1.bf16.msra.mxu0 0
  %5428 = vmatprep.subr.bf16.mxu0 0
  %5429 = vmatpush1.bf16.msra.mxu0 0
  %5430 = vmatprep.subr.bf16.mxu0 0
  %5431 = vmatpush1.bf16.msra.mxu0 0
  %5432 = vmatprep.subr.bf16.mxu0 0
  %5433 = vmatpush1.bf16.msra.mxu0 0
  %5434 = vmatprep.subr.bf16.mxu0 0
  %5435 = vmatpush1.bf16.msra.mxu0 0
  %5436 = vmatprep.subr.bf16.mxu0 0
  %5437 = vmatpush1.bf16.msra.mxu0 0
  %5438 = vmatprep.subr.bf16.mxu0 0
  %5439 = vmatpush1.bf16.msra.mxu0 0
  %5440 = vmatprep.subr.bf16.mxu0 0
  %5441 = vmatpush1.bf16.msra.mxu0 0
  %5442 = vmatprep.subr.bf16.mxu0 0
  %5443 = vmatpush1.bf16.msra.mxu0 0
  %5444 = vmatprep.subr.bf16.mxu0 0
  %5445 = vmatpush1.bf16.msra.mxu0 0
  %5446 = vmatprep.subr.bf16.mxu0 0
  %5447 = vmatpush1.bf16.msra.mxu0 0
  %5448 = vmatprep.subr.bf16.mxu0 0
  %5449 = vmatpush1.bf16.msra.mxu0 0
  %5450 = vmatprep.subr.bf16.mxu0 0
  %5451 = vmatpush1.bf16.msra.mxu0 0
  %5452 = vmatprep.mubr.bf16.mxu0 0
  %5453 = vmatmul.mubr.bf16.gmra.mrb[0].mxu0 %v3155
  %v5454 = vpop.f32.mrb[0].mxu0
  %v5455 = vadd.f32 0.0, %v5454
  %v5456 = vpop.f32.mrb[0].mxu0
  %v5457 = vpop.f32.mrb[0].mxu0
  %v5458 = vadd.f32 0.0, %v5457
  %v5459 = vpop.f32.mrb[0].mxu0
  %5460 = vmatprep.mubr.bf16.mxu0 0
  %5461 = vmatmul.mubr.bf16.gmra.mrb[0].mxu0 %v3158
  %v5462 = vpop.f32.mrb[0].mxu0
  %v5463 = vadd.f32 0.0, %v5462
  %v5464 = vpop.f32.mrb[0].mxu0
  %v5465 = vpop.f32.mrb[0].mxu0
  %v5466 = vadd.f32 0.0, %v5465
  %v5467 = vpop.f32.mrb[0].mxu0
  %5468 = vdwg.mxu0
  %v5469 = vpack.c.bf16 %v5458, %v5455
  %v5470 = vpack.c.bf16 %v5466, %v5463
  %v5475 = vunpack.c.l.b16 %v5416
  %v5476 = vunpack.c.l.b16 %v5417
  %v5477 = vunpack.c.l.b16 %v5418
  %v5478 = vunpack.c.l.b16 %v5419
  %v5479 = vpack.c.b16 %v5476, %v5475
  %v5480 = vpack.c.b16 %v5478, %v5477
  %v5484 = vsel %vm2355, %v5469, 0
  %v5487 = vsel %vm2355, %v5470, 0
  %5489 = vmatprep.subr.bf16.mxu0 0
  %5490 = vmatpush1.bf16.msra.mxu0 %v5479
  %5491 = vmatprep.subr.bf16.mxu0 0
  %5492 = vmatpush1.bf16.msra.mxu0 %v5480
  %5493 = vmatprep.subr.bf16.mxu0 0
  %5494 = vmatpush1.bf16.msra.mxu0 0
  %5495 = vmatprep.subr.bf16.mxu0 0
  %5496 = vmatpush1.bf16.msra.mxu0 0
  %5497 = vmatprep.subr.bf16.mxu0 0
  %5498 = vmatpush1.bf16.msra.mxu0 0
  %5499 = vmatprep.subr.bf16.mxu0 0
  %5500 = vmatpush1.bf16.msra.mxu0 0
  %5501 = vmatprep.subr.bf16.mxu0 0
  %5502 = vmatpush1.bf16.msra.mxu0 0
  %5503 = vmatprep.subr.bf16.mxu0 0
  %5504 = vmatpush1.bf16.msra.mxu0 0
  %5505 = vmatprep.subr.bf16.mxu0 0
  %5506 = vmatpush1.bf16.msra.mxu0 0
  %5507 = vmatprep.subr.bf16.mxu0 0
  %5508 = vmatpush1.bf16.msra.mxu0 0
  %5509 = vmatprep.subr.bf16.mxu0 0
  %5510 = vmatpush1.bf16.msra.mxu0 0
  %5511 = vmatprep.subr.bf16.mxu0 0
  %5512 = vmatpush1.bf16.msra.mxu0 0
  %5513 = vmatprep.subr.bf16.mxu0 0
  %5514 = vmatpush1.bf16.msra.mxu0 0
  %5515 = vmatprep.subr.bf16.mxu0 0
  %5516 = vmatpush1.bf16.msra.mxu0 0
  %5517 = vmatprep.subr.bf16.mxu0 0
  %5518 = vmatpush1.bf16.msra.mxu0 0
  %5519 = vmatprep.subr.bf16.mxu0 0
  %5520 = vmatpush1.bf16.msra.mxu0 0
  %5521 = vmatprep.mubr.bf16.mxu0 0
  %5522 = vmatmul.mubr.bf16.gmra.mrb[0].mxu0 %v5484
  %v5523 = vpop.f32.mrb[0].mxu0
  %v5524 = vadd.f32 0.0, %v5523
  %v5525 = vpop.f32.mrb[0].mxu0
  %v5526 = vpop.f32.mrb[0].mxu0
  %v5527 = vadd.f32 0.0, %v5526
  %v5528 = vpop.f32.mrb[0].mxu0
  %5529 = vmatprep.mubr.bf16.mxu0 0
  %5530 = vmatmul.mubr.bf16.gmra.mrb[0].mxu0 %v5487
  %v5531 = vpop.f32.mrb[0].mxu0
  %v5532 = vadd.f32 0.0, %v5531
  %v5533 = vpop.f32.mrb[0].mxu0
  %v5534 = vpop.f32.mrb[0].mxu0
  %v5535 = vadd.f32 0.0, %v5534
  %v5536 = vpop.f32.mrb[0].mxu0
  %5537 = vdwg.mxu0
  %v5538 = vadd.f32 %v5412, %v5524
  %v5539 = vadd.f32 %v5413, %v5527
  %v5540 = vadd.f32 %v5414, %v5532
  %v5541 = vadd.f32 %v5415, %v5535
  %v5542 = vld [vmem:[%s11 + $0x70] sm:$0xf]
  %v5543 = vld [vmem:[%s11 + $0x74] sm:$0xf]
  %v5544 = vld [vmem:[%s11 + $0x78] sm:$0xf]
  %v5545 = vld [vmem:[%s11 + $0x7c] sm:$0xf]
  %5546 = vmatprep.subr.bf16.mxu0 0
  %5547 = vmatpush1.bf16.msra.mxu0 %v4666
  %5548 = vmatprep.subr.bf16.mxu0 0
  %5549 = vmatpush1.bf16.msra.mxu0 %v4667
  %5550 = vmatprep.subr.bf16.mxu0 0
  %5551 = vmatpush1.bf16.msra.mxu0 0
  %5552 = vmatprep.subr.bf16.mxu0 0
  %5553 = vmatpush1.bf16.msra.mxu0 0
  %5554 = vmatprep.subr.bf16.mxu0 0
  %5555 = vmatpush1.bf16.msra.mxu0 0
  %5556 = vmatprep.subr.bf16.mxu0 0
  %5557 = vmatpush1.bf16.msra.mxu0 0
  %5558 = vmatprep.subr.bf16.mxu0 0
  %5559 = vmatpush1.bf16.msra.mxu0 0
  %5560 = vmatprep.subr.bf16.mxu0 0
  %5561 = vmatpush1.bf16.msra.mxu0 0
  %5562 = vmatprep.subr.bf16.mxu0 0
  %5563 = vmatpush1.bf16.msra.mxu0 0
  %5564 = vmatprep.subr.bf16.mxu0 0
  %5565 = vmatpush1.bf16.msra.mxu0 0
  %5566 = vmatprep.subr.bf16.mxu0 0
  %5567 = vmatpush1.bf16.msra.mxu0 0
  %5568 = vmatprep.subr.bf16.mxu0 0
  %5569 = vmatpush1.bf16.msra.mxu0 0
  %5570 = vmatprep.subr.bf16.mxu0 0
  %5571 = vmatpush1.bf16.msra.mxu0 0
  %5572 = vmatprep.subr.bf16.mxu0 0
  %5573 = vmatpush1.bf16.msra.mxu0 0
  %5574 = vmatprep.subr.bf16.mxu0 0
  %5575 = vmatpush1.bf16.msra.mxu0 0
  %5576 = vmatprep.subr.bf16.mxu0 0
  %5577 = vmatpush1.bf16.msra.mxu0 0
  %5578 = vmatprep.mubr.bf16.mxu0 0
  %5579 = vmatmul.mubr.bf16.gmra.mrb[0].mxu0 %v3289
  %v5580 = vpop.f32.mrb[0].mxu0
  %v5581 = vadd.f32 0.0, %v5580
  %v5582 = vpop.f32.mrb[0].mxu0
  %v5583 = vpop.f32.mrb[0].mxu0
  %v5584 = vadd.f32 0.0, %v5583
  %v5585 = vpop.f32.mrb[0].mxu0
  %5586 = vmatprep.mubr.bf16.mxu0 0
  %5587 = vmatmul.mubr.bf16.gmra.mrb[0].mxu0 %v3292
  %v5588 = vpop.f32.mrb[0].mxu0
  %v5589 = vadd.f32 0.0, %v5588
  %v5590 = vpop.f32.mrb[0].mxu0
  %v5591 = vpop.f32.mrb[0].mxu0
  %v5592 = vadd.f32 0.0, %v5591
  %v5593 = vpop.f32.mrb[0].mxu0
  %5594 = vdwg.mxu0
  %v5595 = vpack.c.bf16 %v5584, %v5581
  %v5596 = vpack.c.bf16 %v5592, %v5589
  %v5601 = vunpack.c.l.b16 %v5542
  %v5602 = vunpack.c.l.b16 %v5543
  %v5603 = vunpack.c.l.b16 %v5544
  %v5604 = vunpack.c.l.b16 %v5545
  %v5605 = vpack.c.b16 %v5602, %v5601
  %v5606 = vpack.c.b16 %v5604, %v5603
  %v5610 = vsel %vm2355, %v5595, 0
  %v5613 = vsel %vm2355, %v5596, 0
  %5615 = vmatprep.subr.bf16.mxu0 0
  %5616 = vmatpush1.bf16.msra.mxu0 %v5605
  %5617 = vmatprep.subr.bf16.mxu0 0
  %5618 = vmatpush1.bf16.msra.mxu0 %v5606
  %5619 = vmatprep.subr.bf16.mxu0 0
  %5620 = vmatpush1.bf16.msra.mxu0 0
  %5621 = vmatprep.subr.bf16.mxu0 0
  %5622 = vmatpush1.bf16.msra.mxu0 0
  %5623 = vmatprep.subr.bf16.mxu0 0
  %5624 = vmatpush1.bf16.msra.mxu0 0
  %5625 = vmatprep.subr.bf16.mxu0 0
  %5626 = vmatpush1.bf16.msra.mxu0 0
  %5627 = vmatprep.subr.bf16.mxu0 0
  %5628 = vmatpush1.bf16.msra.mxu0 0
  %5629 = vmatprep.subr.bf16.mxu0 0
  %5630 = vmatpush1.bf16.msra.mxu0 0
  %5631 = vmatprep.subr.bf16.mxu0 0
  %5632 = vmatpush1.bf16.msra.mxu0 0
  %5633 = vmatprep.subr.bf16.mxu0 0
  %5634 = vmatpush1.bf16.msra.mxu0 0
  %5635 = vmatprep.subr.bf16.mxu0 0
  %5636 = vmatpush1.bf16.msra.mxu0 0
  %5637 = vmatprep.subr.bf16.mxu0 0
  %5638 = vmatpush1.bf16.msra.mxu0 0
  %5639 = vmatprep.subr.bf16.mxu0 0
  %5640 = vmatpush1.bf16.msra.mxu0 0
  %5641 = vmatprep.subr.bf16.mxu0 0
  %5642 = vmatpush1.bf16.msra.mxu0 0
  %5643 = vmatprep.subr.bf16.mxu0 0
  %5644 = vmatpush1.bf16.msra.mxu0 0
  %5645 = vmatprep.subr.bf16.mxu0 0
  %5646 = vmatpush1.bf16.msra.mxu0 0
  %5647 = vmatprep.mubr.bf16.mxu0 0
  %5648 = vmatmul.mubr.bf16.gmra.mrb[0].mxu0 %v5610
  %v5649 = vpop.f32.mrb[0].mxu0
  %v5650 = vadd.f32 0.0, %v5649
  %v5651 = vpop.f32.mrb[0].mxu0
  %v5652 = vpop.f32.mrb[0].mxu0
  %v5653 = vadd.f32 0.0, %v5652
  %v5654 = vpop.f32.mrb[0].mxu0
  %5655 = vmatprep.mubr.bf16.mxu0 0
  %5656 = vmatmul.mubr.bf16.gmra.mrb[0].mxu0 %v5613
  %v5657 = vpop.f32.mrb[0].mxu0
  %v5658 = vadd.f32 0.0, %v5657
  %v5659 = vpop.f32.mrb[0].mxu0
  %v5660 = vpop.f32.mrb[0].mxu0
  %v5661 = vadd.f32 0.0, %v5660
  %v5662 = vpop.f32.mrb[0].mxu0
  %5663 = vdwg.mxu0
  %v5664 = vadd.f32 %v5538, %v5650
  %v5665 = vadd.f32 %v5539, %v5653
  %v5666 = vadd.f32 %v5540, %v5658
  %v5667 = vadd.f32 %v5541, %v5661
  %v5668 = vld [vmem:[%s11 + $0x80] sm:$0xf]
  %v5669 = vld [vmem:[%s11 + $0x84] sm:$0xf]
  %v5670 = vld [vmem:[%s11 + $0x88] sm:$0xf]
  %v5671 = vld [vmem:[%s11 + $0x8c] sm:$0xf]
  %5672 = vmatprep.subr.bf16.mxu0 0
  %5673 = vmatpush1.bf16.msra.mxu0 %v4666
  %5674 = vmatprep.subr.bf16.mxu0 0
  %5675 = vmatpush1.bf16.msra.mxu0 %v4667
  %5676 = vmatprep.subr.bf16.mxu0 0
  %5677 = vmatpush1.bf16.msra.mxu0 0
  %5678 = vmatprep.subr.bf16.mxu0 0
  %5679 = vmatpush1.bf16.msra.mxu0 0
  %5680 = vmatprep.subr.bf16.mxu0 0
  %5681 = vmatpush1.bf16.msra.mxu0 0
  %5682 = vmatprep.subr.bf16.mxu0 0
  %5683 = vmatpush1.bf16.msra.mxu0 0
  %5684 = vmatprep.subr.bf16.mxu0 0
  %5685 = vmatpush1.bf16.msra.mxu0 0
  %5686 = vmatprep.subr.bf16.mxu0 0
  %5687 = vmatpush1.bf16.msra.mxu0 0
  %5688 = vmatprep.subr.bf16.mxu0 0
  %5689 = vmatpush1.bf16.msra.mxu0 0
  %5690 = vmatprep.subr.bf16.mxu0 0
  %5691 = vmatpush1.bf16.msra.mxu0 0
  %5692 = vmatprep.subr.bf16.mxu0 0
  %5693 = vmatpush1.bf16.msra.mxu0 0
  %5694 = vmatprep.subr.bf16.mxu0 0
  %5695 = vmatpush1.bf16.msra.mxu0 0
  %5696 = vmatprep.subr.bf16.mxu0 0
  %5697 = vmatpush1.bf16.msra.mxu0 0
  %5698 = vmatprep.subr.bf16.mxu0 0
  %5699 = vmatpush1.bf16.msra.mxu0 0
  %5700 = vmatprep.subr.bf16.mxu0 0
  %5701 = vmatpush1.bf16.msra.mxu0 0
  %5702 = vmatprep.subr.bf16.mxu0 0
  %5703 = vmatpush1.bf16.msra.mxu0 0
  %5704 = vmatprep.mubr.bf16.mxu0 0
  %5705 = vmatmul.mubr.bf16.gmra.mrb[0].mxu0 %v3423
  %v5706 = vpop.f32.mrb[0].mxu0
  %v5707 = vadd.f32 0.0, %v5706
  %v5708 = vpop.f32.mrb[0].mxu0
  %v5709 = vpop.f32.mrb[0].mxu0
  %v5710 = vadd.f32 0.0, %v5709
  %v5711 = vpop.f32.mrb[0].mxu0
  %5712 = vmatprep.mubr.bf16.mxu0 0
  %5713 = vmatmul.mubr.bf16.gmra.mrb[0].mxu0 %v3426
  %v5714 = vpop.f32.mrb[0].mxu0
  %v5715 = vadd.f32 0.0, %v5714
  %v5716 = vpop.f32.mrb[0].mxu0
  %v5717 = vpop.f32.mrb[0].mxu0
  %v5718 = vadd.f32 0.0, %v5717
  %v5719 = vpop.f32.mrb[0].mxu0
  %5720 = vdwg.mxu0
  %v5721 = vpack.c.bf16 %v5710, %v5707
  %v5722 = vpack.c.bf16 %v5718, %v5715
  %v5727 = vunpack.c.l.b16 %v5668
  %v5728 = vunpack.c.l.b16 %v5669
  %v5729 = vunpack.c.l.b16 %v5670
  %v5730 = vunpack.c.l.b16 %v5671
  %v5731 = vpack.c.b16 %v5728, %v5727
  %v5732 = vpack.c.b16 %v5730, %v5729
  %v5736 = vsel %vm2355, %v5721, 0
  %v5739 = vsel %vm2355, %v5722, 0
  %5741 = vmatprep.subr.bf16.mxu0 0
  %5742 = vmatpush1.bf16.msra.mxu0 %v5731
  %5743 = vmatprep.subr.bf16.mxu0 0
  %5744 = vmatpush1.bf16.msra.mxu0 %v5732
  %5745 = vmatprep.subr.bf16.mxu0 0
  %5746 = vmatpush1.bf16.msra.mxu0 0
  %5747 = vmatprep.subr.bf16.mxu0 0
  %5748 = vmatpush1.bf16.msra.mxu0 0
  %5749 = vmatprep.subr.bf16.mxu0 0
  %5750 = vmatpush1.bf16.msra.mxu0 0
  %5751 = vmatprep.subr.bf16.mxu0 0
  %5752 = vmatpush1.bf16.msra.mxu0 0
  %5753 = vmatprep.subr.bf16.mxu0 0
  %5754 = vmatpush1.bf16.msra.mxu0 0
  %5755 = vmatprep.subr.bf16.mxu0 0
  %5756 = vmatpush1.bf16.msra.mxu0 0
  %5757 = vmatprep.subr.bf16.mxu0 0
  %5758 = vmatpush1.bf16.msra.mxu0 0
  %5759 = vmatprep.subr.bf16.mxu0 0
  %5760 = vmatpush1.bf16.msra.mxu0 0
  %5761 = vmatprep.subr.bf16.mxu0 0
  %5762 = vmatpush1.bf16.msra.mxu0 0
  %5763 = vmatprep.subr.bf16.mxu0 0
  %5764 = vmatpush1.bf16.msra.mxu0 0
  %5765 = vmatprep.subr.bf16.mxu0 0
  %5766 = vmatpush1.bf16.msra.mxu0 0
  %5767 = vmatprep.subr.bf16.mxu0 0
  %5768 = vmatpush1.bf16.msra.mxu0 0
  %5769 = vmatprep.subr.bf16.mxu0 0
  %5770 = vmatpush1.bf16.msra.mxu0 0
  %5771 = vmatprep.subr.bf16.mxu0 0
  %5772 = vmatpush1.bf16.msra.mxu0 0
  %5773 = vmatprep.mubr.bf16.mxu0 0
  %5774 = vmatmul.mubr.bf16.gmra.mrb[0].mxu0 %v5736
  %v5775 = vpop.f32.mrb[0].mxu0
  %v5776 = vadd.f32 0.0, %v5775
  %v5777 = vpop.f32.mrb[0].mxu0
  %v5778 = vpop.f32.mrb[0].mxu0
  %v5779 = vadd.f32 0.0, %v5778
  %v5780 = vpop.f32.mrb[0].mxu0
  %5781 = vmatprep.mubr.bf16.mxu0 0
  %5782 = vmatmul.mubr.bf16.gmra.mrb[0].mxu0 %v5739
  %v5783 = vpop.f32.mrb[0].mxu0
  %v5784 = vadd.f32 0.0, %v5783
  %v5785 = vpop.f32.mrb[0].mxu0
  %v5786 = vpop.f32.mrb[0].mxu0
  %v5787 = vadd.f32 0.0, %v5786
  %v5788 = vpop.f32.mrb[0].mxu0
  %5789 = vdwg.mxu0
  %v5790 = vadd.f32 %v5664, %v5776
  %v5791 = vadd.f32 %v5665, %v5779
  %v5792 = vadd.f32 %v5666, %v5784
  %v5793 = vadd.f32 %v5667, %v5787
  %v5794 = vld [vmem:[%s12] sm:$0x1]
  %v5796 = vlaneseq
  %v5797 = vshrl.u32 %v5796, 7
  %v5798 = vsub.s32 0, %v5797
  %v5799 = vrot.slane %v5794, %v5798
  %v5801 = vmul.f32 %v5790, %v5799
  %v5802 = vmul.f32 %v5791, %v5799
  %v5803 = vmul.f32 %v5792, %v5799
  %v5804 = vmul.f32 %v5793, %v5799
  %v5805 = vld [vmem:[%s13] sm:$0x1]
  %v5807 = vlaneseq
  %v5808 = vshrl.u32 %v5807, 7
  %v5809 = vsub.s32 0, %v5808
  %v5810 = vrot.slane %v5805, %v5809
  %v5812 = vadd.f32 %v5801, %v5810
  %v5813 = vadd.f32 %v5802, %v5810
  %v5814 = vadd.f32 %v5803, %v5810
  %v5815 = vadd.f32 %v5804, %v5810
  %vm5816 = vcmp.gt.f32.partialorder %v5812, 0.0
  %vm5817 = vcmp.gt.f32.partialorder %v5813, 0.0
  %vm5818 = vcmp.gt.f32.partialorder %v5814, 0.0
  %vm5819 = vcmp.gt.f32.partialorder %v5815, 0.0
  %v5820 = vmul.f32 %v5812, 0.2
  %v5821 = vmul.f32 %v5813, 0.2
  %v5822 = vmul.f32 %v5814, 0.2
  %v5823 = vmul.f32 %v5815, 0.2
  %v5824 = vsel %vm5816, %v5812, %v5820
  %v5825 = vsel %vm5817, %v5813, %v5821
  %v5826 = vsel %vm5818, %v5814, %v5822
  %v5827 = vsel %vm5819, %v5815, %v5823
  %v5828 = vld [vmem:[%s1] sm:$0x1]
  %v5829 = vld [vmem:[%s14] sm:$0xff]
  %v5830 = vld [vmem:[%s14 + $0x8] sm:$0xff]
  %v5831 = vld [vmem:[%s14 + $0x10] sm:$0xff]
  %v5832 = vld [vmem:[%s14 + $0x18] sm:$0xff]
  %v5833 = vld [vmem:[%s14 + $0x20] sm:$0xff]
  %v5834 = vld [vmem:[%s14 + $0x28] sm:$0xff]
  %v5835 = vld [vmem:[%s14 + $0x30] sm:$0xff]
  %v5836 = vld [vmem:[%s14 + $0x38] sm:$0xff]
  %v5837 = vld [vmem:[%s15] sm:$0xff]
  %v5839 = vlaneseq
  %v5840 = vshrl.u32 %v5839, 7
  %v5841 = vsub.s32 0, %v5840
  %v5842 = vrot.slane %v5837, %v5841
  %v5843 = vlaneseq
  %v5844 = vshrl.u32 %v5843, 7
  %v5845 = vsub.s32 1, %v5844
  %v5846 = vrot.slane %v5837, %v5845
  %v5847 = vlaneseq
  %v5848 = vshrl.u32 %v5847, 7
  %v5849 = vsub.s32 2, %v5848
  %v5850 = vrot.slane %v5837, %v5849
  %v5851 = vlaneseq
  %v5852 = vshrl.u32 %v5851, 7
  %v5853 = vsub.s32 3, %v5852
  %v5854 = vrot.slane %v5837, %v5853
  %v5855 = vlaneseq
  %v5856 = vshrl.u32 %v5855, 7
  %v5857 = vsub.s32 4, %v5856
  %v5858 = vrot.slane %v5837, %v5857
  %v5859 = vlaneseq
  %v5860 = vshrl.u32 %v5859, 7
  %v5861 = vsub.s32 5, %v5860
  %v5862 = vrot.slane %v5837, %v5861
  %v5863 = vlaneseq
  %v5864 = vshrl.u32 %v5863, 7
  %v5865 = vsub.s32 6, %v5864
  %v5866 = vrot.slane %v5837, %v5865
  %v5867 = vlaneseq
  %v5868 = vshrl.u32 %v5867, 7
  %v5869 = vsub.s32 7, %v5868
  %v5870 = vrot.slane %v5837, %v5869
  %v5887 = vunpack.c.l.b16 %v5829
  %v5888 = vunpack.c.h.b16 %v5829
  %v5889 = vunpack.c.l.b16 %v5830
  %v5890 = vunpack.c.h.b16 %v5830
  %v5891 = vunpack.c.l.b16 %v5831
  %v5892 = vunpack.c.h.b16 %v5831
  %v5893 = vunpack.c.l.b16 %v5832
  %v5894 = vunpack.c.h.b16 %v5832
  %v5895 = vunpack.c.l.b16 %v5833
  %v5896 = vunpack.c.h.b16 %v5833
  %v5897 = vunpack.c.l.b16 %v5834
  %v5898 = vunpack.c.h.b16 %v5834
  %v5899 = vunpack.c.l.b16 %v5835
  %v5900 = vunpack.c.h.b16 %v5835
  %v5901 = vunpack.c.l.b16 %v5836
  %v5902 = vunpack.c.h.b16 %v5836
  %v5903 = vpack.c.b16 %v5895, %v5887
  %v5904 = vpack.c.b16 %v5896, %v5888
  %v5905 = vpack.c.b16 %v5897, %v5889
  %v5906 = vpack.c.b16 %v5898, %v5890
  %v5907 = vpack.c.b16 %v5899, %v5891
  %v5908 = vpack.c.b16 %v5900, %v5892
  %v5909 = vpack.c.b16 %v5901, %v5893
  %v5910 = vpack.c.b16 %v5902, %v5894
  %v5920 = vsel %vm3689, %v5828, 0
  %5922 = vmatprep.subr.bf16.mxu0 %v5904
  %5923 = vmatpush1.bf16.msra.mxu0 %v5903
  %5924 = vmatprep.subr.bf16.mxu0 0
  %5925 = vmatpush1.bf16.msra.mxu0 0
  %5926 = vmatprep.subr.bf16.mxu0 0
  %5927 = vmatpush1.bf16.msra.mxu0 0
  %5928 = vmatprep.subr.bf16.mxu0 0
  %5929 = vmatpush1.bf16.msra.mxu0 0
  %5930 = vmatprep.subr.bf16.mxu0 0
  %5931 = vmatpush1.bf16.msra.mxu0 0
  %5932 = vmatprep.subr.bf16.mxu0 0
  %5933 = vmatpush1.bf16.msra.mxu0 0
  %5934 = vmatprep.subr.bf16.mxu0 0
  %5935 = vmatpush1.bf16.msra.mxu0 0
  %5936 = vmatprep.subr.bf16.mxu0 0
  %5937 = vmatpush1.bf16.msra.mxu0 0
  %5938 = vmatprep.subr.bf16.mxu0 0
  %5939 = vmatpush1.bf16.msra.mxu0 0
  %5940 = vmatprep.subr.bf16.mxu0 0
  %5941 = vmatpush1.bf16.msra.mxu0 0
  %5942 = vmatprep.subr.bf16.mxu0 0
  %5943 = vmatpush1.bf16.msra.mxu0 0
  %5944 = vmatprep.subr.bf16.mxu0 0
  %5945 = vmatpush1.bf16.msra.mxu0 0
  %5946 = vmatprep.subr.bf16.mxu0 0
  %5947 = vmatpush1.bf16.msra.mxu0 0
  %5948 = vmatprep.subr.bf16.mxu0 0
  %5949 = vmatpush1.bf16.msra.mxu0 0
  %5950 = vmatprep.subr.bf16.mxu0 0
  %5951 = vmatpush1.bf16.msra.mxu0 0
  %5952 = vmatprep.subr.bf16.mxu0 0
  %5953 = vmatpush1.bf16.msra.mxu0 0
  %5954 = vmatprep.mubr.bf16.mxu0 0
  %5955 = vmatmul.mubr.bf16.gmra.mrb[0].mxu0 %v5920
  %v5956 = vpop.f32.mrb[0].mxu0
  %v5957 = vadd.f32 %v5842, %v5956
  %v5958 = vpop.f32.mrb[0].mxu0
  %v5959 = vadd.f32 %v5846, %v5958
  %v5960 = vpop.f32.mrb[0].mxu0
  %v5961 = vpop.f32.mrb[0].mxu0
  %5962 = vdwg.mxu0
  %5963 = vmatprep.subr.bf16.mxu0 %v5906
  %5964 = vmatpush1.bf16.msra.mxu0 %v5905
  %5965 = vmatprep.subr.bf16.mxu0 0
  %5966 = vmatpush1.bf16.msra.mxu0 0
  %5967 = vmatprep.subr.bf16.mxu0 0
  %5968 = vmatpush1.bf16.msra.mxu0 0
  %5969 = vmatprep.subr.bf16.mxu0 0
  %5970 = vmatpush1.bf16.msra.mxu0 0
  %5971 = vmatprep.subr.bf16.mxu0 0
  %5972 = vmatpush1.bf16.msra.mxu0 0
  %5973 = vmatprep.subr.bf16.mxu0 0
  %5974 = vmatpush1.bf16.msra.mxu0 0
  %5975 = vmatprep.subr.bf16.mxu0 0
  %5976 = vmatpush1.bf16.msra.mxu0 0
  %5977 = vmatprep.subr.bf16.mxu0 0
  %5978 = vmatpush1.bf16.msra.mxu0 0
  %5979 = vmatprep.subr.bf16.mxu0 0
  %5980 = vmatpush1.bf16.msra.mxu0 0
  %5981 = vmatprep.subr.bf16.mxu0 0
  %5982 = vmatpush1.bf16.msra.mxu0 0
  %5983 = vmatprep.subr.bf16.mxu0 0
  %5984 = vmatpush1.bf16.msra.mxu0 0
  %5985 = vmatprep.subr.bf16.mxu0 0
  %5986 = vmatpush1.bf16.msra.mxu0 0
  %5987 = vmatprep.subr.bf16.mxu0 0
  %5988 = vmatpush1.bf16.msra.mxu0 0
  %5989 = vmatprep.subr.bf16.mxu0 0
  %5990 = vmatpush1.bf16.msra.mxu0 0
  %5991 = vmatprep.subr.bf16.mxu0 0
  %5992 = vmatpush1.bf16.msra.mxu0 0
  %5993 = vmatprep.subr.bf16.mxu0 0
  %5994 = vmatpush1.bf16.msra.mxu0 0
  %5995 = vmatprep.mubr.bf16.mxu0 0
  %5996 = vmatmul.mubr.bf16.gmra.mrb[0].mxu0 %v5920
  %v5997 = vpop.f32.mrb[0].mxu0
  %v5998 = vadd.f32 %v5850, %v5997
  %v5999 = vpop.f32.mrb[0].mxu0
  %v6000 = vadd.f32 %v5854, %v5999
  %v6001 = vpop.f32.mrb[0].mxu0
  %v6002 = vpop.f32.mrb[0].mxu0
  %6003 = vdwg.mxu0
  %6004 = vmatprep.subr.bf16.mxu0 %v5908
  %6005 = vmatpush1.bf16.msra.mxu0 %v5907
  %6006 = vmatprep.subr.bf16.mxu0 0
  %6007 = vmatpush1.bf16.msra.mxu0 0
  %6008 = vmatprep.subr.bf16.mxu0 0
  %6009 = vmatpush1.bf16.msra.mxu0 0
  %6010 = vmatprep.subr.bf16.mxu0 0
  %6011 = vmatpush1.bf16.msra.mxu0 0
  %6012 = vmatprep.subr.bf16.mxu0 0
  %6013 = vmatpush1.bf16.msra.mxu0 0
  %6014 = vmatprep.subr.bf16.mxu0 0
  %6015 = vmatpush1.bf16.msra.mxu0 0
  %6016 = vmatprep.subr.bf16.mxu0 0
  %6017 = vmatpush1.bf16.msra.mxu0 0
  %6018 = vmatprep.subr.bf16.mxu0 0
  %6019 = vmatpush1.bf16.msra.mxu0 0
  %6020 = vmatprep.subr.bf16.mxu0 0
  %6021 = vmatpush1.bf16.msra.mxu0 0
  %6022 = vmatprep.subr.bf16.mxu0 0
  %6023 = vmatpush1.bf16.msra.mxu0 0
  %6024 = vmatprep.subr.bf16.mxu0 0
  %6025 = vmatpush1.bf16.msra.mxu0 0
  %6026 = vmatprep.subr.bf16.mxu0 0
  %6027 = vmatpush1.bf16.msra.mxu0 0
  %6028 = vmatprep.subr.bf16.mxu0 0
  %6029 = vmatpush1.bf16.msra.mxu0 0
  %6030 = vmatprep.subr.bf16.mxu0 0
  %6031 = vmatpush1.bf16.msra.mxu0 0
  %6032 = vmatprep.subr.bf16.mxu0 0
  %6033 = vmatpush1.bf16.msra.mxu0 0
  %6034 = vmatprep.subr.bf16.mxu0 0
  %6035 = vmatpush1.bf16.msra.mxu0 0
  %6036 = vmatprep.mubr.bf16.mxu0 0
  %6037 = vmatmul.mubr.bf16.gmra.mrb[0].mxu0 %v5920
  %v6038 = vpop.f32.mrb[0].mxu0
  %v6039 = vadd.f32 %v5858, %v6038
  %v6040 = vpop.f32.mrb[0].mxu0
  %v6041 = vadd.f32 %v5862, %v6040
  %v6042 = vpop.f32.mrb[0].mxu0
  %v6043 = vpop.f32.mrb[0].mxu0
  %6044 = vdwg.mxu0
  %6045 = vmatprep.subr.bf16.mxu0 %v5910
  %6046 = vmatpush1.bf16.msra.mxu0 %v5909
  %6047 = vmatprep.subr.bf16.mxu0 0
  %6048 = vmatpush1.bf16.msra.mxu0 0
  %6049 = vmatprep.subr.bf16.mxu0 0
  %6050 = vmatpush1.bf16.msra.mxu0 0
  %6051 = vmatprep.subr.bf16.mxu0 0
  %6052 = vmatpush1.bf16.msra.mxu0 0
  %6053 = vmatprep.subr.bf16.mxu0 0
  %6054 = vmatpush1.bf16.msra.mxu0 0
  %6055 = vmatprep.subr.bf16.mxu0 0
  %6056 = vmatpush1.bf16.msra.mxu0 0
  %6057 = vmatprep.subr.bf16.mxu0 0
  %6058 = vmatpush1.bf16.msra.mxu0 0
  %6059 = vmatprep.subr.bf16.mxu0 0
  %6060 = vmatpush1.bf16.msra.mxu0 0
  %6061 = vmatprep.subr.bf16.mxu0 0
  %6062 = vmatpush1.bf16.msra.mxu0 0
  %6063 = vmatprep.subr.bf16.mxu0 0
  %6064 = vmatpush1.bf16.msra.mxu0 0
  %6065 = vmatprep.subr.bf16.mxu0 0
  %6066 = vmatpush1.bf16.msra.mxu0 0
  %6067 = vmatprep.subr.bf16.mxu0 0
  %6068 = vmatpush1.bf16.msra.mxu0 0
  %6069 = vmatprep.subr.bf16.mxu0 0
  %6070 = vmatpush1.bf16.msra.mxu0 0
  %6071 = vmatprep.subr.bf16.mxu0 0
  %6072 = vmatpush1.bf16.msra.mxu0 0
  %6073 = vmatprep.subr.bf16.mxu0 0
  %6074 = vmatpush1.bf16.msra.mxu0 0
  %6075 = vmatprep.subr.bf16.mxu0 0
  %6076 = vmatpush1.bf16.msra.mxu0 0
  %6077 = vmatprep.mubr.bf16.mxu0 0
  %6078 = vmatmul.mubr.bf16.gmra.mrb[0].mxu0 %v5920
  %v6079 = vpop.f32.mrb[0].mxu0
  %v6080 = vadd.f32 %v5866, %v6079
  %v6081 = vpop.f32.mrb[0].mxu0
  %v6082 = vadd.f32 %v5870, %v6081
  %v6083 = vpop.f32.mrb[0].mxu0
  %v6084 = vpop.f32.mrb[0].mxu0
  %6085 = vdwg.mxu0
  %v6086 = vmax.f32 %v5957, 0.0
  %v6087 = vmax.f32 %v5959, 0.0
  %v6088 = vmax.f32 %v5998, 0.0
  %v6089 = vmax.f32 %v6000, 0.0
  %v6090 = vmax.f32 %v6039, 0.0
  %v6091 = vmax.f32 %v6041, 0.0
  %v6092 = vmax.f32 %v6080, 0.0
  %v6093 = vmax.f32 %v6082, 0.0
  %v6094 = vld [vmem:[%s16] sm:$0xff]
  %v6095 = vld [vmem:[%s16 + $0x8] sm:$0xff]
  %v6096 = vld [vmem:[%s16 + $0x10] sm:$0xff]
  %v6097 = vld [vmem:[%s16 + $0x18] sm:$0xff]
  %v6098 = vmul.f32 %v5824, %v6094
  %v6099 = vmul.f32 %v5825, %v6095
  %v6100 = vmul.f32 %v5826, %v6096
  %v6101 = vmul.f32 %v5827, %v6097
  %v6102 = vld [vmem:[%s18] sm:$0x3]
  %v6104 = vsel %vm2355, %v6102, 0
  %6106 = vmatprep.subr.mxu0 0.0
  %6107 = vmatpush1.msra.mxu0 %v6098
  %6108 = vmatprep.subr.mxu0 0.0
  %6109 = vmatpush1.msra.mxu0 %v6099
  %6110 = vmatprep.subr.mxu0 0.0
  %6111 = vmatpush1.msra.mxu0 %v6100
  %6112 = vmatprep.subr.mxu0 0.0
  %6113 = vmatpush1.msra.mxu0 %v6101
  %6114 = vmatprep.subr.mxu0 0.0
  %6115 = vmatpush1.msra.mxu0 0.0
  %6116 = vmatprep.subr.mxu0 0.0
  %6117 = vmatpush1.msra.mxu0 0.0
  %6118 = vmatprep.subr.mxu0 0.0
  %6119 = vmatpush1.msra.mxu0 0.0
  %6120 = vmatprep.subr.mxu0 0.0
  %6121 = vmatpush1.msra.mxu0 0.0
  %6122 = vmatprep.subr.mxu0 0.0
  %6123 = vmatpush1.msra.mxu0 0.0
  %6124 = vmatprep.subr.mxu0 0.0
  %6125 = vmatpush1.msra.mxu0 0.0
  %6126 = vmatprep.subr.mxu0 0.0
  %6127 = vmatpush1.msra.mxu0 0.0
  %6128 = vmatprep.subr.mxu0 0.0
  %6129 = vmatpush1.msra.mxu0 0.0
  %6130 = vmatprep.subr.mxu0 0.0
  %6131 = vmatpush1.msra.mxu0 0.0
  %6132 = vmatprep.subr.mxu0 0.0
  %6133 = vmatpush1.msra.mxu0 0.0
  %6134 = vmatprep.subr.mxu0 0.0
  %6135 = vmatpush1.msra.mxu0 0.0
  %6136 = vmatprep.subr.mxu0 0.0
  %6137 = vmatpush1.msra.mxu0 0.0
  %6138 = vmatprep.subr.mxu0 0.0
  %6139 = vmatpush1.msra.mxu0 0.0
  %6140 = vmatprep.subr.mxu0 0.0
  %6141 = vmatpush1.msra.mxu0 0.0
  %6142 = vmatprep.subr.mxu0 0.0
  %6143 = vmatpush1.msra.mxu0 0.0
  %6144 = vmatprep.subr.mxu0 0.0
  %6145 = vmatpush1.msra.mxu0 0.0
  %6146 = vmatprep.subr.mxu0 0.0
  %6147 = vmatpush1.msra.mxu0 0.0
  %6148 = vmatprep.subr.mxu0 0.0
  %6149 = vmatpush1.msra.mxu0 0.0
  %6150 = vmatprep.subr.mxu0 0.0
  %6151 = vmatpush1.msra.mxu0 0.0
  %6152 = vmatprep.subr.mxu0 0.0
  %6153 = vmatpush1.msra.mxu0 0.0
  %6154 = vmatprep.subr.mxu0 0.0
  %6155 = vmatpush1.msra.mxu0 0.0
  %6156 = vmatprep.subr.mxu0 0.0
  %6157 = vmatpush1.msra.mxu0 0.0
  %6158 = vmatprep.subr.mxu0 0.0
  %6159 = vmatpush1.msra.mxu0 0.0
  %6160 = vmatprep.subr.mxu0 0.0
  %6161 = vmatpush1.msra.mxu0 0.0
  %6162 = vmatprep.subr.mxu0 0.0
  %6163 = vmatpush1.msra.mxu0 0.0
  %6164 = vmatprep.subr.mxu0 0.0
  %6165 = vmatpush1.msra.mxu0 0.0
  %6166 = vmatprep.subr.mxu0 0.0
  %6167 = vmatpush1.msra.mxu0 0.0
  %6168 = vmatprep.subr.mxu0 0.0
  %6169 = vmatpush1.msra.mxu0 0.0
  %6170 = vmatprep.mubr.f32.mxu0 0.0
  %6171 = vmatmul.mubr.f32.gmra.mrb[0].mxu0 %v6104
  %v6172 = vpop.f32.mrb[0].mxu0
  %v6173 = vadd.f32 0.0, %v6172
  %v6174 = vpop.f32.mrb[0].mxu0
  %6175 = vdwg.mxu0
  %vm6176 = vcmask 517120
  %v6177 = vsel %vm6176, %v6173, 0.0
  %6178 = vadd.xlane.f32.xlu0 %v6177
  %v6179 = vpop.xlane.xlu0 %6178
  %v6180 = vld [vmem:[%s17] sm:$0xff]
  %v6182 = vlaneseq
  %v6183 = vshrl.u32 %v6182, 7
  %v6184 = vsub.s32 0, %v6183
  %v6185 = vrot.slane %v6180, %v6184
  %v6186 = vlaneseq
  %v6187 = vshrl.u32 %v6186, 7
  %v6188 = vsub.s32 1, %v6187
  %v6189 = vrot.slane %v6180, %v6188
  %v6190 = vlaneseq
  %v6191 = vshrl.u32 %v6190, 7
  %v6192 = vsub.s32 2, %v6191
  %v6193 = vrot.slane %v6180, %v6192
  %v6194 = vlaneseq
  %v6195 = vshrl.u32 %v6194, 7
  %v6196 = vsub.s32 3, %v6195
  %v6197 = vrot.slane %v6180, %v6196
  %v6198 = vlaneseq
  %v6199 = vshrl.u32 %v6198, 7
  %v6200 = vsub.s32 4, %v6199
  %v6201 = vrot.slane %v6180, %v6200
  %v6202 = vlaneseq
  %v6203 = vshrl.u32 %v6202, 7
  %v6204 = vsub.s32 5, %v6203
  %v6205 = vrot.slane %v6180, %v6204
  %v6206 = vlaneseq
  %v6207 = vshrl.u32 %v6206, 7
  %v6208 = vsub.s32 6, %v6207
  %v6209 = vrot.slane %v6180, %v6208
  %v6210 = vlaneseq
  %v6211 = vshrl.u32 %v6210, 7
  %v6212 = vsub.s32 7, %v6211
  %v6213 = vrot.slane %v6180, %v6212
  %v6222 = vmul.f32 %v6086, %v6185
  %v6223 = vmul.f32 %v6087, %v6189
  %v6224 = vmul.f32 %v6088, %v6193
  %v6225 = vmul.f32 %v6089, %v6197
  %v6226 = vmul.f32 %v6090, %v6201
  %v6227 = vmul.f32 %v6091, %v6205
  %v6228 = vmul.f32 %v6092, %v6209
  %v6229 = vmul.f32 %v6093, %v6213
  %v6230 = vsel %vm282, %v6222, 0.0
  %v6231 = vsel %vm282, %v6223, 0.0
  %v6232 = vadd.f32 %v6230, %v6231
  %v6233 = vsel %vm282, %v6224, 0.0
  %v6234 = vadd.f32 %v6232, %v6233
  %v6235 = vsel %vm282, %v6225, 0.0
  %v6236 = vadd.f32 %v6234, %v6235
  %v6237 = vsel %vm282, %v6226, 0.0
  %v6238 = vadd.f32 %v6236, %v6237
  %v6239 = vsel %vm282, %v6227, 0.0
  %v6240 = vadd.f32 %v6238, %v6239
  %v6241 = vsel %vm282, %v6228, 0.0
  %v6242 = vadd.f32 %v6240, %v6241
  %v6243 = vsel %vm282, %v6229, 0.0
  %v6244 = vadd.f32 %v6242, %v6243
  %6245 = vadd.xlane.f32.xlu0 %v6244
  %v6246 = vpop.xlane.xlu0 %6245
  %v6247 = vadd.f32 %v6179, %v6246
  %v6248 = vxor.u32 %v6247, 2147483648
  %v6249 = vmul.f32 %v6248, 1.442695
  %v6250 = vpow.pop %v6249
  %v6251 = vadd.f32 %v6250, 1.0
  %v6252 = vrcp.pop %v6251
  %v6253 = vmul.f32 1.0, %v6252
  %vm6254 = vcmask 1024
  %6255 = vst.msk [vmem:[%s19] sm:$0x3] %vm6254, %v6253
  // Predicated region
  $region78: #{stage1_discriminator.1} parent=0 // pred_check
    _
  $region79: #{stage1_discriminator.1} parent=0 // pred_check_branch
    %6257 = sbr.rel (0) target = $region81
  $region80: #{stage1_discriminator.1} parent=0 // pred_region
    _
  $region81: #{stage1_discriminator.1} parent=0 // pred_fallthru
    _
  // Predicated region
  $region82: #{stage1_discriminator.1} parent=0 // pred_check
    _
  $region83: #{stage1_discriminator.1} parent=0 // pred_check_branch
    %6259 = sbr.rel (0) target = $region85
  $region84: #{stage1_discriminator.1} parent=0 // pred_region
    _
  $region85: #{stage1_discriminator.1} parent=0 // pred_fallthru
    _

</llo_original>
